<compile_context>
chip_gen: v7x
topology: tpu7x:2x2x1
jax: 0.10.0
libtpu: 0.0.40
codegen_flags: <defaults>
</compile_context>

<pallas_src>
import functools

import jax
import jax.numpy as jnp
from jax.experimental import pallas as pl
from jax.experimental.pallas import tpu as pltpu

EPS = 1e-5            # torch BatchNorm1d default
N_COMPONENTS = 16     # config.n_components (small demo value)
BATCH = 2

# (c_out, kernel, stride, padding, relu_after_bn) for deconv1..deconv4
LAYERS = [
    (64, 5, 3, 0, True),
    (32, 3, 7, 0, True),
    (16, 5, 4, 0, True),
    (1, 7, 5, 1, False),
]


def output_length():
    length = 1
    for _, k, s, p, _ in LAYERS:
        length = (length - 1) * s + k - 2 * p
    return length


# ----------------------------------------------------------------------------
# Fused whole-network Pallas kernel
# ----------------------------------------------------------------------------
def _model_kernel(x_ref, trig_ref,
                  w1x_ref, w1t_ref, b1_ref, g1_ref, be1_ref,
                  w2_ref, b2_ref, g2_ref, be2_ref,
                  w3_ref, b3_ref, g3_ref, be3_ref,
                  w4_ref, b4_ref, g4_ref, be4_ref,
                  out_ref, *, batch, n_components):
    B = batch
    nc = n_components

    def bn_cf(acc, bias, gamma, beta, c, relu):
        # acc: (B*c, L) stacked channels-first (rows ordered b*c + channel).
        # bias/gamma/beta: (c, 1).  Training-mode BN: stats over (batch, L),
        # biased variance, one-pass sum / sum-of-squares.
        l = acc.shape[1]
        n = float(B * l)
        z = acc + jnp.concatenate([bias] * B, axis=0)            # conv bias
        s = jnp.sum(z, axis=1, keepdims=True)                    # (B*c, 1)
        sq = jnp.sum(z * z, axis=1, keepdims=True)
        s_c = sum(s[b * c:(b + 1) * c, :] for b in range(B))     # (c, 1)
        sq_c = sum(sq[b * c:(b + 1) * c, :] for b in range(B))
        mean = s_c / n
        var = jnp.maximum(sq_c / n - mean * mean, 0.0)
        scale = gamma * jax.lax.rsqrt(var + EPS)                 # (c, 1)
        shift = beta - mean * scale
        y = (z * jnp.concatenate([scale] * B, axis=0)
             + jnp.concatenate([shift] * B, axis=0))
        if relu:
            y = jnp.maximum(y, 0.0)
        return y

    def deconv_cf(xs, w2d, c_in, c_out, k_size, stride):
        # xs:  (B*c_in, l_in) stacked channels-first.
        # w2d: (k_size*c_out, c_in), rows ordered (k, c_out)  [== w[ci,co,k]^T]
        l_in = xs.shape[1]
        l_full = (l_in - 1) * stride + k_size
        # (a) per-batch channel contraction on the MXU
        d = []
        for b in range(B):
            xb = xs[b * c_in:(b + 1) * c_in, :]                  # (c_in, l_in)
            d.append(jnp.dot(w2d, xb,
                             preferred_element_type=jnp.float32))  # (K*c_out, l_in)
        # (b) overlap-add scatter along L via 0/1 matmuls (j == i*stride + k)
        rows = jax.lax.broadcasted_iota(jnp.int32, (l_in, l_full), 0)  # i
        cols = jax.lax.broadcasted_iota(jnp.int32, (l_in, l_full), 1)  # j
        diff = cols - rows * stride
        acc = jnp.zeros((B * c_out, l_full), jnp.float32)
        for k in range(k_size):
            dk = jnp.concatenate(
                [d[b][k * c_out:(k + 1) * c_out, :] for b in range(B)], axis=0)
            vk = jnp.where(diff == k, 1.0, 0.0).astype(jnp.float32)
            acc = acc + jnp.dot(dk, vk, preferred_element_type=jnp.float32)
        return acc                                               # (B*c_out, l_full)

    # ---- layer 1: ConvTranspose1d(2*nc -> 64, k=5, s=3), L_in == 1 ----------
    # With L_in == 1 the deconv is an outer product: h[co, k] = sum_ci w * x[ci].
    # Done on the VPU (multiply + lane-reduce) so no transpose is ever needed.
    x = x_ref[...]                                               # (B, nc)
    w1x = w1x_ref[...]                                           # (64, 5, nc)
    w1t = w1t_ref[...]                                           # (64, 5, nc)
    trig = trig_ref[...].reshape(1, 1, nc)                       # (1, 1, nc)
    t_contrib = jnp.sum(w1t * trig, axis=-1)                     # (64, 5), shared
    parts = []
    for b in range(B):
        xb = x[b:b + 1, :].reshape(1, 1, nc)
        parts.append(jnp.sum(w1x * xb, axis=-1) + t_contrib)     # (64, 5)
    h = jnp.concatenate(parts, axis=0)                           # (B*64, 5)
    h = bn_cf(h, b1_ref[...], g1_ref[...], be1_ref[...], 64, relu=True)

    # ---- layer 2: 64 -> 32, k=3, s=7 (stride > k -> gaps get bias only) -----
    h = deconv_cf(h, w2_ref[...], 64, 32, 3, 7)                  # (B*32, 31)
    h = bn_cf(h, b2_ref[...], g2_ref[...], be2_ref[...], 32, relu=True)

    # ---- layer 3: 32 -> 16, k=5, s=4 (overlap-add) --------------------------
    h = deconv_cf(h, w3_ref[...], 32, 16, 5, 4)                  # (B*16, 125)
    h = bn_cf(h, b3_ref[...], g3_ref[...], be3_ref[...], 16, relu=True)

    # ---- layer 4: 16 -> 1, k=7, s=5, padding=1 (no ReLU) --------------------
    h = deconv_cf(h, w4_ref[...], 16, 1, 7, 5)                   # (B, 627)
    h = h[:, 1:-1]                                               # trim padding -> (B, 625)
    h = bn_cf(h, b4_ref[...], g4_ref[...], be4_ref[...], 1, relu=False)

    out_ref[...] = h                                             # (B, 625)


# ----------------------------------------------------------------------------
# Parameters (torch layouts) and one-time repack into kernel layouts
# ----------------------------------------------------------------------------
def init_params(key, n_components):
    """Synthetic parameters in the PyTorch module's native layouts."""
    c_in = 2 * n_components
    keys = jax.random.split(key, 1 + 2 * len(LAYERS))
    params = {"trigger": jax.random.normal(keys[0], (1, n_components), jnp.float32)}
    for i, (c_out, k, _, _, _) in enumerate(LAYERS):
        scale = 1.0 / jnp.sqrt(jnp.float32(c_in * k))
        params[f"w{i+1}"] = scale * jax.random.normal(
            keys[1 + 2 * i], (c_in, c_out, k), jnp.float32)      # ConvTranspose1d weight
        params[f"b{i+1}"] = scale * jax.random.normal(
            keys[2 + 2 * i], (c_out,), jnp.float32)
        params[f"gamma{i+1}"] = jnp.ones((c_out,), jnp.float32)  # BN affine defaults
        params[f"beta{i+1}"] = jnp.zeros((c_out,), jnp.float32)
        c_in = c_out
    return params


def pack_params(params):
    """One-time (outside jit) repack of torch-layout params into kernel layouts."""
    nc = params["trigger"].shape[1]
    p = {"trigger": params["trigger"]}
    # layer 1: (c_in, 64, 5) -> (64, 5, c_in), split into x-part / trigger-part
    w1_t = jnp.transpose(params["w1"], (1, 2, 0))                # (c_out, K, c_in)
    p["w1x"] = w1_t[:, :, :nc]
    p["w1t"] = w1_t[:, :, nc:]
    # layers 2-4: (c_in, c_out, K) -> (K*c_out, c_in), k-major rows
    for i in (2, 3, 4):
        w = params[f"w{i}"]
        c_in, c_out, k = w.shape
        p[f"w{i}"] = jnp.transpose(w, (2, 1, 0)).reshape(k * c_out, c_in)
    for i in (1, 2, 3, 4):
        c_out = params[f"b{i}"].shape[0]
        p[f"b{i}"] = params[f"b{i}"].reshape(c_out, 1)
        p[f"g{i}"] = params[f"gamma{i}"].reshape(c_out, 1)
        p[f"be{i}"] = params[f"beta{i}"].reshape(c_out, 1)
    return p


# ----------------------------------------------------------------------------
# Forward pass: one pallas_call for the whole network
# ----------------------------------------------------------------------------
def forward(packed, x):
    batch, nc = x.shape
    l_out = output_length()
    kern = functools.partial(_model_kernel, batch=batch, n_components=nc)
    vmem = pl.BlockSpec(memory_space=pltpu.MemorySpace.VMEM)
    args = (x, packed["trigger"],
            packed["w1x"], packed["w1t"], packed["b1"], packed["g1"], packed["be1"],
            packed["w2"], packed["b2"], packed["g2"], packed["be2"],
            packed["w3"], packed["b3"], packed["g3"], packed["be3"],
            packed["w4"], packed["b4"], packed["g4"], packed["be4"])
    out = pl.pallas_call(
        kern,
        out_shape=jax.ShapeDtypeStruct((batch, l_out), jnp.float32),
        in_specs=[vmem] * len(args),
        out_specs=vmem,
    )(*args)
    return out.reshape(batch, 1, l_out)                          # (B, 1, 625)


# TODO(synk): torch BatchNorm1d running_mean/running_var updates (a training
# side effect that does not influence this forward output) are not modelled.


# ----------------------------------------------------------------------------
# Plain-JAX reference of the torch module (for a correctness cross-check)
# ----------------------------------------------------------------------------
def reference_forward(params, x):
    batch = x.shape[0]
    nc = params["trigger"].shape[1]
    trig = jnp.broadcast_to(params["trigger"], (batch, nc))
    h = jnp.concatenate([x, trig], axis=1)[:, :, None]           # (B, 2nc, 1) NCL
    for i, (c_out, k_size, stride, pad, relu) in enumerate(LAYERS):
        w = params[f"w{i+1}"]                                    # (c_in, c_out, K)
        b = params[f"b{i+1}"]
        g = params[f"gamma{i+1}"]
        be = params[f"beta{i+1}"]
        l_in = h.shape[2]
        l_full = (l_in - 1) * stride + k_size
        contrib = jnp.einsum("bci,cok->boik", h, w,
                             precision=jax.lax.Precision.HIGHEST)
        out = jnp.zeros((batch, c_out, l_full), jnp.float32)
        for k in range(k_size):
            out = out.at[:, :, k:k + (l_in - 1) * stride + 1:stride].add(
                contrib[:, :, :, k])
        out = out[:, :, pad:l_full - pad] + b.reshape(1, c_out, 1)
        mean = jnp.mean(out, axis=(0, 2), keepdims=True)
        var = jnp.mean((out - mean) ** 2, axis=(0, 2), keepdims=True)
        out = ((out - mean) * jax.lax.rsqrt(var + EPS) * g.reshape(1, c_out, 1)
               + be.reshape(1, c_out, 1))
        if relu:
            out = jnp.maximum(out, 0.0)
        h = out
    return h


if __name__ == "__main__":
    key = jax.random.PRNGKey(0)
    pkey, xkey = jax.random.split(key)

    params = init_params(pkey, N_COMPONENTS)
    packed = pack_params(params)                                 # once, outside jit
    x = jax.random.normal(xkey, (BATCH, N_COMPONENTS), jnp.float32)

    out = jax.block_until_ready(jax.jit(forward)(packed, x))
    assert out.shape == (BATCH, 1, output_length()), out.shape
    assert bool(jnp.all(jnp.isfinite(out)))

    ref = jax.block_until_ready(jax.jit(reference_forward)(params, x))
    err = float(jnp.max(jnp.abs(out - ref)))
    assert err < 5e-2, f"max abs err vs reference: {err}"

    print("KERNEL_OK")
</pallas_src>

<mosaic_0001>
module attributes {stable_mosaic.version = 11 : i64} {
  func.func @_model_kernel(%arg0: memref<2x16xf32, #tpu.memory_space<vmem>>, %arg1: memref<1x16xf32, #tpu.memory_space<vmem>>, %arg2: memref<64x5x16xf32, #tpu.memory_space<vmem>>, %arg3: memref<64x5x16xf32, #tpu.memory_space<vmem>>, %arg4: memref<64x1xf32, #tpu.memory_space<vmem>>, %arg5: memref<64x1xf32, #tpu.memory_space<vmem>>, %arg6: memref<64x1xf32, #tpu.memory_space<vmem>>, %arg7: memref<96x64xf32, #tpu.memory_space<vmem>>, %arg8: memref<32x1xf32, #tpu.memory_space<vmem>>, %arg9: memref<32x1xf32, #tpu.memory_space<vmem>>, %arg10: memref<32x1xf32, #tpu.memory_space<vmem>>, %arg11: memref<80x32xf32, #tpu.memory_space<vmem>>, %arg12: memref<16x1xf32, #tpu.memory_space<vmem>>, %arg13: memref<16x1xf32, #tpu.memory_space<vmem>>, %arg14: memref<16x1xf32, #tpu.memory_space<vmem>>, %arg15: memref<7x16xf32, #tpu.memory_space<vmem>>, %arg16: memref<1x1xf32, #tpu.memory_space<vmem>>, %arg17: memref<1x1xf32, #tpu.memory_space<vmem>>, %arg18: memref<1x1xf32, #tpu.memory_space<vmem>>, %arg19: memref<2x625xf32, #tpu.memory_space<vmem>>) attributes {dimension_semantics = [], scalar_prefetch = 0 : i64, scratch_operands = 0 : i64, tpu.core_type = #tpu.core_type<tc>} {
    %c0 = arith.constant 0 : index
    %c0_0 = arith.constant 0 : index
    %0 = vector.load %arg0[%c0, %c0_0] : memref<2x16xf32, #tpu.memory_space<vmem>>, vector<2x16xf32>
    %c0_1 = arith.constant 0 : index
    %c0_2 = arith.constant 0 : index
    %c0_3 = arith.constant 0 : index
    %1 = vector.load %arg2[%c0_1, %c0_2, %c0_3] : memref<64x5x16xf32, #tpu.memory_space<vmem>>, vector<64x5x16xf32>
    %c0_4 = arith.constant 0 : index
    %c0_5 = arith.constant 0 : index
    %c0_6 = arith.constant 0 : index
    %2 = vector.load %arg3[%c0_4, %c0_5, %c0_6] : memref<64x5x16xf32, #tpu.memory_space<vmem>>, vector<64x5x16xf32>
    %c0_7 = arith.constant 0 : index
    %c0_8 = arith.constant 0 : index
    %3 = vector.load %arg1[%c0_7, %c0_8] : memref<1x16xf32, #tpu.memory_space<vmem>>, vector<1x16xf32>
    %4 = vector.shape_cast %3 : vector<1x16xf32> to vector<1x1x16xf32>
    %5 = vector.broadcast %4 : vector<1x1x16xf32> to vector<64x5x16xf32>
    %6 = arith.mulf %2, %5 : vector<64x5x16xf32>
    %cst = arith.constant dense<0.000000e+00> : vector<64x5xf32>
    %7 = vector.multi_reduction <add>, %6, %cst [2] : vector<64x5x16xf32> to vector<64x5xf32>
    %8 = vector.extract_strided_slice %0 {offsets = [0, 0], sizes = [1, 16], strides = [1, 1]} : vector<2x16xf32> to vector<1x16xf32>
    %9 = vector.shape_cast %8 : vector<1x16xf32> to vector<1x1x16xf32>
    %10 = vector.broadcast %9 : vector<1x1x16xf32> to vector<64x5x16xf32>
    %11 = arith.mulf %1, %10 : vector<64x5x16xf32>
    %cst_9 = arith.constant dense<0.000000e+00> : vector<64x5xf32>
    %12 = vector.multi_reduction <add>, %11, %cst_9 [2] : vector<64x5x16xf32> to vector<64x5xf32>
    %13 = arith.addf %12, %7 : vector<64x5xf32>
    %14 = vector.extract_strided_slice %0 {offsets = [1, 0], sizes = [1, 16], strides = [1, 1]} : vector<2x16xf32> to vector<1x16xf32>
    %15 = vector.shape_cast %14 : vector<1x16xf32> to vector<1x1x16xf32>
    %16 = vector.broadcast %15 : vector<1x1x16xf32> to vector<64x5x16xf32>
    %17 = arith.mulf %1, %16 : vector<64x5x16xf32>
    %cst_10 = arith.constant dense<0.000000e+00> : vector<64x5xf32>
    %18 = vector.multi_reduction <add>, %17, %cst_10 [2] : vector<64x5x16xf32> to vector<64x5xf32>
    %19 = arith.addf %18, %7 : vector<64x5xf32>
    %20 = tpu.concatenate %13, %19 in 0 : vector<64x5xf32>, vector<64x5xf32> -> vector<128x5xf32>
    %c0_11 = arith.constant 0 : index
    %c0_12 = arith.constant 0 : index
    %21 = vector.load %arg4[%c0_11, %c0_12] : memref<64x1xf32, #tpu.memory_space<vmem>>, vector<64x1xf32>
    %c0_13 = arith.constant 0 : index
    %c0_14 = arith.constant 0 : index
    %22 = vector.load %arg5[%c0_13, %c0_14] : memref<64x1xf32, #tpu.memory_space<vmem>>, vector<64x1xf32>
    %c0_15 = arith.constant 0 : index
    %c0_16 = arith.constant 0 : index
    %23 = vector.load %arg6[%c0_15, %c0_16] : memref<64x1xf32, #tpu.memory_space<vmem>>, vector<64x1xf32>
    %24 = tpu.concatenate %21, %21 in 0 : vector<64x1xf32>, vector<64x1xf32> -> vector<128x1xf32>
    %25 = vector.broadcast %24 : vector<128x1xf32> to vector<128x5xf32>
    %26 = arith.addf %20, %25 : vector<128x5xf32>
    %cst_17 = arith.constant dense<0.000000e+00> : vector<128xf32>
    %27 = vector.multi_reduction <add>, %26, %cst_17 [1] : vector<128x5xf32> to vector<128xf32>
    %28 = vector.shape_cast %27 : vector<128xf32> to vector<128x1xf32>
    %29 = arith.mulf %26, %26 : vector<128x5xf32>
    %cst_18 = arith.constant dense<0.000000e+00> : vector<128xf32>
    %30 = vector.multi_reduction <add>, %29, %cst_18 [1] : vector<128x5xf32> to vector<128xf32>
    %31 = vector.shape_cast %30 : vector<128xf32> to vector<128x1xf32>
    %32 = vector.extract_strided_slice %28 {offsets = [0, 0], sizes = [64, 1], strides = [1, 1]} : vector<128x1xf32> to vector<64x1xf32>
    %cst_19 = arith.constant 0.000000e+00 : f32
    %33 = vector.broadcast %cst_19 : f32 to vector<64x1xf32>
    %34 = arith.addf %33, %32 : vector<64x1xf32>
    %35 = vector.extract_strided_slice %28 {offsets = [64, 0], sizes = [64, 1], strides = [1, 1]} : vector<128x1xf32> to vector<64x1xf32>
    %36 = arith.addf %34, %35 : vector<64x1xf32>
    %37 = vector.extract_strided_slice %31 {offsets = [0, 0], sizes = [64, 1], strides = [1, 1]} : vector<128x1xf32> to vector<64x1xf32>
    %cst_20 = arith.constant 0.000000e+00 : f32
    %38 = vector.broadcast %cst_20 : f32 to vector<64x1xf32>
    %39 = arith.addf %38, %37 : vector<64x1xf32>
    %40 = vector.extract_strided_slice %31 {offsets = [64, 0], sizes = [64, 1], strides = [1, 1]} : vector<128x1xf32> to vector<64x1xf32>
    %41 = arith.addf %39, %40 : vector<64x1xf32>
    %cst_21 = arith.constant 1.000000e+01 : f32
    %42 = vector.broadcast %cst_21 : f32 to vector<64x1xf32>
    %43 = arith.divf %36, %42 : vector<64x1xf32>
    %cst_22 = arith.constant 1.000000e+01 : f32
    %44 = vector.broadcast %cst_22 : f32 to vector<64x1xf32>
    %45 = arith.divf %41, %44 : vector<64x1xf32>
    %46 = arith.mulf %43, %43 : vector<64x1xf32>
    %47 = arith.subf %45, %46 : vector<64x1xf32>
    %cst_23 = arith.constant 0.000000e+00 : f32
    %48 = vector.broadcast %cst_23 : f32 to vector<64x1xf32>
    %49 = arith.maximumf %47, %48 : vector<64x1xf32>
    %cst_24 = arith.constant 9.99999974E-6 : f32
    %50 = vector.broadcast %cst_24 : f32 to vector<64x1xf32>
    %51 = arith.addf %49, %50 : vector<64x1xf32>
    %52 = math.rsqrt %51 : vector<64x1xf32>
    %53 = arith.mulf %22, %52 : vector<64x1xf32>
    %54 = arith.mulf %43, %53 : vector<64x1xf32>
    %55 = arith.subf %23, %54 : vector<64x1xf32>
    %56 = tpu.concatenate %53, %53 in 0 : vector<64x1xf32>, vector<64x1xf32> -> vector<128x1xf32>
    %57 = vector.broadcast %56 : vector<128x1xf32> to vector<128x5xf32>
    %58 = arith.mulf %26, %57 : vector<128x5xf32>
    %59 = tpu.concatenate %55, %55 in 0 : vector<64x1xf32>, vector<64x1xf32> -> vector<128x1xf32>
    %60 = vector.broadcast %59 : vector<128x1xf32> to vector<128x5xf32>
    %61 = arith.addf %58, %60 : vector<128x5xf32>
    %cst_25 = arith.constant 0.000000e+00 : f32
    %62 = vector.broadcast %cst_25 : f32 to vector<128x5xf32>
    %63 = arith.maximumf %61, %62 : vector<128x5xf32>
    %c0_26 = arith.constant 0 : index
    %c0_27 = arith.constant 0 : index
    %64 = vector.load %arg7[%c0_26, %c0_27] : memref<96x64xf32, #tpu.memory_space<vmem>>, vector<96x64xf32>
    %65 = vector.extract_strided_slice %63 {offsets = [0, 0], sizes = [64, 5], strides = [1, 1]} : vector<128x5xf32> to vector<64x5xf32>
    %cst_28 = arith.constant dense<0.000000e+00> : vector<96x5xf32>
    %66 = tpu.matmul %64, %65, %cst_28 {dimension_numbers = #tpu.dot_dimension_numbers<[1], [0], [0], [1], [0, 0, 1, 1], [], []>} : vector<96x64xf32>, vector<64x5xf32>, vector<96x5xf32> -> vector<96x5xf32>
    %67 = vector.extract_strided_slice %63 {offsets = [64, 0], sizes = [64, 5], strides = [1, 1]} : vector<128x5xf32> to vector<64x5xf32>
    %cst_29 = arith.constant dense<0.000000e+00> : vector<96x5xf32>
    %68 = tpu.matmul %64, %67, %cst_29 {dimension_numbers = #tpu.dot_dimension_numbers<[1], [0], [0], [1], [0, 0, 1, 1], [], []>} : vector<96x64xf32>, vector<64x5xf32>, vector<96x5xf32> -> vector<96x5xf32>
    %69 = tpu.iota {dimensions = array<i32: 0>} : vector<5x31xi32>
    %70 = tpu.iota {dimensions = array<i32: 1>} : vector<5x31xi32>
    %c7_i32 = arith.constant 7 : i32
    %71 = vector.broadcast %c7_i32 : i32 to vector<5x31xi32>
    %72 = arith.muli %69, %71 : vector<5x31xi32>
    %73 = arith.subi %70, %72 : vector<5x31xi32>
    %cst_30 = arith.constant 0.000000e+00 : f32
    %74 = vector.broadcast %cst_30 : f32 to vector<64x31xf32>
    %75 = vector.extract_strided_slice %66 {offsets = [0, 0], sizes = [32, 5], strides = [1, 1]} : vector<96x5xf32> to vector<32x5xf32>
    %76 = vector.extract_strided_slice %68 {offsets = [0, 0], sizes = [32, 5], strides = [1, 1]} : vector<96x5xf32> to vector<32x5xf32>
    %77 = tpu.concatenate %75, %76 in 0 : vector<32x5xf32>, vector<32x5xf32> -> vector<64x5xf32>
    %c0_i32 = arith.constant 0 : i32
    %78 = vector.broadcast %c0_i32 : i32 to vector<5x31xi32>
    %79 = arith.cmpi eq, %73, %78 : vector<5x31xi32>
    %cst_31 = arith.constant 1.000000e+00 : f32
    %cst_32 = arith.constant 0.000000e+00 : f32
    %80 = vector.broadcast %cst_31 : f32 to vector<5x31xf32>
    %81 = vector.broadcast %cst_32 : f32 to vector<5x31xf32>
    %82 = arith.select %79, %80, %81 : vector<5x31xi1>, vector<5x31xf32>
    %cst_33 = arith.constant dense<0.000000e+00> : vector<64x31xf32>
    %83 = tpu.matmul %77, %82, %cst_33 {dimension_numbers = #tpu.dot_dimension_numbers<[1], [0], [0], [1], [0, 0, 1, 1], [], []>} : vector<64x5xf32>, vector<5x31xf32>, vector<64x31xf32> -> vector<64x31xf32>
    %84 = arith.addf %74, %83 : vector<64x31xf32>
    %85 = vector.extract_strided_slice %66 {offsets = [32, 0], sizes = [32, 5], strides = [1, 1]} : vector<96x5xf32> to vector<32x5xf32>
    %86 = vector.extract_strided_slice %68 {offsets = [32, 0], sizes = [32, 5], strides = [1, 1]} : vector<96x5xf32> to vector<32x5xf32>
    %87 = tpu.concatenate %85, %86 in 0 : vector<32x5xf32>, vector<32x5xf32> -> vector<64x5xf32>
    %c1_i32 = arith.constant 1 : i32
    %88 = vector.broadcast %c1_i32 : i32 to vector<5x31xi32>
    %89 = arith.cmpi eq, %73, %88 : vector<5x31xi32>
    %cst_34 = arith.constant 1.000000e+00 : f32
    %cst_35 = arith.constant 0.000000e+00 : f32
    %90 = vector.broadcast %cst_34 : f32 to vector<5x31xf32>
    %91 = vector.broadcast %cst_35 : f32 to vector<5x31xf32>
    %92 = arith.select %89, %90, %91 : vector<5x31xi1>, vector<5x31xf32>
    %cst_36 = arith.constant dense<0.000000e+00> : vector<64x31xf32>
    %93 = tpu.matmul %87, %92, %cst_36 {dimension_numbers = #tpu.dot_dimension_numbers<[1], [0], [0], [1], [0, 0, 1, 1], [], []>} : vector<64x5xf32>, vector<5x31xf32>, vector<64x31xf32> -> vector<64x31xf32>
    %94 = arith.addf %84, %93 : vector<64x31xf32>
    %95 = vector.extract_strided_slice %66 {offsets = [64, 0], sizes = [32, 5], strides = [1, 1]} : vector<96x5xf32> to vector<32x5xf32>
    %96 = vector.extract_strided_slice %68 {offsets = [64, 0], sizes = [32, 5], strides = [1, 1]} : vector<96x5xf32> to vector<32x5xf32>
    %97 = tpu.concatenate %95, %96 in 0 : vector<32x5xf32>, vector<32x5xf32> -> vector<64x5xf32>
    %c2_i32 = arith.constant 2 : i32
    %98 = vector.broadcast %c2_i32 : i32 to vector<5x31xi32>
    %99 = arith.cmpi eq, %73, %98 : vector<5x31xi32>
    %cst_37 = arith.constant 1.000000e+00 : f32
    %cst_38 = arith.constant 0.000000e+00 : f32
    %100 = vector.broadcast %cst_37 : f32 to vector<5x31xf32>
    %101 = vector.broadcast %cst_38 : f32 to vector<5x31xf32>
    %102 = arith.select %99, %100, %101 : vector<5x31xi1>, vector<5x31xf32>
    %cst_39 = arith.constant dense<0.000000e+00> : vector<64x31xf32>
    %103 = tpu.matmul %97, %102, %cst_39 {dimension_numbers = #tpu.dot_dimension_numbers<[1], [0], [0], [1], [0, 0, 1, 1], [], []>} : vector<64x5xf32>, vector<5x31xf32>, vector<64x31xf32> -> vector<64x31xf32>
    %104 = arith.addf %94, %103 : vector<64x31xf32>
    %c0_40 = arith.constant 0 : index
    %c0_41 = arith.constant 0 : index
    %105 = vector.load %arg8[%c0_40, %c0_41] : memref<32x1xf32, #tpu.memory_space<vmem>>, vector<32x1xf32>
    %c0_42 = arith.constant 0 : index
    %c0_43 = arith.constant 0 : index
    %106 = vector.load %arg9[%c0_42, %c0_43] : memref<32x1xf32, #tpu.memory_space<vmem>>, vector<32x1xf32>
    %c0_44 = arith.constant 0 : index
    %c0_45 = arith.constant 0 : index
    %107 = vector.load %arg10[%c0_44, %c0_45] : memref<32x1xf32, #tpu.memory_space<vmem>>, vector<32x1xf32>
    %108 = tpu.concatenate %105, %105 in 0 : vector<32x1xf32>, vector<32x1xf32> -> vector<64x1xf32>
    %109 = vector.broadcast %108 : vector<64x1xf32> to vector<64x31xf32>
    %110 = arith.addf %104, %109 : vector<64x31xf32>
    %cst_46 = arith.constant dense<0.000000e+00> : vector<64xf32>
    %111 = vector.multi_reduction <add>, %110, %cst_46 [1] : vector<64x31xf32> to vector<64xf32>
    %112 = vector.shape_cast %111 : vector<64xf32> to vector<64x1xf32>
    %113 = arith.mulf %110, %110 : vector<64x31xf32>
    %cst_47 = arith.constant dense<0.000000e+00> : vector<64xf32>
    %114 = vector.multi_reduction <add>, %113, %cst_47 [1] : vector<64x31xf32> to vector<64xf32>
    %115 = vector.shape_cast %114 : vector<64xf32> to vector<64x1xf32>
    %116 = vector.extract_strided_slice %112 {offsets = [0, 0], sizes = [32, 1], strides = [1, 1]} : vector<64x1xf32> to vector<32x1xf32>
    %cst_48 = arith.constant 0.000000e+00 : f32
    %117 = vector.broadcast %cst_48 : f32 to vector<32x1xf32>
    %118 = arith.addf %117, %116 : vector<32x1xf32>
    %119 = vector.extract_strided_slice %112 {offsets = [32, 0], sizes = [32, 1], strides = [1, 1]} : vector<64x1xf32> to vector<32x1xf32>
    %120 = arith.addf %118, %119 : vector<32x1xf32>
    %121 = vector.extract_strided_slice %115 {offsets = [0, 0], sizes = [32, 1], strides = [1, 1]} : vector<64x1xf32> to vector<32x1xf32>
    %cst_49 = arith.constant 0.000000e+00 : f32
    %122 = vector.broadcast %cst_49 : f32 to vector<32x1xf32>
    %123 = arith.addf %122, %121 : vector<32x1xf32>
    %124 = vector.extract_strided_slice %115 {offsets = [32, 0], sizes = [32, 1], strides = [1, 1]} : vector<64x1xf32> to vector<32x1xf32>
    %125 = arith.addf %123, %124 : vector<32x1xf32>
    %cst_50 = arith.constant 6.200000e+01 : f32
    %126 = vector.broadcast %cst_50 : f32 to vector<32x1xf32>
    %127 = arith.divf %120, %126 : vector<32x1xf32>
    %cst_51 = arith.constant 6.200000e+01 : f32
    %128 = vector.broadcast %cst_51 : f32 to vector<32x1xf32>
    %129 = arith.divf %125, %128 : vector<32x1xf32>
    %130 = arith.mulf %127, %127 : vector<32x1xf32>
    %131 = arith.subf %129, %130 : vector<32x1xf32>
    %cst_52 = arith.constant 0.000000e+00 : f32
    %132 = vector.broadcast %cst_52 : f32 to vector<32x1xf32>
    %133 = arith.maximumf %131, %132 : vector<32x1xf32>
    %cst_53 = arith.constant 9.99999974E-6 : f32
    %134 = vector.broadcast %cst_53 : f32 to vector<32x1xf32>
    %135 = arith.addf %133, %134 : vector<32x1xf32>
    %136 = math.rsqrt %135 : vector<32x1xf32>
    %137 = arith.mulf %106, %136 : vector<32x1xf32>
    %138 = arith.mulf %127, %137 : vector<32x1xf32>
    %139 = arith.subf %107, %138 : vector<32x1xf32>
    %140 = tpu.concatenate %137, %137 in 0 : vector<32x1xf32>, vector<32x1xf32> -> vector<64x1xf32>
    %141 = vector.broadcast %140 : vector<64x1xf32> to vector<64x31xf32>
    %142 = arith.mulf %110, %141 : vector<64x31xf32>
    %143 = tpu.concatenate %139, %139 in 0 : vector<32x1xf32>, vector<32x1xf32> -> vector<64x1xf32>
    %144 = vector.broadcast %143 : vector<64x1xf32> to vector<64x31xf32>
    %145 = arith.addf %142, %144 : vector<64x31xf32>
    %cst_54 = arith.constant 0.000000e+00 : f32
    %146 = vector.broadcast %cst_54 : f32 to vector<64x31xf32>
    %147 = arith.maximumf %145, %146 : vector<64x31xf32>
    %c0_55 = arith.constant 0 : index
    %c0_56 = arith.constant 0 : index
    %148 = vector.load %arg11[%c0_55, %c0_56] : memref<80x32xf32, #tpu.memory_space<vmem>>, vector<80x32xf32>
    %149 = vector.extract_strided_slice %147 {offsets = [0, 0], sizes = [32, 31], strides = [1, 1]} : vector<64x31xf32> to vector<32x31xf32>
    %cst_57 = arith.constant dense<0.000000e+00> : vector<80x31xf32>
    %150 = tpu.matmul %148, %149, %cst_57 {dimension_numbers = #tpu.dot_dimension_numbers<[1], [0], [0], [1], [0, 0, 1, 1], [], []>} : vector<80x32xf32>, vector<32x31xf32>, vector<80x31xf32> -> vector<80x31xf32>
    %151 = vector.extract_strided_slice %147 {offsets = [32, 0], sizes = [32, 31], strides = [1, 1]} : vector<64x31xf32> to vector<32x31xf32>
    %cst_58 = arith.constant dense<0.000000e+00> : vector<80x31xf32>
    %152 = tpu.matmul %148, %151, %cst_58 {dimension_numbers = #tpu.dot_dimension_numbers<[1], [0], [0], [1], [0, 0, 1, 1], [], []>} : vector<80x32xf32>, vector<32x31xf32>, vector<80x31xf32> -> vector<80x31xf32>
    %153 = tpu.iota {dimensions = array<i32: 0>} : vector<31x125xi32>
    %154 = tpu.iota {dimensions = array<i32: 1>} : vector<31x125xi32>
    %c4_i32 = arith.constant 4 : i32
    %155 = vector.broadcast %c4_i32 : i32 to vector<31x125xi32>
    %156 = arith.muli %153, %155 : vector<31x125xi32>
    %157 = arith.subi %154, %156 : vector<31x125xi32>
    %cst_59 = arith.constant 0.000000e+00 : f32
    %158 = vector.broadcast %cst_59 : f32 to vector<32x125xf32>
    %159 = vector.extract_strided_slice %150 {offsets = [0, 0], sizes = [16, 31], strides = [1, 1]} : vector<80x31xf32> to vector<16x31xf32>
    %160 = vector.extract_strided_slice %152 {offsets = [0, 0], sizes = [16, 31], strides = [1, 1]} : vector<80x31xf32> to vector<16x31xf32>
    %161 = tpu.concatenate %159, %160 in 0 : vector<16x31xf32>, vector<16x31xf32> -> vector<32x31xf32>
    %c0_i32_60 = arith.constant 0 : i32
    %162 = vector.broadcast %c0_i32_60 : i32 to vector<31x125xi32>
    %163 = arith.cmpi eq, %157, %162 : vector<31x125xi32>
    %cst_61 = arith.constant 1.000000e+00 : f32
    %cst_62 = arith.constant 0.000000e+00 : f32
    %164 = vector.broadcast %cst_61 : f32 to vector<31x125xf32>
    %165 = vector.broadcast %cst_62 : f32 to vector<31x125xf32>
    %166 = arith.select %163, %164, %165 : vector<31x125xi1>, vector<31x125xf32>
    %cst_63 = arith.constant dense<0.000000e+00> : vector<32x125xf32>
    %167 = tpu.matmul %161, %166, %cst_63 {dimension_numbers = #tpu.dot_dimension_numbers<[1], [0], [0], [1], [0, 0, 1, 1], [], []>} : vector<32x31xf32>, vector<31x125xf32>, vector<32x125xf32> -> vector<32x125xf32>
    %168 = arith.addf %158, %167 : vector<32x125xf32>
    %169 = vector.extract_strided_slice %150 {offsets = [16, 0], sizes = [16, 31], strides = [1, 1]} : vector<80x31xf32> to vector<16x31xf32>
    %170 = vector.extract_strided_slice %152 {offsets = [16, 0], sizes = [16, 31], strides = [1, 1]} : vector<80x31xf32> to vector<16x31xf32>
    %171 = tpu.concatenate %169, %170 in 0 : vector<16x31xf32>, vector<16x31xf32> -> vector<32x31xf32>
    %c1_i32_64 = arith.constant 1 : i32
    %172 = vector.broadcast %c1_i32_64 : i32 to vector<31x125xi32>
    %173 = arith.cmpi eq, %157, %172 : vector<31x125xi32>
    %cst_65 = arith.constant 1.000000e+00 : f32
    %cst_66 = arith.constant 0.000000e+00 : f32
    %174 = vector.broadcast %cst_65 : f32 to vector<31x125xf32>
    %175 = vector.broadcast %cst_66 : f32 to vector<31x125xf32>
    %176 = arith.select %173, %174, %175 : vector<31x125xi1>, vector<31x125xf32>
    %cst_67 = arith.constant dense<0.000000e+00> : vector<32x125xf32>
    %177 = tpu.matmul %171, %176, %cst_67 {dimension_numbers = #tpu.dot_dimension_numbers<[1], [0], [0], [1], [0, 0, 1, 1], [], []>} : vector<32x31xf32>, vector<31x125xf32>, vector<32x125xf32> -> vector<32x125xf32>
    %178 = arith.addf %168, %177 : vector<32x125xf32>
    %179 = vector.extract_strided_slice %150 {offsets = [32, 0], sizes = [16, 31], strides = [1, 1]} : vector<80x31xf32> to vector<16x31xf32>
    %180 = vector.extract_strided_slice %152 {offsets = [32, 0], sizes = [16, 31], strides = [1, 1]} : vector<80x31xf32> to vector<16x31xf32>
    %181 = tpu.concatenate %179, %180 in 0 : vector<16x31xf32>, vector<16x31xf32> -> vector<32x31xf32>
    %c2_i32_68 = arith.constant 2 : i32
    %182 = vector.broadcast %c2_i32_68 : i32 to vector<31x125xi32>
    %183 = arith.cmpi eq, %157, %182 : vector<31x125xi32>
    %cst_69 = arith.constant 1.000000e+00 : f32
    %cst_70 = arith.constant 0.000000e+00 : f32
    %184 = vector.broadcast %cst_69 : f32 to vector<31x125xf32>
    %185 = vector.broadcast %cst_70 : f32 to vector<31x125xf32>
    %186 = arith.select %183, %184, %185 : vector<31x125xi1>, vector<31x125xf32>
    %cst_71 = arith.constant dense<0.000000e+00> : vector<32x125xf32>
    %187 = tpu.matmul %181, %186, %cst_71 {dimension_numbers = #tpu.dot_dimension_numbers<[1], [0], [0], [1], [0, 0, 1, 1], [], []>} : vector<32x31xf32>, vector<31x125xf32>, vector<32x125xf32> -> vector<32x125xf32>
    %188 = arith.addf %178, %187 : vector<32x125xf32>
    %189 = vector.extract_strided_slice %150 {offsets = [48, 0], sizes = [16, 31], strides = [1, 1]} : vector<80x31xf32> to vector<16x31xf32>
    %190 = vector.extract_strided_slice %152 {offsets = [48, 0], sizes = [16, 31], strides = [1, 1]} : vector<80x31xf32> to vector<16x31xf32>
    %191 = tpu.concatenate %189, %190 in 0 : vector<16x31xf32>, vector<16x31xf32> -> vector<32x31xf32>
    %c3_i32 = arith.constant 3 : i32
    %192 = vector.broadcast %c3_i32 : i32 to vector<31x125xi32>
    %193 = arith.cmpi eq, %157, %192 : vector<31x125xi32>
    %cst_72 = arith.constant 1.000000e+00 : f32
    %cst_73 = arith.constant 0.000000e+00 : f32
    %194 = vector.broadcast %cst_72 : f32 to vector<31x125xf32>
    %195 = vector.broadcast %cst_73 : f32 to vector<31x125xf32>
    %196 = arith.select %193, %194, %195 : vector<31x125xi1>, vector<31x125xf32>
    %cst_74 = arith.constant dense<0.000000e+00> : vector<32x125xf32>
    %197 = tpu.matmul %191, %196, %cst_74 {dimension_numbers = #tpu.dot_dimension_numbers<[1], [0], [0], [1], [0, 0, 1, 1], [], []>} : vector<32x31xf32>, vector<31x125xf32>, vector<32x125xf32> -> vector<32x125xf32>
    %198 = arith.addf %188, %197 : vector<32x125xf32>
    %199 = vector.extract_strided_slice %150 {offsets = [64, 0], sizes = [16, 31], strides = [1, 1]} : vector<80x31xf32> to vector<16x31xf32>
    %200 = vector.extract_strided_slice %152 {offsets = [64, 0], sizes = [16, 31], strides = [1, 1]} : vector<80x31xf32> to vector<16x31xf32>
    %201 = tpu.concatenate %199, %200 in 0 : vector<16x31xf32>, vector<16x31xf32> -> vector<32x31xf32>
    %c4_i32_75 = arith.constant 4 : i32
    %202 = vector.broadcast %c4_i32_75 : i32 to vector<31x125xi32>
    %203 = arith.cmpi eq, %157, %202 : vector<31x125xi32>
    %cst_76 = arith.constant 1.000000e+00 : f32
    %cst_77 = arith.constant 0.000000e+00 : f32
    %204 = vector.broadcast %cst_76 : f32 to vector<31x125xf32>
    %205 = vector.broadcast %cst_77 : f32 to vector<31x125xf32>
    %206 = arith.select %203, %204, %205 : vector<31x125xi1>, vector<31x125xf32>
    %cst_78 = arith.constant dense<0.000000e+00> : vector<32x125xf32>
    %207 = tpu.matmul %201, %206, %cst_78 {dimension_numbers = #tpu.dot_dimension_numbers<[1], [0], [0], [1], [0, 0, 1, 1], [], []>} : vector<32x31xf32>, vector<31x125xf32>, vector<32x125xf32> -> vector<32x125xf32>
    %208 = arith.addf %198, %207 : vector<32x125xf32>
    %c0_79 = arith.constant 0 : index
    %c0_80 = arith.constant 0 : index
    %209 = vector.load %arg12[%c0_79, %c0_80] : memref<16x1xf32, #tpu.memory_space<vmem>>, vector<16x1xf32>
    %c0_81 = arith.constant 0 : index
    %c0_82 = arith.constant 0 : index
    %210 = vector.load %arg13[%c0_81, %c0_82] : memref<16x1xf32, #tpu.memory_space<vmem>>, vector<16x1xf32>
    %c0_83 = arith.constant 0 : index
    %c0_84 = arith.constant 0 : index
    %211 = vector.load %arg14[%c0_83, %c0_84] : memref<16x1xf32, #tpu.memory_space<vmem>>, vector<16x1xf32>
    %212 = tpu.concatenate %209, %209 in 0 : vector<16x1xf32>, vector<16x1xf32> -> vector<32x1xf32>
    %213 = vector.broadcast %212 : vector<32x1xf32> to vector<32x125xf32>
    %214 = arith.addf %208, %213 : vector<32x125xf32>
    %cst_85 = arith.constant dense<0.000000e+00> : vector<32xf32>
    %215 = vector.multi_reduction <add>, %214, %cst_85 [1] : vector<32x125xf32> to vector<32xf32>
    %216 = vector.shape_cast %215 : vector<32xf32> to vector<32x1xf32>
    %217 = arith.mulf %214, %214 : vector<32x125xf32>
    %cst_86 = arith.constant dense<0.000000e+00> : vector<32xf32>
    %218 = vector.multi_reduction <add>, %217, %cst_86 [1] : vector<32x125xf32> to vector<32xf32>
    %219 = vector.shape_cast %218 : vector<32xf32> to vector<32x1xf32>
    %220 = vector.extract_strided_slice %216 {offsets = [0, 0], sizes = [16, 1], strides = [1, 1]} : vector<32x1xf32> to vector<16x1xf32>
    %cst_87 = arith.constant 0.000000e+00 : f32
    %221 = vector.broadcast %cst_87 : f32 to vector<16x1xf32>
    %222 = arith.addf %221, %220 : vector<16x1xf32>
    %223 = vector.extract_strided_slice %216 {offsets = [16, 0], sizes = [16, 1], strides = [1, 1]} : vector<32x1xf32> to vector<16x1xf32>
    %224 = arith.addf %222, %223 : vector<16x1xf32>
    %225 = vector.extract_strided_slice %219 {offsets = [0, 0], sizes = [16, 1], strides = [1, 1]} : vector<32x1xf32> to vector<16x1xf32>
    %cst_88 = arith.constant 0.000000e+00 : f32
    %226 = vector.broadcast %cst_88 : f32 to vector<16x1xf32>
    %227 = arith.addf %226, %225 : vector<16x1xf32>
    %228 = vector.extract_strided_slice %219 {offsets = [16, 0], sizes = [16, 1], strides = [1, 1]} : vector<32x1xf32> to vector<16x1xf32>
    %229 = arith.addf %227, %228 : vector<16x1xf32>
    %cst_89 = arith.constant 2.500000e+02 : f32
    %230 = vector.broadcast %cst_89 : f32 to vector<16x1xf32>
    %231 = arith.divf %224, %230 : vector<16x1xf32>
    %cst_90 = arith.constant 2.500000e+02 : f32
    %232 = vector.broadcast %cst_90 : f32 to vector<16x1xf32>
    %233 = arith.divf %229, %232 : vector<16x1xf32>
    %234 = arith.mulf %231, %231 : vector<16x1xf32>
    %235 = arith.subf %233, %234 : vector<16x1xf32>
    %cst_91 = arith.constant 0.000000e+00 : f32
    %236 = vector.broadcast %cst_91 : f32 to vector<16x1xf32>
    %237 = arith.maximumf %235, %236 : vector<16x1xf32>
    %cst_92 = arith.constant 9.99999974E-6 : f32
    %238 = vector.broadcast %cst_92 : f32 to vector<16x1xf32>
    %239 = arith.addf %237, %238 : vector<16x1xf32>
    %240 = math.rsqrt %239 : vector<16x1xf32>
    %241 = arith.mulf %210, %240 : vector<16x1xf32>
    %242 = arith.mulf %231, %241 : vector<16x1xf32>
    %243 = arith.subf %211, %242 : vector<16x1xf32>
    %244 = tpu.concatenate %241, %241 in 0 : vector<16x1xf32>, vector<16x1xf32> -> vector<32x1xf32>
    %245 = vector.broadcast %244 : vector<32x1xf32> to vector<32x125xf32>
    %246 = arith.mulf %214, %245 : vector<32x125xf32>
    %247 = tpu.concatenate %243, %243 in 0 : vector<16x1xf32>, vector<16x1xf32> -> vector<32x1xf32>
    %248 = vector.broadcast %247 : vector<32x1xf32> to vector<32x125xf32>
    %249 = arith.addf %246, %248 : vector<32x125xf32>
    %cst_93 = arith.constant 0.000000e+00 : f32
    %250 = vector.broadcast %cst_93 : f32 to vector<32x125xf32>
    %251 = arith.maximumf %249, %250 : vector<32x125xf32>
    %c0_94 = arith.constant 0 : index
    %c0_95 = arith.constant 0 : index
    %252 = vector.load %arg15[%c0_94, %c0_95] : memref<7x16xf32, #tpu.memory_space<vmem>>, vector<7x16xf32>
    %253 = vector.extract_strided_slice %251 {offsets = [0, 0], sizes = [16, 125], strides = [1, 1]} : vector<32x125xf32> to vector<16x125xf32>
    %cst_96 = arith.constant dense<0.000000e+00> : vector<7x125xf32>
    %254 = tpu.matmul %252, %253, %cst_96 {dimension_numbers = #tpu.dot_dimension_numbers<[1], [0], [0], [1], [0, 0, 1, 1], [], []>} : vector<7x16xf32>, vector<16x125xf32>, vector<7x125xf32> -> vector<7x125xf32>
    %255 = vector.extract_strided_slice %251 {offsets = [16, 0], sizes = [16, 125], strides = [1, 1]} : vector<32x125xf32> to vector<16x125xf32>
    %cst_97 = arith.constant dense<0.000000e+00> : vector<7x125xf32>
    %256 = tpu.matmul %252, %255, %cst_97 {dimension_numbers = #tpu.dot_dimension_numbers<[1], [0], [0], [1], [0, 0, 1, 1], [], []>} : vector<7x16xf32>, vector<16x125xf32>, vector<7x125xf32> -> vector<7x125xf32>
    %257 = tpu.iota {dimensions = array<i32: 0>} : vector<125x627xi32>
    %258 = tpu.iota {dimensions = array<i32: 1>} : vector<125x627xi32>
    %c5_i32 = arith.constant 5 : i32
    %259 = vector.broadcast %c5_i32 : i32 to vector<125x627xi32>
    %260 = arith.muli %257, %259 : vector<125x627xi32>
    %261 = arith.subi %258, %260 : vector<125x627xi32>
    %cst_98 = arith.constant 0.000000e+00 : f32
    %262 = vector.broadcast %cst_98 : f32 to vector<2x627xf32>
    %263 = vector.extract_strided_slice %254 {offsets = [0, 0], sizes = [1, 125], strides = [1, 1]} : vector<7x125xf32> to vector<1x125xf32>
    %264 = vector.extract_strided_slice %256 {offsets = [0, 0], sizes = [1, 125], strides = [1, 1]} : vector<7x125xf32> to vector<1x125xf32>
    %265 = tpu.concatenate %263, %264 in 0 : vector<1x125xf32>, vector<1x125xf32> -> vector<2x125xf32>
    %c0_i32_99 = arith.constant 0 : i32
    %266 = vector.broadcast %c0_i32_99 : i32 to vector<125x627xi32>
    %267 = arith.cmpi eq, %261, %266 : vector<125x627xi32>
    %cst_100 = arith.constant 1.000000e+00 : f32
    %cst_101 = arith.constant 0.000000e+00 : f32
    %268 = vector.broadcast %cst_100 : f32 to vector<125x627xf32>
    %269 = vector.broadcast %cst_101 : f32 to vector<125x627xf32>
    %270 = arith.select %267, %268, %269 : vector<125x627xi1>, vector<125x627xf32>
    %cst_102 = arith.constant dense<0.000000e+00> : vector<2x627xf32>
    %271 = tpu.matmul %265, %270, %cst_102 {dimension_numbers = #tpu.dot_dimension_numbers<[1], [0], [0], [1], [0, 0, 1, 1], [], []>} : vector<2x125xf32>, vector<125x627xf32>, vector<2x627xf32> -> vector<2x627xf32>
    %272 = arith.addf %262, %271 : vector<2x627xf32>
    %273 = vector.extract_strided_slice %254 {offsets = [1, 0], sizes = [1, 125], strides = [1, 1]} : vector<7x125xf32> to vector<1x125xf32>
    %274 = vector.extract_strided_slice %256 {offsets = [1, 0], sizes = [1, 125], strides = [1, 1]} : vector<7x125xf32> to vector<1x125xf32>
    %275 = tpu.concatenate %273, %274 in 0 : vector<1x125xf32>, vector<1x125xf32> -> vector<2x125xf32>
    %c1_i32_103 = arith.constant 1 : i32
    %276 = vector.broadcast %c1_i32_103 : i32 to vector<125x627xi32>
    %277 = arith.cmpi eq, %261, %276 : vector<125x627xi32>
    %cst_104 = arith.constant 1.000000e+00 : f32
    %cst_105 = arith.constant 0.000000e+00 : f32
    %278 = vector.broadcast %cst_104 : f32 to vector<125x627xf32>
    %279 = vector.broadcast %cst_105 : f32 to vector<125x627xf32>
    %280 = arith.select %277, %278, %279 : vector<125x627xi1>, vector<125x627xf32>
    %cst_106 = arith.constant dense<0.000000e+00> : vector<2x627xf32>
    %281 = tpu.matmul %275, %280, %cst_106 {dimension_numbers = #tpu.dot_dimension_numbers<[1], [0], [0], [1], [0, 0, 1, 1], [], []>} : vector<2x125xf32>, vector<125x627xf32>, vector<2x627xf32> -> vector<2x627xf32>
    %282 = arith.addf %272, %281 : vector<2x627xf32>
    %283 = vector.extract_strided_slice %254 {offsets = [2, 0], sizes = [1, 125], strides = [1, 1]} : vector<7x125xf32> to vector<1x125xf32>
    %284 = vector.extract_strided_slice %256 {offsets = [2, 0], sizes = [1, 125], strides = [1, 1]} : vector<7x125xf32> to vector<1x125xf32>
    %285 = tpu.concatenate %283, %284 in 0 : vector<1x125xf32>, vector<1x125xf32> -> vector<2x125xf32>
    %c2_i32_107 = arith.constant 2 : i32
    %286 = vector.broadcast %c2_i32_107 : i32 to vector<125x627xi32>
    %287 = arith.cmpi eq, %261, %286 : vector<125x627xi32>
    %cst_108 = arith.constant 1.000000e+00 : f32
    %cst_109 = arith.constant 0.000000e+00 : f32
    %288 = vector.broadcast %cst_108 : f32 to vector<125x627xf32>
    %289 = vector.broadcast %cst_109 : f32 to vector<125x627xf32>
    %290 = arith.select %287, %288, %289 : vector<125x627xi1>, vector<125x627xf32>
    %cst_110 = arith.constant dense<0.000000e+00> : vector<2x627xf32>
    %291 = tpu.matmul %285, %290, %cst_110 {dimension_numbers = #tpu.dot_dimension_numbers<[1], [0], [0], [1], [0, 0, 1, 1], [], []>} : vector<2x125xf32>, vector<125x627xf32>, vector<2x627xf32> -> vector<2x627xf32>
    %292 = arith.addf %282, %291 : vector<2x627xf32>
    %293 = vector.extract_strided_slice %254 {offsets = [3, 0], sizes = [1, 125], strides = [1, 1]} : vector<7x125xf32> to vector<1x125xf32>
    %294 = vector.extract_strided_slice %256 {offsets = [3, 0], sizes = [1, 125], strides = [1, 1]} : vector<7x125xf32> to vector<1x125xf32>
    %295 = tpu.concatenate %293, %294 in 0 : vector<1x125xf32>, vector<1x125xf32> -> vector<2x125xf32>
    %c3_i32_111 = arith.constant 3 : i32
    %296 = vector.broadcast %c3_i32_111 : i32 to vector<125x627xi32>
    %297 = arith.cmpi eq, %261, %296 : vector<125x627xi32>
    %cst_112 = arith.constant 1.000000e+00 : f32
    %cst_113 = arith.constant 0.000000e+00 : f32
    %298 = vector.broadcast %cst_112 : f32 to vector<125x627xf32>
    %299 = vector.broadcast %cst_113 : f32 to vector<125x627xf32>
    %300 = arith.select %297, %298, %299 : vector<125x627xi1>, vector<125x627xf32>
    %cst_114 = arith.constant dense<0.000000e+00> : vector<2x627xf32>
    %301 = tpu.matmul %295, %300, %cst_114 {dimension_numbers = #tpu.dot_dimension_numbers<[1], [0], [0], [1], [0, 0, 1, 1], [], []>} : vector<2x125xf32>, vector<125x627xf32>, vector<2x627xf32> -> vector<2x627xf32>
    %302 = arith.addf %292, %301 : vector<2x627xf32>
    %303 = vector.extract_strided_slice %254 {offsets = [4, 0], sizes = [1, 125], strides = [1, 1]} : vector<7x125xf32> to vector<1x125xf32>
    %304 = vector.extract_strided_slice %256 {offsets = [4, 0], sizes = [1, 125], strides = [1, 1]} : vector<7x125xf32> to vector<1x125xf32>
    %305 = tpu.concatenate %303, %304 in 0 : vector<1x125xf32>, vector<1x125xf32> -> vector<2x125xf32>
    %c4_i32_115 = arith.constant 4 : i32
    %306 = vector.broadcast %c4_i32_115 : i32 to vector<125x627xi32>
    %307 = arith.cmpi eq, %261, %306 : vector<125x627xi32>
    %cst_116 = arith.constant 1.000000e+00 : f32
    %cst_117 = arith.constant 0.000000e+00 : f32
    %308 = vector.broadcast %cst_116 : f32 to vector<125x627xf32>
    %309 = vector.broadcast %cst_117 : f32 to vector<125x627xf32>
    %310 = arith.select %307, %308, %309 : vector<125x627xi1>, vector<125x627xf32>
    %cst_118 = arith.constant dense<0.000000e+00> : vector<2x627xf32>
    %311 = tpu.matmul %305, %310, %cst_118 {dimension_numbers = #tpu.dot_dimension_numbers<[1], [0], [0], [1], [0, 0, 1, 1], [], []>} : vector<2x125xf32>, vector<125x627xf32>, vector<2x627xf32> -> vector<2x627xf32>
    %312 = arith.addf %302, %311 : vector<2x627xf32>
    %313 = vector.extract_strided_slice %254 {offsets = [5, 0], sizes = [1, 125], strides = [1, 1]} : vector<7x125xf32> to vector<1x125xf32>
    %314 = vector.extract_strided_slice %256 {offsets = [5, 0], sizes = [1, 125], strides = [1, 1]} : vector<7x125xf32> to vector<1x125xf32>
    %315 = tpu.concatenate %313, %314 in 0 : vector<1x125xf32>, vector<1x125xf32> -> vector<2x125xf32>
    %c5_i32_119 = arith.constant 5 : i32
    %316 = vector.broadcast %c5_i32_119 : i32 to vector<125x627xi32>
    %317 = arith.cmpi eq, %261, %316 : vector<125x627xi32>
    %cst_120 = arith.constant 1.000000e+00 : f32
    %cst_121 = arith.constant 0.000000e+00 : f32
    %318 = vector.broadcast %cst_120 : f32 to vector<125x627xf32>
    %319 = vector.broadcast %cst_121 : f32 to vector<125x627xf32>
    %320 = arith.select %317, %318, %319 : vector<125x627xi1>, vector<125x627xf32>
    %cst_122 = arith.constant dense<0.000000e+00> : vector<2x627xf32>
    %321 = tpu.matmul %315, %320, %cst_122 {dimension_numbers = #tpu.dot_dimension_numbers<[1], [0], [0], [1], [0, 0, 1, 1], [], []>} : vector<2x125xf32>, vector<125x627xf32>, vector<2x627xf32> -> vector<2x627xf32>
    %322 = arith.addf %312, %321 : vector<2x627xf32>
    %323 = vector.extract_strided_slice %254 {offsets = [6, 0], sizes = [1, 125], strides = [1, 1]} : vector<7x125xf32> to vector<1x125xf32>
    %324 = vector.extract_strided_slice %256 {offsets = [6, 0], sizes = [1, 125], strides = [1, 1]} : vector<7x125xf32> to vector<1x125xf32>
    %325 = tpu.concatenate %323, %324 in 0 : vector<1x125xf32>, vector<1x125xf32> -> vector<2x125xf32>
    %c6_i32 = arith.constant 6 : i32
    %326 = vector.broadcast %c6_i32 : i32 to vector<125x627xi32>
    %327 = arith.cmpi eq, %261, %326 : vector<125x627xi32>
    %cst_123 = arith.constant 1.000000e+00 : f32
    %cst_124 = arith.constant 0.000000e+00 : f32
    %328 = vector.broadcast %cst_123 : f32 to vector<125x627xf32>
    %329 = vector.broadcast %cst_124 : f32 to vector<125x627xf32>
    %330 = arith.select %327, %328, %329 : vector<125x627xi1>, vector<125x627xf32>
    %cst_125 = arith.constant dense<0.000000e+00> : vector<2x627xf32>
    %331 = tpu.matmul %325, %330, %cst_125 {dimension_numbers = #tpu.dot_dimension_numbers<[1], [0], [0], [1], [0, 0, 1, 1], [], []>} : vector<2x125xf32>, vector<125x627xf32>, vector<2x627xf32> -> vector<2x627xf32>
    %332 = arith.addf %322, %331 : vector<2x627xf32>
    %333 = vector.extract_strided_slice %332 {offsets = [0, 1], sizes = [2, 625], strides = [1, 1]} : vector<2x627xf32> to vector<2x625xf32>
    %c0_126 = arith.constant 0 : index
    %c0_127 = arith.constant 0 : index
    %334 = vector.load %arg16[%c0_126, %c0_127] : memref<1x1xf32, #tpu.memory_space<vmem>>, vector<1x1xf32>
    %c0_128 = arith.constant 0 : index
    %c0_129 = arith.constant 0 : index
    %335 = vector.load %arg17[%c0_128, %c0_129] : memref<1x1xf32, #tpu.memory_space<vmem>>, vector<1x1xf32>
    %c0_130 = arith.constant 0 : index
    %c0_131 = arith.constant 0 : index
    %336 = vector.load %arg18[%c0_130, %c0_131] : memref<1x1xf32, #tpu.memory_space<vmem>>, vector<1x1xf32>
    %337 = tpu.concatenate %334, %334 in 0 : vector<1x1xf32>, vector<1x1xf32> -> vector<2x1xf32>
    %338 = vector.broadcast %337 : vector<2x1xf32> to vector<2x625xf32>
    %339 = arith.addf %333, %338 : vector<2x625xf32>
    %cst_132 = arith.constant dense<0.000000e+00> : vector<2xf32>
    %340 = vector.multi_reduction <add>, %339, %cst_132 [1] : vector<2x625xf32> to vector<2xf32>
    %341 = vector.shape_cast %340 : vector<2xf32> to vector<2x1xf32>
    %342 = arith.mulf %339, %339 : vector<2x625xf32>
    %cst_133 = arith.constant dense<0.000000e+00> : vector<2xf32>
    %343 = vector.multi_reduction <add>, %342, %cst_133 [1] : vector<2x625xf32> to vector<2xf32>
    %344 = vector.shape_cast %343 : vector<2xf32> to vector<2x1xf32>
    %345 = vector.extract_strided_slice %341 {offsets = [0, 0], sizes = [1, 1], strides = [1, 1]} : vector<2x1xf32> to vector<1x1xf32>
    %cst_134 = arith.constant 0.000000e+00 : f32
    %346 = vector.broadcast %cst_134 : f32 to vector<1x1xf32>
    %347 = arith.addf %346, %345 : vector<1x1xf32>
    %348 = vector.extract_strided_slice %341 {offsets = [1, 0], sizes = [1, 1], strides = [1, 1]} : vector<2x1xf32> to vector<1x1xf32>
    %349 = arith.addf %347, %348 : vector<1x1xf32>
    %350 = vector.extract_strided_slice %344 {offsets = [0, 0], sizes = [1, 1], strides = [1, 1]} : vector<2x1xf32> to vector<1x1xf32>
    %cst_135 = arith.constant 0.000000e+00 : f32
    %351 = vector.broadcast %cst_135 : f32 to vector<1x1xf32>
    %352 = arith.addf %351, %350 : vector<1x1xf32>
    %353 = vector.extract_strided_slice %344 {offsets = [1, 0], sizes = [1, 1], strides = [1, 1]} : vector<2x1xf32> to vector<1x1xf32>
    %354 = arith.addf %352, %353 : vector<1x1xf32>
    %cst_136 = arith.constant 1.250000e+03 : f32
    %355 = vector.broadcast %cst_136 : f32 to vector<1x1xf32>
    %356 = arith.divf %349, %355 : vector<1x1xf32>
    %cst_137 = arith.constant 1.250000e+03 : f32
    %357 = vector.broadcast %cst_137 : f32 to vector<1x1xf32>
    %358 = arith.divf %354, %357 : vector<1x1xf32>
    %359 = arith.mulf %356, %356 : vector<1x1xf32>
    %360 = arith.subf %358, %359 : vector<1x1xf32>
    %cst_138 = arith.constant 0.000000e+00 : f32
    %361 = vector.broadcast %cst_138 : f32 to vector<1x1xf32>
    %362 = arith.maximumf %360, %361 : vector<1x1xf32>
    %cst_139 = arith.constant 9.99999974E-6 : f32
    %363 = vector.broadcast %cst_139 : f32 to vector<1x1xf32>
    %364 = arith.addf %362, %363 : vector<1x1xf32>
    %365 = math.rsqrt %364 : vector<1x1xf32>
    %366 = arith.mulf %335, %365 : vector<1x1xf32>
    %367 = arith.mulf %356, %366 : vector<1x1xf32>
    %368 = arith.subf %336, %367 : vector<1x1xf32>
    %369 = tpu.concatenate %366, %366 in 0 : vector<1x1xf32>, vector<1x1xf32> -> vector<2x1xf32>
    %370 = vector.broadcast %369 : vector<2x1xf32> to vector<2x625xf32>
    %371 = arith.mulf %339, %370 : vector<2x625xf32>
    %372 = tpu.concatenate %368, %368 in 0 : vector<1x1xf32>, vector<1x1xf32> -> vector<2x1xf32>
    %373 = vector.broadcast %372 : vector<2x1xf32> to vector<2x625xf32>
    %374 = arith.addf %371, %373 : vector<2x625xf32>
    %c0_140 = arith.constant 0 : index
    %c0_141 = arith.constant 0 : index
    %375 = vector.load %arg19[%c0_140, %c0_141] : memref<2x625xf32, #tpu.memory_space<vmem>>, vector<2x625xf32>
    tpu.vector_store %arg19[%c0_140, %c0_141], %374 {strides = array<i32>} : memref<2x625xf32, #tpu.memory_space<vmem>>, vector<2x625xf32>,
    return
  }
}

</mosaic_0001>

<llo_original>
// kernel: forward.1
$region0: #{forward.1}
  #allocation0 [shape = 'u32[]', space=smem, size = 0x4, offset = 0x4, fixed_abs, tag = 'smem constant byte address 0x4 - core index']
  #allocation1 [shape = 'u32[144,128]{1,0:T(1,128)}', space=vmem, size = 0x12000, scoped, tag = 'internal scratch']
  #allocation2 [shape = 'f32[1,1]{1,0:T(1,128)S(1)}', space=vmem, size = 0x200, scoped, tag = 'scoped memory for forward.1']
  #allocation3 [shape = 'f32[1,1]{1,0:T(1,128)S(1)}', space=vmem, size = 0x200, scoped, tag = 'scoped memory for forward.1']
  #allocation4 [shape = 'f32[1,1]{1,0:T(1,128)S(1)}', space=vmem, size = 0x200, scoped, tag = 'scoped memory for forward.1']
  %s0 = inlined_call_operand.vmem [shape: f32[2,16], index: 0, kind: input, shape index: {}]
  %s1 = inlined_call_operand.vmem [shape: f32[1,16], index: 1, kind: input, shape index: {}]
  %s2 = inlined_call_operand.vmem [shape: f32[64,5,16], index: 2, kind: input, shape index: {}]
  %s3 = inlined_call_operand.vmem [shape: f32[64,5,16], index: 3, kind: input, shape index: {}]
  %s4 = inlined_call_operand.vmem [shape: f32[64,1], index: 4, kind: input, shape index: {}]
  %s5 = inlined_call_operand.vmem [shape: f32[64,1], index: 5, kind: input, shape index: {}]
  %s6 = inlined_call_operand.vmem [shape: f32[64,1], index: 6, kind: input, shape index: {}]
  %s7 = inlined_call_operand.vmem [shape: f32[96,64], index: 7, kind: input, shape index: {}]
  %s8 = inlined_call_operand.vmem [shape: f32[32,1], index: 8, kind: input, shape index: {}]
  %s9 = inlined_call_operand.vmem [shape: f32[32,1], index: 9, kind: input, shape index: {}]
  %s10 = inlined_call_operand.vmem [shape: f32[32,1], index: 10, kind: input, shape index: {}]
  %s11 = inlined_call_operand.vmem [shape: f32[80,32], index: 11, kind: input, shape index: {}]
  %s12 = inlined_call_operand.vmem [shape: f32[16,1], index: 12, kind: input, shape index: {}]
  %s13 = inlined_call_operand.vmem [shape: f32[16,1], index: 13, kind: input, shape index: {}]
  %s14 = inlined_call_operand.vmem [shape: f32[16,1], index: 14, kind: input, shape index: {}]
  %s15 = inlined_call_operand.vmem [shape: f32[7,16], index: 15, kind: input, shape index: {}]
  %s16 = inlined_call_operand.<no memory space> [shape: f32[1,1], index: 16, kind: input, shape index: {}]
  %s17 = inlined_call_operand.<no memory space> [shape: f32[1,1], index: 17, kind: input, shape index: {}]
  %s18 = inlined_call_operand.<no memory space> [shape: f32[1,1], index: 18, kind: input, shape index: {}]
  %s19 = inlined_call_operand.vmem [shape: f32[2,625], index: 19, kind: output, shape index: {}]
  %s20 = sld [smem:[#allocation0]]
  $region86: #{forward.1} parent=0
    _
  %s22 = ssub.s32 1, %s20
  %s23 = scalar_select 0, %s22, %s20
  %v24 = vstv %s16
  %25 = vst [vmem:[#allocation2] sm:$0x1] %v24
  %v26 = vstv %s17
  %27 = vst [vmem:[#allocation3] sm:$0x1] %v26
  %v28 = vstv %s18
  %29 = vst [vmem:[#allocation4] sm:$0x1] %v28
  // Predicated region
  $region2: #{forward.1} parent=0 // pred_check
    _
  $region3: #{forward.1} parent=0 // pred_check_branch
    %31 = sbr.rel (0) target = $region5
  $region4: #{forward.1} parent=0 // pred_region
    _
  $region5: #{forward.1} parent=0 // pred_fallthru
    _
  // Predicated region
  $region6: #{forward.1} parent=0 // pred_check
    _
  $region7: #{forward.1} parent=0 // pred_check_branch
    %33 = sbr.rel (0) target = $region9
  $region8: #{forward.1} parent=0 // pred_region
    _
  $region9: #{forward.1} parent=0 // pred_fallthru
    _
  // Predicated region
  $region10: #{forward.1} parent=0 // pred_check
    _
  $region11: #{forward.1} parent=0 // pred_check_branch
    %35 = sbr.rel (0) target = $region13
  $region12: #{forward.1} parent=0 // pred_region
    _
  $region13: #{forward.1} parent=0 // pred_fallthru
    _
  // Predicated region
  $region14: #{forward.1} parent=0 // pred_check
    _
  $region15: #{forward.1} parent=0 // pred_check_branch
    %37 = sbr.rel (0) target = $region17
  $region16: #{forward.1} parent=0 // pred_region
    _
  $region17: #{forward.1} parent=0 // pred_fallthru
    _
  // Predicated region
  $region18: #{forward.1} parent=0 // pred_check
    _
  $region19: #{forward.1} parent=0 // pred_check_branch
    %39 = sbr.rel (0) target = $region21
  $region20: #{forward.1} parent=0 // pred_region
    _
  $region21: #{forward.1} parent=0 // pred_fallthru
    _
  // Predicated region
  $region22: #{forward.1} parent=0 // pred_check
    _
  $region23: #{forward.1} parent=0 // pred_check_branch
    %41 = sbr.rel (0) target = $region25
  $region24: #{forward.1} parent=0 // pred_region
    _
  $region25: #{forward.1} parent=0 // pred_fallthru
    _
  // Predicated region
  $region26: #{forward.1} parent=0 // pred_check
    _
  $region27: #{forward.1} parent=0 // pred_check_branch
    %43 = sbr.rel (0) target = $region29
  $region28: #{forward.1} parent=0 // pred_region
    _
  $region29: #{forward.1} parent=0 // pred_fallthru
    _
  // Predicated region
  $region30: #{forward.1} parent=0 // pred_check
    _
  $region31: #{forward.1} parent=0 // pred_check_branch
    %45 = sbr.rel (0) target = $region33
  $region32: #{forward.1} parent=0 // pred_region
    _
  $region33: #{forward.1} parent=0 // pred_fallthru
    _
  // Predicated region
  $region34: #{forward.1} parent=0 // pred_check
    _
  $region35: #{forward.1} parent=0 // pred_check_branch
    %47 = sbr.rel (0) target = $region37
  $region36: #{forward.1} parent=0 // pred_region
    _
  $region37: #{forward.1} parent=0 // pred_fallthru
    _
  // Predicated region
  $region38: #{forward.1} parent=0 // pred_check
    _
  $region39: #{forward.1} parent=0 // pred_check_branch
    %49 = sbr.rel (0) target = $region41
  $region40: #{forward.1} parent=0 // pred_region
    _
  $region41: #{forward.1} parent=0 // pred_fallthru
    _
  // Predicated region
  $region42: #{forward.1} parent=0 // pred_check
    _
  $region43: #{forward.1} parent=0 // pred_check_branch
    %51 = sbr.rel (0) target = $region45
  $region44: #{forward.1} parent=0 // pred_region
    _
  $region45: #{forward.1} parent=0 // pred_fallthru
    _
  // Predicated region
  $region46: #{forward.1} parent=0 // pred_check
    _
  $region47: #{forward.1} parent=0 // pred_check_branch
    %53 = sbr.rel (0) target = $region49
  $region48: #{forward.1} parent=0 // pred_region
    _
  $region49: #{forward.1} parent=0 // pred_fallthru
    _
  // Predicated region
  $region50: #{forward.1} parent=0 // pred_check
    _
  $region51: #{forward.1} parent=0 // pred_check_branch
    %55 = sbr.rel (0) target = $region53
  $region52: #{forward.1} parent=0 // pred_region
    _
  $region53: #{forward.1} parent=0 // pred_fallthru
    _
  // Predicated region
  $region54: #{forward.1} parent=0 // pred_check
    _
  $region55: #{forward.1} parent=0 // pred_check_branch
    %57 = sbr.rel (0) target = $region57
  $region56: #{forward.1} parent=0 // pred_region
    _
  $region57: #{forward.1} parent=0 // pred_fallthru
    _
  // Predicated region
  $region58: #{forward.1} parent=0 // pred_check
    _
  $region59: #{forward.1} parent=0 // pred_check_branch
    %59 = sbr.rel (0) target = $region61
  $region60: #{forward.1} parent=0 // pred_region
    _
  $region61: #{forward.1} parent=0 // pred_fallthru
    _
  // Predicated region
  $region62: #{forward.1} parent=0 // pred_check
    _
  $region63: #{forward.1} parent=0 // pred_check_branch
    %61 = sbr.rel (0) target = $region65
  $region64: #{forward.1} parent=0 // pred_region
    _
  $region65: #{forward.1} parent=0 // pred_fallthru
    _
  // Predicated region
  $region66: #{forward.1} parent=0 // pred_check
    _
  $region67: #{forward.1} parent=0 // pred_check_branch
    %63 = sbr.rel (0) target = $region69
  $region68: #{forward.1} parent=0 // pred_region
    _
  $region69: #{forward.1} parent=0 // pred_fallthru
    _
  // Predicated region
  $region70: #{forward.1} parent=0 // pred_check
    _
  $region71: #{forward.1} parent=0 // pred_check_branch
    %65 = sbr.rel (0) target = $region73
  $region72: #{forward.1} parent=0 // pred_region
    _
  $region73: #{forward.1} parent=0 // pred_fallthru
    _
  // Predicated region
  $region74: #{forward.1} parent=0 // pred_check
    _
  $region75: #{forward.1} parent=0 // pred_check_branch
    %67 = sbr.rel (0) target = $region77
  $region76: #{forward.1} parent=0 // pred_region
    _
  $region77: #{forward.1} parent=0 // pred_fallthru
    _
  %v68 = vld [vmem:[%s0] sm:$0x3]
  %v69 = vld [vmem:[%s2] sm:$0x1f]
  %v70 = vld [vmem:[%s2 + $0x8] sm:$0x1f]
  %v71 = vld [vmem:[%s2 + $0x10] sm:$0x1f]
  %v72 = vld [vmem:[%s2 + $0x18] sm:$0x1f]
  %v73 = vld [vmem:[%s2 + $0x20] sm:$0x1f]
  %v74 = vld [vmem:[%s2 + $0x28] sm:$0x1f]
  %v75 = vld [vmem:[%s2 + $0x30] sm:$0x1f]
  %v76 = vld [vmem:[%s2 + $0x38] sm:$0x1f]
  %v77 = vld [vmem:[%s2 + $0x40] sm:$0x1f]
  %v78 = vld [vmem:[%s2 + $0x48] sm:$0x1f]
  %v79 = vld [vmem:[%s2 + $0x50] sm:$0x1f]
  %v80 = vld [vmem:[%s2 + $0x58] sm:$0x1f]
  %v81 = vld [vmem:[%s2 + $0x60] sm:$0x1f]
  %v82 = vld [vmem:[%s2 + $0x68] sm:$0x1f]
  %v83 = vld [vmem:[%s2 + $0x70] sm:$0x1f]
  %v84 = vld [vmem:[%s2 + $0x78] sm:$0x1f]
  %v85 = vld [vmem:[%s2 + $0x80] sm:$0x1f]
  %v86 = vld [vmem:[%s2 + $0x88] sm:$0x1f]
  %v87 = vld [vmem:[%s2 + $0x90] sm:$0x1f]
  %v88 = vld [vmem:[%s2 + $0x98] sm:$0x1f]
  %v89 = vld [vmem:[%s2 + $0xa0] sm:$0x1f]
  %v90 = vld [vmem:[%s2 + $0xa8] sm:$0x1f]
  %v91 = vld [vmem:[%s2 + $0xb0] sm:$0x1f]
  %v92 = vld [vmem:[%s2 + $0xb8] sm:$0x1f]
  %v93 = vld [vmem:[%s2 + $0xc0] sm:$0x1f]
  %v94 = vld [vmem:[%s2 + $0xc8] sm:$0x1f]
  %v95 = vld [vmem:[%s2 + $0xd0] sm:$0x1f]
  %v96 = vld [vmem:[%s2 + $0xd8] sm:$0x1f]
  %v97 = vld [vmem:[%s2 + $0xe0] sm:$0x1f]
  %v98 = vld [vmem:[%s2 + $0xe8] sm:$0x1f]
  %v99 = vld [vmem:[%s2 + $0xf0] sm:$0x1f]
  %v100 = vld [vmem:[%s2 + $0xf8] sm:$0x1f]
  %v101 = vld [vmem:[%s2 + $0x100] sm:$0x1f]
  %v102 = vld [vmem:[%s2 + $0x108] sm:$0x1f]
  %v103 = vld [vmem:[%s2 + $0x110] sm:$0x1f]
  %v104 = vld [vmem:[%s2 + $0x118] sm:$0x1f]
  %v105 = vld [vmem:[%s2 + $0x120] sm:$0x1f]
  %v106 = vld [vmem:[%s2 + $0x128] sm:$0x1f]
  %v107 = vld [vmem:[%s2 + $0x130] sm:$0x1f]
  %v108 = vld [vmem:[%s2 + $0x138] sm:$0x1f]
  %v109 = vld [vmem:[%s2 + $0x140] sm:$0x1f]
  %v110 = vld [vmem:[%s2 + $0x148] sm:$0x1f]
  %v111 = vld [vmem:[%s2 + $0x150] sm:$0x1f]
  %v112 = vld [vmem:[%s2 + $0x158] sm:$0x1f]
  %v113 = vld [vmem:[%s2 + $0x160] sm:$0x1f]
  %v114 = vld [vmem:[%s2 + $0x168] sm:$0x1f]
  %v115 = vld [vmem:[%s2 + $0x170] sm:$0x1f]
  %v116 = vld [vmem:[%s2 + $0x178] sm:$0x1f]
  %v117 = vld [vmem:[%s2 + $0x180] sm:$0x1f]
  %v118 = vld [vmem:[%s2 + $0x188] sm:$0x1f]
  %v119 = vld [vmem:[%s2 + $0x190] sm:$0x1f]
  %v120 = vld [vmem:[%s2 + $0x198] sm:$0x1f]
  %v121 = vld [vmem:[%s2 + $0x1a0] sm:$0x1f]
  %v122 = vld [vmem:[%s2 + $0x1a8] sm:$0x1f]
  %v123 = vld [vmem:[%s2 + $0x1b0] sm:$0x1f]
  %v124 = vld [vmem:[%s2 + $0x1b8] sm:$0x1f]
  %v125 = vld [vmem:[%s2 + $0x1c0] sm:$0x1f]
  %v126 = vld [vmem:[%s2 + $0x1c8] sm:$0x1f]
  %v127 = vld [vmem:[%s2 + $0x1d0] sm:$0x1f]
  %v128 = vld [vmem:[%s2 + $0x1d8] sm:$0x1f]
  %v129 = vld [vmem:[%s2 + $0x1e0] sm:$0x1f]
  %v130 = vld [vmem:[%s2 + $0x1e8] sm:$0x1f]
  %v131 = vld [vmem:[%s2 + $0x1f0] sm:$0x1f]
  %v132 = vld [vmem:[%s2 + $0x1f8] sm:$0x1f]
  %v133 = vld [vmem:[%s3] sm:$0x1f]
  %v134 = vld [vmem:[%s3 + $0x8] sm:$0x1f]
  %v135 = vld [vmem:[%s3 + $0x10] sm:$0x1f]
  %v136 = vld [vmem:[%s3 + $0x18] sm:$0x1f]
  %v137 = vld [vmem:[%s3 + $0x20] sm:$0x1f]
  %v138 = vld [vmem:[%s3 + $0x28] sm:$0x1f]
  %v139 = vld [vmem:[%s3 + $0x30] sm:$0x1f]
  %v140 = vld [vmem:[%s3 + $0x38] sm:$0x1f]
  %v141 = vld [vmem:[%s3 + $0x40] sm:$0x1f]
  %v142 = vld [vmem:[%s3 + $0x48] sm:$0x1f]
  %v143 = vld [vmem:[%s3 + $0x50] sm:$0x1f]
  %v144 = vld [vmem:[%s3 + $0x58] sm:$0x1f]
  %v145 = vld [vmem:[%s3 + $0x60] sm:$0x1f]
  %v146 = vld [vmem:[%s3 + $0x68] sm:$0x1f]
  %v147 = vld [vmem:[%s3 + $0x70] sm:$0x1f]
  %v148 = vld [vmem:[%s3 + $0x78] sm:$0x1f]
  %v149 = vld [vmem:[%s3 + $0x80] sm:$0x1f]
  %v150 = vld [vmem:[%s3 + $0x88] sm:$0x1f]
  %v151 = vld [vmem:[%s3 + $0x90] sm:$0x1f]
  %v152 = vld [vmem:[%s3 + $0x98] sm:$0x1f]
  %v153 = vld [vmem:[%s3 + $0xa0] sm:$0x1f]
  %v154 = vld [vmem:[%s3 + $0xa8] sm:$0x1f]
  %v155 = vld [vmem:[%s3 + $0xb0] sm:$0x1f]
  %v156 = vld [vmem:[%s3 + $0xb8] sm:$0x1f]
  %v157 = vld [vmem:[%s3 + $0xc0] sm:$0x1f]
  %v158 = vld [vmem:[%s3 + $0xc8] sm:$0x1f]
  %v159 = vld [vmem:[%s3 + $0xd0] sm:$0x1f]
  %v160 = vld [vmem:[%s3 + $0xd8] sm:$0x1f]
  %v161 = vld [vmem:[%s3 + $0xe0] sm:$0x1f]
  %v162 = vld [vmem:[%s3 + $0xe8] sm:$0x1f]
  %v163 = vld [vmem:[%s3 + $0xf0] sm:$0x1f]
  %v164 = vld [vmem:[%s3 + $0xf8] sm:$0x1f]
  %v165 = vld [vmem:[%s3 + $0x100] sm:$0x1f]
  %v166 = vld [vmem:[%s3 + $0x108] sm:$0x1f]
  %v167 = vld [vmem:[%s3 + $0x110] sm:$0x1f]
  %v168 = vld [vmem:[%s3 + $0x118] sm:$0x1f]
  %v169 = vld [vmem:[%s3 + $0x120] sm:$0x1f]
  %v170 = vld [vmem:[%s3 + $0x128] sm:$0x1f]
  %v171 = vld [vmem:[%s3 + $0x130] sm:$0x1f]
  %v172 = vld [vmem:[%s3 + $0x138] sm:$0x1f]
  %v173 = vld [vmem:[%s3 + $0x140] sm:$0x1f]
  %v174 = vld [vmem:[%s3 + $0x148] sm:$0x1f]
  %v175 = vld [vmem:[%s3 + $0x150] sm:$0x1f]
  %v176 = vld [vmem:[%s3 + $0x158] sm:$0x1f]
  %v177 = vld [vmem:[%s3 + $0x160] sm:$0x1f]
  %v178 = vld [vmem:[%s3 + $0x168] sm:$0x1f]
  %v179 = vld [vmem:[%s3 + $0x170] sm:$0x1f]
  %v180 = vld [vmem:[%s3 + $0x178] sm:$0x1f]
  %v181 = vld [vmem:[%s3 + $0x180] sm:$0x1f]
  %v182 = vld [vmem:[%s3 + $0x188] sm:$0x1f]
  %v183 = vld [vmem:[%s3 + $0x190] sm:$0x1f]
  %v184 = vld [vmem:[%s3 + $0x198] sm:$0x1f]
  %v185 = vld [vmem:[%s3 + $0x1a0] sm:$0x1f]
  %v186 = vld [vmem:[%s3 + $0x1a8] sm:$0x1f]
  %v187 = vld [vmem:[%s3 + $0x1b0] sm:$0x1f]
  %v188 = vld [vmem:[%s3 + $0x1b8] sm:$0x1f]
  %v189 = vld [vmem:[%s3 + $0x1c0] sm:$0x1f]
  %v190 = vld [vmem:[%s3 + $0x1c8] sm:$0x1f]
  %v191 = vld [vmem:[%s3 + $0x1d0] sm:$0x1f]
  %v192 = vld [vmem:[%s3 + $0x1d8] sm:$0x1f]
  %v193 = vld [vmem:[%s3 + $0x1e0] sm:$0x1f]
  %v194 = vld [vmem:[%s3 + $0x1e8] sm:$0x1f]
  %v195 = vld [vmem:[%s3 + $0x1f0] sm:$0x1f]
  %v196 = vld [vmem:[%s3 + $0x1f8] sm:$0x1f]
  %v197 = vld [vmem:[%s1] sm:$0x1]
  %v199 = vlaneseq
  %v200 = vshrl.u32 %v199, 7
  %v201 = vsub.s32 0, %v200
  %v202 = vrot.slane %v197, %v201
  %v204 = vmul.f32 %v133, %v202
  %v205 = vmul.f32 %v134, %v202
  %v206 = vmul.f32 %v135, %v202
  %v207 = vmul.f32 %v136, %v202
  %v208 = vmul.f32 %v137, %v202
  %v209 = vmul.f32 %v138, %v202
  %v210 = vmul.f32 %v139, %v202
  %v211 = vmul.f32 %v140, %v202
  %v212 = vmul.f32 %v141, %v202
  %v213 = vmul.f32 %v142, %v202
  %v214 = vmul.f32 %v143, %v202
  %v215 = vmul.f32 %v144, %v202
  %v216 = vmul.f32 %v145, %v202
  %v217 = vmul.f32 %v146, %v202
  %v218 = vmul.f32 %v147, %v202
  %v219 = vmul.f32 %v148, %v202
  %v220 = vmul.f32 %v149, %v202
  %v221 = vmul.f32 %v150, %v202
  %v222 = vmul.f32 %v151, %v202
  %v223 = vmul.f32 %v152, %v202
  %v224 = vmul.f32 %v153, %v202
  %v225 = vmul.f32 %v154, %v202
  %v226 = vmul.f32 %v155, %v202
  %v227 = vmul.f32 %v156, %v202
  %v228 = vmul.f32 %v157, %v202
  %v229 = vmul.f32 %v158, %v202
  %v230 = vmul.f32 %v159, %v202
  %v231 = vmul.f32 %v160, %v202
  %v232 = vmul.f32 %v161, %v202
  %v233 = vmul.f32 %v162, %v202
  %v234 = vmul.f32 %v163, %v202
  %v235 = vmul.f32 %v164, %v202
  %v236 = vmul.f32 %v165, %v202
  %v237 = vmul.f32 %v166, %v202
  %v238 = vmul.f32 %v167, %v202
  %v239 = vmul.f32 %v168, %v202
  %v240 = vmul.f32 %v169, %v202
  %v241 = vmul.f32 %v170, %v202
  %v242 = vmul.f32 %v171, %v202
  %v243 = vmul.f32 %v172, %v202
  %v244 = vmul.f32 %v173, %v202
  %v245 = vmul.f32 %v174, %v202
  %v246 = vmul.f32 %v175, %v202
  %v247 = vmul.f32 %v176, %v202
  %v248 = vmul.f32 %v177, %v202
  %v249 = vmul.f32 %v178, %v202
  %v250 = vmul.f32 %v179, %v202
  %v251 = vmul.f32 %v180, %v202
  %v252 = vmul.f32 %v181, %v202
  %v253 = vmul.f32 %v182, %v202
  %v254 = vmul.f32 %v183, %v202
  %v255 = vmul.f32 %v184, %v202
  %v256 = vmul.f32 %v185, %v202
  %v257 = vmul.f32 %v186, %v202
  %v258 = vmul.f32 %v187, %v202
  %v259 = vmul.f32 %v188, %v202
  %v260 = vmul.f32 %v189, %v202
  %v261 = vmul.f32 %v190, %v202
  %v262 = vmul.f32 %v191, %v202
  %v263 = vmul.f32 %v192, %v202
  %v264 = vmul.f32 %v193, %v202
  %v265 = vmul.f32 %v194, %v202
  %v266 = vmul.f32 %v195, %v202
  %v267 = vmul.f32 %v196, %v202
  %vm268 = vcmask 126976
  %v269 = vsel %vm268, %v204, 0.0
  %270 = vadd.xlane.f32.xlu0 %v269
  %v271 = vpop.xlane.xlu0 %270
  %v272 = vsel %vm268, %v205, 0.0
  %273 = vadd.xlane.f32.xlu0 %v272
  %v274 = vpop.xlane.xlu0 %273
  %v275 = vsel %vm268, %v206, 0.0
  %276 = vadd.xlane.f32.xlu0 %v275
  %v277 = vpop.xlane.xlu0 %276
  %v278 = vsel %vm268, %v207, 0.0
  %279 = vadd.xlane.f32.xlu0 %v278
  %v280 = vpop.xlane.xlu0 %279
  %v281 = vsel %vm268, %v208, 0.0
  %282 = vadd.xlane.f32.xlu0 %v281
  %v283 = vpop.xlane.xlu0 %282
  %v284 = vsel %vm268, %v209, 0.0
  %285 = vadd.xlane.f32.xlu0 %v284
  %v286 = vpop.xlane.xlu0 %285
  %v287 = vsel %vm268, %v210, 0.0
  %288 = vadd.xlane.f32.xlu0 %v287
  %v289 = vpop.xlane.xlu0 %288
  %v290 = vsel %vm268, %v211, 0.0
  %291 = vadd.xlane.f32.xlu0 %v290
  %v292 = vpop.xlane.xlu0 %291
  %v293 = vsel %vm268, %v212, 0.0
  %294 = vadd.xlane.f32.xlu0 %v293
  %v295 = vpop.xlane.xlu0 %294
  %v296 = vsel %vm268, %v213, 0.0
  %297 = vadd.xlane.f32.xlu0 %v296
  %v298 = vpop.xlane.xlu0 %297
  %v299 = vsel %vm268, %v214, 0.0
  %300 = vadd.xlane.f32.xlu0 %v299
  %v301 = vpop.xlane.xlu0 %300
  %v302 = vsel %vm268, %v215, 0.0
  %303 = vadd.xlane.f32.xlu0 %v302
  %v304 = vpop.xlane.xlu0 %303
  %v305 = vsel %vm268, %v216, 0.0
  %306 = vadd.xlane.f32.xlu0 %v305
  %v307 = vpop.xlane.xlu0 %306
  %v308 = vsel %vm268, %v217, 0.0
  %309 = vadd.xlane.f32.xlu0 %v308
  %v310 = vpop.xlane.xlu0 %309
  %v311 = vsel %vm268, %v218, 0.0
  %312 = vadd.xlane.f32.xlu0 %v311
  %v313 = vpop.xlane.xlu0 %312
  %v314 = vsel %vm268, %v219, 0.0
  %315 = vadd.xlane.f32.xlu0 %v314
  %v316 = vpop.xlane.xlu0 %315
  %v317 = vsel %vm268, %v220, 0.0
  %318 = vadd.xlane.f32.xlu0 %v317
  %v319 = vpop.xlane.xlu0 %318
  %v320 = vsel %vm268, %v221, 0.0
  %321 = vadd.xlane.f32.xlu0 %v320
  %v322 = vpop.xlane.xlu0 %321
  %v323 = vsel %vm268, %v222, 0.0
  %324 = vadd.xlane.f32.xlu0 %v323
  %v325 = vpop.xlane.xlu0 %324
  %v326 = vsel %vm268, %v223, 0.0
  %327 = vadd.xlane.f32.xlu0 %v326
  %v328 = vpop.xlane.xlu0 %327
  %v329 = vsel %vm268, %v224, 0.0
  %330 = vadd.xlane.f32.xlu0 %v329
  %v331 = vpop.xlane.xlu0 %330
  %v332 = vsel %vm268, %v225, 0.0
  %333 = vadd.xlane.f32.xlu0 %v332
  %v334 = vpop.xlane.xlu0 %333
  %v335 = vsel %vm268, %v226, 0.0
  %336 = vadd.xlane.f32.xlu0 %v335
  %v337 = vpop.xlane.xlu0 %336
  %v338 = vsel %vm268, %v227, 0.0
  %339 = vadd.xlane.f32.xlu0 %v338
  %v340 = vpop.xlane.xlu0 %339
  %v341 = vsel %vm268, %v228, 0.0
  %342 = vadd.xlane.f32.xlu0 %v341
  %v343 = vpop.xlane.xlu0 %342
  %v344 = vsel %vm268, %v229, 0.0
  %345 = vadd.xlane.f32.xlu0 %v344
  %v346 = vpop.xlane.xlu0 %345
  %v347 = vsel %vm268, %v230, 0.0
  %348 = vadd.xlane.f32.xlu0 %v347
  %v349 = vpop.xlane.xlu0 %348
  %v350 = vsel %vm268, %v231, 0.0
  %351 = vadd.xlane.f32.xlu0 %v350
  %v352 = vpop.xlane.xlu0 %351
  %v353 = vsel %vm268, %v232, 0.0
  %354 = vadd.xlane.f32.xlu0 %v353
  %v355 = vpop.xlane.xlu0 %354
  %v356 = vsel %vm268, %v233, 0.0
  %357 = vadd.xlane.f32.xlu0 %v356
  %v358 = vpop.xlane.xlu0 %357
  %v359 = vsel %vm268, %v234, 0.0
  %360 = vadd.xlane.f32.xlu0 %v359
  %v361 = vpop.xlane.xlu0 %360
  %v362 = vsel %vm268, %v235, 0.0
  %363 = vadd.xlane.f32.xlu0 %v362
  %v364 = vpop.xlane.xlu0 %363
  %v365 = vsel %vm268, %v236, 0.0
  %366 = vadd.xlane.f32.xlu0 %v365
  %v367 = vpop.xlane.xlu0 %366
  %v368 = vsel %vm268, %v237, 0.0
  %369 = vadd.xlane.f32.xlu0 %v368
  %v370 = vpop.xlane.xlu0 %369
  %v371 = vsel %vm268, %v238, 0.0
  %372 = vadd.xlane.f32.xlu0 %v371
  %v373 = vpop.xlane.xlu0 %372
  %v374 = vsel %vm268, %v239, 0.0
  %375 = vadd.xlane.f32.xlu0 %v374
  %v376 = vpop.xlane.xlu0 %375
  %v377 = vsel %vm268, %v240, 0.0
  %378 = vadd.xlane.f32.xlu0 %v377
  %v379 = vpop.xlane.xlu0 %378
  %v380 = vsel %vm268, %v241, 0.0
  %381 = vadd.xlane.f32.xlu0 %v380
  %v382 = vpop.xlane.xlu0 %381
  %v383 = vsel %vm268, %v242, 0.0
  %384 = vadd.xlane.f32.xlu0 %v383
  %v385 = vpop.xlane.xlu0 %384
  %v386 = vsel %vm268, %v243, 0.0
  %387 = vadd.xlane.f32.xlu0 %v386
  %v388 = vpop.xlane.xlu0 %387
  %v389 = vsel %vm268, %v244, 0.0
  %390 = vadd.xlane.f32.xlu0 %v389
  %v391 = vpop.xlane.xlu0 %390
  %v392 = vsel %vm268, %v245, 0.0
  %393 = vadd.xlane.f32.xlu0 %v392
  %v394 = vpop.xlane.xlu0 %393
  %v395 = vsel %vm268, %v246, 0.0
  %396 = vadd.xlane.f32.xlu0 %v395
  %v397 = vpop.xlane.xlu0 %396
  %v398 = vsel %vm268, %v247, 0.0
  %399 = vadd.xlane.f32.xlu0 %v398
  %v400 = vpop.xlane.xlu0 %399
  %v401 = vsel %vm268, %v248, 0.0
  %402 = vadd.xlane.f32.xlu0 %v401
  %v403 = vpop.xlane.xlu0 %402
  %v404 = vsel %vm268, %v249, 0.0
  %405 = vadd.xlane.f32.xlu0 %v404
  %v406 = vpop.xlane.xlu0 %405
  %v407 = vsel %vm268, %v250, 0.0
  %408 = vadd.xlane.f32.xlu0 %v407
  %v409 = vpop.xlane.xlu0 %408
  %v410 = vsel %vm268, %v251, 0.0
  %411 = vadd.xlane.f32.xlu0 %v410
  %v412 = vpop.xlane.xlu0 %411
  %v413 = vsel %vm268, %v252, 0.0
  %414 = vadd.xlane.f32.xlu0 %v413
  %v415 = vpop.xlane.xlu0 %414
  %v416 = vsel %vm268, %v253, 0.0
  %417 = vadd.xlane.f32.xlu0 %v416
  %v418 = vpop.xlane.xlu0 %417
  %v419 = vsel %vm268, %v254, 0.0
  %420 = vadd.xlane.f32.xlu0 %v419
  %v421 = vpop.xlane.xlu0 %420
  %v422 = vsel %vm268, %v255, 0.0
  %423 = vadd.xlane.f32.xlu0 %v422
  %v424 = vpop.xlane.xlu0 %423
  %v425 = vsel %vm268, %v256, 0.0
  %426 = vadd.xlane.f32.xlu0 %v425
  %v427 = vpop.xlane.xlu0 %426
  %v428 = vsel %vm268, %v257, 0.0
  %429 = vadd.xlane.f32.xlu0 %v428
  %v430 = vpop.xlane.xlu0 %429
  %v431 = vsel %vm268, %v258, 0.0
  %432 = vadd.xlane.f32.xlu0 %v431
  %v433 = vpop.xlane.xlu0 %432
  %v434 = vsel %vm268, %v259, 0.0
  %435 = vadd.xlane.f32.xlu0 %v434
  %v436 = vpop.xlane.xlu0 %435
  %v437 = vsel %vm268, %v260, 0.0
  %438 = vadd.xlane.f32.xlu0 %v437
  %v439 = vpop.xlane.xlu0 %438
  %v440 = vsel %vm268, %v261, 0.0
  %441 = vadd.xlane.f32.xlu0 %v440
  %v442 = vpop.xlane.xlu0 %441
  %v443 = vsel %vm268, %v262, 0.0
  %444 = vadd.xlane.f32.xlu0 %v443
  %v445 = vpop.xlane.xlu0 %444
  %v446 = vsel %vm268, %v263, 0.0
  %447 = vadd.xlane.f32.xlu0 %v446
  %v448 = vpop.xlane.xlu0 %447
  %v449 = vsel %vm268, %v264, 0.0
  %450 = vadd.xlane.f32.xlu0 %v449
  %v451 = vpop.xlane.xlu0 %450
  %v452 = vsel %vm268, %v265, 0.0
  %453 = vadd.xlane.f32.xlu0 %v452
  %v454 = vpop.xlane.xlu0 %453
  %v455 = vsel %vm268, %v266, 0.0
  %456 = vadd.xlane.f32.xlu0 %v455
  %v457 = vpop.xlane.xlu0 %456
  %v458 = vsel %vm268, %v267, 0.0
  %459 = vadd.xlane.f32.xlu0 %v458
  %v460 = vpop.xlane.xlu0 %459
  %v461 = vlaneseq
  %v462 = vshrl.u32 %v461, 7
  %v463 = vsub.s32 0, %v462
  %v464 = vrot.slane %v68, %v463
  %v465 = vmul.f32 %v69, %v464
  %v466 = vmul.f32 %v70, %v464
  %v467 = vmul.f32 %v71, %v464
  %v468 = vmul.f32 %v72, %v464
  %v469 = vmul.f32 %v73, %v464
  %v470 = vmul.f32 %v74, %v464
  %v471 = vmul.f32 %v75, %v464
  %v472 = vmul.f32 %v76, %v464
  %v473 = vmul.f32 %v77, %v464
  %v474 = vmul.f32 %v78, %v464
  %v475 = vmul.f32 %v79, %v464
  %v476 = vmul.f32 %v80, %v464
  %v477 = vmul.f32 %v81, %v464
  %v478 = vmul.f32 %v82, %v464
  %v479 = vmul.f32 %v83, %v464
  %v480 = vmul.f32 %v84, %v464
  %v481 = vmul.f32 %v85, %v464
  %v482 = vmul.f32 %v86, %v464
  %v483 = vmul.f32 %v87, %v464
  %v484 = vmul.f32 %v88, %v464
  %v485 = vmul.f32 %v89, %v464
  %v486 = vmul.f32 %v90, %v464
  %v487 = vmul.f32 %v91, %v464
  %v488 = vmul.f32 %v92, %v464
  %v489 = vmul.f32 %v93, %v464
  %v490 = vmul.f32 %v94, %v464
  %v491 = vmul.f32 %v95, %v464
  %v492 = vmul.f32 %v96, %v464
  %v493 = vmul.f32 %v97, %v464
  %v494 = vmul.f32 %v98, %v464
  %v495 = vmul.f32 %v99, %v464
  %v496 = vmul.f32 %v100, %v464
  %v497 = vmul.f32 %v101, %v464
  %v498 = vmul.f32 %v102, %v464
  %v499 = vmul.f32 %v103, %v464
  %v500 = vmul.f32 %v104, %v464
  %v501 = vmul.f32 %v105, %v464
  %v502 = vmul.f32 %v106, %v464
  %v503 = vmul.f32 %v107, %v464
  %v504 = vmul.f32 %v108, %v464
  %v505 = vmul.f32 %v109, %v464
  %v506 = vmul.f32 %v110, %v464
  %v507 = vmul.f32 %v111, %v464
  %v508 = vmul.f32 %v112, %v464
  %v509 = vmul.f32 %v113, %v464
  %v510 = vmul.f32 %v114, %v464
  %v511 = vmul.f32 %v115, %v464
  %v512 = vmul.f32 %v116, %v464
  %v513 = vmul.f32 %v117, %v464
  %v514 = vmul.f32 %v118, %v464
  %v515 = vmul.f32 %v119, %v464
  %v516 = vmul.f32 %v120, %v464
  %v517 = vmul.f32 %v121, %v464
  %v518 = vmul.f32 %v122, %v464
  %v519 = vmul.f32 %v123, %v464
  %v520 = vmul.f32 %v124, %v464
  %v521 = vmul.f32 %v125, %v464
  %v522 = vmul.f32 %v126, %v464
  %v523 = vmul.f32 %v127, %v464
  %v524 = vmul.f32 %v128, %v464
  %v525 = vmul.f32 %v129, %v464
  %v526 = vmul.f32 %v130, %v464
  %v527 = vmul.f32 %v131, %v464
  %v528 = vmul.f32 %v132, %v464
  %v529 = vsel %vm268, %v465, 0.0
  %530 = vadd.xlane.f32.xlu0 %v529
  %v531 = vpop.xlane.xlu0 %530
  %v532 = vsel %vm268, %v466, 0.0
  %533 = vadd.xlane.f32.xlu0 %v532
  %v534 = vpop.xlane.xlu0 %533
  %v535 = vsel %vm268, %v467, 0.0
  %536 = vadd.xlane.f32.xlu0 %v535
  %v537 = vpop.xlane.xlu0 %536
  %v538 = vsel %vm268, %v468, 0.0
  %539 = vadd.xlane.f32.xlu0 %v538
  %v540 = vpop.xlane.xlu0 %539
  %v541 = vsel %vm268, %v469, 0.0
  %542 = vadd.xlane.f32.xlu0 %v541
  %v543 = vpop.xlane.xlu0 %542
  %v544 = vsel %vm268, %v470, 0.0
  %545 = vadd.xlane.f32.xlu0 %v544
  %v546 = vpop.xlane.xlu0 %545
  %v547 = vsel %vm268, %v471, 0.0
  %548 = vadd.xlane.f32.xlu0 %v547
  %v549 = vpop.xlane.xlu0 %548
  %v550 = vsel %vm268, %v472, 0.0
  %551 = vadd.xlane.f32.xlu0 %v550
  %v552 = vpop.xlane.xlu0 %551
  %v553 = vsel %vm268, %v473, 0.0
  %554 = vadd.xlane.f32.xlu0 %v553
  %v555 = vpop.xlane.xlu0 %554
  %v556 = vsel %vm268, %v474, 0.0
  %557 = vadd.xlane.f32.xlu0 %v556
  %v558 = vpop.xlane.xlu0 %557
  %v559 = vsel %vm268, %v475, 0.0
  %560 = vadd.xlane.f32.xlu0 %v559
  %v561 = vpop.xlane.xlu0 %560
  %v562 = vsel %vm268, %v476, 0.0
  %563 = vadd.xlane.f32.xlu0 %v562
  %v564 = vpop.xlane.xlu0 %563
  %v565 = vsel %vm268, %v477, 0.0
  %566 = vadd.xlane.f32.xlu0 %v565
  %v567 = vpop.xlane.xlu0 %566
  %v568 = vsel %vm268, %v478, 0.0
  %569 = vadd.xlane.f32.xlu0 %v568
  %v570 = vpop.xlane.xlu0 %569
  %v571 = vsel %vm268, %v479, 0.0
  %572 = vadd.xlane.f32.xlu0 %v571
  %v573 = vpop.xlane.xlu0 %572
  %v574 = vsel %vm268, %v480, 0.0
  %575 = vadd.xlane.f32.xlu0 %v574
  %v576 = vpop.xlane.xlu0 %575
  %v577 = vsel %vm268, %v481, 0.0
  %578 = vadd.xlane.f32.xlu0 %v577
  %v579 = vpop.xlane.xlu0 %578
  %v580 = vsel %vm268, %v482, 0.0
  %581 = vadd.xlane.f32.xlu0 %v580
  %v582 = vpop.xlane.xlu0 %581
  %v583 = vsel %vm268, %v483, 0.0
  %584 = vadd.xlane.f32.xlu0 %v583
  %v585 = vpop.xlane.xlu0 %584
  %v586 = vsel %vm268, %v484, 0.0
  %587 = vadd.xlane.f32.xlu0 %v586
  %v588 = vpop.xlane.xlu0 %587
  %v589 = vsel %vm268, %v485, 0.0
  %590 = vadd.xlane.f32.xlu0 %v589
  %v591 = vpop.xlane.xlu0 %590
  %v592 = vsel %vm268, %v486, 0.0
  %593 = vadd.xlane.f32.xlu0 %v592
  %v594 = vpop.xlane.xlu0 %593
  %v595 = vsel %vm268, %v487, 0.0
  %596 = vadd.xlane.f32.xlu0 %v595
  %v597 = vpop.xlane.xlu0 %596
  %v598 = vsel %vm268, %v488, 0.0
  %599 = vadd.xlane.f32.xlu0 %v598
  %v600 = vpop.xlane.xlu0 %599
  %v601 = vsel %vm268, %v489, 0.0
  %602 = vadd.xlane.f32.xlu0 %v601
  %v603 = vpop.xlane.xlu0 %602
  %v604 = vsel %vm268, %v490, 0.0
  %605 = vadd.xlane.f32.xlu0 %v604
  %v606 = vpop.xlane.xlu0 %605
  %v607 = vsel %vm268, %v491, 0.0
  %608 = vadd.xlane.f32.xlu0 %v607
  %v609 = vpop.xlane.xlu0 %608
  %v610 = vsel %vm268, %v492, 0.0
  %611 = vadd.xlane.f32.xlu0 %v610
  %v612 = vpop.xlane.xlu0 %611
  %v613 = vsel %vm268, %v493, 0.0
  %614 = vadd.xlane.f32.xlu0 %v613
  %v615 = vpop.xlane.xlu0 %614
  %v616 = vsel %vm268, %v494, 0.0
  %617 = vadd.xlane.f32.xlu0 %v616
  %v618 = vpop.xlane.xlu0 %617
  %v619 = vsel %vm268, %v495, 0.0
  %620 = vadd.xlane.f32.xlu0 %v619
  %v621 = vpop.xlane.xlu0 %620
  %v622 = vsel %vm268, %v496, 0.0
  %623 = vadd.xlane.f32.xlu0 %v622
  %v624 = vpop.xlane.xlu0 %623
  %v625 = vsel %vm268, %v497, 0.0
  %626 = vadd.xlane.f32.xlu0 %v625
  %v627 = vpop.xlane.xlu0 %626
  %v628 = vsel %vm268, %v498, 0.0
  %629 = vadd.xlane.f32.xlu0 %v628
  %v630 = vpop.xlane.xlu0 %629
  %v631 = vsel %vm268, %v499, 0.0
  %632 = vadd.xlane.f32.xlu0 %v631
  %v633 = vpop.xlane.xlu0 %632
  %v634 = vsel %vm268, %v500, 0.0
  %635 = vadd.xlane.f32.xlu0 %v634
  %v636 = vpop.xlane.xlu0 %635
  %v637 = vsel %vm268, %v501, 0.0
  %638 = vadd.xlane.f32.xlu0 %v637
  %v639 = vpop.xlane.xlu0 %638
  %v640 = vsel %vm268, %v502, 0.0
  %641 = vadd.xlane.f32.xlu0 %v640
  %v642 = vpop.xlane.xlu0 %641
  %v643 = vsel %vm268, %v503, 0.0
  %644 = vadd.xlane.f32.xlu0 %v643
  %v645 = vpop.xlane.xlu0 %644
  %v646 = vsel %vm268, %v504, 0.0
  %647 = vadd.xlane.f32.xlu0 %v646
  %v648 = vpop.xlane.xlu0 %647
  %v649 = vsel %vm268, %v505, 0.0
  %650 = vadd.xlane.f32.xlu0 %v649
  %v651 = vpop.xlane.xlu0 %650
  %v652 = vsel %vm268, %v506, 0.0
  %653 = vadd.xlane.f32.xlu0 %v652
  %v654 = vpop.xlane.xlu0 %653
  %v655 = vsel %vm268, %v507, 0.0
  %656 = vadd.xlane.f32.xlu0 %v655
  %v657 = vpop.xlane.xlu0 %656
  %v658 = vsel %vm268, %v508, 0.0
  %659 = vadd.xlane.f32.xlu0 %v658
  %v660 = vpop.xlane.xlu0 %659
  %v661 = vsel %vm268, %v509, 0.0
  %662 = vadd.xlane.f32.xlu0 %v661
  %v663 = vpop.xlane.xlu0 %662
  %v664 = vsel %vm268, %v510, 0.0
  %665 = vadd.xlane.f32.xlu0 %v664
  %v666 = vpop.xlane.xlu0 %665
  %v667 = vsel %vm268, %v511, 0.0
  %668 = vadd.xlane.f32.xlu0 %v667
  %v669 = vpop.xlane.xlu0 %668
  %v670 = vsel %vm268, %v512, 0.0
  %671 = vadd.xlane.f32.xlu0 %v670
  %v672 = vpop.xlane.xlu0 %671
  %v673 = vsel %vm268, %v513, 0.0
  %674 = vadd.xlane.f32.xlu0 %v673
  %v675 = vpop.xlane.xlu0 %674
  %v676 = vsel %vm268, %v514, 0.0
  %677 = vadd.xlane.f32.xlu0 %v676
  %v678 = vpop.xlane.xlu0 %677
  %v679 = vsel %vm268, %v515, 0.0
  %680 = vadd.xlane.f32.xlu0 %v679
  %v681 = vpop.xlane.xlu0 %680
  %v682 = vsel %vm268, %v516, 0.0
  %683 = vadd.xlane.f32.xlu0 %v682
  %v684 = vpop.xlane.xlu0 %683
  %v685 = vsel %vm268, %v517, 0.0
  %686 = vadd.xlane.f32.xlu0 %v685
  %v687 = vpop.xlane.xlu0 %686
  %v688 = vsel %vm268, %v518, 0.0
  %689 = vadd.xlane.f32.xlu0 %v688
  %v690 = vpop.xlane.xlu0 %689
  %v691 = vsel %vm268, %v519, 0.0
  %692 = vadd.xlane.f32.xlu0 %v691
  %v693 = vpop.xlane.xlu0 %692
  %v694 = vsel %vm268, %v520, 0.0
  %695 = vadd.xlane.f32.xlu0 %v694
  %v696 = vpop.xlane.xlu0 %695
  %v697 = vsel %vm268, %v521, 0.0
  %698 = vadd.xlane.f32.xlu0 %v697
  %v699 = vpop.xlane.xlu0 %698
  %v700 = vsel %vm268, %v522, 0.0
  %701 = vadd.xlane.f32.xlu0 %v700
  %v702 = vpop.xlane.xlu0 %701
  %v703 = vsel %vm268, %v523, 0.0
  %704 = vadd.xlane.f32.xlu0 %v703
  %v705 = vpop.xlane.xlu0 %704
  %v706 = vsel %vm268, %v524, 0.0
  %707 = vadd.xlane.f32.xlu0 %v706
  %v708 = vpop.xlane.xlu0 %707
  %v709 = vsel %vm268, %v525, 0.0
  %710 = vadd.xlane.f32.xlu0 %v709
  %v711 = vpop.xlane.xlu0 %710
  %v712 = vsel %vm268, %v526, 0.0
  %713 = vadd.xlane.f32.xlu0 %v712
  %v714 = vpop.xlane.xlu0 %713
  %v715 = vsel %vm268, %v527, 0.0
  %716 = vadd.xlane.f32.xlu0 %v715
  %v717 = vpop.xlane.xlu0 %716
  %v718 = vsel %vm268, %v528, 0.0
  %719 = vadd.xlane.f32.xlu0 %v718
  %v720 = vpop.xlane.xlu0 %719
  %v721 = vadd.f32 %v531, %v271
  %v722 = vadd.f32 %v534, %v274
  %v723 = vadd.f32 %v537, %v277
  %v724 = vadd.f32 %v540, %v280
  %v725 = vadd.f32 %v543, %v283
  %v726 = vadd.f32 %v546, %v286
  %v727 = vadd.f32 %v549, %v289
  %v728 = vadd.f32 %v552, %v292
  %v729 = vadd.f32 %v555, %v295
  %v730 = vadd.f32 %v558, %v298
  %v731 = vadd.f32 %v561, %v301
  %v732 = vadd.f32 %v564, %v304
  %v733 = vadd.f32 %v567, %v307
  %v734 = vadd.f32 %v570, %v310
  %v735 = vadd.f32 %v573, %v313
  %v736 = vadd.f32 %v576, %v316
  %v737 = vadd.f32 %v579, %v319
  %v738 = vadd.f32 %v582, %v322
  %v739 = vadd.f32 %v585, %v325
  %v740 = vadd.f32 %v588, %v328
  %v741 = vadd.f32 %v591, %v331
  %v742 = vadd.f32 %v594, %v334
  %v743 = vadd.f32 %v597, %v337
  %v744 = vadd.f32 %v600, %v340
  %v745 = vadd.f32 %v603, %v343
  %v746 = vadd.f32 %v606, %v346
  %v747 = vadd.f32 %v609, %v349
  %v748 = vadd.f32 %v612, %v352
  %v749 = vadd.f32 %v615, %v355
  %v750 = vadd.f32 %v618, %v358
  %v751 = vadd.f32 %v621, %v361
  %v752 = vadd.f32 %v624, %v364
  %v753 = vadd.f32 %v627, %v367
  %v754 = vadd.f32 %v630, %v370
  %v755 = vadd.f32 %v633, %v373
  %v756 = vadd.f32 %v636, %v376
  %v757 = vadd.f32 %v639, %v379
  %v758 = vadd.f32 %v642, %v382
  %v759 = vadd.f32 %v645, %v385
  %v760 = vadd.f32 %v648, %v388
  %v761 = vadd.f32 %v651, %v391
  %v762 = vadd.f32 %v654, %v394
  %v763 = vadd.f32 %v657, %v397
  %v764 = vadd.f32 %v660, %v400
  %v765 = vadd.f32 %v663, %v403
  %v766 = vadd.f32 %v666, %v406
  %v767 = vadd.f32 %v669, %v409
  %v768 = vadd.f32 %v672, %v412
  %v769 = vadd.f32 %v675, %v415
  %v770 = vadd.f32 %v678, %v418
  %v771 = vadd.f32 %v681, %v421
  %v772 = vadd.f32 %v684, %v424
  %v773 = vadd.f32 %v687, %v427
  %v774 = vadd.f32 %v690, %v430
  %v775 = vadd.f32 %v693, %v433
  %v776 = vadd.f32 %v696, %v436
  %v777 = vadd.f32 %v699, %v439
  %v778 = vadd.f32 %v702, %v442
  %v779 = vadd.f32 %v705, %v445
  %v780 = vadd.f32 %v708, %v448
  %v781 = vadd.f32 %v711, %v451
  %v782 = vadd.f32 %v714, %v454
  %v783 = vadd.f32 %v717, %v457
  %v784 = vadd.f32 %v720, %v460
  %v785 = vlaneseq
  %v786 = vshrl.u32 %v785, 7
  %v787 = vsub.s32 1, %v786
  %v788 = vrot.slane %v68, %v787
  %v789 = vmul.f32 %v69, %v788
  %v790 = vmul.f32 %v70, %v788
  %v791 = vmul.f32 %v71, %v788
  %v792 = vmul.f32 %v72, %v788
  %v793 = vmul.f32 %v73, %v788
  %v794 = vmul.f32 %v74, %v788
  %v795 = vmul.f32 %v75, %v788
  %v796 = vmul.f32 %v76, %v788
  %v797 = vmul.f32 %v77, %v788
  %v798 = vmul.f32 %v78, %v788
  %v799 = vmul.f32 %v79, %v788
  %v800 = vmul.f32 %v80, %v788
  %v801 = vmul.f32 %v81, %v788
  %v802 = vmul.f32 %v82, %v788
  %v803 = vmul.f32 %v83, %v788
  %v804 = vmul.f32 %v84, %v788
  %v805 = vmul.f32 %v85, %v788
  %v806 = vmul.f32 %v86, %v788
  %v807 = vmul.f32 %v87, %v788
  %v808 = vmul.f32 %v88, %v788
  %v809 = vmul.f32 %v89, %v788
  %v810 = vmul.f32 %v90, %v788
  %v811 = vmul.f32 %v91, %v788
  %v812 = vmul.f32 %v92, %v788
  %v813 = vmul.f32 %v93, %v788
  %v814 = vmul.f32 %v94, %v788
  %v815 = vmul.f32 %v95, %v788
  %v816 = vmul.f32 %v96, %v788
  %v817 = vmul.f32 %v97, %v788
  %v818 = vmul.f32 %v98, %v788
  %v819 = vmul.f32 %v99, %v788
  %v820 = vmul.f32 %v100, %v788
  %v821 = vmul.f32 %v101, %v788
  %v822 = vmul.f32 %v102, %v788
  %v823 = vmul.f32 %v103, %v788
  %v824 = vmul.f32 %v104, %v788
  %v825 = vmul.f32 %v105, %v788
  %v826 = vmul.f32 %v106, %v788
  %v827 = vmul.f32 %v107, %v788
  %v828 = vmul.f32 %v108, %v788
  %v829 = vmul.f32 %v109, %v788
  %v830 = vmul.f32 %v110, %v788
  %v831 = vmul.f32 %v111, %v788
  %v832 = vmul.f32 %v112, %v788
  %v833 = vmul.f32 %v113, %v788
  %v834 = vmul.f32 %v114, %v788
  %v835 = vmul.f32 %v115, %v788
  %v836 = vmul.f32 %v116, %v788
  %v837 = vmul.f32 %v117, %v788
  %v838 = vmul.f32 %v118, %v788
  %v839 = vmul.f32 %v119, %v788
  %v840 = vmul.f32 %v120, %v788
  %v841 = vmul.f32 %v121, %v788
  %v842 = vmul.f32 %v122, %v788
  %v843 = vmul.f32 %v123, %v788
  %v844 = vmul.f32 %v124, %v788
  %v845 = vmul.f32 %v125, %v788
  %v846 = vmul.f32 %v126, %v788
  %v847 = vmul.f32 %v127, %v788
  %v848 = vmul.f32 %v128, %v788
  %v849 = vmul.f32 %v129, %v788
  %v850 = vmul.f32 %v130, %v788
  %v851 = vmul.f32 %v131, %v788
  %v852 = vmul.f32 %v132, %v788
  %v853 = vsel %vm268, %v789, 0.0
  %854 = vadd.xlane.f32.xlu0 %v853
  %v855 = vpop.xlane.xlu0 %854
  %v856 = vsel %vm268, %v790, 0.0
  %857 = vadd.xlane.f32.xlu0 %v856
  %v858 = vpop.xlane.xlu0 %857
  %v859 = vsel %vm268, %v791, 0.0
  %860 = vadd.xlane.f32.xlu0 %v859
  %v861 = vpop.xlane.xlu0 %860
  %v862 = vsel %vm268, %v792, 0.0
  %863 = vadd.xlane.f32.xlu0 %v862
  %v864 = vpop.xlane.xlu0 %863
  %v865 = vsel %vm268, %v793, 0.0
  %866 = vadd.xlane.f32.xlu0 %v865
  %v867 = vpop.xlane.xlu0 %866
  %v868 = vsel %vm268, %v794, 0.0
  %869 = vadd.xlane.f32.xlu0 %v868
  %v870 = vpop.xlane.xlu0 %869
  %v871 = vsel %vm268, %v795, 0.0
  %872 = vadd.xlane.f32.xlu0 %v871
  %v873 = vpop.xlane.xlu0 %872
  %v874 = vsel %vm268, %v796, 0.0
  %875 = vadd.xlane.f32.xlu0 %v874
  %v876 = vpop.xlane.xlu0 %875
  %v877 = vsel %vm268, %v797, 0.0
  %878 = vadd.xlane.f32.xlu0 %v877
  %v879 = vpop.xlane.xlu0 %878
  %v880 = vsel %vm268, %v798, 0.0
  %881 = vadd.xlane.f32.xlu0 %v880
  %v882 = vpop.xlane.xlu0 %881
  %v883 = vsel %vm268, %v799, 0.0
  %884 = vadd.xlane.f32.xlu0 %v883
  %v885 = vpop.xlane.xlu0 %884
  %v886 = vsel %vm268, %v800, 0.0
  %887 = vadd.xlane.f32.xlu0 %v886
  %v888 = vpop.xlane.xlu0 %887
  %v889 = vsel %vm268, %v801, 0.0
  %890 = vadd.xlane.f32.xlu0 %v889
  %v891 = vpop.xlane.xlu0 %890
  %v892 = vsel %vm268, %v802, 0.0
  %893 = vadd.xlane.f32.xlu0 %v892
  %v894 = vpop.xlane.xlu0 %893
  %v895 = vsel %vm268, %v803, 0.0
  %896 = vadd.xlane.f32.xlu0 %v895
  %v897 = vpop.xlane.xlu0 %896
  %v898 = vsel %vm268, %v804, 0.0
  %899 = vadd.xlane.f32.xlu0 %v898
  %v900 = vpop.xlane.xlu0 %899
  %v901 = vsel %vm268, %v805, 0.0
  %902 = vadd.xlane.f32.xlu0 %v901
  %v903 = vpop.xlane.xlu0 %902
  %v904 = vsel %vm268, %v806, 0.0
  %905 = vadd.xlane.f32.xlu0 %v904
  %v906 = vpop.xlane.xlu0 %905
  %v907 = vsel %vm268, %v807, 0.0
  %908 = vadd.xlane.f32.xlu0 %v907
  %v909 = vpop.xlane.xlu0 %908
  %v910 = vsel %vm268, %v808, 0.0
  %911 = vadd.xlane.f32.xlu0 %v910
  %v912 = vpop.xlane.xlu0 %911
  %v913 = vsel %vm268, %v809, 0.0
  %914 = vadd.xlane.f32.xlu0 %v913
  %v915 = vpop.xlane.xlu0 %914
  %v916 = vsel %vm268, %v810, 0.0
  %917 = vadd.xlane.f32.xlu0 %v916
  %v918 = vpop.xlane.xlu0 %917
  %v919 = vsel %vm268, %v811, 0.0
  %920 = vadd.xlane.f32.xlu0 %v919
  %v921 = vpop.xlane.xlu0 %920
  %v922 = vsel %vm268, %v812, 0.0
  %923 = vadd.xlane.f32.xlu0 %v922
  %v924 = vpop.xlane.xlu0 %923
  %v925 = vsel %vm268, %v813, 0.0
  %926 = vadd.xlane.f32.xlu0 %v925
  %v927 = vpop.xlane.xlu0 %926
  %v928 = vsel %vm268, %v814, 0.0
  %929 = vadd.xlane.f32.xlu0 %v928
  %v930 = vpop.xlane.xlu0 %929
  %v931 = vsel %vm268, %v815, 0.0
  %932 = vadd.xlane.f32.xlu0 %v931
  %v933 = vpop.xlane.xlu0 %932
  %v934 = vsel %vm268, %v816, 0.0
  %935 = vadd.xlane.f32.xlu0 %v934
  %v936 = vpop.xlane.xlu0 %935
  %v937 = vsel %vm268, %v817, 0.0
  %938 = vadd.xlane.f32.xlu0 %v937
  %v939 = vpop.xlane.xlu0 %938
  %v940 = vsel %vm268, %v818, 0.0
  %941 = vadd.xlane.f32.xlu0 %v940
  %v942 = vpop.xlane.xlu0 %941
  %v943 = vsel %vm268, %v819, 0.0
  %944 = vadd.xlane.f32.xlu0 %v943
  %v945 = vpop.xlane.xlu0 %944
  %v946 = vsel %vm268, %v820, 0.0
  %947 = vadd.xlane.f32.xlu0 %v946
  %v948 = vpop.xlane.xlu0 %947
  %v949 = vsel %vm268, %v821, 0.0
  %950 = vadd.xlane.f32.xlu0 %v949
  %v951 = vpop.xlane.xlu0 %950
  %v952 = vsel %vm268, %v822, 0.0
  %953 = vadd.xlane.f32.xlu0 %v952
  %v954 = vpop.xlane.xlu0 %953
  %v955 = vsel %vm268, %v823, 0.0
  %956 = vadd.xlane.f32.xlu0 %v955
  %v957 = vpop.xlane.xlu0 %956
  %v958 = vsel %vm268, %v824, 0.0
  %959 = vadd.xlane.f32.xlu0 %v958
  %v960 = vpop.xlane.xlu0 %959
  %v961 = vsel %vm268, %v825, 0.0
  %962 = vadd.xlane.f32.xlu0 %v961
  %v963 = vpop.xlane.xlu0 %962
  %v964 = vsel %vm268, %v826, 0.0
  %965 = vadd.xlane.f32.xlu0 %v964
  %v966 = vpop.xlane.xlu0 %965
  %v967 = vsel %vm268, %v827, 0.0
  %968 = vadd.xlane.f32.xlu0 %v967
  %v969 = vpop.xlane.xlu0 %968
  %v970 = vsel %vm268, %v828, 0.0
  %971 = vadd.xlane.f32.xlu0 %v970
  %v972 = vpop.xlane.xlu0 %971
  %v973 = vsel %vm268, %v829, 0.0
  %974 = vadd.xlane.f32.xlu0 %v973
  %v975 = vpop.xlane.xlu0 %974
  %v976 = vsel %vm268, %v830, 0.0
  %977 = vadd.xlane.f32.xlu0 %v976
  %v978 = vpop.xlane.xlu0 %977
  %v979 = vsel %vm268, %v831, 0.0
  %980 = vadd.xlane.f32.xlu0 %v979
  %v981 = vpop.xlane.xlu0 %980
  %v982 = vsel %vm268, %v832, 0.0
  %983 = vadd.xlane.f32.xlu0 %v982
  %v984 = vpop.xlane.xlu0 %983
  %v985 = vsel %vm268, %v833, 0.0
  %986 = vadd.xlane.f32.xlu0 %v985
  %v987 = vpop.xlane.xlu0 %986
  %v988 = vsel %vm268, %v834, 0.0
  %989 = vadd.xlane.f32.xlu0 %v988
  %v990 = vpop.xlane.xlu0 %989
  %v991 = vsel %vm268, %v835, 0.0
  %992 = vadd.xlane.f32.xlu0 %v991
  %v993 = vpop.xlane.xlu0 %992
  %v994 = vsel %vm268, %v836, 0.0
  %995 = vadd.xlane.f32.xlu0 %v994
  %v996 = vpop.xlane.xlu0 %995
  %v997 = vsel %vm268, %v837, 0.0
  %998 = vadd.xlane.f32.xlu0 %v997
  %v999 = vpop.xlane.xlu0 %998
  %v1000 = vsel %vm268, %v838, 0.0
  %1001 = vadd.xlane.f32.xlu0 %v1000
  %v1002 = vpop.xlane.xlu0 %1001
  %v1003 = vsel %vm268, %v839, 0.0
  %1004 = vadd.xlane.f32.xlu0 %v1003
  %v1005 = vpop.xlane.xlu0 %1004
  %v1006 = vsel %vm268, %v840, 0.0
  %1007 = vadd.xlane.f32.xlu0 %v1006
  %v1008 = vpop.xlane.xlu0 %1007
  %v1009 = vsel %vm268, %v841, 0.0
  %1010 = vadd.xlane.f32.xlu0 %v1009
  %v1011 = vpop.xlane.xlu0 %1010
  %v1012 = vsel %vm268, %v842, 0.0
  %1013 = vadd.xlane.f32.xlu0 %v1012
  %v1014 = vpop.xlane.xlu0 %1013
  %v1015 = vsel %vm268, %v843, 0.0
  %1016 = vadd.xlane.f32.xlu0 %v1015
  %v1017 = vpop.xlane.xlu0 %1016
  %v1018 = vsel %vm268, %v844, 0.0
  %1019 = vadd.xlane.f32.xlu0 %v1018
  %v1020 = vpop.xlane.xlu0 %1019
  %v1021 = vsel %vm268, %v845, 0.0
  %1022 = vadd.xlane.f32.xlu0 %v1021
  %v1023 = vpop.xlane.xlu0 %1022
  %v1024 = vsel %vm268, %v846, 0.0
  %1025 = vadd.xlane.f32.xlu0 %v1024
  %v1026 = vpop.xlane.xlu0 %1025
  %v1027 = vsel %vm268, %v847, 0.0
  %1028 = vadd.xlane.f32.xlu0 %v1027
  %v1029 = vpop.xlane.xlu0 %1028
  %v1030 = vsel %vm268, %v848, 0.0
  %1031 = vadd.xlane.f32.xlu0 %v1030
  %v1032 = vpop.xlane.xlu0 %1031
  %v1033 = vsel %vm268, %v849, 0.0
  %1034 = vadd.xlane.f32.xlu0 %v1033
  %v1035 = vpop.xlane.xlu0 %1034
  %v1036 = vsel %vm268, %v850, 0.0
  %1037 = vadd.xlane.f32.xlu0 %v1036
  %v1038 = vpop.xlane.xlu0 %1037
  %v1039 = vsel %vm268, %v851, 0.0
  %1040 = vadd.xlane.f32.xlu0 %v1039
  %v1041 = vpop.xlane.xlu0 %1040
  %v1042 = vsel %vm268, %v852, 0.0
  %1043 = vadd.xlane.f32.xlu0 %v1042
  %v1044 = vpop.xlane.xlu0 %1043
  %v1045 = vadd.f32 %v855, %v271
  %v1046 = vadd.f32 %v858, %v274
  %v1047 = vadd.f32 %v861, %v277
  %v1048 = vadd.f32 %v864, %v280
  %v1049 = vadd.f32 %v867, %v283
  %v1050 = vadd.f32 %v870, %v286
  %v1051 = vadd.f32 %v873, %v289
  %v1052 = vadd.f32 %v876, %v292
  %v1053 = vadd.f32 %v879, %v295
  %v1054 = vadd.f32 %v882, %v298
  %v1055 = vadd.f32 %v885, %v301
  %v1056 = vadd.f32 %v888, %v304
  %v1057 = vadd.f32 %v891, %v307
  %v1058 = vadd.f32 %v894, %v310
  %v1059 = vadd.f32 %v897, %v313
  %v1060 = vadd.f32 %v900, %v316
  %v1061 = vadd.f32 %v903, %v319
  %v1062 = vadd.f32 %v906, %v322
  %v1063 = vadd.f32 %v909, %v325
  %v1064 = vadd.f32 %v912, %v328
  %v1065 = vadd.f32 %v915, %v331
  %v1066 = vadd.f32 %v918, %v334
  %v1067 = vadd.f32 %v921, %v337
  %v1068 = vadd.f32 %v924, %v340
  %v1069 = vadd.f32 %v927, %v343
  %v1070 = vadd.f32 %v930, %v346
  %v1071 = vadd.f32 %v933, %v349
  %v1072 = vadd.f32 %v936, %v352
  %v1073 = vadd.f32 %v939, %v355
  %v1074 = vadd.f32 %v942, %v358
  %v1075 = vadd.f32 %v945, %v361
  %v1076 = vadd.f32 %v948, %v364
  %v1077 = vadd.f32 %v951, %v367
  %v1078 = vadd.f32 %v954, %v370
  %v1079 = vadd.f32 %v957, %v373
  %v1080 = vadd.f32 %v960, %v376
  %v1081 = vadd.f32 %v963, %v379
  %v1082 = vadd.f32 %v966, %v382
  %v1083 = vadd.f32 %v969, %v385
  %v1084 = vadd.f32 %v972, %v388
  %v1085 = vadd.f32 %v975, %v391
  %v1086 = vadd.f32 %v978, %v394
  %v1087 = vadd.f32 %v981, %v397
  %v1088 = vadd.f32 %v984, %v400
  %v1089 = vadd.f32 %v987, %v403
  %v1090 = vadd.f32 %v990, %v406
  %v1091 = vadd.f32 %v993, %v409
  %v1092 = vadd.f32 %v996, %v412
  %v1093 = vadd.f32 %v999, %v415
  %v1094 = vadd.f32 %v1002, %v418
  %v1095 = vadd.f32 %v1005, %v421
  %v1096 = vadd.f32 %v1008, %v424
  %v1097 = vadd.f32 %v1011, %v427
  %v1098 = vadd.f32 %v1014, %v430
  %v1099 = vadd.f32 %v1017, %v433
  %v1100 = vadd.f32 %v1020, %v436
  %v1101 = vadd.f32 %v1023, %v439
  %v1102 = vadd.f32 %v1026, %v442
  %v1103 = vadd.f32 %v1029, %v445
  %v1104 = vadd.f32 %v1032, %v448
  %v1105 = vadd.f32 %v1035, %v451
  %v1106 = vadd.f32 %v1038, %v454
  %v1107 = vadd.f32 %v1041, %v457
  %v1108 = vadd.f32 %v1044, %v460
  %v1173 = vlaneseq
  %v1174 = vand.u32 %v1173, 127
  %v1175 = vlaneseq
  %v1176 = vshrl.u32 %v1175, 7
  %v1177 = vsub.s32 %v1174, %v1176
  %v1178 = vrot.slane %v721, %v1177
  %v1179 = vlaneseq
  %v1180 = vshrl.u32 %v1179, 7
  %v1181 = vsub.s32 %v1174, %v1180
  %v1182 = vrot.slane %v722, %v1181
  %v1183 = vlaneseq
  %v1184 = vshrl.u32 %v1183, 7
  %v1185 = vsub.s32 %v1174, %v1184
  %v1186 = vrot.slane %v723, %v1185
  %v1187 = vlaneseq
  %v1188 = vshrl.u32 %v1187, 7
  %v1189 = vsub.s32 %v1174, %v1188
  %v1190 = vrot.slane %v724, %v1189
  %v1191 = vlaneseq
  %v1192 = vshrl.u32 %v1191, 7
  %v1193 = vsub.s32 %v1174, %v1192
  %v1194 = vrot.slane %v725, %v1193
  %v1195 = vlaneseq
  %v1196 = vshrl.u32 %v1195, 7
  %v1197 = vsub.s32 %v1174, %v1196
  %v1198 = vrot.slane %v726, %v1197
  %v1199 = vlaneseq
  %v1200 = vshrl.u32 %v1199, 7
  %v1201 = vsub.s32 %v1174, %v1200
  %v1202 = vrot.slane %v727, %v1201
  %v1203 = vlaneseq
  %v1204 = vshrl.u32 %v1203, 7
  %v1205 = vsub.s32 %v1174, %v1204
  %v1206 = vrot.slane %v728, %v1205
  %v1207 = vlaneseq
  %v1208 = vshrl.u32 %v1207, 7
  %v1209 = vsub.s32 %v1174, %v1208
  %v1210 = vrot.slane %v729, %v1209
  %v1211 = vlaneseq
  %v1212 = vshrl.u32 %v1211, 7
  %v1213 = vsub.s32 %v1174, %v1212
  %v1214 = vrot.slane %v730, %v1213
  %v1215 = vlaneseq
  %v1216 = vshrl.u32 %v1215, 7
  %v1217 = vsub.s32 %v1174, %v1216
  %v1218 = vrot.slane %v731, %v1217
  %v1219 = vlaneseq
  %v1220 = vshrl.u32 %v1219, 7
  %v1221 = vsub.s32 %v1174, %v1220
  %v1222 = vrot.slane %v732, %v1221
  %v1223 = vlaneseq
  %v1224 = vshrl.u32 %v1223, 7
  %v1225 = vsub.s32 %v1174, %v1224
  %v1226 = vrot.slane %v733, %v1225
  %v1227 = vlaneseq
  %v1228 = vshrl.u32 %v1227, 7
  %v1229 = vsub.s32 %v1174, %v1228
  %v1230 = vrot.slane %v734, %v1229
  %v1231 = vlaneseq
  %v1232 = vshrl.u32 %v1231, 7
  %v1233 = vsub.s32 %v1174, %v1232
  %v1234 = vrot.slane %v735, %v1233
  %v1235 = vlaneseq
  %v1236 = vshrl.u32 %v1235, 7
  %v1237 = vsub.s32 %v1174, %v1236
  %v1238 = vrot.slane %v736, %v1237
  %v1239 = vlaneseq
  %v1240 = vshrl.u32 %v1239, 7
  %v1241 = vsub.s32 %v1174, %v1240
  %v1242 = vrot.slane %v737, %v1241
  %v1243 = vlaneseq
  %v1244 = vshrl.u32 %v1243, 7
  %v1245 = vsub.s32 %v1174, %v1244
  %v1246 = vrot.slane %v738, %v1245
  %v1247 = vlaneseq
  %v1248 = vshrl.u32 %v1247, 7
  %v1249 = vsub.s32 %v1174, %v1248
  %v1250 = vrot.slane %v739, %v1249
  %v1251 = vlaneseq
  %v1252 = vshrl.u32 %v1251, 7
  %v1253 = vsub.s32 %v1174, %v1252
  %v1254 = vrot.slane %v740, %v1253
  %v1255 = vlaneseq
  %v1256 = vshrl.u32 %v1255, 7
  %v1257 = vsub.s32 %v1174, %v1256
  %v1258 = vrot.slane %v741, %v1257
  %v1259 = vlaneseq
  %v1260 = vshrl.u32 %v1259, 7
  %v1261 = vsub.s32 %v1174, %v1260
  %v1262 = vrot.slane %v742, %v1261
  %v1263 = vlaneseq
  %v1264 = vshrl.u32 %v1263, 7
  %v1265 = vsub.s32 %v1174, %v1264
  %v1266 = vrot.slane %v743, %v1265
  %v1267 = vlaneseq
  %v1268 = vshrl.u32 %v1267, 7
  %v1269 = vsub.s32 %v1174, %v1268
  %v1270 = vrot.slane %v744, %v1269
  %v1271 = vlaneseq
  %v1272 = vshrl.u32 %v1271, 7
  %v1273 = vsub.s32 %v1174, %v1272
  %v1274 = vrot.slane %v745, %v1273
  %v1275 = vlaneseq
  %v1276 = vshrl.u32 %v1275, 7
  %v1277 = vsub.s32 %v1174, %v1276
  %v1278 = vrot.slane %v746, %v1277
  %v1279 = vlaneseq
  %v1280 = vshrl.u32 %v1279, 7
  %v1281 = vsub.s32 %v1174, %v1280
  %v1282 = vrot.slane %v747, %v1281
  %v1283 = vlaneseq
  %v1284 = vshrl.u32 %v1283, 7
  %v1285 = vsub.s32 %v1174, %v1284
  %v1286 = vrot.slane %v748, %v1285
  %v1287 = vlaneseq
  %v1288 = vshrl.u32 %v1287, 7
  %v1289 = vsub.s32 %v1174, %v1288
  %v1290 = vrot.slane %v749, %v1289
  %v1291 = vlaneseq
  %v1292 = vshrl.u32 %v1291, 7
  %v1293 = vsub.s32 %v1174, %v1292
  %v1294 = vrot.slane %v750, %v1293
  %v1295 = vlaneseq
  %v1296 = vshrl.u32 %v1295, 7
  %v1297 = vsub.s32 %v1174, %v1296
  %v1298 = vrot.slane %v751, %v1297
  %v1299 = vlaneseq
  %v1300 = vshrl.u32 %v1299, 7
  %v1301 = vsub.s32 %v1174, %v1300
  %v1302 = vrot.slane %v752, %v1301
  %v1303 = vlaneseq
  %v1304 = vshrl.u32 %v1303, 7
  %v1305 = vsub.s32 %v1174, %v1304
  %v1306 = vrot.slane %v753, %v1305
  %v1307 = vlaneseq
  %v1308 = vshrl.u32 %v1307, 7
  %v1309 = vsub.s32 %v1174, %v1308
  %v1310 = vrot.slane %v754, %v1309
  %v1311 = vlaneseq
  %v1312 = vshrl.u32 %v1311, 7
  %v1313 = vsub.s32 %v1174, %v1312
  %v1314 = vrot.slane %v755, %v1313
  %v1315 = vlaneseq
  %v1316 = vshrl.u32 %v1315, 7
  %v1317 = vsub.s32 %v1174, %v1316
  %v1318 = vrot.slane %v756, %v1317
  %v1319 = vlaneseq
  %v1320 = vshrl.u32 %v1319, 7
  %v1321 = vsub.s32 %v1174, %v1320
  %v1322 = vrot.slane %v757, %v1321
  %v1323 = vlaneseq
  %v1324 = vshrl.u32 %v1323, 7
  %v1325 = vsub.s32 %v1174, %v1324
  %v1326 = vrot.slane %v758, %v1325
  %v1327 = vlaneseq
  %v1328 = vshrl.u32 %v1327, 7
  %v1329 = vsub.s32 %v1174, %v1328
  %v1330 = vrot.slane %v759, %v1329
  %v1331 = vlaneseq
  %v1332 = vshrl.u32 %v1331, 7
  %v1333 = vsub.s32 %v1174, %v1332
  %v1334 = vrot.slane %v760, %v1333
  %v1335 = vlaneseq
  %v1336 = vshrl.u32 %v1335, 7
  %v1337 = vsub.s32 %v1174, %v1336
  %v1338 = vrot.slane %v761, %v1337
  %v1339 = vlaneseq
  %v1340 = vshrl.u32 %v1339, 7
  %v1341 = vsub.s32 %v1174, %v1340
  %v1342 = vrot.slane %v762, %v1341
  %v1343 = vlaneseq
  %v1344 = vshrl.u32 %v1343, 7
  %v1345 = vsub.s32 %v1174, %v1344
  %v1346 = vrot.slane %v763, %v1345
  %v1347 = vlaneseq
  %v1348 = vshrl.u32 %v1347, 7
  %v1349 = vsub.s32 %v1174, %v1348
  %v1350 = vrot.slane %v764, %v1349
  %v1351 = vlaneseq
  %v1352 = vshrl.u32 %v1351, 7
  %v1353 = vsub.s32 %v1174, %v1352
  %v1354 = vrot.slane %v765, %v1353
  %v1355 = vlaneseq
  %v1356 = vshrl.u32 %v1355, 7
  %v1357 = vsub.s32 %v1174, %v1356
  %v1358 = vrot.slane %v766, %v1357
  %v1359 = vlaneseq
  %v1360 = vshrl.u32 %v1359, 7
  %v1361 = vsub.s32 %v1174, %v1360
  %v1362 = vrot.slane %v767, %v1361
  %v1363 = vlaneseq
  %v1364 = vshrl.u32 %v1363, 7
  %v1365 = vsub.s32 %v1174, %v1364
  %v1366 = vrot.slane %v768, %v1365
  %v1367 = vlaneseq
  %v1368 = vshrl.u32 %v1367, 7
  %v1369 = vsub.s32 %v1174, %v1368
  %v1370 = vrot.slane %v769, %v1369
  %v1371 = vlaneseq
  %v1372 = vshrl.u32 %v1371, 7
  %v1373 = vsub.s32 %v1174, %v1372
  %v1374 = vrot.slane %v770, %v1373
  %v1375 = vlaneseq
  %v1376 = vshrl.u32 %v1375, 7
  %v1377 = vsub.s32 %v1174, %v1376
  %v1378 = vrot.slane %v771, %v1377
  %v1379 = vlaneseq
  %v1380 = vshrl.u32 %v1379, 7
  %v1381 = vsub.s32 %v1174, %v1380
  %v1382 = vrot.slane %v772, %v1381
  %v1383 = vlaneseq
  %v1384 = vshrl.u32 %v1383, 7
  %v1385 = vsub.s32 %v1174, %v1384
  %v1386 = vrot.slane %v773, %v1385
  %v1387 = vlaneseq
  %v1388 = vshrl.u32 %v1387, 7
  %v1389 = vsub.s32 %v1174, %v1388
  %v1390 = vrot.slane %v774, %v1389
  %v1391 = vlaneseq
  %v1392 = vshrl.u32 %v1391, 7
  %v1393 = vsub.s32 %v1174, %v1392
  %v1394 = vrot.slane %v775, %v1393
  %v1395 = vlaneseq
  %v1396 = vshrl.u32 %v1395, 7
  %v1397 = vsub.s32 %v1174, %v1396
  %v1398 = vrot.slane %v776, %v1397
  %v1399 = vlaneseq
  %v1400 = vshrl.u32 %v1399, 7
  %v1401 = vsub.s32 %v1174, %v1400
  %v1402 = vrot.slane %v777, %v1401
  %v1403 = vlaneseq
  %v1404 = vshrl.u32 %v1403, 7
  %v1405 = vsub.s32 %v1174, %v1404
  %v1406 = vrot.slane %v778, %v1405
  %v1407 = vlaneseq
  %v1408 = vshrl.u32 %v1407, 7
  %v1409 = vsub.s32 %v1174, %v1408
  %v1410 = vrot.slane %v779, %v1409
  %v1411 = vlaneseq
  %v1412 = vshrl.u32 %v1411, 7
  %v1413 = vsub.s32 %v1174, %v1412
  %v1414 = vrot.slane %v780, %v1413
  %v1415 = vlaneseq
  %v1416 = vshrl.u32 %v1415, 7
  %v1417 = vsub.s32 %v1174, %v1416
  %v1418 = vrot.slane %v781, %v1417
  %v1419 = vlaneseq
  %v1420 = vshrl.u32 %v1419, 7
  %v1421 = vsub.s32 %v1174, %v1420
  %v1422 = vrot.slane %v782, %v1421
  %v1423 = vlaneseq
  %v1424 = vshrl.u32 %v1423, 7
  %v1425 = vsub.s32 %v1174, %v1424
  %v1426 = vrot.slane %v783, %v1425
  %v1427 = vlaneseq
  %v1428 = vshrl.u32 %v1427, 7
  %v1429 = vsub.s32 %v1174, %v1428
  %v1430 = vrot.slane %v784, %v1429
  %vm1431 = vcmask 1041409
  %v1432 = vsel %vm1431, %v1182, %v1178
  %vm1433 = vcmask 1042434
  %v1434 = vsel %vm1433, %v1186, %v1432
  %vm1435 = vcmask 1043459
  %v1436 = vsel %vm1435, %v1190, %v1434
  %vm1437 = vcmask 1044484
  %v1438 = vsel %vm1437, %v1194, %v1436
  %vm1439 = vcmask 1045509
  %v1440 = vsel %vm1439, %v1198, %v1438
  %vm1441 = vcmask 1046534
  %v1442 = vsel %vm1441, %v1202, %v1440
  %vm1443 = vcmask 1047559
  %v1444 = vsel %vm1443, %v1206, %v1442
  %v1445 = vsel %vm1431, %v1214, %v1210
  %v1446 = vsel %vm1433, %v1218, %v1445
  %v1447 = vsel %vm1435, %v1222, %v1446
  %v1448 = vsel %vm1437, %v1226, %v1447
  %v1449 = vsel %vm1439, %v1230, %v1448
  %v1450 = vsel %vm1441, %v1234, %v1449
  %v1451 = vsel %vm1443, %v1238, %v1450
  %v1452 = vsel %vm1431, %v1246, %v1242
  %v1453 = vsel %vm1433, %v1250, %v1452
  %v1454 = vsel %vm1435, %v1254, %v1453
  %v1455 = vsel %vm1437, %v1258, %v1454
  %v1456 = vsel %vm1439, %v1262, %v1455
  %v1457 = vsel %vm1441, %v1266, %v1456
  %v1458 = vsel %vm1443, %v1270, %v1457
  %v1459 = vsel %vm1431, %v1278, %v1274
  %v1460 = vsel %vm1433, %v1282, %v1459
  %v1461 = vsel %vm1435, %v1286, %v1460
  %v1462 = vsel %vm1437, %v1290, %v1461
  %v1463 = vsel %vm1439, %v1294, %v1462
  %v1464 = vsel %vm1441, %v1298, %v1463
  %v1465 = vsel %vm1443, %v1302, %v1464
  %v1466 = vsel %vm1431, %v1310, %v1306
  %v1467 = vsel %vm1433, %v1314, %v1466
  %v1468 = vsel %vm1435, %v1318, %v1467
  %v1469 = vsel %vm1437, %v1322, %v1468
  %v1470 = vsel %vm1439, %v1326, %v1469
  %v1471 = vsel %vm1441, %v1330, %v1470
  %v1472 = vsel %vm1443, %v1334, %v1471
  %v1473 = vsel %vm1431, %v1342, %v1338
  %v1474 = vsel %vm1433, %v1346, %v1473
  %v1475 = vsel %vm1435, %v1350, %v1474
  %v1476 = vsel %vm1437, %v1354, %v1475
  %v1477 = vsel %vm1439, %v1358, %v1476
  %v1478 = vsel %vm1441, %v1362, %v1477
  %v1479 = vsel %vm1443, %v1366, %v1478
  %v1480 = vsel %vm1431, %v1374, %v1370
  %v1481 = vsel %vm1433, %v1378, %v1480
  %v1482 = vsel %vm1435, %v1382, %v1481
  %v1483 = vsel %vm1437, %v1386, %v1482
  %v1484 = vsel %vm1439, %v1390, %v1483
  %v1485 = vsel %vm1441, %v1394, %v1484
  %v1486 = vsel %vm1443, %v1398, %v1485
  %v1487 = vsel %vm1431, %v1406, %v1402
  %v1488 = vsel %vm1433, %v1410, %v1487
  %v1489 = vsel %vm1435, %v1414, %v1488
  %v1490 = vsel %vm1437, %v1418, %v1489
  %v1491 = vsel %vm1439, %v1422, %v1490
  %v1492 = vsel %vm1441, %v1426, %v1491
  %v1493 = vsel %vm1443, %v1430, %v1492
  %v1566 = vlaneseq
  %v1567 = vshrl.u32 %v1566, 7
  %v1568 = vsub.s32 %v1174, %v1567
  %v1569 = vrot.slane %v1045, %v1568
  %v1570 = vlaneseq
  %v1571 = vshrl.u32 %v1570, 7
  %v1572 = vsub.s32 %v1174, %v1571
  %v1573 = vrot.slane %v1046, %v1572
  %v1574 = vlaneseq
  %v1575 = vshrl.u32 %v1574, 7
  %v1576 = vsub.s32 %v1174, %v1575
  %v1577 = vrot.slane %v1047, %v1576
  %v1578 = vlaneseq
  %v1579 = vshrl.u32 %v1578, 7
  %v1580 = vsub.s32 %v1174, %v1579
  %v1581 = vrot.slane %v1048, %v1580
  %v1582 = vlaneseq
  %v1583 = vshrl.u32 %v1582, 7
  %v1584 = vsub.s32 %v1174, %v1583
  %v1585 = vrot.slane %v1049, %v1584
  %v1586 = vlaneseq
  %v1587 = vshrl.u32 %v1586, 7
  %v1588 = vsub.s32 %v1174, %v1587
  %v1589 = vrot.slane %v1050, %v1588
  %v1590 = vlaneseq
  %v1591 = vshrl.u32 %v1590, 7
  %v1592 = vsub.s32 %v1174, %v1591
  %v1593 = vrot.slane %v1051, %v1592
  %v1594 = vlaneseq
  %v1595 = vshrl.u32 %v1594, 7
  %v1596 = vsub.s32 %v1174, %v1595
  %v1597 = vrot.slane %v1052, %v1596
  %v1598 = vlaneseq
  %v1599 = vshrl.u32 %v1598, 7
  %v1600 = vsub.s32 %v1174, %v1599
  %v1601 = vrot.slane %v1053, %v1600
  %v1602 = vlaneseq
  %v1603 = vshrl.u32 %v1602, 7
  %v1604 = vsub.s32 %v1174, %v1603
  %v1605 = vrot.slane %v1054, %v1604
  %v1606 = vlaneseq
  %v1607 = vshrl.u32 %v1606, 7
  %v1608 = vsub.s32 %v1174, %v1607
  %v1609 = vrot.slane %v1055, %v1608
  %v1610 = vlaneseq
  %v1611 = vshrl.u32 %v1610, 7
  %v1612 = vsub.s32 %v1174, %v1611
  %v1613 = vrot.slane %v1056, %v1612
  %v1614 = vlaneseq
  %v1615 = vshrl.u32 %v1614, 7
  %v1616 = vsub.s32 %v1174, %v1615
  %v1617 = vrot.slane %v1057, %v1616
  %v1618 = vlaneseq
  %v1619 = vshrl.u32 %v1618, 7
  %v1620 = vsub.s32 %v1174, %v1619
  %v1621 = vrot.slane %v1058, %v1620
  %v1622 = vlaneseq
  %v1623 = vshrl.u32 %v1622, 7
  %v1624 = vsub.s32 %v1174, %v1623
  %v1625 = vrot.slane %v1059, %v1624
  %v1626 = vlaneseq
  %v1627 = vshrl.u32 %v1626, 7
  %v1628 = vsub.s32 %v1174, %v1627
  %v1629 = vrot.slane %v1060, %v1628
  %v1630 = vlaneseq
  %v1631 = vshrl.u32 %v1630, 7
  %v1632 = vsub.s32 %v1174, %v1631
  %v1633 = vrot.slane %v1061, %v1632
  %v1634 = vlaneseq
  %v1635 = vshrl.u32 %v1634, 7
  %v1636 = vsub.s32 %v1174, %v1635
  %v1637 = vrot.slane %v1062, %v1636
  %v1638 = vlaneseq
  %v1639 = vshrl.u32 %v1638, 7
  %v1640 = vsub.s32 %v1174, %v1639
  %v1641 = vrot.slane %v1063, %v1640
  %v1642 = vlaneseq
  %v1643 = vshrl.u32 %v1642, 7
  %v1644 = vsub.s32 %v1174, %v1643
  %v1645 = vrot.slane %v1064, %v1644
  %v1646 = vlaneseq
  %v1647 = vshrl.u32 %v1646, 7
  %v1648 = vsub.s32 %v1174, %v1647
  %v1649 = vrot.slane %v1065, %v1648
  %v1650 = vlaneseq
  %v1651 = vshrl.u32 %v1650, 7
  %v1652 = vsub.s32 %v1174, %v1651
  %v1653 = vrot.slane %v1066, %v1652
  %v1654 = vlaneseq
  %v1655 = vshrl.u32 %v1654, 7
  %v1656 = vsub.s32 %v1174, %v1655
  %v1657 = vrot.slane %v1067, %v1656
  %v1658 = vlaneseq
  %v1659 = vshrl.u32 %v1658, 7
  %v1660 = vsub.s32 %v1174, %v1659
  %v1661 = vrot.slane %v1068, %v1660
  %v1662 = vlaneseq
  %v1663 = vshrl.u32 %v1662, 7
  %v1664 = vsub.s32 %v1174, %v1663
  %v1665 = vrot.slane %v1069, %v1664
  %v1666 = vlaneseq
  %v1667 = vshrl.u32 %v1666, 7
  %v1668 = vsub.s32 %v1174, %v1667
  %v1669 = vrot.slane %v1070, %v1668
  %v1670 = vlaneseq
  %v1671 = vshrl.u32 %v1670, 7
  %v1672 = vsub.s32 %v1174, %v1671
  %v1673 = vrot.slane %v1071, %v1672
  %v1674 = vlaneseq
  %v1675 = vshrl.u32 %v1674, 7
  %v1676 = vsub.s32 %v1174, %v1675
  %v1677 = vrot.slane %v1072, %v1676
  %v1678 = vlaneseq
  %v1679 = vshrl.u32 %v1678, 7
  %v1680 = vsub.s32 %v1174, %v1679
  %v1681 = vrot.slane %v1073, %v1680
  %v1682 = vlaneseq
  %v1683 = vshrl.u32 %v1682, 7
  %v1684 = vsub.s32 %v1174, %v1683
  %v1685 = vrot.slane %v1074, %v1684
  %v1686 = vlaneseq
  %v1687 = vshrl.u32 %v1686, 7
  %v1688 = vsub.s32 %v1174, %v1687
  %v1689 = vrot.slane %v1075, %v1688
  %v1690 = vlaneseq
  %v1691 = vshrl.u32 %v1690, 7
  %v1692 = vsub.s32 %v1174, %v1691
  %v1693 = vrot.slane %v1076, %v1692
  %v1694 = vlaneseq
  %v1695 = vshrl.u32 %v1694, 7
  %v1696 = vsub.s32 %v1174, %v1695
  %v1697 = vrot.slane %v1077, %v1696
  %v1698 = vlaneseq
  %v1699 = vshrl.u32 %v1698, 7
  %v1700 = vsub.s32 %v1174, %v1699
  %v1701 = vrot.slane %v1078, %v1700
  %v1702 = vlaneseq
  %v1703 = vshrl.u32 %v1702, 7
  %v1704 = vsub.s32 %v1174, %v1703
  %v1705 = vrot.slane %v1079, %v1704
  %v1706 = vlaneseq
  %v1707 = vshrl.u32 %v1706, 7
  %v1708 = vsub.s32 %v1174, %v1707
  %v1709 = vrot.slane %v1080, %v1708
  %v1710 = vlaneseq
  %v1711 = vshrl.u32 %v1710, 7
  %v1712 = vsub.s32 %v1174, %v1711
  %v1713 = vrot.slane %v1081, %v1712
  %v1714 = vlaneseq
  %v1715 = vshrl.u32 %v1714, 7
  %v1716 = vsub.s32 %v1174, %v1715
  %v1717 = vrot.slane %v1082, %v1716
  %v1718 = vlaneseq
  %v1719 = vshrl.u32 %v1718, 7
  %v1720 = vsub.s32 %v1174, %v1719
  %v1721 = vrot.slane %v1083, %v1720
  %v1722 = vlaneseq
  %v1723 = vshrl.u32 %v1722, 7
  %v1724 = vsub.s32 %v1174, %v1723
  %v1725 = vrot.slane %v1084, %v1724
  %v1726 = vlaneseq
  %v1727 = vshrl.u32 %v1726, 7
  %v1728 = vsub.s32 %v1174, %v1727
  %v1729 = vrot.slane %v1085, %v1728
  %v1730 = vlaneseq
  %v1731 = vshrl.u32 %v1730, 7
  %v1732 = vsub.s32 %v1174, %v1731
  %v1733 = vrot.slane %v1086, %v1732
  %v1734 = vlaneseq
  %v1735 = vshrl.u32 %v1734, 7
  %v1736 = vsub.s32 %v1174, %v1735
  %v1737 = vrot.slane %v1087, %v1736
  %v1738 = vlaneseq
  %v1739 = vshrl.u32 %v1738, 7
  %v1740 = vsub.s32 %v1174, %v1739
  %v1741 = vrot.slane %v1088, %v1740
  %v1742 = vlaneseq
  %v1743 = vshrl.u32 %v1742, 7
  %v1744 = vsub.s32 %v1174, %v1743
  %v1745 = vrot.slane %v1089, %v1744
  %v1746 = vlaneseq
  %v1747 = vshrl.u32 %v1746, 7
  %v1748 = vsub.s32 %v1174, %v1747
  %v1749 = vrot.slane %v1090, %v1748
  %v1750 = vlaneseq
  %v1751 = vshrl.u32 %v1750, 7
  %v1752 = vsub.s32 %v1174, %v1751
  %v1753 = vrot.slane %v1091, %v1752
  %v1754 = vlaneseq
  %v1755 = vshrl.u32 %v1754, 7
  %v1756 = vsub.s32 %v1174, %v1755
  %v1757 = vrot.slane %v1092, %v1756
  %v1758 = vlaneseq
  %v1759 = vshrl.u32 %v1758, 7
  %v1760 = vsub.s32 %v1174, %v1759
  %v1761 = vrot.slane %v1093, %v1760
  %v1762 = vlaneseq
  %v1763 = vshrl.u32 %v1762, 7
  %v1764 = vsub.s32 %v1174, %v1763
  %v1765 = vrot.slane %v1094, %v1764
  %v1766 = vlaneseq
  %v1767 = vshrl.u32 %v1766, 7
  %v1768 = vsub.s32 %v1174, %v1767
  %v1769 = vrot.slane %v1095, %v1768
  %v1770 = vlaneseq
  %v1771 = vshrl.u32 %v1770, 7
  %v1772 = vsub.s32 %v1174, %v1771
  %v1773 = vrot.slane %v1096, %v1772
  %v1774 = vlaneseq
  %v1775 = vshrl.u32 %v1774, 7
  %v1776 = vsub.s32 %v1174, %v1775
  %v1777 = vrot.slane %v1097, %v1776
  %v1778 = vlaneseq
  %v1779 = vshrl.u32 %v1778, 7
  %v1780 = vsub.s32 %v1174, %v1779
  %v1781 = vrot.slane %v1098, %v1780
  %v1782 = vlaneseq
  %v1783 = vshrl.u32 %v1782, 7
  %v1784 = vsub.s32 %v1174, %v1783
  %v1785 = vrot.slane %v1099, %v1784
  %v1786 = vlaneseq
  %v1787 = vshrl.u32 %v1786, 7
  %v1788 = vsub.s32 %v1174, %v1787
  %v1789 = vrot.slane %v1100, %v1788
  %v1790 = vlaneseq
  %v1791 = vshrl.u32 %v1790, 7
  %v1792 = vsub.s32 %v1174, %v1791
  %v1793 = vrot.slane %v1101, %v1792
  %v1794 = vlaneseq
  %v1795 = vshrl.u32 %v1794, 7
  %v1796 = vsub.s32 %v1174, %v1795
  %v1797 = vrot.slane %v1102, %v1796
  %v1798 = vlaneseq
  %v1799 = vshrl.u32 %v1798, 7
  %v1800 = vsub.s32 %v1174, %v1799
  %v1801 = vrot.slane %v1103, %v1800
  %v1802 = vlaneseq
  %v1803 = vshrl.u32 %v1802, 7
  %v1804 = vsub.s32 %v1174, %v1803
  %v1805 = vrot.slane %v1104, %v1804
  %v1806 = vlaneseq
  %v1807 = vshrl.u32 %v1806, 7
  %v1808 = vsub.s32 %v1174, %v1807
  %v1809 = vrot.slane %v1105, %v1808
  %v1810 = vlaneseq
  %v1811 = vshrl.u32 %v1810, 7
  %v1812 = vsub.s32 %v1174, %v1811
  %v1813 = vrot.slane %v1106, %v1812
  %v1814 = vlaneseq
  %v1815 = vshrl.u32 %v1814, 7
  %v1816 = vsub.s32 %v1174, %v1815
  %v1817 = vrot.slane %v1107, %v1816
  %v1818 = vlaneseq
  %v1819 = vshrl.u32 %v1818, 7
  %v1820 = vsub.s32 %v1174, %v1819
  %v1821 = vrot.slane %v1108, %v1820
  %v1822 = vsel %vm1431, %v1573, %v1569
  %v1823 = vsel %vm1433, %v1577, %v1822
  %v1824 = vsel %vm1435, %v1581, %v1823
  %v1825 = vsel %vm1437, %v1585, %v1824
  %v1826 = vsel %vm1439, %v1589, %v1825
  %v1827 = vsel %vm1441, %v1593, %v1826
  %v1828 = vsel %vm1443, %v1597, %v1827
  %v1829 = vsel %vm1431, %v1605, %v1601
  %v1830 = vsel %vm1433, %v1609, %v1829
  %v1831 = vsel %vm1435, %v1613, %v1830
  %v1832 = vsel %vm1437, %v1617, %v1831
  %v1833 = vsel %vm1439, %v1621, %v1832
  %v1834 = vsel %vm1441, %v1625, %v1833
  %v1835 = vsel %vm1443, %v1629, %v1834
  %v1836 = vsel %vm1431, %v1637, %v1633
  %v1837 = vsel %vm1433, %v1641, %v1836
  %v1838 = vsel %vm1435, %v1645, %v1837
  %v1839 = vsel %vm1437, %v1649, %v1838
  %v1840 = vsel %vm1439, %v1653, %v1839
  %v1841 = vsel %vm1441, %v1657, %v1840
  %v1842 = vsel %vm1443, %v1661, %v1841
  %v1843 = vsel %vm1431, %v1669, %v1665
  %v1844 = vsel %vm1433, %v1673, %v1843
  %v1845 = vsel %vm1435, %v1677, %v1844
  %v1846 = vsel %vm1437, %v1681, %v1845
  %v1847 = vsel %vm1439, %v1685, %v1846
  %v1848 = vsel %vm1441, %v1689, %v1847
  %v1849 = vsel %vm1443, %v1693, %v1848
  %v1850 = vsel %vm1431, %v1701, %v1697
  %v1851 = vsel %vm1433, %v1705, %v1850
  %v1852 = vsel %vm1435, %v1709, %v1851
  %v1853 = vsel %vm1437, %v1713, %v1852
  %v1854 = vsel %vm1439, %v1717, %v1853
  %v1855 = vsel %vm1441, %v1721, %v1854
  %v1856 = vsel %vm1443, %v1725, %v1855
  %v1857 = vsel %vm1431, %v1733, %v1729
  %v1858 = vsel %vm1433, %v1737, %v1857
  %v1859 = vsel %vm1435, %v1741, %v1858
  %v1860 = vsel %vm1437, %v1745, %v1859
  %v1861 = vsel %vm1439, %v1749, %v1860
  %v1862 = vsel %vm1441, %v1753, %v1861
  %v1863 = vsel %vm1443, %v1757, %v1862
  %v1864 = vsel %vm1431, %v1765, %v1761
  %v1865 = vsel %vm1433, %v1769, %v1864
  %v1866 = vsel %vm1435, %v1773, %v1865
  %v1867 = vsel %vm1437, %v1777, %v1866
  %v1868 = vsel %vm1439, %v1781, %v1867
  %v1869 = vsel %vm1441, %v1785, %v1868
  %v1870 = vsel %vm1443, %v1789, %v1869
  %v1871 = vsel %vm1431, %v1797, %v1793
  %v1872 = vsel %vm1433, %v1801, %v1871
  %v1873 = vsel %vm1435, %v1805, %v1872
  %v1874 = vsel %vm1437, %v1809, %v1873
  %v1875 = vsel %vm1439, %v1813, %v1874
  %v1876 = vsel %vm1441, %v1817, %v1875
  %v1877 = vsel %vm1443, %v1821, %v1876
  %v1886 = vld [vmem:[%s4] sm:$0xff]
  %v1887 = vld [vmem:[%s4 + $0x8] sm:$0xff]
  %v1888 = vld [vmem:[%s4 + $0x10] sm:$0xff]
  %v1889 = vld [vmem:[%s4 + $0x18] sm:$0xff]
  %v1890 = vld [vmem:[%s4 + $0x20] sm:$0xff]
  %v1891 = vld [vmem:[%s4 + $0x28] sm:$0xff]
  %v1892 = vld [vmem:[%s4 + $0x30] sm:$0xff]
  %v1893 = vld [vmem:[%s4 + $0x38] sm:$0xff]
  %v1894 = vld [vmem:[%s5] sm:$0xff]
  %v1895 = vld [vmem:[%s5 + $0x8] sm:$0xff]
  %v1896 = vld [vmem:[%s5 + $0x10] sm:$0xff]
  %v1897 = vld [vmem:[%s5 + $0x18] sm:$0xff]
  %v1898 = vld [vmem:[%s5 + $0x20] sm:$0xff]
  %v1899 = vld [vmem:[%s5 + $0x28] sm:$0xff]
  %v1900 = vld [vmem:[%s5 + $0x30] sm:$0xff]
  %v1901 = vld [vmem:[%s5 + $0x38] sm:$0xff]
  %v1902 = vld [vmem:[%s6] sm:$0xff]
  %v1903 = vld [vmem:[%s6 + $0x8] sm:$0xff]
  %v1904 = vld [vmem:[%s6 + $0x10] sm:$0xff]
  %v1905 = vld [vmem:[%s6 + $0x18] sm:$0xff]
  %v1906 = vld [vmem:[%s6 + $0x20] sm:$0xff]
  %v1907 = vld [vmem:[%s6 + $0x28] sm:$0xff]
  %v1908 = vld [vmem:[%s6 + $0x30] sm:$0xff]
  %v1909 = vld [vmem:[%s6 + $0x38] sm:$0xff]
  %1911 = vset.pattern.permute.xlu0 0
  %1912 = vperm.xlu0 %1911, %v1886
  %v1913 = vpop.permute.xlu0 %1912
  %1916 = vset.pattern.permute.xlu0 0
  %1917 = vperm.xlu0 %1916, %v1887
  %v1918 = vpop.permute.xlu0 %1917
  %1921 = vset.pattern.permute.xlu0 0
  %1922 = vperm.xlu0 %1921, %v1888
  %v1923 = vpop.permute.xlu0 %1922
  %1926 = vset.pattern.permute.xlu0 0
  %1927 = vperm.xlu0 %1926, %v1889
  %v1928 = vpop.permute.xlu0 %1927
  %1931 = vset.pattern.permute.xlu0 0
  %1932 = vperm.xlu0 %1931, %v1890
  %v1933 = vpop.permute.xlu0 %1932
  %1936 = vset.pattern.permute.xlu0 0
  %1937 = vperm.xlu0 %1936, %v1891
  %v1938 = vpop.permute.xlu0 %1937
  %1941 = vset.pattern.permute.xlu0 0
  %1942 = vperm.xlu0 %1941, %v1892
  %v1943 = vpop.permute.xlu0 %1942
  %1946 = vset.pattern.permute.xlu0 0
  %1947 = vperm.xlu0 %1946, %v1893
  %v1948 = vpop.permute.xlu0 %1947
  %v1950 = vadd.f32 %v1444, %v1913
  %v1951 = vadd.f32 %v1451, %v1918
  %v1952 = vadd.f32 %v1458, %v1923
  %v1953 = vadd.f32 %v1465, %v1928
  %v1954 = vadd.f32 %v1472, %v1933
  %v1955 = vadd.f32 %v1479, %v1938
  %v1956 = vadd.f32 %v1486, %v1943
  %v1957 = vadd.f32 %v1493, %v1948
  %v1958 = vadd.f32 %v1828, %v1913
  %v1959 = vadd.f32 %v1835, %v1918
  %v1960 = vadd.f32 %v1842, %v1923
  %v1961 = vadd.f32 %v1849, %v1928
  %v1962 = vadd.f32 %v1856, %v1933
  %v1963 = vadd.f32 %v1863, %v1938
  %v1964 = vadd.f32 %v1870, %v1943
  %v1965 = vadd.f32 %v1877, %v1948
  %vm1966 = vcmask 39936
  %v1967 = vsel %vm1966, %v1950, 0.0
  %1968 = vadd.xlane.f32.xlu0 %v1967
  %v1969 = vpop.xlane.xlu0 %1968
  %v1970 = vsel %vm1966, %v1951, 0.0
  %1971 = vadd.xlane.f32.xlu0 %v1970
  %v1972 = vpop.xlane.xlu0 %1971
  %v1973 = vsel %vm1966, %v1952, 0.0
  %1974 = vadd.xlane.f32.xlu0 %v1973
  %v1975 = vpop.xlane.xlu0 %1974
  %v1976 = vsel %vm1966, %v1953, 0.0
  %1977 = vadd.xlane.f32.xlu0 %v1976
  %v1978 = vpop.xlane.xlu0 %1977
  %v1979 = vsel %vm1966, %v1954, 0.0
  %1980 = vadd.xlane.f32.xlu0 %v1979
  %v1981 = vpop.xlane.xlu0 %1980
  %v1982 = vsel %vm1966, %v1955, 0.0
  %1983 = vadd.xlane.f32.xlu0 %v1982
  %v1984 = vpop.xlane.xlu0 %1983
  %v1985 = vsel %vm1966, %v1956, 0.0
  %1986 = vadd.xlane.f32.xlu0 %v1985
  %v1987 = vpop.xlane.xlu0 %1986
  %v1988 = vsel %vm1966, %v1957, 0.0
  %1989 = vadd.xlane.f32.xlu0 %v1988
  %v1990 = vpop.xlane.xlu0 %1989
  %v1991 = vsel %vm1966, %v1958, 0.0
  %1992 = vadd.xlane.f32.xlu0 %v1991
  %v1993 = vpop.xlane.xlu0 %1992
  %v1994 = vsel %vm1966, %v1959, 0.0
  %1995 = vadd.xlane.f32.xlu0 %v1994
  %v1996 = vpop.xlane.xlu0 %1995
  %v1997 = vsel %vm1966, %v1960, 0.0
  %1998 = vadd.xlane.f32.xlu0 %v1997
  %v1999 = vpop.xlane.xlu0 %1998
  %v2000 = vsel %vm1966, %v1961, 0.0
  %2001 = vadd.xlane.f32.xlu0 %v2000
  %v2002 = vpop.xlane.xlu0 %2001
  %v2003 = vsel %vm1966, %v1962, 0.0
  %2004 = vadd.xlane.f32.xlu0 %v2003
  %v2005 = vpop.xlane.xlu0 %2004
  %v2006 = vsel %vm1966, %v1963, 0.0
  %2007 = vadd.xlane.f32.xlu0 %v2006
  %v2008 = vpop.xlane.xlu0 %2007
  %v2009 = vsel %vm1966, %v1964, 0.0
  %2010 = vadd.xlane.f32.xlu0 %v2009
  %v2011 = vpop.xlane.xlu0 %2010
  %v2012 = vsel %vm1966, %v1965, 0.0
  %2013 = vadd.xlane.f32.xlu0 %v2012
  %v2014 = vpop.xlane.xlu0 %2013
  %v2015 = vmul.f32 %v1950, %v1950
  %v2016 = vmul.f32 %v1951, %v1951
  %v2017 = vmul.f32 %v1952, %v1952
  %v2018 = vmul.f32 %v1953, %v1953
  %v2019 = vmul.f32 %v1954, %v1954
  %v2020 = vmul.f32 %v1955, %v1955
  %v2021 = vmul.f32 %v1956, %v1956
  %v2022 = vmul.f32 %v1957, %v1957
  %v2023 = vmul.f32 %v1958, %v1958
  %v2024 = vmul.f32 %v1959, %v1959
  %v2025 = vmul.f32 %v1960, %v1960
  %v2026 = vmul.f32 %v1961, %v1961
  %v2027 = vmul.f32 %v1962, %v1962
  %v2028 = vmul.f32 %v1963, %v1963
  %v2029 = vmul.f32 %v1964, %v1964
  %v2030 = vmul.f32 %v1965, %v1965
  %v2031 = vsel %vm1966, %v2015, 0.0
  %2032 = vadd.xlane.f32.xlu0 %v2031
  %v2033 = vpop.xlane.xlu0 %2032
  %v2034 = vsel %vm1966, %v2016, 0.0
  %2035 = vadd.xlane.f32.xlu0 %v2034
  %v2036 = vpop.xlane.xlu0 %2035
  %v2037 = vsel %vm1966, %v2017, 0.0
  %2038 = vadd.xlane.f32.xlu0 %v2037
  %v2039 = vpop.xlane.xlu0 %2038
  %v2040 = vsel %vm1966, %v2018, 0.0
  %2041 = vadd.xlane.f32.xlu0 %v2040
  %v2042 = vpop.xlane.xlu0 %2041
  %v2043 = vsel %vm1966, %v2019, 0.0
  %2044 = vadd.xlane.f32.xlu0 %v2043
  %v2045 = vpop.xlane.xlu0 %2044
  %v2046 = vsel %vm1966, %v2020, 0.0
  %2047 = vadd.xlane.f32.xlu0 %v2046
  %v2048 = vpop.xlane.xlu0 %2047
  %v2049 = vsel %vm1966, %v2021, 0.0
  %2050 = vadd.xlane.f32.xlu0 %v2049
  %v2051 = vpop.xlane.xlu0 %2050
  %v2052 = vsel %vm1966, %v2022, 0.0
  %2053 = vadd.xlane.f32.xlu0 %v2052
  %v2054 = vpop.xlane.xlu0 %2053
  %v2055 = vsel %vm1966, %v2023, 0.0
  %2056 = vadd.xlane.f32.xlu0 %v2055
  %v2057 = vpop.xlane.xlu0 %2056
  %v2058 = vsel %vm1966, %v2024, 0.0
  %2059 = vadd.xlane.f32.xlu0 %v2058
  %v2060 = vpop.xlane.xlu0 %2059
  %v2061 = vsel %vm1966, %v2025, 0.0
  %2062 = vadd.xlane.f32.xlu0 %v2061
  %v2063 = vpop.xlane.xlu0 %2062
  %v2064 = vsel %vm1966, %v2026, 0.0
  %2065 = vadd.xlane.f32.xlu0 %v2064
  %v2066 = vpop.xlane.xlu0 %2065
  %v2067 = vsel %vm1966, %v2027, 0.0
  %2068 = vadd.xlane.f32.xlu0 %v2067
  %v2069 = vpop.xlane.xlu0 %2068
  %v2070 = vsel %vm1966, %v2028, 0.0
  %2071 = vadd.xlane.f32.xlu0 %v2070
  %v2072 = vpop.xlane.xlu0 %2071
  %v2073 = vsel %vm1966, %v2029, 0.0
  %2074 = vadd.xlane.f32.xlu0 %v2073
  %v2075 = vpop.xlane.xlu0 %2074
  %v2076 = vsel %vm1966, %v2030, 0.0
  %2077 = vadd.xlane.f32.xlu0 %v2076
  %v2078 = vpop.xlane.xlu0 %2077
  %v2079 = vadd.f32 %v1969, 0.0
  %v2080 = vadd.f32 %v1972, 0.0
  %v2081 = vadd.f32 %v1975, 0.0
  %v2082 = vadd.f32 %v1978, 0.0
  %v2083 = vadd.f32 %v1981, 0.0
  %v2084 = vadd.f32 %v1984, 0.0
  %v2085 = vadd.f32 %v1987, 0.0
  %v2086 = vadd.f32 %v1990, 0.0
  %v2087 = vadd.f32 %v2079, %v1993
  %v2088 = vadd.f32 %v2080, %v1996
  %v2089 = vadd.f32 %v2081, %v1999
  %v2090 = vadd.f32 %v2082, %v2002
  %v2091 = vadd.f32 %v2083, %v2005
  %v2092 = vadd.f32 %v2084, %v2008
  %v2093 = vadd.f32 %v2085, %v2011
  %v2094 = vadd.f32 %v2086, %v2014
  %v2095 = vadd.f32 %v2033, 0.0
  %v2096 = vadd.f32 %v2036, 0.0
  %v2097 = vadd.f32 %v2039, 0.0
  %v2098 = vadd.f32 %v2042, 0.0
  %v2099 = vadd.f32 %v2045, 0.0
  %v2100 = vadd.f32 %v2048, 0.0
  %v2101 = vadd.f32 %v2051, 0.0
  %v2102 = vadd.f32 %v2054, 0.0
  %v2103 = vadd.f32 %v2095, %v2057
  %v2104 = vadd.f32 %v2096, %v2060
  %v2105 = vadd.f32 %v2097, %v2063
  %v2106 = vadd.f32 %v2098, %v2066
  %v2107 = vadd.f32 %v2099, %v2069
  %v2108 = vadd.f32 %v2100, %v2072
  %v2109 = vadd.f32 %v2101, %v2075
  %v2110 = vadd.f32 %v2102, %v2078
  %v2111 = vrcp.pop 10.0
  %v2112 = vmul.f32 %v2087, %v2111
  %v2113 = vmul.f32 %v2088, %v2111
  %v2114 = vmul.f32 %v2089, %v2111
  %v2115 = vmul.f32 %v2090, %v2111
  %v2116 = vmul.f32 %v2091, %v2111
  %v2117 = vmul.f32 %v2092, %v2111
  %v2118 = vmul.f32 %v2093, %v2111
  %v2119 = vmul.f32 %v2094, %v2111
  %v2120 = vmul.f32 %v2103, %v2111
  %v2121 = vmul.f32 %v2104, %v2111
  %v2122 = vmul.f32 %v2105, %v2111
  %v2123 = vmul.f32 %v2106, %v2111
  %v2124 = vmul.f32 %v2107, %v2111
  %v2125 = vmul.f32 %v2108, %v2111
  %v2126 = vmul.f32 %v2109, %v2111
  %v2127 = vmul.f32 %v2110, %v2111
  %v2128 = vmul.f32 %v2112, %v2112
  %v2129 = vmul.f32 %v2113, %v2113
  %v2130 = vmul.f32 %v2114, %v2114
  %v2131 = vmul.f32 %v2115, %v2115
  %v2132 = vmul.f32 %v2116, %v2116
  %v2133 = vmul.f32 %v2117, %v2117
  %v2134 = vmul.f32 %v2118, %v2118
  %v2135 = vmul.f32 %v2119, %v2119
  %v2136 = vsub.f32 %v2120, %v2128
  %v2137 = vsub.f32 %v2121, %v2129
  %v2138 = vsub.f32 %v2122, %v2130
  %v2139 = vsub.f32 %v2123, %v2131
  %v2140 = vsub.f32 %v2124, %v2132
  %v2141 = vsub.f32 %v2125, %v2133
  %v2142 = vsub.f32 %v2126, %v2134
  %v2143 = vsub.f32 %v2127, %v2135
  %v2144 = vmax.f32 %v2136, 0.0
  %v2145 = vmax.f32 %v2137, 0.0
  %v2146 = vmax.f32 %v2138, 0.0
  %v2147 = vmax.f32 %v2139, 0.0
  %v2148 = vmax.f32 %v2140, 0.0
  %v2149 = vmax.f32 %v2141, 0.0
  %v2150 = vmax.f32 %v2142, 0.0
  %v2151 = vmax.f32 %v2143, 0.0
  %v2152 = vadd.f32 %v2144, 1e-05
  %v2153 = vadd.f32 %v2145, 1e-05
  %v2154 = vadd.f32 %v2146, 1e-05
  %v2155 = vadd.f32 %v2147, 1e-05
  %v2156 = vadd.f32 %v2148, 1e-05
  %v2157 = vadd.f32 %v2149, 1e-05
  %v2158 = vadd.f32 %v2150, 1e-05
  %v2159 = vadd.f32 %v2151, 1e-05
  %v2160 = vrsqrt.pop %v2152
  %v2161 = vrsqrt.pop %v2153
  %v2162 = vrsqrt.pop %v2154
  %v2163 = vrsqrt.pop %v2155
  %v2164 = vrsqrt.pop %v2156
  %v2165 = vrsqrt.pop %v2157
  %v2166 = vrsqrt.pop %v2158
  %v2167 = vrsqrt.pop %v2159
  %v2168 = vmul.f32 %v1894, %v2160
  %v2169 = vmul.f32 %v1895, %v2161
  %v2170 = vmul.f32 %v1896, %v2162
  %v2171 = vmul.f32 %v1897, %v2163
  %v2172 = vmul.f32 %v1898, %v2164
  %v2173 = vmul.f32 %v1899, %v2165
  %v2174 = vmul.f32 %v1900, %v2166
  %v2175 = vmul.f32 %v1901, %v2167
  %v2176 = vmul.f32 %v2112, %v2168
  %v2177 = vmul.f32 %v2113, %v2169
  %v2178 = vmul.f32 %v2114, %v2170
  %v2179 = vmul.f32 %v2115, %v2171
  %v2180 = vmul.f32 %v2116, %v2172
  %v2181 = vmul.f32 %v2117, %v2173
  %v2182 = vmul.f32 %v2118, %v2174
  %v2183 = vmul.f32 %v2119, %v2175
  %v2184 = vsub.f32 %v1902, %v2176
  %v2185 = vsub.f32 %v1903, %v2177
  %v2186 = vsub.f32 %v1904, %v2178
  %v2187 = vsub.f32 %v1905, %v2179
  %v2188 = vsub.f32 %v1906, %v2180
  %v2189 = vsub.f32 %v1907, %v2181
  %v2190 = vsub.f32 %v1908, %v2182
  %v2191 = vsub.f32 %v1909, %v2183
  %2193 = vset.pattern.permute.xlu0 0
  %2194 = vperm.xlu0 %2193, %v2168
  %v2195 = vpop.permute.xlu0 %2194
  %2198 = vset.pattern.permute.xlu0 0
  %2199 = vperm.xlu0 %2198, %v2169
  %v2200 = vpop.permute.xlu0 %2199
  %2203 = vset.pattern.permute.xlu0 0
  %2204 = vperm.xlu0 %2203, %v2170
  %v2205 = vpop.permute.xlu0 %2204
  %2208 = vset.pattern.permute.xlu0 0
  %2209 = vperm.xlu0 %2208, %v2171
  %v2210 = vpop.permute.xlu0 %2209
  %2213 = vset.pattern.permute.xlu0 0
  %2214 = vperm.xlu0 %2213, %v2172
  %v2215 = vpop.permute.xlu0 %2214
  %2218 = vset.pattern.permute.xlu0 0
  %2219 = vperm.xlu0 %2218, %v2173
  %v2220 = vpop.permute.xlu0 %2219
  %2223 = vset.pattern.permute.xlu0 0
  %2224 = vperm.xlu0 %2223, %v2174
  %v2225 = vpop.permute.xlu0 %2224
  %2228 = vset.pattern.permute.xlu0 0
  %2229 = vperm.xlu0 %2228, %v2175
  %v2230 = vpop.permute.xlu0 %2229
  %v2232 = vmul.f32 %v1950, %v2195
  %v2233 = vmul.f32 %v1951, %v2200
  %v2234 = vmul.f32 %v1952, %v2205
  %v2235 = vmul.f32 %v1953, %v2210
  %v2236 = vmul.f32 %v1954, %v2215
  %v2237 = vmul.f32 %v1955, %v2220
  %v2238 = vmul.f32 %v1956, %v2225
  %v2239 = vmul.f32 %v1957, %v2230
  %v2240 = vmul.f32 %v1958, %v2195
  %v2241 = vmul.f32 %v1959, %v2200
  %v2242 = vmul.f32 %v1960, %v2205
  %v2243 = vmul.f32 %v1961, %v2210
  %v2244 = vmul.f32 %v1962, %v2215
  %v2245 = vmul.f32 %v1963, %v2220
  %v2246 = vmul.f32 %v1964, %v2225
  %v2247 = vmul.f32 %v1965, %v2230
  %2249 = vset.pattern.permute.xlu0 0
  %2250 = vperm.xlu0 %2249, %v2184
  %v2251 = vpop.permute.xlu0 %2250
  %2254 = vset.pattern.permute.xlu0 0
  %2255 = vperm.xlu0 %2254, %v2185
  %v2256 = vpop.permute.xlu0 %2255
  %2259 = vset.pattern.permute.xlu0 0
  %2260 = vperm.xlu0 %2259, %v2186
  %v2261 = vpop.permute.xlu0 %2260
  %2264 = vset.pattern.permute.xlu0 0
  %2265 = vperm.xlu0 %2264, %v2187
  %v2266 = vpop.permute.xlu0 %2265
  %2269 = vset.pattern.permute.xlu0 0
  %2270 = vperm.xlu0 %2269, %v2188
  %v2271 = vpop.permute.xlu0 %2270
  %2274 = vset.pattern.permute.xlu0 0
  %2275 = vperm.xlu0 %2274, %v2189
  %v2276 = vpop.permute.xlu0 %2275
  %2279 = vset.pattern.permute.xlu0 0
  %2280 = vperm.xlu0 %2279, %v2190
  %v2281 = vpop.permute.xlu0 %2280
  %2284 = vset.pattern.permute.xlu0 0
  %2285 = vperm.xlu0 %2284, %v2191
  %v2286 = vpop.permute.xlu0 %2285
  %v2288 = vadd.f32 %v2232, %v2251
  %v2289 = vadd.f32 %v2233, %v2256
  %v2290 = vadd.f32 %v2234, %v2261
  %v2291 = vadd.f32 %v2235, %v2266
  %v2292 = vadd.f32 %v2236, %v2271
  %v2293 = vadd.f32 %v2237, %v2276
  %v2294 = vadd.f32 %v2238, %v2281
  %v2295 = vadd.f32 %v2239, %v2286
  %v2296 = vadd.f32 %v2240, %v2251
  %v2297 = vadd.f32 %v2241, %v2256
  %v2298 = vadd.f32 %v2242, %v2261
  %v2299 = vadd.f32 %v2243, %v2266
  %v2300 = vadd.f32 %v2244, %v2271
  %v2301 = vadd.f32 %v2245, %v2276
  %v2302 = vadd.f32 %v2246, %v2281
  %v2303 = vadd.f32 %v2247, %v2286
  %v2304 = vmax.f32 %v2288, 0.0
  %v2305 = vmax.f32 %v2289, 0.0
  %v2306 = vmax.f32 %v2290, 0.0
  %v2307 = vmax.f32 %v2291, 0.0
  %v2308 = vmax.f32 %v2292, 0.0
  %v2309 = vmax.f32 %v2293, 0.0
  %v2310 = vmax.f32 %v2294, 0.0
  %v2311 = vmax.f32 %v2295, 0.0
  %v2312 = vmax.f32 %v2296, 0.0
  %v2313 = vmax.f32 %v2297, 0.0
  %v2314 = vmax.f32 %v2298, 0.0
  %v2315 = vmax.f32 %v2299, 0.0
  %v2316 = vmax.f32 %v2300, 0.0
  %v2317 = vmax.f32 %v2301, 0.0
  %v2318 = vmax.f32 %v2302, 0.0
  %v2319 = vmax.f32 %v2303, 0.0
  %v2320 = vld [vmem:[%s7] sm:$0xff]
  %v2321 = vld [vmem:[%s7 + $0x8] sm:$0xff]
  %v2322 = vld [vmem:[%s7 + $0x10] sm:$0xff]
  %v2323 = vld [vmem:[%s7 + $0x18] sm:$0xff]
  %v2324 = vld [vmem:[%s7 + $0x20] sm:$0xff]
  %v2325 = vld [vmem:[%s7 + $0x28] sm:$0xff]
  %v2326 = vld [vmem:[%s7 + $0x30] sm:$0xff]
  %v2327 = vld [vmem:[%s7 + $0x38] sm:$0xff]
  %v2328 = vld [vmem:[%s7 + $0x40] sm:$0xff]
  %v2329 = vld [vmem:[%s7 + $0x48] sm:$0xff]
  %v2330 = vld [vmem:[%s7 + $0x50] sm:$0xff]
  %v2331 = vld [vmem:[%s7 + $0x58] sm:$0xff]
  %vm2332 = vcmask 523264
  %v2334 = vsel %vm2332, %v2320, 0
  %v2337 = vsel %vm2332, %v2321, 0
  %v2340 = vsel %vm2332, %v2322, 0
  %v2343 = vsel %vm2332, %v2323, 0
  %v2346 = vsel %vm2332, %v2324, 0
  %v2349 = vsel %vm2332, %v2325, 0
  %v2352 = vsel %vm2332, %v2326, 0
  %v2355 = vsel %vm2332, %v2327, 0
  %v2358 = vsel %vm2332, %v2328, 0
  %v2361 = vsel %vm2332, %v2329, 0
  %v2364 = vsel %vm2332, %v2330, 0
  %v2367 = vsel %vm2332, %v2331, 0
  %2369 = vmatprep.subr.mxu0 0.0
  %2370 = vmatpush1.msra.mxu0 %v2304
  %2371 = vmatprep.subr.mxu0 0.0
  %2372 = vmatpush1.msra.mxu0 %v2305
  %2373 = vmatprep.subr.mxu0 0.0
  %2374 = vmatpush1.msra.mxu0 %v2306
  %2375 = vmatprep.subr.mxu0 0.0
  %2376 = vmatpush1.msra.mxu0 %v2307
  %2377 = vmatprep.subr.mxu0 0.0
  %2378 = vmatpush1.msra.mxu0 %v2308
  %2379 = vmatprep.subr.mxu0 0.0
  %2380 = vmatpush1.msra.mxu0 %v2309
  %2381 = vmatprep.subr.mxu0 0.0
  %2382 = vmatpush1.msra.mxu0 %v2310
  %2383 = vmatprep.subr.mxu0 0.0
  %2384 = vmatpush1.msra.mxu0 %v2311
  %2385 = vmatprep.subr.mxu0 0.0
  %2386 = vmatpush1.msra.mxu0 0.0
  %2387 = vmatprep.subr.mxu0 0.0
  %2388 = vmatpush1.msra.mxu0 0.0
  %2389 = vmatprep.subr.mxu0 0.0
  %2390 = vmatpush1.msra.mxu0 0.0
  %2391 = vmatprep.subr.mxu0 0.0
  %2392 = vmatpush1.msra.mxu0 0.0
  %2393 = vmatprep.subr.mxu0 0.0
  %2394 = vmatpush1.msra.mxu0 0.0
  %2395 = vmatprep.subr.mxu0 0.0
  %2396 = vmatpush1.msra.mxu0 0.0
  %2397 = vmatprep.subr.mxu0 0.0
  %2398 = vmatpush1.msra.mxu0 0.0
  %2399 = vmatprep.subr.mxu0 0.0
  %2400 = vmatpush1.msra.mxu0 0.0
  %2401 = vmatprep.subr.mxu0 0.0
  %2402 = vmatpush1.msra.mxu0 0.0
  %2403 = vmatprep.subr.mxu0 0.0
  %2404 = vmatpush1.msra.mxu0 0.0
  %2405 = vmatprep.subr.mxu0 0.0
  %2406 = vmatpush1.msra.mxu0 0.0
  %2407 = vmatprep.subr.mxu0 0.0
  %2408 = vmatpush1.msra.mxu0 0.0
  %2409 = vmatprep.subr.mxu0 0.0
  %2410 = vmatpush1.msra.mxu0 0.0
  %2411 = vmatprep.subr.mxu0 0.0
  %2412 = vmatpush1.msra.mxu0 0.0
  %2413 = vmatprep.subr.mxu0 0.0
  %2414 = vmatpush1.msra.mxu0 0.0
  %2415 = vmatprep.subr.mxu0 0.0
  %2416 = vmatpush1.msra.mxu0 0.0
  %2417 = vmatprep.subr.mxu0 0.0
  %2418 = vmatpush1.msra.mxu0 0.0
  %2419 = vmatprep.subr.mxu0 0.0
  %2420 = vmatpush1.msra.mxu0 0.0
  %2421 = vmatprep.subr.mxu0 0.0
  %2422 = vmatpush1.msra.mxu0 0.0
  %2423 = vmatprep.subr.mxu0 0.0
  %2424 = vmatpush1.msra.mxu0 0.0
  %2425 = vmatprep.subr.mxu0 0.0
  %2426 = vmatpush1.msra.mxu0 0.0
  %2427 = vmatprep.subr.mxu0 0.0
  %2428 = vmatpush1.msra.mxu0 0.0
  %2429 = vmatprep.subr.mxu0 0.0
  %2430 = vmatpush1.msra.mxu0 0.0
  %2431 = vmatprep.subr.mxu0 0.0
  %2432 = vmatpush1.msra.mxu0 0.0
  %2433 = vmatprep.mubr.f32.mxu0 0.0
  %2434 = vmatmul.mubr.f32.gmra.mrb[0].mxu0 %v2334
  %v2435 = vpop.f32.mrb[0].mxu0
  %v2436 = vadd.f32 0.0, %v2435
  %v2437 = vpop.f32.mrb[0].mxu0
  %2438 = vmatprep.mubr.f32.mxu0 0.0
  %2439 = vmatmul.mubr.f32.gmra.mrb[0].mxu0 %v2337
  %v2440 = vpop.f32.mrb[0].mxu0
  %v2441 = vadd.f32 0.0, %v2440
  %v2442 = vpop.f32.mrb[0].mxu0
  %2443 = vmatprep.mubr.f32.mxu0 0.0
  %2444 = vmatmul.mubr.f32.gmra.mrb[0].mxu0 %v2340
  %v2445 = vpop.f32.mrb[0].mxu0
  %v2446 = vadd.f32 0.0, %v2445
  %v2447 = vpop.f32.mrb[0].mxu0
  %2448 = vmatprep.mubr.f32.mxu0 0.0
  %2449 = vmatmul.mubr.f32.gmra.mrb[0].mxu0 %v2343
  %v2450 = vpop.f32.mrb[0].mxu0
  %v2451 = vadd.f32 0.0, %v2450
  %v2452 = vpop.f32.mrb[0].mxu0
  %2453 = vmatprep.mubr.f32.mxu0 0.0
  %2454 = vmatmul.mubr.f32.gmra.mrb[0].mxu0 %v2346
  %v2455 = vpop.f32.mrb[0].mxu0
  %v2456 = vadd.f32 0.0, %v2455
  %v2457 = vpop.f32.mrb[0].mxu0
  %2458 = vmatprep.mubr.f32.mxu0 0.0
  %2459 = vmatmul.mubr.f32.gmra.mrb[0].mxu0 %v2349
  %v2460 = vpop.f32.mrb[0].mxu0
  %v2461 = vadd.f32 0.0, %v2460
  %v2462 = vpop.f32.mrb[0].mxu0
  %2463 = vmatprep.mubr.f32.mxu0 0.0
  %2464 = vmatmul.mubr.f32.gmra.mrb[0].mxu0 %v2352
  %v2465 = vpop.f32.mrb[0].mxu0
  %v2466 = vadd.f32 0.0, %v2465
  %v2467 = vpop.f32.mrb[0].mxu0
  %2468 = vmatprep.mubr.f32.mxu0 0.0
  %2469 = vmatmul.mubr.f32.gmra.mrb[0].mxu0 %v2355
  %v2470 = vpop.f32.mrb[0].mxu0
  %v2471 = vadd.f32 0.0, %v2470
  %v2472 = vpop.f32.mrb[0].mxu0
  %2473 = vmatprep.mubr.f32.mxu0 0.0
  %2474 = vmatmul.mubr.f32.gmra.mrb[0].mxu0 %v2358
  %v2475 = vpop.f32.mrb[0].mxu0
  %v2476 = vadd.f32 0.0, %v2475
  %v2477 = vpop.f32.mrb[0].mxu0
  %2478 = vmatprep.mubr.f32.mxu0 0.0
  %2479 = vmatmul.mubr.f32.gmra.mrb[0].mxu0 %v2361
  %v2480 = vpop.f32.mrb[0].mxu0
  %v2481 = vadd.f32 0.0, %v2480
  %v2482 = vpop.f32.mrb[0].mxu0
  %2483 = vmatprep.mubr.f32.mxu0 0.0
  %2484 = vmatmul.mubr.f32.gmra.mrb[0].mxu0 %v2364
  %v2485 = vpop.f32.mrb[0].mxu0
  %v2486 = vadd.f32 0.0, %v2485
  %v2487 = vpop.f32.mrb[0].mxu0
  %2488 = vmatprep.mubr.f32.mxu0 0.0
  %2489 = vmatmul.mubr.f32.gmra.mrb[0].mxu0 %v2367
  %v2490 = vpop.f32.mrb[0].mxu0
  %v2491 = vadd.f32 0.0, %v2490
  %v2492 = vpop.f32.mrb[0].mxu0
  %2493 = vdwg.mxu0
  %2494 = vmatprep.subr.mxu0 0.0
  %2495 = vmatpush1.msra.mxu0 %v2312
  %2496 = vmatprep.subr.mxu0 0.0
  %2497 = vmatpush1.msra.mxu0 %v2313
  %2498 = vmatprep.subr.mxu0 0.0
  %2499 = vmatpush1.msra.mxu0 %v2314
  %2500 = vmatprep.subr.mxu0 0.0
  %2501 = vmatpush1.msra.mxu0 %v2315
  %2502 = vmatprep.subr.mxu0 0.0
  %2503 = vmatpush1.msra.mxu0 %v2316
  %2504 = vmatprep.subr.mxu0 0.0
  %2505 = vmatpush1.msra.mxu0 %v2317
  %2506 = vmatprep.subr.mxu0 0.0
  %2507 = vmatpush1.msra.mxu0 %v2318
  %2508 = vmatprep.subr.mxu0 0.0
  %2509 = vmatpush1.msra.mxu0 %v2319
  %2510 = vmatprep.subr.mxu0 0.0
  %2511 = vmatpush1.msra.mxu0 0.0
  %2512 = vmatprep.subr.mxu0 0.0
  %2513 = vmatpush1.msra.mxu0 0.0
  %2514 = vmatprep.subr.mxu0 0.0
  %2515 = vmatpush1.msra.mxu0 0.0
  %2516 = vmatprep.subr.mxu0 0.0
  %2517 = vmatpush1.msra.mxu0 0.0
  %2518 = vmatprep.subr.mxu0 0.0
  %2519 = vmatpush1.msra.mxu0 0.0
  %2520 = vmatprep.subr.mxu0 0.0
  %2521 = vmatpush1.msra.mxu0 0.0
  %2522 = vmatprep.subr.mxu0 0.0
  %2523 = vmatpush1.msra.mxu0 0.0
  %2524 = vmatprep.subr.mxu0 0.0
  %2525 = vmatpush1.msra.mxu0 0.0
  %2526 = vmatprep.subr.mxu0 0.0
  %2527 = vmatpush1.msra.mxu0 0.0
  %2528 = vmatprep.subr.mxu0 0.0
  %2529 = vmatpush1.msra.mxu0 0.0
  %2530 = vmatprep.subr.mxu0 0.0
  %2531 = vmatpush1.msra.mxu0 0.0
  %2532 = vmatprep.subr.mxu0 0.0
  %2533 = vmatpush1.msra.mxu0 0.0
  %2534 = vmatprep.subr.mxu0 0.0
  %2535 = vmatpush1.msra.mxu0 0.0
  %2536 = vmatprep.subr.mxu0 0.0
  %2537 = vmatpush1.msra.mxu0 0.0
  %2538 = vmatprep.subr.mxu0 0.0
  %2539 = vmatpush1.msra.mxu0 0.0
  %2540 = vmatprep.subr.mxu0 0.0
  %2541 = vmatpush1.msra.mxu0 0.0
  %2542 = vmatprep.subr.mxu0 0.0
  %2543 = vmatpush1.msra.mxu0 0.0
  %2544 = vmatprep.subr.mxu0 0.0
  %2545 = vmatpush1.msra.mxu0 0.0
  %2546 = vmatprep.subr.mxu0 0.0
  %2547 = vmatpush1.msra.mxu0 0.0
  %2548 = vmatprep.subr.mxu0 0.0
  %2549 = vmatpush1.msra.mxu0 0.0
  %2550 = vmatprep.subr.mxu0 0.0
  %2551 = vmatpush1.msra.mxu0 0.0
  %2552 = vmatprep.subr.mxu0 0.0
  %2553 = vmatpush1.msra.mxu0 0.0
  %2554 = vmatprep.subr.mxu0 0.0
  %2555 = vmatpush1.msra.mxu0 0.0
  %2556 = vmatprep.subr.mxu0 0.0
  %2557 = vmatpush1.msra.mxu0 0.0
  %2558 = vmatprep.mubr.f32.mxu0 0.0
  %2559 = vmatmul.mubr.f32.gmra.mrb[0].mxu0 %v2334
  %v2560 = vpop.f32.mrb[0].mxu0
  %v2561 = vadd.f32 0.0, %v2560
  %v2562 = vpop.f32.mrb[0].mxu0
  %2563 = vmatprep.mubr.f32.mxu0 0.0
  %2564 = vmatmul.mubr.f32.gmra.mrb[0].mxu0 %v2337
  %v2565 = vpop.f32.mrb[0].mxu0
  %v2566 = vadd.f32 0.0, %v2565
  %v2567 = vpop.f32.mrb[0].mxu0
  %2568 = vmatprep.mubr.f32.mxu0 0.0
  %2569 = vmatmul.mubr.f32.gmra.mrb[0].mxu0 %v2340
  %v2570 = vpop.f32.mrb[0].mxu0
  %v2571 = vadd.f32 0.0, %v2570
  %v2572 = vpop.f32.mrb[0].mxu0
  %2573 = vmatprep.mubr.f32.mxu0 0.0
  %2574 = vmatmul.mubr.f32.gmra.mrb[0].mxu0 %v2343
  %v2575 = vpop.f32.mrb[0].mxu0
  %v2576 = vadd.f32 0.0, %v2575
  %v2577 = vpop.f32.mrb[0].mxu0
  %2578 = vmatprep.mubr.f32.mxu0 0.0
  %2579 = vmatmul.mubr.f32.gmra.mrb[0].mxu0 %v2346
  %v2580 = vpop.f32.mrb[0].mxu0
  %v2581 = vadd.f32 0.0, %v2580
  %v2582 = vpop.f32.mrb[0].mxu0
  %2583 = vmatprep.mubr.f32.mxu0 0.0
  %2584 = vmatmul.mubr.f32.gmra.mrb[0].mxu0 %v2349
  %v2585 = vpop.f32.mrb[0].mxu0
  %v2586 = vadd.f32 0.0, %v2585
  %v2587 = vpop.f32.mrb[0].mxu0
  %2588 = vmatprep.mubr.f32.mxu0 0.0
  %2589 = vmatmul.mubr.f32.gmra.mrb[0].mxu0 %v2352
  %v2590 = vpop.f32.mrb[0].mxu0
  %v2591 = vadd.f32 0.0, %v2590
  %v2592 = vpop.f32.mrb[0].mxu0
  %2593 = vmatprep.mubr.f32.mxu0 0.0
  %2594 = vmatmul.mubr.f32.gmra.mrb[0].mxu0 %v2355
  %v2595 = vpop.f32.mrb[0].mxu0
  %v2596 = vadd.f32 0.0, %v2595
  %v2597 = vpop.f32.mrb[0].mxu0
  %2598 = vmatprep.mubr.f32.mxu0 0.0
  %2599 = vmatmul.mubr.f32.gmra.mrb[0].mxu0 %v2358
  %v2600 = vpop.f32.mrb[0].mxu0
  %v2601 = vadd.f32 0.0, %v2600
  %v2602 = vpop.f32.mrb[0].mxu0
  %2603 = vmatprep.mubr.f32.mxu0 0.0
  %2604 = vmatmul.mubr.f32.gmra.mrb[0].mxu0 %v2361
  %v2605 = vpop.f32.mrb[0].mxu0
  %v2606 = vadd.f32 0.0, %v2605
  %v2607 = vpop.f32.mrb[0].mxu0
  %2608 = vmatprep.mubr.f32.mxu0 0.0
  %2609 = vmatmul.mubr.f32.gmra.mrb[0].mxu0 %v2364
  %v2610 = vpop.f32.mrb[0].mxu0
  %v2611 = vadd.f32 0.0, %v2610
  %v2612 = vpop.f32.mrb[0].mxu0
  %2613 = vmatprep.mubr.f32.mxu0 0.0
  %2614 = vmatmul.mubr.f32.gmra.mrb[0].mxu0 %v2367
  %v2615 = vpop.f32.mrb[0].mxu0
  %v2616 = vadd.f32 0.0, %v2615
  %v2617 = vpop.f32.mrb[0].mxu0
  %2618 = vdwg.mxu0
  %v2619 = vlaneseq
  %v2620 = vshrl.u32 %v2619, 7
  %v2621 = vmul.u32 %v2620, 7
  %v2622 = vsub.s32 %v1174, %v2621
  %vm2623 = vcmp.eq.s32.totalorder %v2622, 0
  %v2624 = vsel %vm2623, 1.0, 0.0
  %vm2625 = vcmp.eq.s32.totalorder %v2622, 1
  %v2626 = vsel %vm2625, 1.0, 0.0
  %v2628 = vsel %vm1966, %v2456, 0
  %v2631 = vsel %vm1966, %v2461, 0
  %v2634 = vsel %vm1966, %v2466, 0
  %v2637 = vsel %vm1966, %v2471, 0
  %v2640 = vsel %vm1966, %v2581, 0
  %v2643 = vsel %vm1966, %v2586, 0
  %v2646 = vsel %vm1966, %v2591, 0
  %v2649 = vsel %vm1966, %v2596, 0
  %vm2651 = vcmask 1044480
  %v2653 = vsel %vm2651, %v2626, 0
  %2655 = vmatprep.subr.mxu0 0.0
  %2656 = vmatpush1.msra.mxu0 %v2653
  %2657 = vmatprep.subr.mxu0 0.0
  %2658 = vmatpush1.msra.mxu0 0.0
  %2659 = vmatprep.subr.mxu0 0.0
  %2660 = vmatpush1.msra.mxu0 0.0
  %2661 = vmatprep.subr.mxu0 0.0
  %2662 = vmatpush1.msra.mxu0 0.0
  %2663 = vmatprep.subr.mxu0 0.0
  %2664 = vmatpush1.msra.mxu0 0.0
  %2665 = vmatprep.subr.mxu0 0.0
  %2666 = vmatpush1.msra.mxu0 0.0
  %2667 = vmatprep.subr.mxu0 0.0
  %2668 = vmatpush1.msra.mxu0 0.0
  %2669 = vmatprep.subr.mxu0 0.0
  %2670 = vmatpush1.msra.mxu0 0.0
  %2671 = vmatprep.subr.mxu0 0.0
  %2672 = vmatpush1.msra.mxu0 0.0
  %2673 = vmatprep.subr.mxu0 0.0
  %2674 = vmatpush1.msra.mxu0 0.0
  %2675 = vmatprep.subr.mxu0 0.0
  %2676 = vmatpush1.msra.mxu0 0.0
  %2677 = vmatprep.subr.mxu0 0.0
  %2678 = vmatpush1.msra.mxu0 0.0
  %2679 = vmatprep.subr.mxu0 0.0
  %2680 = vmatpush1.msra.mxu0 0.0
  %2681 = vmatprep.subr.mxu0 0.0
  %2682 = vmatpush1.msra.mxu0 0.0
  %2683 = vmatprep.subr.mxu0 0.0
  %2684 = vmatpush1.msra.mxu0 0.0
  %2685 = vmatprep.subr.mxu0 0.0
  %2686 = vmatpush1.msra.mxu0 0.0
  %2687 = vmatprep.subr.mxu0 0.0
  %2688 = vmatpush1.msra.mxu0 0.0
  %2689 = vmatprep.subr.mxu0 0.0
  %2690 = vmatpush1.msra.mxu0 0.0
  %2691 = vmatprep.subr.mxu0 0.0
  %2692 = vmatpush1.msra.mxu0 0.0
  %2693 = vmatprep.subr.mxu0 0.0
  %2694 = vmatpush1.msra.mxu0 0.0
  %2695 = vmatprep.subr.mxu0 0.0
  %2696 = vmatpush1.msra.mxu0 0.0
  %2697 = vmatprep.subr.mxu0 0.0
  %2698 = vmatpush1.msra.mxu0 0.0
  %2699 = vmatprep.subr.mxu0 0.0
  %2700 = vmatpush1.msra.mxu0 0.0
  %2701 = vmatprep.subr.mxu0 0.0
  %2702 = vmatpush1.msra.mxu0 0.0
  %2703 = vmatprep.subr.mxu0 0.0
  %2704 = vmatpush1.msra.mxu0 0.0
  %2705 = vmatprep.subr.mxu0 0.0
  %2706 = vmatpush1.msra.mxu0 0.0
  %2707 = vmatprep.subr.mxu0 0.0
  %2708 = vmatpush1.msra.mxu0 0.0
  %2709 = vmatprep.subr.mxu0 0.0
  %2710 = vmatpush1.msra.mxu0 0.0
  %2711 = vmatprep.subr.mxu0 0.0
  %2712 = vmatpush1.msra.mxu0 0.0
  %2713 = vmatprep.subr.mxu0 0.0
  %2714 = vmatpush1.msra.mxu0 0.0
  %2715 = vmatprep.subr.mxu0 0.0
  %2716 = vmatpush1.msra.mxu0 0.0
  %2717 = vmatprep.subr.mxu0 0.0
  %2718 = vmatpush1.msra.mxu0 0.0
  %2719 = vmatprep.mubr.f32.mxu0 0.0
  %2720 = vmatmul.mubr.f32.gmra.mrb[0].mxu0 %v2628
  %v2721 = vpop.f32.mrb[0].mxu0
  %v2722 = vadd.f32 0.0, %v2721
  %v2723 = vpop.f32.mrb[0].mxu0
  %2724 = vmatprep.mubr.f32.mxu0 0.0
  %2725 = vmatmul.mubr.f32.gmra.mrb[0].mxu0 %v2631
  %v2726 = vpop.f32.mrb[0].mxu0
  %v2727 = vadd.f32 0.0, %v2726
  %v2728 = vpop.f32.mrb[0].mxu0
  %2729 = vmatprep.mubr.f32.mxu0 0.0
  %2730 = vmatmul.mubr.f32.gmra.mrb[0].mxu0 %v2634
  %v2731 = vpop.f32.mrb[0].mxu0
  %v2732 = vadd.f32 0.0, %v2731
  %v2733 = vpop.f32.mrb[0].mxu0
  %2734 = vmatprep.mubr.f32.mxu0 0.0
  %2735 = vmatmul.mubr.f32.gmra.mrb[0].mxu0 %v2637
  %v2736 = vpop.f32.mrb[0].mxu0
  %v2737 = vadd.f32 0.0, %v2736
  %v2738 = vpop.f32.mrb[0].mxu0
  %2739 = vmatprep.mubr.f32.mxu0 0.0
  %2740 = vmatmul.mubr.f32.gmra.mrb[0].mxu0 %v2640
  %v2741 = vpop.f32.mrb[0].mxu0
  %v2742 = vadd.f32 0.0, %v2741
  %v2743 = vpop.f32.mrb[0].mxu0
  %2744 = vmatprep.mubr.f32.mxu0 0.0
  %2745 = vmatmul.mubr.f32.gmra.mrb[0].mxu0 %v2643
  %v2746 = vpop.f32.mrb[0].mxu0
  %v2747 = vadd.f32 0.0, %v2746
  %v2748 = vpop.f32.mrb[0].mxu0
  %2749 = vmatprep.mubr.f32.mxu0 0.0
  %2750 = vmatmul.mubr.f32.gmra.mrb[0].mxu0 %v2646
  %v2751 = vpop.f32.mrb[0].mxu0
  %v2752 = vadd.f32 0.0, %v2751
  %v2753 = vpop.f32.mrb[0].mxu0
  %2754 = vmatprep.mubr.f32.mxu0 0.0
  %2755 = vmatmul.mubr.f32.gmra.mrb[0].mxu0 %v2649
  %v2756 = vpop.f32.mrb[0].mxu0
  %v2757 = vadd.f32 0.0, %v2756
  %v2758 = vpop.f32.mrb[0].mxu0
  %2759 = vdwg.mxu0
  %v2761 = vsel %vm1966, %v2436, 0
  %v2764 = vsel %vm1966, %v2441, 0
  %v2767 = vsel %vm1966, %v2446, 0
  %v2770 = vsel %vm1966, %v2451, 0
  %v2773 = vsel %vm1966, %v2561, 0
  %v2776 = vsel %vm1966, %v2566, 0
  %v2779 = vsel %vm1966, %v2571, 0
  %v2782 = vsel %vm1966, %v2576, 0
  %v2785 = vsel %vm2651, %v2624, 0
  %2787 = vmatprep.subr.mxu0 0.0
  %2788 = vmatpush1.msra.mxu0 %v2785
  %2789 = vmatprep.subr.mxu0 0.0
  %2790 = vmatpush1.msra.mxu0 0.0
  %2791 = vmatprep.subr.mxu0 0.0
  %2792 = vmatpush1.msra.mxu0 0.0
  %2793 = vmatprep.subr.mxu0 0.0
  %2794 = vmatpush1.msra.mxu0 0.0
  %2795 = vmatprep.subr.mxu0 0.0
  %2796 = vmatpush1.msra.mxu0 0.0
  %2797 = vmatprep.subr.mxu0 0.0
  %2798 = vmatpush1.msra.mxu0 0.0
  %2799 = vmatprep.subr.mxu0 0.0
  %2800 = vmatpush1.msra.mxu0 0.0
  %2801 = vmatprep.subr.mxu0 0.0
  %2802 = vmatpush1.msra.mxu0 0.0
  %2803 = vmatprep.subr.mxu0 0.0
  %2804 = vmatpush1.msra.mxu0 0.0
  %2805 = vmatprep.subr.mxu0 0.0
  %2806 = vmatpush1.msra.mxu0 0.0
  %2807 = vmatprep.subr.mxu0 0.0
  %2808 = vmatpush1.msra.mxu0 0.0
  %2809 = vmatprep.subr.mxu0 0.0
  %2810 = vmatpush1.msra.mxu0 0.0
  %2811 = vmatprep.subr.mxu0 0.0
  %2812 = vmatpush1.msra.mxu0 0.0
  %2813 = vmatprep.subr.mxu0 0.0
  %2814 = vmatpush1.msra.mxu0 0.0
  %2815 = vmatprep.subr.mxu0 0.0
  %2816 = vmatpush1.msra.mxu0 0.0
  %2817 = vmatprep.subr.mxu0 0.0
  %2818 = vmatpush1.msra.mxu0 0.0
  %2819 = vmatprep.subr.mxu0 0.0
  %2820 = vmatpush1.msra.mxu0 0.0
  %2821 = vmatprep.subr.mxu0 0.0
  %2822 = vmatpush1.msra.mxu0 0.0
  %2823 = vmatprep.subr.mxu0 0.0
  %2824 = vmatpush1.msra.mxu0 0.0
  %2825 = vmatprep.subr.mxu0 0.0
  %2826 = vmatpush1.msra.mxu0 0.0
  %2827 = vmatprep.subr.mxu0 0.0
  %2828 = vmatpush1.msra.mxu0 0.0
  %2829 = vmatprep.subr.mxu0 0.0
  %2830 = vmatpush1.msra.mxu0 0.0
  %2831 = vmatprep.subr.mxu0 0.0
  %2832 = vmatpush1.msra.mxu0 0.0
  %2833 = vmatprep.subr.mxu0 0.0
  %2834 = vmatpush1.msra.mxu0 0.0
  %2835 = vmatprep.subr.mxu0 0.0
  %2836 = vmatpush1.msra.mxu0 0.0
  %2837 = vmatprep.subr.mxu0 0.0
  %2838 = vmatpush1.msra.mxu0 0.0
  %2839 = vmatprep.subr.mxu0 0.0
  %2840 = vmatpush1.msra.mxu0 0.0
  %2841 = vmatprep.subr.mxu0 0.0
  %2842 = vmatpush1.msra.mxu0 0.0
  %2843 = vmatprep.subr.mxu0 0.0
  %2844 = vmatpush1.msra.mxu0 0.0
  %2845 = vmatprep.subr.mxu0 0.0
  %2846 = vmatpush1.msra.mxu0 0.0
  %2847 = vmatprep.subr.mxu0 0.0
  %2848 = vmatpush1.msra.mxu0 0.0
  %2849 = vmatprep.subr.mxu0 0.0
  %2850 = vmatpush1.msra.mxu0 0.0
  %2851 = vmatprep.mubr.f32.mxu0 0.0
  %2852 = vmatmul.mubr.f32.gmra.mrb[0].mxu0 %v2761
  %v2853 = vpop.f32.mrb[0].mxu0
  %v2854 = vadd.f32 %v2722, %v2853
  %v2855 = vpop.f32.mrb[0].mxu0
  %2856 = vmatprep.mubr.f32.mxu0 0.0
  %2857 = vmatmul.mubr.f32.gmra.mrb[0].mxu0 %v2764
  %v2858 = vpop.f32.mrb[0].mxu0
  %v2859 = vadd.f32 %v2727, %v2858
  %v2860 = vpop.f32.mrb[0].mxu0
  %2861 = vmatprep.mubr.f32.mxu0 0.0
  %2862 = vmatmul.mubr.f32.gmra.mrb[0].mxu0 %v2767
  %v2863 = vpop.f32.mrb[0].mxu0
  %v2864 = vadd.f32 %v2732, %v2863
  %v2865 = vpop.f32.mrb[0].mxu0
  %2866 = vmatprep.mubr.f32.mxu0 0.0
  %2867 = vmatmul.mubr.f32.gmra.mrb[0].mxu0 %v2770
  %v2868 = vpop.f32.mrb[0].mxu0
  %v2869 = vadd.f32 %v2737, %v2868
  %v2870 = vpop.f32.mrb[0].mxu0
  %2871 = vmatprep.mubr.f32.mxu0 0.0
  %2872 = vmatmul.mubr.f32.gmra.mrb[0].mxu0 %v2773
  %v2873 = vpop.f32.mrb[0].mxu0
  %v2874 = vadd.f32 %v2742, %v2873
  %v2875 = vpop.f32.mrb[0].mxu0
  %2876 = vmatprep.mubr.f32.mxu0 0.0
  %2877 = vmatmul.mubr.f32.gmra.mrb[0].mxu0 %v2776
  %v2878 = vpop.f32.mrb[0].mxu0
  %v2879 = vadd.f32 %v2747, %v2878
  %v2880 = vpop.f32.mrb[0].mxu0
  %2881 = vmatprep.mubr.f32.mxu0 0.0
  %2882 = vmatmul.mubr.f32.gmra.mrb[0].mxu0 %v2779
  %v2883 = vpop.f32.mrb[0].mxu0
  %v2884 = vadd.f32 %v2752, %v2883
  %v2885 = vpop.f32.mrb[0].mxu0
  %2886 = vmatprep.mubr.f32.mxu0 0.0
  %2887 = vmatmul.mubr.f32.gmra.mrb[0].mxu0 %v2782
  %v2888 = vpop.f32.mrb[0].mxu0
  %v2889 = vadd.f32 %v2757, %v2888
  %v2890 = vpop.f32.mrb[0].mxu0
  %2891 = vdwg.mxu0
  %vm2892 = vcmp.eq.s32.totalorder %v2622, 2
  %v2893 = vsel %vm2892, 1.0, 0.0
  %v2895 = vsel %vm1966, %v2476, 0
  %v2898 = vsel %vm1966, %v2481, 0
  %v2901 = vsel %vm1966, %v2486, 0
  %v2904 = vsel %vm1966, %v2491, 0
  %v2907 = vsel %vm1966, %v2601, 0
  %v2910 = vsel %vm1966, %v2606, 0
  %v2913 = vsel %vm1966, %v2611, 0
  %v2916 = vsel %vm1966, %v2616, 0
  %v2919 = vsel %vm2651, %v2893, 0
  %2921 = vmatprep.subr.mxu0 0.0
  %2922 = vmatpush1.msra.mxu0 %v2919
  %2923 = vmatprep.subr.mxu0 0.0
  %2924 = vmatpush1.msra.mxu0 0.0
  %2925 = vmatprep.subr.mxu0 0.0
  %2926 = vmatpush1.msra.mxu0 0.0
  %2927 = vmatprep.subr.mxu0 0.0
  %2928 = vmatpush1.msra.mxu0 0.0
  %2929 = vmatprep.subr.mxu0 0.0
  %2930 = vmatpush1.msra.mxu0 0.0
  %2931 = vmatprep.subr.mxu0 0.0
  %2932 = vmatpush1.msra.mxu0 0.0
  %2933 = vmatprep.subr.mxu0 0.0
  %2934 = vmatpush1.msra.mxu0 0.0
  %2935 = vmatprep.subr.mxu0 0.0
  %2936 = vmatpush1.msra.mxu0 0.0
  %2937 = vmatprep.subr.mxu0 0.0
  %2938 = vmatpush1.msra.mxu0 0.0
  %2939 = vmatprep.subr.mxu0 0.0
  %2940 = vmatpush1.msra.mxu0 0.0
  %2941 = vmatprep.subr.mxu0 0.0
  %2942 = vmatpush1.msra.mxu0 0.0
  %2943 = vmatprep.subr.mxu0 0.0
  %2944 = vmatpush1.msra.mxu0 0.0
  %2945 = vmatprep.subr.mxu0 0.0
  %2946 = vmatpush1.msra.mxu0 0.0
  %2947 = vmatprep.subr.mxu0 0.0
  %2948 = vmatpush1.msra.mxu0 0.0
  %2949 = vmatprep.subr.mxu0 0.0
  %2950 = vmatpush1.msra.mxu0 0.0
  %2951 = vmatprep.subr.mxu0 0.0
  %2952 = vmatpush1.msra.mxu0 0.0
  %2953 = vmatprep.subr.mxu0 0.0
  %2954 = vmatpush1.msra.mxu0 0.0
  %2955 = vmatprep.subr.mxu0 0.0
  %2956 = vmatpush1.msra.mxu0 0.0
  %2957 = vmatprep.subr.mxu0 0.0
  %2958 = vmatpush1.msra.mxu0 0.0
  %2959 = vmatprep.subr.mxu0 0.0
  %2960 = vmatpush1.msra.mxu0 0.0
  %2961 = vmatprep.subr.mxu0 0.0
  %2962 = vmatpush1.msra.mxu0 0.0
  %2963 = vmatprep.subr.mxu0 0.0
  %2964 = vmatpush1.msra.mxu0 0.0
  %2965 = vmatprep.subr.mxu0 0.0
  %2966 = vmatpush1.msra.mxu0 0.0
  %2967 = vmatprep.subr.mxu0 0.0
  %2968 = vmatpush1.msra.mxu0 0.0
  %2969 = vmatprep.subr.mxu0 0.0
  %2970 = vmatpush1.msra.mxu0 0.0
  %2971 = vmatprep.subr.mxu0 0.0
  %2972 = vmatpush1.msra.mxu0 0.0
  %2973 = vmatprep.subr.mxu0 0.0
  %2974 = vmatpush1.msra.mxu0 0.0
  %2975 = vmatprep.subr.mxu0 0.0
  %2976 = vmatpush1.msra.mxu0 0.0
  %2977 = vmatprep.subr.mxu0 0.0
  %2978 = vmatpush1.msra.mxu0 0.0
  %2979 = vmatprep.subr.mxu0 0.0
  %2980 = vmatpush1.msra.mxu0 0.0
  %2981 = vmatprep.subr.mxu0 0.0
  %2982 = vmatpush1.msra.mxu0 0.0
  %2983 = vmatprep.subr.mxu0 0.0
  %2984 = vmatpush1.msra.mxu0 0.0
  %2985 = vmatprep.mubr.f32.mxu0 0.0
  %2986 = vmatmul.mubr.f32.gmra.mrb[0].mxu0 %v2895
  %v2987 = vpop.f32.mrb[0].mxu0
  %v2988 = vadd.f32 0.0, %v2987
  %v2989 = vpop.f32.mrb[0].mxu0
  %2990 = vmatprep.mubr.f32.mxu0 0.0
  %2991 = vmatmul.mubr.f32.gmra.mrb[0].mxu0 %v2898
  %v2992 = vpop.f32.mrb[0].mxu0
  %v2993 = vadd.f32 0.0, %v2992
  %v2994 = vpop.f32.mrb[0].mxu0
  %2995 = vmatprep.mubr.f32.mxu0 0.0
  %2996 = vmatmul.mubr.f32.gmra.mrb[0].mxu0 %v2901
  %v2997 = vpop.f32.mrb[0].mxu0
  %v2998 = vadd.f32 0.0, %v2997
  %v2999 = vpop.f32.mrb[0].mxu0
  %3000 = vmatprep.mubr.f32.mxu0 0.0
  %3001 = vmatmul.mubr.f32.gmra.mrb[0].mxu0 %v2904
  %v3002 = vpop.f32.mrb[0].mxu0
  %v3003 = vadd.f32 0.0, %v3002
  %v3004 = vpop.f32.mrb[0].mxu0
  %3005 = vmatprep.mubr.f32.mxu0 0.0
  %3006 = vmatmul.mubr.f32.gmra.mrb[0].mxu0 %v2907
  %v3007 = vpop.f32.mrb[0].mxu0
  %v3008 = vadd.f32 0.0, %v3007
  %v3009 = vpop.f32.mrb[0].mxu0
  %3010 = vmatprep.mubr.f32.mxu0 0.0
  %3011 = vmatmul.mubr.f32.gmra.mrb[0].mxu0 %v2910
  %v3012 = vpop.f32.mrb[0].mxu0
  %v3013 = vadd.f32 0.0, %v3012
  %v3014 = vpop.f32.mrb[0].mxu0
  %3015 = vmatprep.mubr.f32.mxu0 0.0
  %3016 = vmatmul.mubr.f32.gmra.mrb[0].mxu0 %v2913
  %v3017 = vpop.f32.mrb[0].mxu0
  %v3018 = vadd.f32 0.0, %v3017
  %v3019 = vpop.f32.mrb[0].mxu0
  %3020 = vmatprep.mubr.f32.mxu0 0.0
  %3021 = vmatmul.mubr.f32.gmra.mrb[0].mxu0 %v2916
  %v3022 = vpop.f32.mrb[0].mxu0
  %v3023 = vadd.f32 0.0, %v3022
  %v3024 = vpop.f32.mrb[0].mxu0
  %3025 = vdwg.mxu0
  %v3026 = vadd.f32 %v2854, %v2988
  %v3027 = vadd.f32 %v2859, %v2993
  %v3028 = vadd.f32 %v2864, %v2998
  %v3029 = vadd.f32 %v2869, %v3003
  %v3030 = vadd.f32 %v2874, %v3008
  %v3031 = vadd.f32 %v2879, %v3013
  %v3032 = vadd.f32 %v2884, %v3018
  %v3033 = vadd.f32 %v2889, %v3023
  %v3034 = vld [vmem:[%s8] sm:$0xff]
  %v3035 = vld [vmem:[%s8 + $0x8] sm:$0xff]
  %v3036 = vld [vmem:[%s8 + $0x10] sm:$0xff]
  %v3037 = vld [vmem:[%s8 + $0x18] sm:$0xff]
  %v3038 = vld [vmem:[%s9] sm:$0xff]
  %v3039 = vld [vmem:[%s9 + $0x8] sm:$0xff]
  %v3040 = vld [vmem:[%s9 + $0x10] sm:$0xff]
  %v3041 = vld [vmem:[%s9 + $0x18] sm:$0xff]
  %v3042 = vld [vmem:[%s10] sm:$0xff]
  %v3043 = vld [vmem:[%s10 + $0x8] sm:$0xff]
  %v3044 = vld [vmem:[%s10 + $0x10] sm:$0xff]
  %v3045 = vld [vmem:[%s10 + $0x18] sm:$0xff]
  %3047 = vset.pattern.permute.xlu0 0
  %3048 = vperm.xlu0 %3047, %v3034
  %v3049 = vpop.permute.xlu0 %3048
  %3052 = vset.pattern.permute.xlu0 0
  %3053 = vperm.xlu0 %3052, %v3035
  %v3054 = vpop.permute.xlu0 %3053
  %3057 = vset.pattern.permute.xlu0 0
  %3058 = vperm.xlu0 %3057, %v3036
  %v3059 = vpop.permute.xlu0 %3058
  %3062 = vset.pattern.permute.xlu0 0
  %3063 = vperm.xlu0 %3062, %v3037
  %v3064 = vpop.permute.xlu0 %3063
  %v3066 = vadd.f32 %v3026, %v3049
  %v3067 = vadd.f32 %v3027, %v3054
  %v3068 = vadd.f32 %v3028, %v3059
  %v3069 = vadd.f32 %v3029, %v3064
  %v3070 = vadd.f32 %v3030, %v3049
  %v3071 = vadd.f32 %v3031, %v3054
  %v3072 = vadd.f32 %v3032, %v3059
  %v3073 = vadd.f32 %v3033, %v3064
  %vm3074 = vcmask 252928
  %v3075 = vsel %vm3074, %v3066, 0.0
  %3076 = vadd.xlane.f32.xlu0 %v3075
  %v3077 = vpop.xlane.xlu0 %3076
  %v3078 = vsel %vm3074, %v3067, 0.0
  %3079 = vadd.xlane.f32.xlu0 %v3078
  %v3080 = vpop.xlane.xlu0 %3079
  %v3081 = vsel %vm3074, %v3068, 0.0
  %3082 = vadd.xlane.f32.xlu0 %v3081
  %v3083 = vpop.xlane.xlu0 %3082
  %v3084 = vsel %vm3074, %v3069, 0.0
  %3085 = vadd.xlane.f32.xlu0 %v3084
  %v3086 = vpop.xlane.xlu0 %3085
  %v3087 = vsel %vm3074, %v3070, 0.0
  %3088 = vadd.xlane.f32.xlu0 %v3087
  %v3089 = vpop.xlane.xlu0 %3088
  %v3090 = vsel %vm3074, %v3071, 0.0
  %3091 = vadd.xlane.f32.xlu0 %v3090
  %v3092 = vpop.xlane.xlu0 %3091
  %v3093 = vsel %vm3074, %v3072, 0.0
  %3094 = vadd.xlane.f32.xlu0 %v3093
  %v3095 = vpop.xlane.xlu0 %3094
  %v3096 = vsel %vm3074, %v3073, 0.0
  %3097 = vadd.xlane.f32.xlu0 %v3096
  %v3098 = vpop.xlane.xlu0 %3097
  %v3099 = vmul.f32 %v3066, %v3066
  %v3100 = vmul.f32 %v3067, %v3067
  %v3101 = vmul.f32 %v3068, %v3068
  %v3102 = vmul.f32 %v3069, %v3069
  %v3103 = vmul.f32 %v3070, %v3070
  %v3104 = vmul.f32 %v3071, %v3071
  %v3105 = vmul.f32 %v3072, %v3072
  %v3106 = vmul.f32 %v3073, %v3073
  %v3107 = vsel %vm3074, %v3099, 0.0
  %3108 = vadd.xlane.f32.xlu0 %v3107
  %v3109 = vpop.xlane.xlu0 %3108
  %v3110 = vsel %vm3074, %v3100, 0.0
  %3111 = vadd.xlane.f32.xlu0 %v3110
  %v3112 = vpop.xlane.xlu0 %3111
  %v3113 = vsel %vm3074, %v3101, 0.0
  %3114 = vadd.xlane.f32.xlu0 %v3113
  %v3115 = vpop.xlane.xlu0 %3114
  %v3116 = vsel %vm3074, %v3102, 0.0
  %3117 = vadd.xlane.f32.xlu0 %v3116
  %v3118 = vpop.xlane.xlu0 %3117
  %v3119 = vsel %vm3074, %v3103, 0.0
  %3120 = vadd.xlane.f32.xlu0 %v3119
  %v3121 = vpop.xlane.xlu0 %3120
  %v3122 = vsel %vm3074, %v3104, 0.0
  %3123 = vadd.xlane.f32.xlu0 %v3122
  %v3124 = vpop.xlane.xlu0 %3123
  %v3125 = vsel %vm3074, %v3105, 0.0
  %3126 = vadd.xlane.f32.xlu0 %v3125
  %v3127 = vpop.xlane.xlu0 %3126
  %v3128 = vsel %vm3074, %v3106, 0.0
  %3129 = vadd.xlane.f32.xlu0 %v3128
  %v3130 = vpop.xlane.xlu0 %3129
  %v3131 = vadd.f32 %v3077, 0.0
  %v3132 = vadd.f32 %v3080, 0.0
  %v3133 = vadd.f32 %v3083, 0.0
  %v3134 = vadd.f32 %v3086, 0.0
  %v3135 = vadd.f32 %v3131, %v3089
  %v3136 = vadd.f32 %v3132, %v3092
  %v3137 = vadd.f32 %v3133, %v3095
  %v3138 = vadd.f32 %v3134, %v3098
  %v3139 = vadd.f32 %v3109, 0.0
  %v3140 = vadd.f32 %v3112, 0.0
  %v3141 = vadd.f32 %v3115, 0.0
  %v3142 = vadd.f32 %v3118, 0.0
  %v3143 = vadd.f32 %v3139, %v3121
  %v3144 = vadd.f32 %v3140, %v3124
  %v3145 = vadd.f32 %v3141, %v3127
  %v3146 = vadd.f32 %v3142, %v3130
  %v3147 = vrcp.pop 62.0
  %v3148 = vmul.f32 %v3135, %v3147
  %v3149 = vmul.f32 %v3136, %v3147
  %v3150 = vmul.f32 %v3137, %v3147
  %v3151 = vmul.f32 %v3138, %v3147
  %v3152 = vmul.f32 %v3143, %v3147
  %v3153 = vmul.f32 %v3144, %v3147
  %v3154 = vmul.f32 %v3145, %v3147
  %v3155 = vmul.f32 %v3146, %v3147
  %v3156 = vmul.f32 %v3148, %v3148
  %v3157 = vmul.f32 %v3149, %v3149
  %v3158 = vmul.f32 %v3150, %v3150
  %v3159 = vmul.f32 %v3151, %v3151
  %v3160 = vsub.f32 %v3152, %v3156
  %v3161 = vsub.f32 %v3153, %v3157
  %v3162 = vsub.f32 %v3154, %v3158
  %v3163 = vsub.f32 %v3155, %v3159
  %v3164 = vmax.f32 %v3160, 0.0
  %v3165 = vmax.f32 %v3161, 0.0
  %v3166 = vmax.f32 %v3162, 0.0
  %v3167 = vmax.f32 %v3163, 0.0
  %v3168 = vadd.f32 %v3164, 1e-05
  %v3169 = vadd.f32 %v3165, 1e-05
  %v3170 = vadd.f32 %v3166, 1e-05
  %v3171 = vadd.f32 %v3167, 1e-05
  %v3172 = vrsqrt.pop %v3168
  %v3173 = vrsqrt.pop %v3169
  %v3174 = vrsqrt.pop %v3170
  %v3175 = vrsqrt.pop %v3171
  %v3176 = vmul.f32 %v3038, %v3172
  %v3177 = vmul.f32 %v3039, %v3173
  %v3178 = vmul.f32 %v3040, %v3174
  %v3179 = vmul.f32 %v3041, %v3175
  %v3180 = vmul.f32 %v3148, %v3176
  %v3181 = vmul.f32 %v3149, %v3177
  %v3182 = vmul.f32 %v3150, %v3178
  %v3183 = vmul.f32 %v3151, %v3179
  %v3184 = vsub.f32 %v3042, %v3180
  %v3185 = vsub.f32 %v3043, %v3181
  %v3186 = vsub.f32 %v3044, %v3182
  %v3187 = vsub.f32 %v3045, %v3183
  %3189 = vset.pattern.permute.xlu0 0
  %3190 = vperm.xlu0 %3189, %v3176
  %v3191 = vpop.permute.xlu0 %3190
  %3194 = vset.pattern.permute.xlu0 0
  %3195 = vperm.xlu0 %3194, %v3177
  %v3196 = vpop.permute.xlu0 %3195
  %3199 = vset.pattern.permute.xlu0 0
  %3200 = vperm.xlu0 %3199, %v3178
  %v3201 = vpop.permute.xlu0 %3200
  %3204 = vset.pattern.permute.xlu0 0
  %3205 = vperm.xlu0 %3204, %v3179
  %v3206 = vpop.permute.xlu0 %3205
  %v3208 = vmul.f32 %v3066, %v3191
  %v3209 = vmul.f32 %v3067, %v3196
  %v3210 = vmul.f32 %v3068, %v3201
  %v3211 = vmul.f32 %v3069, %v3206
  %v3212 = vmul.f32 %v3070, %v3191
  %v3213 = vmul.f32 %v3071, %v3196
  %v3214 = vmul.f32 %v3072, %v3201
  %v3215 = vmul.f32 %v3073, %v3206
  %3217 = vset.pattern.permute.xlu0 0
  %3218 = vperm.xlu0 %3217, %v3184
  %v3219 = vpop.permute.xlu0 %3218
  %3222 = vset.pattern.permute.xlu0 0
  %3223 = vperm.xlu0 %3222, %v3185
  %v3224 = vpop.permute.xlu0 %3223
  %3227 = vset.pattern.permute.xlu0 0
  %3228 = vperm.xlu0 %3227, %v3186
  %v3229 = vpop.permute.xlu0 %3228
  %3232 = vset.pattern.permute.xlu0 0
  %3233 = vperm.xlu0 %3232, %v3187
  %v3234 = vpop.permute.xlu0 %3233
  %v3236 = vadd.f32 %v3208, %v3219
  %v3237 = vadd.f32 %v3209, %v3224
  %v3238 = vadd.f32 %v3210, %v3229
  %v3239 = vadd.f32 %v3211, %v3234
  %v3240 = vadd.f32 %v3212, %v3219
  %v3241 = vadd.f32 %v3213, %v3224
  %v3242 = vadd.f32 %v3214, %v3229
  %v3243 = vadd.f32 %v3215, %v3234
  %v3244 = vmax.f32 %v3236, 0.0
  %v3245 = vmax.f32 %v3237, 0.0
  %v3246 = vmax.f32 %v3238, 0.0
  %v3247 = vmax.f32 %v3239, 0.0
  %v3248 = vmax.f32 %v3240, 0.0
  %v3249 = vmax.f32 %v3241, 0.0
  %v3250 = vmax.f32 %v3242, 0.0
  %v3251 = vmax.f32 %v3243, 0.0
  %v3252 = vld [vmem:[%s11] sm:$0xff]
  %v3253 = vld [vmem:[%s11 + $0x8] sm:$0xff]
  %v3254 = vld [vmem:[%s11 + $0x10] sm:$0xff]
  %v3255 = vld [vmem:[%s11 + $0x18] sm:$0xff]
  %v3256 = vld [vmem:[%s11 + $0x20] sm:$0xff]
  %v3257 = vld [vmem:[%s11 + $0x28] sm:$0xff]
  %v3258 = vld [vmem:[%s11 + $0x30] sm:$0xff]
  %v3259 = vld [vmem:[%s11 + $0x38] sm:$0xff]
  %v3260 = vld [vmem:[%s11 + $0x40] sm:$0xff]
  %v3261 = vld [vmem:[%s11 + $0x48] sm:$0xff]
  %vm3262 = vcmask 261120
  %v3264 = vsel %vm3262, %v3252, 0
  %v3267 = vsel %vm3262, %v3253, 0
  %v3270 = vsel %vm3262, %v3254, 0
  %v3273 = vsel %vm3262, %v3255, 0
  %v3276 = vsel %vm3262, %v3256, 0
  %v3279 = vsel %vm3262, %v3257, 0
  %v3282 = vsel %vm3262, %v3258, 0
  %v3285 = vsel %vm3262, %v3259, 0
  %v3288 = vsel %vm3262, %v3260, 0
  %v3291 = vsel %vm3262, %v3261, 0
  %3293 = vmatprep.subr.mxu0 0.0
  %3294 = vmatpush1.msra.mxu0 %v3244
  %3295 = vmatprep.subr.mxu0 0.0
  %3296 = vmatpush1.msra.mxu0 %v3245
  %3297 = vmatprep.subr.mxu0 0.0
  %3298 = vmatpush1.msra.mxu0 %v3246
  %3299 = vmatprep.subr.mxu0 0.0
  %3300 = vmatpush1.msra.mxu0 %v3247
  %3301 = vmatprep.subr.mxu0 0.0
  %3302 = vmatpush1.msra.mxu0 0.0
  %3303 = vmatprep.subr.mxu0 0.0
  %3304 = vmatpush1.msra.mxu0 0.0
  %3305 = vmatprep.subr.mxu0 0.0
  %3306 = vmatpush1.msra.mxu0 0.0
  %3307 = vmatprep.subr.mxu0 0.0
  %3308 = vmatpush1.msra.mxu0 0.0
  %3309 = vmatprep.subr.mxu0 0.0
  %3310 = vmatpush1.msra.mxu0 0.0
  %3311 = vmatprep.subr.mxu0 0.0
  %3312 = vmatpush1.msra.mxu0 0.0
  %3313 = vmatprep.subr.mxu0 0.0
  %3314 = vmatpush1.msra.mxu0 0.0
  %3315 = vmatprep.subr.mxu0 0.0
  %3316 = vmatpush1.msra.mxu0 0.0
  %3317 = vmatprep.subr.mxu0 0.0
  %3318 = vmatpush1.msra.mxu0 0.0
  %3319 = vmatprep.subr.mxu0 0.0
  %3320 = vmatpush1.msra.mxu0 0.0
  %3321 = vmatprep.subr.mxu0 0.0
  %3322 = vmatpush1.msra.mxu0 0.0
  %3323 = vmatprep.subr.mxu0 0.0
  %3324 = vmatpush1.msra.mxu0 0.0
  %3325 = vmatprep.subr.mxu0 0.0
  %3326 = vmatpush1.msra.mxu0 0.0
  %3327 = vmatprep.subr.mxu0 0.0
  %3328 = vmatpush1.msra.mxu0 0.0
  %3329 = vmatprep.subr.mxu0 0.0
  %3330 = vmatpush1.msra.mxu0 0.0
  %3331 = vmatprep.subr.mxu0 0.0
  %3332 = vmatpush1.msra.mxu0 0.0
  %3333 = vmatprep.subr.mxu0 0.0
  %3334 = vmatpush1.msra.mxu0 0.0
  %3335 = vmatprep.subr.mxu0 0.0
  %3336 = vmatpush1.msra.mxu0 0.0
  %3337 = vmatprep.subr.mxu0 0.0
  %3338 = vmatpush1.msra.mxu0 0.0
  %3339 = vmatprep.subr.mxu0 0.0
  %3340 = vmatpush1.msra.mxu0 0.0
  %3341 = vmatprep.subr.mxu0 0.0
  %3342 = vmatpush1.msra.mxu0 0.0
  %3343 = vmatprep.subr.mxu0 0.0
  %3344 = vmatpush1.msra.mxu0 0.0
  %3345 = vmatprep.subr.mxu0 0.0
  %3346 = vmatpush1.msra.mxu0 0.0
  %3347 = vmatprep.subr.mxu0 0.0
  %3348 = vmatpush1.msra.mxu0 0.0
  %3349 = vmatprep.subr.mxu0 0.0
  %3350 = vmatpush1.msra.mxu0 0.0
  %3351 = vmatprep.subr.mxu0 0.0
  %3352 = vmatpush1.msra.mxu0 0.0
  %3353 = vmatprep.subr.mxu0 0.0
  %3354 = vmatpush1.msra.mxu0 0.0
  %3355 = vmatprep.subr.mxu0 0.0
  %3356 = vmatpush1.msra.mxu0 0.0
  %3357 = vmatprep.mubr.f32.mxu0 0.0
  %3358 = vmatmul.mubr.f32.gmra.mrb[0].mxu0 %v3264
  %v3359 = vpop.f32.mrb[0].mxu0
  %v3360 = vadd.f32 0.0, %v3359
  %v3361 = vpop.f32.mrb[0].mxu0
  %3362 = vmatprep.mubr.f32.mxu0 0.0
  %3363 = vmatmul.mubr.f32.gmra.mrb[0].mxu0 %v3267
  %v3364 = vpop.f32.mrb[0].mxu0
  %v3365 = vadd.f32 0.0, %v3364
  %v3366 = vpop.f32.mrb[0].mxu0
  %3367 = vmatprep.mubr.f32.mxu0 0.0
  %3368 = vmatmul.mubr.f32.gmra.mrb[0].mxu0 %v3270
  %v3369 = vpop.f32.mrb[0].mxu0
  %v3370 = vadd.f32 0.0, %v3369
  %v3371 = vpop.f32.mrb[0].mxu0
  %3372 = vmatprep.mubr.f32.mxu0 0.0
  %3373 = vmatmul.mubr.f32.gmra.mrb[0].mxu0 %v3273
  %v3374 = vpop.f32.mrb[0].mxu0
  %v3375 = vadd.f32 0.0, %v3374
  %v3376 = vpop.f32.mrb[0].mxu0
  %3377 = vmatprep.mubr.f32.mxu0 0.0
  %3378 = vmatmul.mubr.f32.gmra.mrb[0].mxu0 %v3276
  %v3379 = vpop.f32.mrb[0].mxu0
  %v3380 = vadd.f32 0.0, %v3379
  %v3381 = vpop.f32.mrb[0].mxu0
  %3382 = vmatprep.mubr.f32.mxu0 0.0
  %3383 = vmatmul.mubr.f32.gmra.mrb[0].mxu0 %v3279
  %v3384 = vpop.f32.mrb[0].mxu0
  %v3385 = vadd.f32 0.0, %v3384
  %v3386 = vpop.f32.mrb[0].mxu0
  %3387 = vmatprep.mubr.f32.mxu0 0.0
  %3388 = vmatmul.mubr.f32.gmra.mrb[0].mxu0 %v3282
  %v3389 = vpop.f32.mrb[0].mxu0
  %v3390 = vadd.f32 0.0, %v3389
  %v3391 = vpop.f32.mrb[0].mxu0
  %3392 = vmatprep.mubr.f32.mxu0 0.0
  %3393 = vmatmul.mubr.f32.gmra.mrb[0].mxu0 %v3285
  %v3394 = vpop.f32.mrb[0].mxu0
  %v3395 = vadd.f32 0.0, %v3394
  %v3396 = vpop.f32.mrb[0].mxu0
  %3397 = vmatprep.mubr.f32.mxu0 0.0
  %3398 = vmatmul.mubr.f32.gmra.mrb[0].mxu0 %v3288
  %v3399 = vpop.f32.mrb[0].mxu0
  %v3400 = vadd.f32 0.0, %v3399
  %v3401 = vpop.f32.mrb[0].mxu0
  %3402 = vmatprep.mubr.f32.mxu0 0.0
  %3403 = vmatmul.mubr.f32.gmra.mrb[0].mxu0 %v3291
  %v3404 = vpop.f32.mrb[0].mxu0
  %v3405 = vadd.f32 0.0, %v3404
  %v3406 = vpop.f32.mrb[0].mxu0
  %3407 = vdwg.mxu0
  %3408 = vmatprep.subr.mxu0 0.0
  %3409 = vmatpush1.msra.mxu0 %v3248
  %3410 = vmatprep.subr.mxu0 0.0
  %3411 = vmatpush1.msra.mxu0 %v3249
  %3412 = vmatprep.subr.mxu0 0.0
  %3413 = vmatpush1.msra.mxu0 %v3250
  %3414 = vmatprep.subr.mxu0 0.0
  %3415 = vmatpush1.msra.mxu0 %v3251
  %3416 = vmatprep.subr.mxu0 0.0
  %3417 = vmatpush1.msra.mxu0 0.0
  %3418 = vmatprep.subr.mxu0 0.0
  %3419 = vmatpush1.msra.mxu0 0.0
  %3420 = vmatprep.subr.mxu0 0.0
  %3421 = vmatpush1.msra.mxu0 0.0
  %3422 = vmatprep.subr.mxu0 0.0
  %3423 = vmatpush1.msra.mxu0 0.0
  %3424 = vmatprep.subr.mxu0 0.0
  %3425 = vmatpush1.msra.mxu0 0.0
  %3426 = vmatprep.subr.mxu0 0.0
  %3427 = vmatpush1.msra.mxu0 0.0
  %3428 = vmatprep.subr.mxu0 0.0
  %3429 = vmatpush1.msra.mxu0 0.0
  %3430 = vmatprep.subr.mxu0 0.0
  %3431 = vmatpush1.msra.mxu0 0.0
  %3432 = vmatprep.subr.mxu0 0.0
  %3433 = vmatpush1.msra.mxu0 0.0
  %3434 = vmatprep.subr.mxu0 0.0
  %3435 = vmatpush1.msra.mxu0 0.0
  %3436 = vmatprep.subr.mxu0 0.0
  %3437 = vmatpush1.msra.mxu0 0.0
  %3438 = vmatprep.subr.mxu0 0.0
  %3439 = vmatpush1.msra.mxu0 0.0
  %3440 = vmatprep.subr.mxu0 0.0
  %3441 = vmatpush1.msra.mxu0 0.0
  %3442 = vmatprep.subr.mxu0 0.0
  %3443 = vmatpush1.msra.mxu0 0.0
  %3444 = vmatprep.subr.mxu0 0.0
  %3445 = vmatpush1.msra.mxu0 0.0
  %3446 = vmatprep.subr.mxu0 0.0
  %3447 = vmatpush1.msra.mxu0 0.0
  %3448 = vmatprep.subr.mxu0 0.0
  %3449 = vmatpush1.msra.mxu0 0.0
  %3450 = vmatprep.subr.mxu0 0.0
  %3451 = vmatpush1.msra.mxu0 0.0
  %3452 = vmatprep.subr.mxu0 0.0
  %3453 = vmatpush1.msra.mxu0 0.0
  %3454 = vmatprep.subr.mxu0 0.0
  %3455 = vmatpush1.msra.mxu0 0.0
  %3456 = vmatprep.subr.mxu0 0.0
  %3457 = vmatpush1.msra.mxu0 0.0
  %3458 = vmatprep.subr.mxu0 0.0
  %3459 = vmatpush1.msra.mxu0 0.0
  %3460 = vmatprep.subr.mxu0 0.0
  %3461 = vmatpush1.msra.mxu0 0.0
  %3462 = vmatprep.subr.mxu0 0.0
  %3463 = vmatpush1.msra.mxu0 0.0
  %3464 = vmatprep.subr.mxu0 0.0
  %3465 = vmatpush1.msra.mxu0 0.0
  %3466 = vmatprep.subr.mxu0 0.0
  %3467 = vmatpush1.msra.mxu0 0.0
  %3468 = vmatprep.subr.mxu0 0.0
  %3469 = vmatpush1.msra.mxu0 0.0
  %3470 = vmatprep.subr.mxu0 0.0
  %3471 = vmatpush1.msra.mxu0 0.0
  %3472 = vmatprep.mubr.f32.mxu0 0.0
  %3473 = vmatmul.mubr.f32.gmra.mrb[0].mxu0 %v3264
  %v3474 = vpop.f32.mrb[0].mxu0
  %v3475 = vadd.f32 0.0, %v3474
  %v3476 = vpop.f32.mrb[0].mxu0
  %3477 = vmatprep.mubr.f32.mxu0 0.0
  %3478 = vmatmul.mubr.f32.gmra.mrb[0].mxu0 %v3267
  %v3479 = vpop.f32.mrb[0].mxu0
  %v3480 = vadd.f32 0.0, %v3479
  %v3481 = vpop.f32.mrb[0].mxu0
  %3482 = vmatprep.mubr.f32.mxu0 0.0
  %3483 = vmatmul.mubr.f32.gmra.mrb[0].mxu0 %v3270
  %v3484 = vpop.f32.mrb[0].mxu0
  %v3485 = vadd.f32 0.0, %v3484
  %v3486 = vpop.f32.mrb[0].mxu0
  %3487 = vmatprep.mubr.f32.mxu0 0.0
  %3488 = vmatmul.mubr.f32.gmra.mrb[0].mxu0 %v3273
  %v3489 = vpop.f32.mrb[0].mxu0
  %v3490 = vadd.f32 0.0, %v3489
  %v3491 = vpop.f32.mrb[0].mxu0
  %3492 = vmatprep.mubr.f32.mxu0 0.0
  %3493 = vmatmul.mubr.f32.gmra.mrb[0].mxu0 %v3276
  %v3494 = vpop.f32.mrb[0].mxu0
  %v3495 = vadd.f32 0.0, %v3494
  %v3496 = vpop.f32.mrb[0].mxu0
  %3497 = vmatprep.mubr.f32.mxu0 0.0
  %3498 = vmatmul.mubr.f32.gmra.mrb[0].mxu0 %v3279
  %v3499 = vpop.f32.mrb[0].mxu0
  %v3500 = vadd.f32 0.0, %v3499
  %v3501 = vpop.f32.mrb[0].mxu0
  %3502 = vmatprep.mubr.f32.mxu0 0.0
  %3503 = vmatmul.mubr.f32.gmra.mrb[0].mxu0 %v3282
  %v3504 = vpop.f32.mrb[0].mxu0
  %v3505 = vadd.f32 0.0, %v3504
  %v3506 = vpop.f32.mrb[0].mxu0
  %3507 = vmatprep.mubr.f32.mxu0 0.0
  %3508 = vmatmul.mubr.f32.gmra.mrb[0].mxu0 %v3285
  %v3509 = vpop.f32.mrb[0].mxu0
  %v3510 = vadd.f32 0.0, %v3509
  %v3511 = vpop.f32.mrb[0].mxu0
  %3512 = vmatprep.mubr.f32.mxu0 0.0
  %3513 = vmatmul.mubr.f32.gmra.mrb[0].mxu0 %v3288
  %v3514 = vpop.f32.mrb[0].mxu0
  %v3515 = vadd.f32 0.0, %v3514
  %v3516 = vpop.f32.mrb[0].mxu0
  %3517 = vmatprep.mubr.f32.mxu0 0.0
  %3518 = vmatmul.mubr.f32.gmra.mrb[0].mxu0 %v3291
  %v3519 = vpop.f32.mrb[0].mxu0
  %v3520 = vadd.f32 0.0, %v3519
  %v3521 = vpop.f32.mrb[0].mxu0
  %3522 = vdwg.mxu0
  %v3523 = vadd.s32 %v2620, 8
  %v3524 = vadd.s32 %v2620, 16
  %v3525 = vadd.s32 %v2620, 24
  %v3526 = vmul.u32 %v2620, 4
  %v3527 = vmul.u32 %v3523, 4
  %v3528 = vmul.u32 %v3524, 4
  %v3529 = vmul.u32 %v3525, 4
  %v3530 = vsub.s32 %v1174, %v3526
  %v3531 = vsub.s32 %v1174, %v3527
  %v3532 = vsub.s32 %v1174, %v3528
  %v3533 = vsub.s32 %v1174, %v3529
  %vm3534 = vcmp.eq.s32.totalorder %v3530, 0
  %vm3535 = vcmp.eq.s32.totalorder %v3531, 0
  %vm3536 = vcmp.eq.s32.totalorder %v3532, 0
  %vm3537 = vcmp.eq.s32.totalorder %v3533, 0
  %v3538 = vsel %vm3534, 1.0, 0.0
  %v3539 = vsel %vm3535, 1.0, 0.0
  %v3540 = vsel %vm3536, 1.0, 0.0
  %v3541 = vsel %vm3537, 1.0, 0.0
  %vm3542 = vcmp.eq.s32.totalorder %v3530, 1
  %vm3543 = vcmp.eq.s32.totalorder %v3531, 1
  %vm3544 = vcmp.eq.s32.totalorder %v3532, 1
  %vm3545 = vcmp.eq.s32.totalorder %v3533, 1
  %v3546 = vsel %vm3542, 1.0, 0.0
  %v3547 = vsel %vm3543, 1.0, 0.0
  %v3548 = vsel %vm3544, 1.0, 0.0
  %v3549 = vsel %vm3545, 1.0, 0.0
  %v3551 = vsel %vm3074, %v3370, 0
  %v3554 = vsel %vm3074, %v3375, 0
  %v3557 = vsel %vm3074, %v3485, 0
  %v3560 = vsel %vm3074, %v3490, 0
  %vm3562 = vcmask 1046528
  %v3564 = vsel %vm3562, %v3549, 0
  %3566 = vmatprep.subr.mxu0 0.0
  %3567 = vmatpush1.msra.mxu0 %v3546
  %3568 = vmatprep.subr.mxu0 0.0
  %3569 = vmatpush1.msra.mxu0 %v3547
  %3570 = vmatprep.subr.mxu0 0.0
  %3571 = vmatpush1.msra.mxu0 %v3548
  %3572 = vmatprep.subr.mxu0 0.0
  %3573 = vmatpush1.msra.mxu0 %v3564
  %3574 = vmatprep.subr.mxu0 0.0
  %3575 = vmatpush1.msra.mxu0 0.0
  %3576 = vmatprep.subr.mxu0 0.0
  %3577 = vmatpush1.msra.mxu0 0.0
  %3578 = vmatprep.subr.mxu0 0.0
  %3579 = vmatpush1.msra.mxu0 0.0
  %3580 = vmatprep.subr.mxu0 0.0
  %3581 = vmatpush1.msra.mxu0 0.0
  %3582 = vmatprep.subr.mxu0 0.0
  %3583 = vmatpush1.msra.mxu0 0.0
  %3584 = vmatprep.subr.mxu0 0.0
  %3585 = vmatpush1.msra.mxu0 0.0
  %3586 = vmatprep.subr.mxu0 0.0
  %3587 = vmatpush1.msra.mxu0 0.0
  %3588 = vmatprep.subr.mxu0 0.0
  %3589 = vmatpush1.msra.mxu0 0.0
  %3590 = vmatprep.subr.mxu0 0.0
  %3591 = vmatpush1.msra.mxu0 0.0
  %3592 = vmatprep.subr.mxu0 0.0
  %3593 = vmatpush1.msra.mxu0 0.0
  %3594 = vmatprep.subr.mxu0 0.0
  %3595 = vmatpush1.msra.mxu0 0.0
  %3596 = vmatprep.subr.mxu0 0.0
  %3597 = vmatpush1.msra.mxu0 0.0
  %3598 = vmatprep.subr.mxu0 0.0
  %3599 = vmatpush1.msra.mxu0 0.0
  %3600 = vmatprep.subr.mxu0 0.0
  %3601 = vmatpush1.msra.mxu0 0.0
  %3602 = vmatprep.subr.mxu0 0.0
  %3603 = vmatpush1.msra.mxu0 0.0
  %3604 = vmatprep.subr.mxu0 0.0
  %3605 = vmatpush1.msra.mxu0 0.0
  %3606 = vmatprep.subr.mxu0 0.0
  %3607 = vmatpush1.msra.mxu0 0.0
  %3608 = vmatprep.subr.mxu0 0.0
  %3609 = vmatpush1.msra.mxu0 0.0
  %3610 = vmatprep.subr.mxu0 0.0
  %3611 = vmatpush1.msra.mxu0 0.0
  %3612 = vmatprep.subr.mxu0 0.0
  %3613 = vmatpush1.msra.mxu0 0.0
  %3614 = vmatprep.subr.mxu0 0.0
  %3615 = vmatpush1.msra.mxu0 0.0
  %3616 = vmatprep.subr.mxu0 0.0
  %3617 = vmatpush1.msra.mxu0 0.0
  %3618 = vmatprep.subr.mxu0 0.0
  %3619 = vmatpush1.msra.mxu0 0.0
  %3620 = vmatprep.subr.mxu0 0.0
  %3621 = vmatpush1.msra.mxu0 0.0
  %3622 = vmatprep.subr.mxu0 0.0
  %3623 = vmatpush1.msra.mxu0 0.0
  %3624 = vmatprep.subr.mxu0 0.0
  %3625 = vmatpush1.msra.mxu0 0.0
  %3626 = vmatprep.subr.mxu0 0.0
  %3627 = vmatpush1.msra.mxu0 0.0
  %3628 = vmatprep.subr.mxu0 0.0
  %3629 = vmatpush1.msra.mxu0 0.0
  %3630 = vmatprep.mubr.f32.mxu0 0.0
  %3631 = vmatmul.mubr.f32.gmra.mrb[0].mxu0 %v3551
  %v3632 = vpop.f32.mrb[0].mxu0
  %v3633 = vadd.f32 0.0, %v3632
  %v3634 = vpop.f32.mrb[0].mxu0
  %3635 = vmatprep.mubr.f32.mxu0 0.0
  %3636 = vmatmul.mubr.f32.gmra.mrb[0].mxu0 %v3554
  %v3637 = vpop.f32.mrb[0].mxu0
  %v3638 = vadd.f32 0.0, %v3637
  %v3639 = vpop.f32.mrb[0].mxu0
  %3640 = vmatprep.mubr.f32.mxu0 0.0
  %3641 = vmatmul.mubr.f32.gmra.mrb[0].mxu0 %v3557
  %v3642 = vpop.f32.mrb[0].mxu0
  %v3643 = vadd.f32 0.0, %v3642
  %v3644 = vpop.f32.mrb[0].mxu0
  %3645 = vmatprep.mubr.f32.mxu0 0.0
  %3646 = vmatmul.mubr.f32.gmra.mrb[0].mxu0 %v3560
  %v3647 = vpop.f32.mrb[0].mxu0
  %v3648 = vadd.f32 0.0, %v3647
  %v3649 = vpop.f32.mrb[0].mxu0
  %3650 = vdwg.mxu0
  %v3652 = vsel %vm3074, %v3360, 0
  %v3655 = vsel %vm3074, %v3365, 0
  %v3658 = vsel %vm3074, %v3475, 0
  %v3661 = vsel %vm3074, %v3480, 0
  %v3664 = vsel %vm3562, %v3541, 0
  %3666 = vmatprep.subr.mxu0 0.0
  %3667 = vmatpush1.msra.mxu0 %v3538
  %3668 = vmatprep.subr.mxu0 0.0
  %3669 = vmatpush1.msra.mxu0 %v3539
  %3670 = vmatprep.subr.mxu0 0.0
  %3671 = vmatpush1.msra.mxu0 %v3540
  %3672 = vmatprep.subr.mxu0 0.0
  %3673 = vmatpush1.msra.mxu0 %v3664
  %3674 = vmatprep.subr.mxu0 0.0
  %3675 = vmatpush1.msra.mxu0 0.0
  %3676 = vmatprep.subr.mxu0 0.0
  %3677 = vmatpush1.msra.mxu0 0.0
  %3678 = vmatprep.subr.mxu0 0.0
  %3679 = vmatpush1.msra.mxu0 0.0
  %3680 = vmatprep.subr.mxu0 0.0
  %3681 = vmatpush1.msra.mxu0 0.0
  %3682 = vmatprep.subr.mxu0 0.0
  %3683 = vmatpush1.msra.mxu0 0.0
  %3684 = vmatprep.subr.mxu0 0.0
  %3685 = vmatpush1.msra.mxu0 0.0
  %3686 = vmatprep.subr.mxu0 0.0
  %3687 = vmatpush1.msra.mxu0 0.0
  %3688 = vmatprep.subr.mxu0 0.0
  %3689 = vmatpush1.msra.mxu0 0.0
  %3690 = vmatprep.subr.mxu0 0.0
  %3691 = vmatpush1.msra.mxu0 0.0
  %3692 = vmatprep.subr.mxu0 0.0
  %3693 = vmatpush1.msra.mxu0 0.0
  %3694 = vmatprep.subr.mxu0 0.0
  %3695 = vmatpush1.msra.mxu0 0.0
  %3696 = vmatprep.subr.mxu0 0.0
  %3697 = vmatpush1.msra.mxu0 0.0
  %3698 = vmatprep.subr.mxu0 0.0
  %3699 = vmatpush1.msra.mxu0 0.0
  %3700 = vmatprep.subr.mxu0 0.0
  %3701 = vmatpush1.msra.mxu0 0.0
  %3702 = vmatprep.subr.mxu0 0.0
  %3703 = vmatpush1.msra.mxu0 0.0
  %3704 = vmatprep.subr.mxu0 0.0
  %3705 = vmatpush1.msra.mxu0 0.0
  %3706 = vmatprep.subr.mxu0 0.0
  %3707 = vmatpush1.msra.mxu0 0.0
  %3708 = vmatprep.subr.mxu0 0.0
  %3709 = vmatpush1.msra.mxu0 0.0
  %3710 = vmatprep.subr.mxu0 0.0
  %3711 = vmatpush1.msra.mxu0 0.0
  %3712 = vmatprep.subr.mxu0 0.0
  %3713 = vmatpush1.msra.mxu0 0.0
  %3714 = vmatprep.subr.mxu0 0.0
  %3715 = vmatpush1.msra.mxu0 0.0
  %3716 = vmatprep.subr.mxu0 0.0
  %3717 = vmatpush1.msra.mxu0 0.0
  %3718 = vmatprep.subr.mxu0 0.0
  %3719 = vmatpush1.msra.mxu0 0.0
  %3720 = vmatprep.subr.mxu0 0.0
  %3721 = vmatpush1.msra.mxu0 0.0
  %3722 = vmatprep.subr.mxu0 0.0
  %3723 = vmatpush1.msra.mxu0 0.0
  %3724 = vmatprep.subr.mxu0 0.0
  %3725 = vmatpush1.msra.mxu0 0.0
  %3726 = vmatprep.subr.mxu0 0.0
  %3727 = vmatpush1.msra.mxu0 0.0
  %3728 = vmatprep.subr.mxu0 0.0
  %3729 = vmatpush1.msra.mxu0 0.0
  %3730 = vmatprep.mubr.f32.mxu0 0.0
  %3731 = vmatmul.mubr.f32.gmra.mrb[0].mxu0 %v3652
  %v3732 = vpop.f32.mrb[0].mxu0
  %v3733 = vadd.f32 %v3633, %v3732
  %v3734 = vpop.f32.mrb[0].mxu0
  %3735 = vmatprep.mubr.f32.mxu0 0.0
  %3736 = vmatmul.mubr.f32.gmra.mrb[0].mxu0 %v3655
  %v3737 = vpop.f32.mrb[0].mxu0
  %v3738 = vadd.f32 %v3638, %v3737
  %v3739 = vpop.f32.mrb[0].mxu0
  %3740 = vmatprep.mubr.f32.mxu0 0.0
  %3741 = vmatmul.mubr.f32.gmra.mrb[0].mxu0 %v3658
  %v3742 = vpop.f32.mrb[0].mxu0
  %v3743 = vadd.f32 %v3643, %v3742
  %v3744 = vpop.f32.mrb[0].mxu0
  %3745 = vmatprep.mubr.f32.mxu0 0.0
  %3746 = vmatmul.mubr.f32.gmra.mrb[0].mxu0 %v3661
  %v3747 = vpop.f32.mrb[0].mxu0
  %v3748 = vadd.f32 %v3648, %v3747
  %v3749 = vpop.f32.mrb[0].mxu0
  %3750 = vdwg.mxu0
  %vm3751 = vcmp.eq.s32.totalorder %v3530, 2
  %vm3752 = vcmp.eq.s32.totalorder %v3531, 2
  %vm3753 = vcmp.eq.s32.totalorder %v3532, 2
  %vm3754 = vcmp.eq.s32.totalorder %v3533, 2
  %v3755 = vsel %vm3751, 1.0, 0.0
  %v3756 = vsel %vm3752, 1.0, 0.0
  %v3757 = vsel %vm3753, 1.0, 0.0
  %v3758 = vsel %vm3754, 1.0, 0.0
  %v3760 = vsel %vm3074, %v3380, 0
  %v3763 = vsel %vm3074, %v3385, 0
  %v3766 = vsel %vm3074, %v3495, 0
  %v3769 = vsel %vm3074, %v3500, 0
  %v3772 = vsel %vm3562, %v3758, 0
  %3774 = vmatprep.subr.mxu0 0.0
  %3775 = vmatpush1.msra.mxu0 %v3755
  %3776 = vmatprep.subr.mxu0 0.0
  %3777 = vmatpush1.msra.mxu0 %v3756
  %3778 = vmatprep.subr.mxu0 0.0
  %3779 = vmatpush1.msra.mxu0 %v3757
  %3780 = vmatprep.subr.mxu0 0.0
  %3781 = vmatpush1.msra.mxu0 %v3772
  %3782 = vmatprep.subr.mxu0 0.0
  %3783 = vmatpush1.msra.mxu0 0.0
  %3784 = vmatprep.subr.mxu0 0.0
  %3785 = vmatpush1.msra.mxu0 0.0
  %3786 = vmatprep.subr.mxu0 0.0
  %3787 = vmatpush1.msra.mxu0 0.0
  %3788 = vmatprep.subr.mxu0 0.0
  %3789 = vmatpush1.msra.mxu0 0.0
  %3790 = vmatprep.subr.mxu0 0.0
  %3791 = vmatpush1.msra.mxu0 0.0
  %3792 = vmatprep.subr.mxu0 0.0
  %3793 = vmatpush1.msra.mxu0 0.0
  %3794 = vmatprep.subr.mxu0 0.0
  %3795 = vmatpush1.msra.mxu0 0.0
  %3796 = vmatprep.subr.mxu0 0.0
  %3797 = vmatpush1.msra.mxu0 0.0
  %3798 = vmatprep.subr.mxu0 0.0
  %3799 = vmatpush1.msra.mxu0 0.0
  %3800 = vmatprep.subr.mxu0 0.0
  %3801 = vmatpush1.msra.mxu0 0.0
  %3802 = vmatprep.subr.mxu0 0.0
  %3803 = vmatpush1.msra.mxu0 0.0
  %3804 = vmatprep.subr.mxu0 0.0
  %3805 = vmatpush1.msra.mxu0 0.0
  %3806 = vmatprep.subr.mxu0 0.0
  %3807 = vmatpush1.msra.mxu0 0.0
  %3808 = vmatprep.subr.mxu0 0.0
  %3809 = vmatpush1.msra.mxu0 0.0
  %3810 = vmatprep.subr.mxu0 0.0
  %3811 = vmatpush1.msra.mxu0 0.0
  %3812 = vmatprep.subr.mxu0 0.0
  %3813 = vmatpush1.msra.mxu0 0.0
  %3814 = vmatprep.subr.mxu0 0.0
  %3815 = vmatpush1.msra.mxu0 0.0
  %3816 = vmatprep.subr.mxu0 0.0
  %3817 = vmatpush1.msra.mxu0 0.0
  %3818 = vmatprep.subr.mxu0 0.0
  %3819 = vmatpush1.msra.mxu0 0.0
  %3820 = vmatprep.subr.mxu0 0.0
  %3821 = vmatpush1.msra.mxu0 0.0
  %3822 = vmatprep.subr.mxu0 0.0
  %3823 = vmatpush1.msra.mxu0 0.0
  %3824 = vmatprep.subr.mxu0 0.0
  %3825 = vmatpush1.msra.mxu0 0.0
  %3826 = vmatprep.subr.mxu0 0.0
  %3827 = vmatpush1.msra.mxu0 0.0
  %3828 = vmatprep.subr.mxu0 0.0
  %3829 = vmatpush1.msra.mxu0 0.0
  %3830 = vmatprep.subr.mxu0 0.0
  %3831 = vmatpush1.msra.mxu0 0.0
  %3832 = vmatprep.subr.mxu0 0.0
  %3833 = vmatpush1.msra.mxu0 0.0
  %3834 = vmatprep.subr.mxu0 0.0
  %3835 = vmatpush1.msra.mxu0 0.0
  %3836 = vmatprep.subr.mxu0 0.0
  %3837 = vmatpush1.msra.mxu0 0.0
  %3838 = vmatprep.mubr.f32.mxu0 0.0
  %3839 = vmatmul.mubr.f32.gmra.mrb[0].mxu0 %v3760
  %v3840 = vpop.f32.mrb[0].mxu0
  %v3841 = vadd.f32 0.0, %v3840
  %v3842 = vpop.f32.mrb[0].mxu0
  %3843 = vmatprep.mubr.f32.mxu0 0.0
  %3844 = vmatmul.mubr.f32.gmra.mrb[0].mxu0 %v3763
  %v3845 = vpop.f32.mrb[0].mxu0
  %v3846 = vadd.f32 0.0, %v3845
  %v3847 = vpop.f32.mrb[0].mxu0
  %3848 = vmatprep.mubr.f32.mxu0 0.0
  %3849 = vmatmul.mubr.f32.gmra.mrb[0].mxu0 %v3766
  %v3850 = vpop.f32.mrb[0].mxu0
  %v3851 = vadd.f32 0.0, %v3850
  %v3852 = vpop.f32.mrb[0].mxu0
  %3853 = vmatprep.mubr.f32.mxu0 0.0
  %3854 = vmatmul.mubr.f32.gmra.mrb[0].mxu0 %v3769
  %v3855 = vpop.f32.mrb[0].mxu0
  %v3856 = vadd.f32 0.0, %v3855
  %v3857 = vpop.f32.mrb[0].mxu0
  %3858 = vdwg.mxu0
  %v3859 = vadd.f32 %v3733, %v3841
  %v3860 = vadd.f32 %v3738, %v3846
  %v3861 = vadd.f32 %v3743, %v3851
  %v3862 = vadd.f32 %v3748, %v3856
  %vm3863 = vcmp.eq.s32.totalorder %v3530, 3
  %vm3864 = vcmp.eq.s32.totalorder %v3531, 3
  %vm3865 = vcmp.eq.s32.totalorder %v3532, 3
  %vm3866 = vcmp.eq.s32.totalorder %v3533, 3
  %v3867 = vsel %vm3863, 1.0, 0.0
  %v3868 = vsel %vm3864, 1.0, 0.0
  %v3869 = vsel %vm3865, 1.0, 0.0
  %v3870 = vsel %vm3866, 1.0, 0.0
  %v3872 = vsel %vm3074, %v3390, 0
  %v3875 = vsel %vm3074, %v3395, 0
  %v3878 = vsel %vm3074, %v3505, 0
  %v3881 = vsel %vm3074, %v3510, 0
  %v3884 = vsel %vm3562, %v3870, 0
  %3886 = vmatprep.subr.mxu0 0.0
  %3887 = vmatpush1.msra.mxu0 %v3867
  %3888 = vmatprep.subr.mxu0 0.0
  %3889 = vmatpush1.msra.mxu0 %v3868
  %3890 = vmatprep.subr.mxu0 0.0
  %3891 = vmatpush1.msra.mxu0 %v3869
  %3892 = vmatprep.subr.mxu0 0.0
  %3893 = vmatpush1.msra.mxu0 %v3884
  %3894 = vmatprep.subr.mxu0 0.0
  %3895 = vmatpush1.msra.mxu0 0.0
  %3896 = vmatprep.subr.mxu0 0.0
  %3897 = vmatpush1.msra.mxu0 0.0
  %3898 = vmatprep.subr.mxu0 0.0
  %3899 = vmatpush1.msra.mxu0 0.0
  %3900 = vmatprep.subr.mxu0 0.0
  %3901 = vmatpush1.msra.mxu0 0.0
  %3902 = vmatprep.subr.mxu0 0.0
  %3903 = vmatpush1.msra.mxu0 0.0
  %3904 = vmatprep.subr.mxu0 0.0
  %3905 = vmatpush1.msra.mxu0 0.0
  %3906 = vmatprep.subr.mxu0 0.0
  %3907 = vmatpush1.msra.mxu0 0.0
  %3908 = vmatprep.subr.mxu0 0.0
  %3909 = vmatpush1.msra.mxu0 0.0
  %3910 = vmatprep.subr.mxu0 0.0
  %3911 = vmatpush1.msra.mxu0 0.0
  %3912 = vmatprep.subr.mxu0 0.0
  %3913 = vmatpush1.msra.mxu0 0.0
  %3914 = vmatprep.subr.mxu0 0.0
  %3915 = vmatpush1.msra.mxu0 0.0
  %3916 = vmatprep.subr.mxu0 0.0
  %3917 = vmatpush1.msra.mxu0 0.0
  %3918 = vmatprep.subr.mxu0 0.0
  %3919 = vmatpush1.msra.mxu0 0.0
  %3920 = vmatprep.subr.mxu0 0.0
  %3921 = vmatpush1.msra.mxu0 0.0
  %3922 = vmatprep.subr.mxu0 0.0
  %3923 = vmatpush1.msra.mxu0 0.0
  %3924 = vmatprep.subr.mxu0 0.0
  %3925 = vmatpush1.msra.mxu0 0.0
  %3926 = vmatprep.subr.mxu0 0.0
  %3927 = vmatpush1.msra.mxu0 0.0
  %3928 = vmatprep.subr.mxu0 0.0
  %3929 = vmatpush1.msra.mxu0 0.0
  %3930 = vmatprep.subr.mxu0 0.0
  %3931 = vmatpush1.msra.mxu0 0.0
  %3932 = vmatprep.subr.mxu0 0.0
  %3933 = vmatpush1.msra.mxu0 0.0
  %3934 = vmatprep.subr.mxu0 0.0
  %3935 = vmatpush1.msra.mxu0 0.0
  %3936 = vmatprep.subr.mxu0 0.0
  %3937 = vmatpush1.msra.mxu0 0.0
  %3938 = vmatprep.subr.mxu0 0.0
  %3939 = vmatpush1.msra.mxu0 0.0
  %3940 = vmatprep.subr.mxu0 0.0
  %3941 = vmatpush1.msra.mxu0 0.0
  %3942 = vmatprep.subr.mxu0 0.0
  %3943 = vmatpush1.msra.mxu0 0.0
  %3944 = vmatprep.subr.mxu0 0.0
  %3945 = vmatpush1.msra.mxu0 0.0
  %3946 = vmatprep.subr.mxu0 0.0
  %3947 = vmatpush1.msra.mxu0 0.0
  %3948 = vmatprep.subr.mxu0 0.0
  %3949 = vmatpush1.msra.mxu0 0.0
  %3950 = vmatprep.mubr.f32.mxu0 0.0
  %3951 = vmatmul.mubr.f32.gmra.mrb[0].mxu0 %v3872
  %v3952 = vpop.f32.mrb[0].mxu0
  %v3953 = vadd.f32 0.0, %v3952
  %v3954 = vpop.f32.mrb[0].mxu0
  %3955 = vmatprep.mubr.f32.mxu0 0.0
  %3956 = vmatmul.mubr.f32.gmra.mrb[0].mxu0 %v3875
  %v3957 = vpop.f32.mrb[0].mxu0
  %v3958 = vadd.f32 0.0, %v3957
  %v3959 = vpop.f32.mrb[0].mxu0
  %3960 = vmatprep.mubr.f32.mxu0 0.0
  %3961 = vmatmul.mubr.f32.gmra.mrb[0].mxu0 %v3878
  %v3962 = vpop.f32.mrb[0].mxu0
  %v3963 = vadd.f32 0.0, %v3962
  %v3964 = vpop.f32.mrb[0].mxu0
  %3965 = vmatprep.mubr.f32.mxu0 0.0
  %3966 = vmatmul.mubr.f32.gmra.mrb[0].mxu0 %v3881
  %v3967 = vpop.f32.mrb[0].mxu0
  %v3968 = vadd.f32 0.0, %v3967
  %v3969 = vpop.f32.mrb[0].mxu0
  %3970 = vdwg.mxu0
  %v3971 = vadd.f32 %v3859, %v3953
  %v3972 = vadd.f32 %v3860, %v3958
  %v3973 = vadd.f32 %v3861, %v3963
  %v3974 = vadd.f32 %v3862, %v3968
  %vm3975 = vcmp.eq.s32.totalorder %v3530, 4
  %vm3976 = vcmp.eq.s32.totalorder %v3531, 4
  %vm3977 = vcmp.eq.s32.totalorder %v3532, 4
  %vm3978 = vcmp.eq.s32.totalorder %v3533, 4
  %v3979 = vsel %vm3975, 1.0, 0.0
  %v3980 = vsel %vm3976, 1.0, 0.0
  %v3981 = vsel %vm3977, 1.0, 0.0
  %v3982 = vsel %vm3978, 1.0, 0.0
  %v3984 = vsel %vm3074, %v3400, 0
  %v3987 = vsel %vm3074, %v3405, 0
  %v3990 = vsel %vm3074, %v3515, 0
  %v3993 = vsel %vm3074, %v3520, 0
  %v3996 = vsel %vm3562, %v3982, 0
  %3998 = vmatprep.subr.mxu0 0.0
  %3999 = vmatpush1.msra.mxu0 %v3979
  %4000 = vmatprep.subr.mxu0 0.0
  %4001 = vmatpush1.msra.mxu0 %v3980
  %4002 = vmatprep.subr.mxu0 0.0
  %4003 = vmatpush1.msra.mxu0 %v3981
  %4004 = vmatprep.subr.mxu0 0.0
  %4005 = vmatpush1.msra.mxu0 %v3996
  %4006 = vmatprep.subr.mxu0 0.0
  %4007 = vmatpush1.msra.mxu0 0.0
  %4008 = vmatprep.subr.mxu0 0.0
  %4009 = vmatpush1.msra.mxu0 0.0
  %4010 = vmatprep.subr.mxu0 0.0
  %4011 = vmatpush1.msra.mxu0 0.0
  %4012 = vmatprep.subr.mxu0 0.0
  %4013 = vmatpush1.msra.mxu0 0.0
  %4014 = vmatprep.subr.mxu0 0.0
  %4015 = vmatpush1.msra.mxu0 0.0
  %4016 = vmatprep.subr.mxu0 0.0
  %4017 = vmatpush1.msra.mxu0 0.0
  %4018 = vmatprep.subr.mxu0 0.0
  %4019 = vmatpush1.msra.mxu0 0.0
  %4020 = vmatprep.subr.mxu0 0.0
  %4021 = vmatpush1.msra.mxu0 0.0
  %4022 = vmatprep.subr.mxu0 0.0
  %4023 = vmatpush1.msra.mxu0 0.0
  %4024 = vmatprep.subr.mxu0 0.0
  %4025 = vmatpush1.msra.mxu0 0.0
  %4026 = vmatprep.subr.mxu0 0.0
  %4027 = vmatpush1.msra.mxu0 0.0
  %4028 = vmatprep.subr.mxu0 0.0
  %4029 = vmatpush1.msra.mxu0 0.0
  %4030 = vmatprep.subr.mxu0 0.0
  %4031 = vmatpush1.msra.mxu0 0.0
  %4032 = vmatprep.subr.mxu0 0.0
  %4033 = vmatpush1.msra.mxu0 0.0
  %4034 = vmatprep.subr.mxu0 0.0
  %4035 = vmatpush1.msra.mxu0 0.0
  %4036 = vmatprep.subr.mxu0 0.0
  %4037 = vmatpush1.msra.mxu0 0.0
  %4038 = vmatprep.subr.mxu0 0.0
  %4039 = vmatpush1.msra.mxu0 0.0
  %4040 = vmatprep.subr.mxu0 0.0
  %4041 = vmatpush1.msra.mxu0 0.0
  %4042 = vmatprep.subr.mxu0 0.0
  %4043 = vmatpush1.msra.mxu0 0.0
  %4044 = vmatprep.subr.mxu0 0.0
  %4045 = vmatpush1.msra.mxu0 0.0
  %4046 = vmatprep.subr.mxu0 0.0
  %4047 = vmatpush1.msra.mxu0 0.0
  %4048 = vmatprep.subr.mxu0 0.0
  %4049 = vmatpush1.msra.mxu0 0.0
  %4050 = vmatprep.subr.mxu0 0.0
  %4051 = vmatpush1.msra.mxu0 0.0
  %4052 = vmatprep.subr.mxu0 0.0
  %4053 = vmatpush1.msra.mxu0 0.0
  %4054 = vmatprep.subr.mxu0 0.0
  %4055 = vmatpush1.msra.mxu0 0.0
  %4056 = vmatprep.subr.mxu0 0.0
  %4057 = vmatpush1.msra.mxu0 0.0
  %4058 = vmatprep.subr.mxu0 0.0
  %4059 = vmatpush1.msra.mxu0 0.0
  %4060 = vmatprep.subr.mxu0 0.0
  %4061 = vmatpush1.msra.mxu0 0.0
  %4062 = vmatprep.mubr.f32.mxu0 0.0
  %4063 = vmatmul.mubr.f32.gmra.mrb[0].mxu0 %v3984
  %v4064 = vpop.f32.mrb[0].mxu0
  %v4065 = vadd.f32 0.0, %v4064
  %v4066 = vpop.f32.mrb[0].mxu0
  %4067 = vmatprep.mubr.f32.mxu0 0.0
  %4068 = vmatmul.mubr.f32.gmra.mrb[0].mxu0 %v3987
  %v4069 = vpop.f32.mrb[0].mxu0
  %v4070 = vadd.f32 0.0, %v4069
  %v4071 = vpop.f32.mrb[0].mxu0
  %4072 = vmatprep.mubr.f32.mxu0 0.0
  %4073 = vmatmul.mubr.f32.gmra.mrb[0].mxu0 %v3990
  %v4074 = vpop.f32.mrb[0].mxu0
  %v4075 = vadd.f32 0.0, %v4074
  %v4076 = vpop.f32.mrb[0].mxu0
  %4077 = vmatprep.mubr.f32.mxu0 0.0
  %4078 = vmatmul.mubr.f32.gmra.mrb[0].mxu0 %v3993
  %v4079 = vpop.f32.mrb[0].mxu0
  %v4080 = vadd.f32 0.0, %v4079
  %v4081 = vpop.f32.mrb[0].mxu0
  %4082 = vdwg.mxu0
  %v4083 = vadd.f32 %v3971, %v4065
  %v4084 = vadd.f32 %v3972, %v4070
  %v4085 = vadd.f32 %v3973, %v4075
  %v4086 = vadd.f32 %v3974, %v4080
  %v4087 = vld [vmem:[%s12] sm:$0xff]
  %v4088 = vld [vmem:[%s12 + $0x8] sm:$0xff]
  %v4089 = vld [vmem:[%s13] sm:$0xff]
  %v4090 = vld [vmem:[%s13 + $0x8] sm:$0xff]
  %v4091 = vld [vmem:[%s14] sm:$0xff]
  %v4092 = vld [vmem:[%s14 + $0x8] sm:$0xff]
  %4094 = vset.pattern.permute.xlu0 0
  %4095 = vperm.xlu0 %4094, %v4087
  %v4096 = vpop.permute.xlu0 %4095
  %4099 = vset.pattern.permute.xlu0 0
  %4100 = vperm.xlu0 %4099, %v4088
  %v4101 = vpop.permute.xlu0 %4100
  %v4103 = vadd.f32 %v4083, %v4096
  %v4104 = vadd.f32 %v4084, %v4101
  %v4105 = vadd.f32 %v4085, %v4096
  %v4106 = vadd.f32 %v4086, %v4101
  %vm4107 = vcmask 1022976
  %v4108 = vsel %vm4107, %v4103, 0.0
  %4109 = vadd.xlane.f32.xlu0 %v4108
  %v4110 = vpop.xlane.xlu0 %4109
  %v4111 = vsel %vm4107, %v4104, 0.0
  %4112 = vadd.xlane.f32.xlu0 %v4111
  %v4113 = vpop.xlane.xlu0 %4112
  %v4114 = vsel %vm4107, %v4105, 0.0
  %4115 = vadd.xlane.f32.xlu0 %v4114
  %v4116 = vpop.xlane.xlu0 %4115
  %v4117 = vsel %vm4107, %v4106, 0.0
  %4118 = vadd.xlane.f32.xlu0 %v4117
  %v4119 = vpop.xlane.xlu0 %4118
  %v4120 = vmul.f32 %v4103, %v4103
  %v4121 = vmul.f32 %v4104, %v4104
  %v4122 = vmul.f32 %v4105, %v4105
  %v4123 = vmul.f32 %v4106, %v4106
  %v4124 = vsel %vm4107, %v4120, 0.0
  %4125 = vadd.xlane.f32.xlu0 %v4124
  %v4126 = vpop.xlane.xlu0 %4125
  %v4127 = vsel %vm4107, %v4121, 0.0
  %4128 = vadd.xlane.f32.xlu0 %v4127
  %v4129 = vpop.xlane.xlu0 %4128
  %v4130 = vsel %vm4107, %v4122, 0.0
  %4131 = vadd.xlane.f32.xlu0 %v4130
  %v4132 = vpop.xlane.xlu0 %4131
  %v4133 = vsel %vm4107, %v4123, 0.0
  %4134 = vadd.xlane.f32.xlu0 %v4133
  %v4135 = vpop.xlane.xlu0 %4134
  %v4136 = vadd.f32 %v4110, 0.0
  %v4137 = vadd.f32 %v4113, 0.0
  %v4138 = vadd.f32 %v4136, %v4116
  %v4139 = vadd.f32 %v4137, %v4119
  %v4140 = vadd.f32 %v4126, 0.0
  %v4141 = vadd.f32 %v4129, 0.0
  %v4142 = vadd.f32 %v4140, %v4132
  %v4143 = vadd.f32 %v4141, %v4135
  %v4144 = vrcp.pop 250.0
  %v4145 = vmul.f32 %v4138, %v4144
  %v4146 = vmul.f32 %v4139, %v4144
  %v4147 = vmul.f32 %v4142, %v4144
  %v4148 = vmul.f32 %v4143, %v4144
  %v4149 = vmul.f32 %v4145, %v4145
  %v4150 = vmul.f32 %v4146, %v4146
  %v4151 = vsub.f32 %v4147, %v4149
  %v4152 = vsub.f32 %v4148, %v4150
  %v4153 = vmax.f32 %v4151, 0.0
  %v4154 = vmax.f32 %v4152, 0.0
  %v4155 = vadd.f32 %v4153, 1e-05
  %v4156 = vadd.f32 %v4154, 1e-05
  %v4157 = vrsqrt.pop %v4155
  %v4158 = vrsqrt.pop %v4156
  %v4159 = vmul.f32 %v4089, %v4157
  %v4160 = vmul.f32 %v4090, %v4158
  %v4161 = vmul.f32 %v4145, %v4159
  %v4162 = vmul.f32 %v4146, %v4160
  %v4163 = vsub.f32 %v4091, %v4161
  %v4164 = vsub.f32 %v4092, %v4162
  %4166 = vset.pattern.permute.xlu0 0
  %4167 = vperm.xlu0 %4166, %v4159
  %v4168 = vpop.permute.xlu0 %4167
  %4171 = vset.pattern.permute.xlu0 0
  %4172 = vperm.xlu0 %4171, %v4160
  %v4173 = vpop.permute.xlu0 %4172
  %v4175 = vmul.f32 %v4103, %v4168
  %v4176 = vmul.f32 %v4104, %v4173
  %v4177 = vmul.f32 %v4105, %v4168
  %v4178 = vmul.f32 %v4106, %v4173
  %4180 = vset.pattern.permute.xlu0 0
  %4181 = vperm.xlu0 %4180, %v4163
  %v4182 = vpop.permute.xlu0 %4181
  %4185 = vset.pattern.permute.xlu0 0
  %4186 = vperm.xlu0 %4185, %v4164
  %v4187 = vpop.permute.xlu0 %4186
  %v4189 = vadd.f32 %v4175, %v4182
  %v4190 = vadd.f32 %v4176, %v4187
  %v4191 = vadd.f32 %v4177, %v4182
  %v4192 = vadd.f32 %v4178, %v4187
  %v4193 = vmax.f32 %v4189, 0.0
  %v4194 = vmax.f32 %v4190, 0.0
  %v4195 = vmax.f32 %v4191, 0.0
  %v4196 = vmax.f32 %v4192, 0.0
  %v4197 = vld [vmem:[%s15] sm:$0x7f]
  %vm4198 = vcmask 130048
  %v4200 = vsel %vm4198, %v4197, 0
  %4202 = vmatprep.subr.mxu0 0.0
  %4203 = vmatpush1.msra.mxu0 %v4193
  %4204 = vmatprep.subr.mxu0 0.0
  %4205 = vmatpush1.msra.mxu0 %v4194
  %4206 = vmatprep.subr.mxu0 0.0
  %4207 = vmatpush1.msra.mxu0 0.0
  %4208 = vmatprep.subr.mxu0 0.0
  %4209 = vmatpush1.msra.mxu0 0.0
  %4210 = vmatprep.subr.mxu0 0.0
  %4211 = vmatpush1.msra.mxu0 0.0
  %4212 = vmatprep.subr.mxu0 0.0
  %4213 = vmatpush1.msra.mxu0 0.0
  %4214 = vmatprep.subr.mxu0 0.0
  %4215 = vmatpush1.msra.mxu0 0.0
  %4216 = vmatprep.subr.mxu0 0.0
  %4217 = vmatpush1.msra.mxu0 0.0
  %4218 = vmatprep.subr.mxu0 0.0
  %4219 = vmatpush1.msra.mxu0 0.0
  %4220 = vmatprep.subr.mxu0 0.0
  %4221 = vmatpush1.msra.mxu0 0.0
  %4222 = vmatprep.subr.mxu0 0.0
  %4223 = vmatpush1.msra.mxu0 0.0
  %4224 = vmatprep.subr.mxu0 0.0
  %4225 = vmatpush1.msra.mxu0 0.0
  %4226 = vmatprep.subr.mxu0 0.0
  %4227 = vmatpush1.msra.mxu0 0.0
  %4228 = vmatprep.subr.mxu0 0.0
  %4229 = vmatpush1.msra.mxu0 0.0
  %4230 = vmatprep.subr.mxu0 0.0
  %4231 = vmatpush1.msra.mxu0 0.0
  %4232 = vmatprep.subr.mxu0 0.0
  %4233 = vmatpush1.msra.mxu0 0.0
  %4234 = vmatprep.subr.mxu0 0.0
  %4235 = vmatpush1.msra.mxu0 0.0
  %4236 = vmatprep.subr.mxu0 0.0
  %4237 = vmatpush1.msra.mxu0 0.0
  %4238 = vmatprep.subr.mxu0 0.0
  %4239 = vmatpush1.msra.mxu0 0.0
  %4240 = vmatprep.subr.mxu0 0.0
  %4241 = vmatpush1.msra.mxu0 0.0
  %4242 = vmatprep.subr.mxu0 0.0
  %4243 = vmatpush1.msra.mxu0 0.0
  %4244 = vmatprep.subr.mxu0 0.0
  %4245 = vmatpush1.msra.mxu0 0.0
  %4246 = vmatprep.subr.mxu0 0.0
  %4247 = vmatpush1.msra.mxu0 0.0
  %4248 = vmatprep.subr.mxu0 0.0
  %4249 = vmatpush1.msra.mxu0 0.0
  %4250 = vmatprep.subr.mxu0 0.0
  %4251 = vmatpush1.msra.mxu0 0.0
  %4252 = vmatprep.subr.mxu0 0.0
  %4253 = vmatpush1.msra.mxu0 0.0
  %4254 = vmatprep.subr.mxu0 0.0
  %4255 = vmatpush1.msra.mxu0 0.0
  %4256 = vmatprep.subr.mxu0 0.0
  %4257 = vmatpush1.msra.mxu0 0.0
  %4258 = vmatprep.subr.mxu0 0.0
  %4259 = vmatpush1.msra.mxu0 0.0
  %4260 = vmatprep.subr.mxu0 0.0
  %4261 = vmatpush1.msra.mxu0 0.0
  %4262 = vmatprep.subr.mxu0 0.0
  %4263 = vmatpush1.msra.mxu0 0.0
  %4264 = vmatprep.subr.mxu0 0.0
  %4265 = vmatpush1.msra.mxu0 0.0
  %4266 = vmatprep.mubr.f32.mxu0 0.0
  %4267 = vmatmul.mubr.f32.gmra.mrb[0].mxu0 %v4200
  %v4268 = vpop.f32.mrb[0].mxu0
  %v4269 = vadd.f32 0.0, %v4268
  %v4270 = vpop.f32.mrb[0].mxu0
  %4271 = vdwg.mxu0
  %4272 = vmatprep.subr.mxu0 0.0
  %4273 = vmatpush1.msra.mxu0 %v4195
  %4274 = vmatprep.subr.mxu0 0.0
  %4275 = vmatpush1.msra.mxu0 %v4196
  %4276 = vmatprep.subr.mxu0 0.0
  %4277 = vmatpush1.msra.mxu0 0.0
  %4278 = vmatprep.subr.mxu0 0.0
  %4279 = vmatpush1.msra.mxu0 0.0
  %4280 = vmatprep.subr.mxu0 0.0
  %4281 = vmatpush1.msra.mxu0 0.0
  %4282 = vmatprep.subr.mxu0 0.0
  %4283 = vmatpush1.msra.mxu0 0.0
  %4284 = vmatprep.subr.mxu0 0.0
  %4285 = vmatpush1.msra.mxu0 0.0
  %4286 = vmatprep.subr.mxu0 0.0
  %4287 = vmatpush1.msra.mxu0 0.0
  %4288 = vmatprep.subr.mxu0 0.0
  %4289 = vmatpush1.msra.mxu0 0.0
  %4290 = vmatprep.subr.mxu0 0.0
  %4291 = vmatpush1.msra.mxu0 0.0
  %4292 = vmatprep.subr.mxu0 0.0
  %4293 = vmatpush1.msra.mxu0 0.0
  %4294 = vmatprep.subr.mxu0 0.0
  %4295 = vmatpush1.msra.mxu0 0.0
  %4296 = vmatprep.subr.mxu0 0.0
  %4297 = vmatpush1.msra.mxu0 0.0
  %4298 = vmatprep.subr.mxu0 0.0
  %4299 = vmatpush1.msra.mxu0 0.0
  %4300 = vmatprep.subr.mxu0 0.0
  %4301 = vmatpush1.msra.mxu0 0.0
  %4302 = vmatprep.subr.mxu0 0.0
  %4303 = vmatpush1.msra.mxu0 0.0
  %4304 = vmatprep.subr.mxu0 0.0
  %4305 = vmatpush1.msra.mxu0 0.0
  %4306 = vmatprep.subr.mxu0 0.0
  %4307 = vmatpush1.msra.mxu0 0.0
  %4308 = vmatprep.subr.mxu0 0.0
  %4309 = vmatpush1.msra.mxu0 0.0
  %4310 = vmatprep.subr.mxu0 0.0
  %4311 = vmatpush1.msra.mxu0 0.0
  %4312 = vmatprep.subr.mxu0 0.0
  %4313 = vmatpush1.msra.mxu0 0.0
  %4314 = vmatprep.subr.mxu0 0.0
  %4315 = vmatpush1.msra.mxu0 0.0
  %4316 = vmatprep.subr.mxu0 0.0
  %4317 = vmatpush1.msra.mxu0 0.0
  %4318 = vmatprep.subr.mxu0 0.0
  %4319 = vmatpush1.msra.mxu0 0.0
  %4320 = vmatprep.subr.mxu0 0.0
  %4321 = vmatpush1.msra.mxu0 0.0
  %4322 = vmatprep.subr.mxu0 0.0
  %4323 = vmatpush1.msra.mxu0 0.0
  %4324 = vmatprep.subr.mxu0 0.0
  %4325 = vmatpush1.msra.mxu0 0.0
  %4326 = vmatprep.subr.mxu0 0.0
  %4327 = vmatpush1.msra.mxu0 0.0
  %4328 = vmatprep.subr.mxu0 0.0
  %4329 = vmatpush1.msra.mxu0 0.0
  %4330 = vmatprep.subr.mxu0 0.0
  %4331 = vmatpush1.msra.mxu0 0.0
  %4332 = vmatprep.subr.mxu0 0.0
  %4333 = vmatpush1.msra.mxu0 0.0
  %4334 = vmatprep.subr.mxu0 0.0
  %4335 = vmatpush1.msra.mxu0 0.0
  %4336 = vmatprep.mubr.f32.mxu0 0.0
  %4337 = vmatmul.mubr.f32.gmra.mrb[0].mxu0 %v4200
  %v4338 = vpop.f32.mrb[0].mxu0
  %v4339 = vadd.f32 0.0, %v4338
  %v4340 = vpop.f32.mrb[0].mxu0
  %4341 = vdwg.mxu0
  %v4342 = vadd.s32 %v2620, 32
  %v4343 = vadd.s32 %v2620, 40
  %v4344 = vadd.s32 %v2620, 48
  %v4345 = vadd.s32 %v2620, 56
  %v4346 = vadd.s32 %v2620, 64
  %v4347 = vadd.s32 %v2620, 72
  %v4348 = vadd.s32 %v2620, 80
  %v4349 = vadd.s32 %v2620, 88
  %v4350 = vadd.s32 %v2620, 96
  %v4351 = vadd.s32 %v2620, 104
  %v4352 = vadd.s32 %v2620, 112
  %v4353 = vadd.s32 %v2620, 120
  %v4354 = vadd.s32 %v1174, 128
  %v4355 = vadd.s32 %v1174, 256
  %v4356 = vadd.s32 %v1174, 384
  %v4357 = vadd.s32 %v1174, 512
  %v4358 = vmul.u32 %v2620, 5
  %v4359 = vmul.u32 %v3523, 5
  %v4360 = vmul.u32 %v3524, 5
  %v4361 = vmul.u32 %v3525, 5
  %v4362 = vmul.u32 %v4342, 5
  %v4363 = vmul.u32 %v4343, 5
  %v4364 = vmul.u32 %v4344, 5
  %v4365 = vmul.u32 %v4345, 5
  %v4366 = vmul.u32 %v4346, 5
  %v4367 = vmul.u32 %v4347, 5
  %v4368 = vmul.u32 %v4348, 5
  %v4369 = vmul.u32 %v4349, 5
  %v4370 = vmul.u32 %v4350, 5
  %v4371 = vmul.u32 %v4351, 5
  %v4372 = vmul.u32 %v4352, 5
  %v4373 = vmul.u32 %v4353, 5
  %v4374 = vsub.s32 %v1174, %v4358
  %v4375 = vsub.s32 %v4354, %v4358
  %v4376 = vsub.s32 %v4355, %v4358
  %v4377 = vsub.s32 %v4356, %v4358
  %v4378 = vsub.s32 %v4357, %v4358
  %v4379 = vsub.s32 %v1174, %v4359
  %v4380 = vsub.s32 %v4354, %v4359
  %v4381 = vsub.s32 %v4355, %v4359
  %v4382 = vsub.s32 %v4356, %v4359
  %v4383 = vsub.s32 %v4357, %v4359
  %v4384 = vsub.s32 %v1174, %v4360
  %v4385 = vsub.s32 %v4354, %v4360
  %v4386 = vsub.s32 %v4355, %v4360
  %v4387 = vsub.s32 %v4356, %v4360
  %v4388 = vsub.s32 %v4357, %v4360
  %v4389 = vsub.s32 %v1174, %v4361
  %v4390 = vsub.s32 %v4354, %v4361
  %v4391 = vsub.s32 %v4355, %v4361
  %v4392 = vsub.s32 %v4356, %v4361
  %v4393 = vsub.s32 %v4357, %v4361
  %v4394 = vsub.s32 %v1174, %v4362
  %v4395 = vsub.s32 %v4354, %v4362
  %v4396 = vsub.s32 %v4355, %v4362
  %v4397 = vsub.s32 %v4356, %v4362
  %v4398 = vsub.s32 %v4357, %v4362
  %v4399 = vsub.s32 %v1174, %v4363
  %v4400 = vsub.s32 %v4354, %v4363
  %v4401 = vsub.s32 %v4355, %v4363
  %v4402 = vsub.s32 %v4356, %v4363
  %v4403 = vsub.s32 %v4357, %v4363
  %v4404 = vsub.s32 %v1174, %v4364
  %v4405 = vsub.s32 %v4354, %v4364
  %v4406 = vsub.s32 %v4355, %v4364
  %v4407 = vsub.s32 %v4356, %v4364
  %v4408 = vsub.s32 %v4357, %v4364
  %v4409 = vsub.s32 %v1174, %v4365
  %v4410 = vsub.s32 %v4354, %v4365
  %v4411 = vsub.s32 %v4355, %v4365
  %v4412 = vsub.s32 %v4356, %v4365
  %v4413 = vsub.s32 %v4357, %v4365
  %v4414 = vsub.s32 %v1174, %v4366
  %v4415 = vsub.s32 %v4354, %v4366
  %v4416 = vsub.s32 %v4355, %v4366
  %v4417 = vsub.s32 %v4356, %v4366
  %v4418 = vsub.s32 %v4357, %v4366
  %v4419 = vsub.s32 %v1174, %v4367
  %v4420 = vsub.s32 %v4354, %v4367
  %v4421 = vsub.s32 %v4355, %v4367
  %v4422 = vsub.s32 %v4356, %v4367
  %v4423 = vsub.s32 %v4357, %v4367
  %v4424 = vsub.s32 %v1174, %v4368
  %v4425 = vsub.s32 %v4354, %v4368
  %v4426 = vsub.s32 %v4355, %v4368
  %v4427 = vsub.s32 %v4356, %v4368
  %v4428 = vsub.s32 %v4357, %v4368
  %v4429 = vsub.s32 %v1174, %v4369
  %v4430 = vsub.s32 %v4354, %v4369
  %v4431 = vsub.s32 %v4355, %v4369
  %v4432 = vsub.s32 %v4356, %v4369
  %v4433 = vsub.s32 %v4357, %v4369
  %v4434 = vsub.s32 %v1174, %v4370
  %v4435 = vsub.s32 %v4354, %v4370
  %v4436 = vsub.s32 %v4355, %v4370
  %v4437 = vsub.s32 %v4356, %v4370
  %v4438 = vsub.s32 %v4357, %v4370
  %v4439 = vsub.s32 %v1174, %v4371
  %v4440 = vsub.s32 %v4354, %v4371
  %v4441 = vsub.s32 %v4355, %v4371
  %v4442 = vsub.s32 %v4356, %v4371
  %v4443 = vsub.s32 %v4357, %v4371
  %v4444 = vsub.s32 %v1174, %v4372
  %v4445 = vsub.s32 %v4354, %v4372
  %v4446 = vsub.s32 %v4355, %v4372
  %v4447 = vsub.s32 %v4356, %v4372
  %v4448 = vsub.s32 %v4357, %v4372
  %v4449 = vsub.s32 %v1174, %v4373
  %v4450 = vsub.s32 %v4354, %v4373
  %v4451 = vsub.s32 %v4355, %v4373
  %v4452 = vsub.s32 %v4356, %v4373
  %v4453 = vsub.s32 %v4357, %v4373
  %v4455 = vrot.slane %v4339, 7
  %vm4457 = vcmask 1040384
  %v4458 = vsel %vm4457, %v4269, %v4455
  %vm4459 = vcmp.eq.s32.totalorder %v4374, 0
  %vm4460 = vcmp.eq.s32.totalorder %v4375, 0
  %vm4461 = vcmp.eq.s32.totalorder %v4376, 0
  %vm4462 = vcmp.eq.s32.totalorder %v4377, 0
  %vm4463 = vcmp.eq.s32.totalorder %v4378, 0
  %vm4464 = vcmp.eq.s32.totalorder %v4379, 0
  %vm4465 = vcmp.eq.s32.totalorder %v4380, 0
  %vm4466 = vcmp.eq.s32.totalorder %v4381, 0
  %vm4467 = vcmp.eq.s32.totalorder %v4382, 0
  %vm4468 = vcmp.eq.s32.totalorder %v4383, 0
  %vm4469 = vcmp.eq.s32.totalorder %v4384, 0
  %vm4470 = vcmp.eq.s32.totalorder %v4385, 0
  %vm4471 = vcmp.eq.s32.totalorder %v4386, 0
  %vm4472 = vcmp.eq.s32.totalorder %v4387, 0
  %vm4473 = vcmp.eq.s32.totalorder %v4388, 0
  %vm4474 = vcmp.eq.s32.totalorder %v4389, 0
  %vm4475 = vcmp.eq.s32.totalorder %v4390, 0
  %vm4476 = vcmp.eq.s32.totalorder %v4391, 0
  %vm4477 = vcmp.eq.s32.totalorder %v4392, 0
  %vm4478 = vcmp.eq.s32.totalorder %v4393, 0
  %vm4479 = vcmp.eq.s32.totalorder %v4394, 0
  %vm4480 = vcmp.eq.s32.totalorder %v4395, 0
  %vm4481 = vcmp.eq.s32.totalorder %v4396, 0
  %vm4482 = vcmp.eq.s32.totalorder %v4397, 0
  %vm4483 = vcmp.eq.s32.totalorder %v4398, 0
  %vm4484 = vcmp.eq.s32.totalorder %v4399, 0
  %vm4485 = vcmp.eq.s32.totalorder %v4400, 0
  %vm4486 = vcmp.eq.s32.totalorder %v4401, 0
  %vm4487 = vcmp.eq.s32.totalorder %v4402, 0
  %vm4488 = vcmp.eq.s32.totalorder %v4403, 0
  %vm4489 = vcmp.eq.s32.totalorder %v4404, 0
  %vm4490 = vcmp.eq.s32.totalorder %v4405, 0
  %vm4491 = vcmp.eq.s32.totalorder %v4406, 0
  %vm4492 = vcmp.eq.s32.totalorder %v4407, 0
  %vm4493 = vcmp.eq.s32.totalorder %v4408, 0
  %vm4494 = vcmp.eq.s32.totalorder %v4409, 0
  %vm4495 = vcmp.eq.s32.totalorder %v4410, 0
  %vm4496 = vcmp.eq.s32.totalorder %v4411, 0
  %vm4497 = vcmp.eq.s32.totalorder %v4412, 0
  %vm4498 = vcmp.eq.s32.totalorder %v4413, 0
  %vm4499 = vcmp.eq.s32.totalorder %v4414, 0
  %vm4500 = vcmp.eq.s32.totalorder %v4415, 0
  %vm4501 = vcmp.eq.s32.totalorder %v4416, 0
  %vm4502 = vcmp.eq.s32.totalorder %v4417, 0
  %vm4503 = vcmp.eq.s32.totalorder %v4418, 0
  %vm4504 = vcmp.eq.s32.totalorder %v4419, 0
  %vm4505 = vcmp.eq.s32.totalorder %v4420, 0
  %vm4506 = vcmp.eq.s32.totalorder %v4421, 0
  %vm4507 = vcmp.eq.s32.totalorder %v4422, 0
  %vm4508 = vcmp.eq.s32.totalorder %v4423, 0
  %vm4509 = vcmp.eq.s32.totalorder %v4424, 0
  %vm4510 = vcmp.eq.s32.totalorder %v4425, 0
  %vm4511 = vcmp.eq.s32.totalorder %v4426, 0
  %vm4512 = vcmp.eq.s32.totalorder %v4427, 0
  %vm4513 = vcmp.eq.s32.totalorder %v4428, 0
  %vm4514 = vcmp.eq.s32.totalorder %v4429, 0
  %vm4515 = vcmp.eq.s32.totalorder %v4430, 0
  %vm4516 = vcmp.eq.s32.totalorder %v4431, 0
  %vm4517 = vcmp.eq.s32.totalorder %v4432, 0
  %vm4518 = vcmp.eq.s32.totalorder %v4433, 0
  %vm4519 = vcmp.eq.s32.totalorder %v4434, 0
  %vm4520 = vcmp.eq.s32.totalorder %v4435, 0
  %vm4521 = vcmp.eq.s32.totalorder %v4436, 0
  %vm4522 = vcmp.eq.s32.totalorder %v4437, 0
  %vm4523 = vcmp.eq.s32.totalorder %v4438, 0
  %vm4524 = vcmp.eq.s32.totalorder %v4439, 0
  %vm4525 = vcmp.eq.s32.totalorder %v4440, 0
  %vm4526 = vcmp.eq.s32.totalorder %v4441, 0
  %vm4527 = vcmp.eq.s32.totalorder %v4442, 0
  %vm4528 = vcmp.eq.s32.totalorder %v4443, 0
  %vm4529 = vcmp.eq.s32.totalorder %v4444, 0
  %vm4530 = vcmp.eq.s32.totalorder %v4445, 0
  %vm4531 = vcmp.eq.s32.totalorder %v4446, 0
  %vm4532 = vcmp.eq.s32.totalorder %v4447, 0
  %vm4533 = vcmp.eq.s32.totalorder %v4448, 0
  %vm4534 = vcmp.eq.s32.totalorder %v4449, 0
  %vm4535 = vcmp.eq.s32.totalorder %v4450, 0
  %vm4536 = vcmp.eq.s32.totalorder %v4451, 0
  %vm4537 = vcmp.eq.s32.totalorder %v4452, 0
  %vm4538 = vcmp.eq.s32.totalorder %v4453, 0
  %v4539 = vsel %vm4459, 1.0, 0.0
  %v4540 = vsel %vm4460, 1.0, 0.0
  %v4541 = vsel %vm4461, 1.0, 0.0
  %v4542 = vsel %vm4462, 1.0, 0.0
  %v4543 = vsel %vm4463, 1.0, 0.0
  %v4544 = vsel %vm4464, 1.0, 0.0
  %v4545 = vsel %vm4465, 1.0, 0.0
  %v4546 = vsel %vm4466, 1.0, 0.0
  %v4547 = vsel %vm4467, 1.0, 0.0
  %v4548 = vsel %vm4468, 1.0, 0.0
  %v4549 = vsel %vm4469, 1.0, 0.0
  %v4550 = vsel %vm4470, 1.0, 0.0
  %v4551 = vsel %vm4471, 1.0, 0.0
  %v4552 = vsel %vm4472, 1.0, 0.0
  %v4553 = vsel %vm4473, 1.0, 0.0
  %v4554 = vsel %vm4474, 1.0, 0.0
  %v4555 = vsel %vm4475, 1.0, 0.0
  %v4556 = vsel %vm4476, 1.0, 0.0
  %v4557 = vsel %vm4477, 1.0, 0.0
  %v4558 = vsel %vm4478, 1.0, 0.0
  %v4559 = vsel %vm4479, 1.0, 0.0
  %v4560 = vsel %vm4480, 1.0, 0.0
  %v4561 = vsel %vm4481, 1.0, 0.0
  %v4562 = vsel %vm4482, 1.0, 0.0
  %v4563 = vsel %vm4483, 1.0, 0.0
  %v4564 = vsel %vm4484, 1.0, 0.0
  %v4565 = vsel %vm4485, 1.0, 0.0
  %v4566 = vsel %vm4486, 1.0, 0.0
  %v4567 = vsel %vm4487, 1.0, 0.0
  %v4568 = vsel %vm4488, 1.0, 0.0
  %v4569 = vsel %vm4489, 1.0, 0.0
  %v4570 = vsel %vm4490, 1.0, 0.0
  %v4571 = vsel %vm4491, 1.0, 0.0
  %v4572 = vsel %vm4492, 1.0, 0.0
  %v4573 = vsel %vm4493, 1.0, 0.0
  %v4574 = vsel %vm4494, 1.0, 0.0
  %v4575 = vsel %vm4495, 1.0, 0.0
  %v4576 = vsel %vm4496, 1.0, 0.0
  %v4577 = vsel %vm4497, 1.0, 0.0
  %v4578 = vsel %vm4498, 1.0, 0.0
  %v4579 = vsel %vm4499, 1.0, 0.0
  %v4580 = vsel %vm4500, 1.0, 0.0
  %v4581 = vsel %vm4501, 1.0, 0.0
  %v4582 = vsel %vm4502, 1.0, 0.0
  %v4583 = vsel %vm4503, 1.0, 0.0
  %v4584 = vsel %vm4504, 1.0, 0.0
  %v4585 = vsel %vm4505, 1.0, 0.0
  %v4586 = vsel %vm4506, 1.0, 0.0
  %v4587 = vsel %vm4507, 1.0, 0.0
  %v4588 = vsel %vm4508, 1.0, 0.0
  %v4589 = vsel %vm4509, 1.0, 0.0
  %v4590 = vsel %vm4510, 1.0, 0.0
  %v4591 = vsel %vm4511, 1.0, 0.0
  %v4592 = vsel %vm4512, 1.0, 0.0
  %v4593 = vsel %vm4513, 1.0, 0.0
  %v4594 = vsel %vm4514, 1.0, 0.0
  %v4595 = vsel %vm4515, 1.0, 0.0
  %v4596 = vsel %vm4516, 1.0, 0.0
  %v4597 = vsel %vm4517, 1.0, 0.0
  %v4598 = vsel %vm4518, 1.0, 0.0
  %v4599 = vsel %vm4519, 1.0, 0.0
  %v4600 = vsel %vm4520, 1.0, 0.0
  %v4601 = vsel %vm4521, 1.0, 0.0
  %v4602 = vsel %vm4522, 1.0, 0.0
  %v4603 = vsel %vm4523, 1.0, 0.0
  %v4604 = vsel %vm4524, 1.0, 0.0
  %v4605 = vsel %vm4525, 1.0, 0.0
  %v4606 = vsel %vm4526, 1.0, 0.0
  %v4607 = vsel %vm4527, 1.0, 0.0
  %v4608 = vsel %vm4528, 1.0, 0.0
  %v4609 = vsel %vm4529, 1.0, 0.0
  %v4610 = vsel %vm4530, 1.0, 0.0
  %v4611 = vsel %vm4531, 1.0, 0.0
  %v4612 = vsel %vm4532, 1.0, 0.0
  %v4613 = vsel %vm4533, 1.0, 0.0
  %v4614 = vsel %vm4534, 1.0, 0.0
  %v4615 = vsel %vm4535, 1.0, 0.0
  %v4616 = vsel %vm4536, 1.0, 0.0
  %v4617 = vsel %vm4537, 1.0, 0.0
  %v4618 = vsel %vm4538, 1.0, 0.0
  %v4620 = vrot.slane %v4269, 1
  %v4622 = vsel %vm4457, %v4620, %v4339
  %vm4623 = vcmp.eq.s32.totalorder %v4374, 1
  %vm4624 = vcmp.eq.s32.totalorder %v4375, 1
  %vm4625 = vcmp.eq.s32.totalorder %v4376, 1
  %vm4626 = vcmp.eq.s32.totalorder %v4377, 1
  %vm4627 = vcmp.eq.s32.totalorder %v4378, 1
  %vm4628 = vcmp.eq.s32.totalorder %v4379, 1
  %vm4629 = vcmp.eq.s32.totalorder %v4380, 1
  %vm4630 = vcmp.eq.s32.totalorder %v4381, 1
  %vm4631 = vcmp.eq.s32.totalorder %v4382, 1
  %vm4632 = vcmp.eq.s32.totalorder %v4383, 1
  %vm4633 = vcmp.eq.s32.totalorder %v4384, 1
  %vm4634 = vcmp.eq.s32.totalorder %v4385, 1
  %vm4635 = vcmp.eq.s32.totalorder %v4386, 1
  %vm4636 = vcmp.eq.s32.totalorder %v4387, 1
  %vm4637 = vcmp.eq.s32.totalorder %v4388, 1
  %vm4638 = vcmp.eq.s32.totalorder %v4389, 1
  %vm4639 = vcmp.eq.s32.totalorder %v4390, 1
  %vm4640 = vcmp.eq.s32.totalorder %v4391, 1
  %vm4641 = vcmp.eq.s32.totalorder %v4392, 1
  %vm4642 = vcmp.eq.s32.totalorder %v4393, 1
  %vm4643 = vcmp.eq.s32.totalorder %v4394, 1
  %vm4644 = vcmp.eq.s32.totalorder %v4395, 1
  %vm4645 = vcmp.eq.s32.totalorder %v4396, 1
  %vm4646 = vcmp.eq.s32.totalorder %v4397, 1
  %vm4647 = vcmp.eq.s32.totalorder %v4398, 1
  %vm4648 = vcmp.eq.s32.totalorder %v4399, 1
  %vm4649 = vcmp.eq.s32.totalorder %v4400, 1
  %vm4650 = vcmp.eq.s32.totalorder %v4401, 1
  %vm4651 = vcmp.eq.s32.totalorder %v4402, 1
  %vm4652 = vcmp.eq.s32.totalorder %v4403, 1
  %vm4653 = vcmp.eq.s32.totalorder %v4404, 1
  %vm4654 = vcmp.eq.s32.totalorder %v4405, 1
  %vm4655 = vcmp.eq.s32.totalorder %v4406, 1
  %vm4656 = vcmp.eq.s32.totalorder %v4407, 1
  %vm4657 = vcmp.eq.s32.totalorder %v4408, 1
  %vm4658 = vcmp.eq.s32.totalorder %v4409, 1
  %vm4659 = vcmp.eq.s32.totalorder %v4410, 1
  %vm4660 = vcmp.eq.s32.totalorder %v4411, 1
  %vm4661 = vcmp.eq.s32.totalorder %v4412, 1
  %vm4662 = vcmp.eq.s32.totalorder %v4413, 1
  %vm4663 = vcmp.eq.s32.totalorder %v4414, 1
  %vm4664 = vcmp.eq.s32.totalorder %v4415, 1
  %vm4665 = vcmp.eq.s32.totalorder %v4416, 1
  %vm4666 = vcmp.eq.s32.totalorder %v4417, 1
  %vm4667 = vcmp.eq.s32.totalorder %v4418, 1
  %vm4668 = vcmp.eq.s32.totalorder %v4419, 1
  %vm4669 = vcmp.eq.s32.totalorder %v4420, 1
  %vm4670 = vcmp.eq.s32.totalorder %v4421, 1
  %vm4671 = vcmp.eq.s32.totalorder %v4422, 1
  %vm4672 = vcmp.eq.s32.totalorder %v4423, 1
  %vm4673 = vcmp.eq.s32.totalorder %v4424, 1
  %vm4674 = vcmp.eq.s32.totalorder %v4425, 1
  %vm4675 = vcmp.eq.s32.totalorder %v4426, 1
  %vm4676 = vcmp.eq.s32.totalorder %v4427, 1
  %vm4677 = vcmp.eq.s32.totalorder %v4428, 1
  %vm4678 = vcmp.eq.s32.totalorder %v4429, 1
  %vm4679 = vcmp.eq.s32.totalorder %v4430, 1
  %vm4680 = vcmp.eq.s32.totalorder %v4431, 1
  %vm4681 = vcmp.eq.s32.totalorder %v4432, 1
  %vm4682 = vcmp.eq.s32.totalorder %v4433, 1
  %vm4683 = vcmp.eq.s32.totalorder %v4434, 1
  %vm4684 = vcmp.eq.s32.totalorder %v4435, 1
  %vm4685 = vcmp.eq.s32.totalorder %v4436, 1
  %vm4686 = vcmp.eq.s32.totalorder %v4437, 1
  %vm4687 = vcmp.eq.s32.totalorder %v4438, 1
  %vm4688 = vcmp.eq.s32.totalorder %v4439, 1
  %vm4689 = vcmp.eq.s32.totalorder %v4440, 1
  %vm4690 = vcmp.eq.s32.totalorder %v4441, 1
  %vm4691 = vcmp.eq.s32.totalorder %v4442, 1
  %vm4692 = vcmp.eq.s32.totalorder %v4443, 1
  %vm4693 = vcmp.eq.s32.totalorder %v4444, 1
  %vm4694 = vcmp.eq.s32.totalorder %v4445, 1
  %vm4695 = vcmp.eq.s32.totalorder %v4446, 1
  %vm4696 = vcmp.eq.s32.totalorder %v4447, 1
  %vm4697 = vcmp.eq.s32.totalorder %v4448, 1
  %vm4698 = vcmp.eq.s32.totalorder %v4449, 1
  %vm4699 = vcmp.eq.s32.totalorder %v4450, 1
  %vm4700 = vcmp.eq.s32.totalorder %v4451, 1
  %vm4701 = vcmp.eq.s32.totalorder %v4452, 1
  %vm4702 = vcmp.eq.s32.totalorder %v4453, 1
  %v4703 = vsel %vm4623, 1.0, 0.0
  %v4704 = vsel %vm4624, 1.0, 0.0
  %v4705 = vsel %vm4625, 1.0, 0.0
  %v4706 = vsel %vm4626, 1.0, 0.0
  %v4707 = vsel %vm4627, 1.0, 0.0
  %v4708 = vsel %vm4628, 1.0, 0.0
  %v4709 = vsel %vm4629, 1.0, 0.0
  %v4710 = vsel %vm4630, 1.0, 0.0
  %v4711 = vsel %vm4631, 1.0, 0.0
  %v4712 = vsel %vm4632, 1.0, 0.0
  %v4713 = vsel %vm4633, 1.0, 0.0
  %v4714 = vsel %vm4634, 1.0, 0.0
  %v4715 = vsel %vm4635, 1.0, 0.0
  %v4716 = vsel %vm4636, 1.0, 0.0
  %v4717 = vsel %vm4637, 1.0, 0.0
  %v4718 = vsel %vm4638, 1.0, 0.0
  %v4719 = vsel %vm4639, 1.0, 0.0
  %v4720 = vsel %vm4640, 1.0, 0.0
  %v4721 = vsel %vm4641, 1.0, 0.0
  %v4722 = vsel %vm4642, 1.0, 0.0
  %v4723 = vsel %vm4643, 1.0, 0.0
  %v4724 = vsel %vm4644, 1.0, 0.0
  %v4725 = vsel %vm4645, 1.0, 0.0
  %v4726 = vsel %vm4646, 1.0, 0.0
  %v4727 = vsel %vm4647, 1.0, 0.0
  %v4728 = vsel %vm4648, 1.0, 0.0
  %v4729 = vsel %vm4649, 1.0, 0.0
  %v4730 = vsel %vm4650, 1.0, 0.0
  %v4731 = vsel %vm4651, 1.0, 0.0
  %v4732 = vsel %vm4652, 1.0, 0.0
  %v4733 = vsel %vm4653, 1.0, 0.0
  %v4734 = vsel %vm4654, 1.0, 0.0
  %v4735 = vsel %vm4655, 1.0, 0.0
  %v4736 = vsel %vm4656, 1.0, 0.0
  %v4737 = vsel %vm4657, 1.0, 0.0
  %v4738 = vsel %vm4658, 1.0, 0.0
  %v4739 = vsel %vm4659, 1.0, 0.0
  %v4740 = vsel %vm4660, 1.0, 0.0
  %v4741 = vsel %vm4661, 1.0, 0.0
  %v4742 = vsel %vm4662, 1.0, 0.0
  %v4743 = vsel %vm4663, 1.0, 0.0
  %v4744 = vsel %vm4664, 1.0, 0.0
  %v4745 = vsel %vm4665, 1.0, 0.0
  %v4746 = vsel %vm4666, 1.0, 0.0
  %v4747 = vsel %vm4667, 1.0, 0.0
  %v4748 = vsel %vm4668, 1.0, 0.0
  %v4749 = vsel %vm4669, 1.0, 0.0
  %v4750 = vsel %vm4670, 1.0, 0.0
  %v4751 = vsel %vm4671, 1.0, 0.0
  %v4752 = vsel %vm4672, 1.0, 0.0
  %v4753 = vsel %vm4673, 1.0, 0.0
  %v4754 = vsel %vm4674, 1.0, 0.0
  %v4755 = vsel %vm4675, 1.0, 0.0
  %v4756 = vsel %vm4676, 1.0, 0.0
  %v4757 = vsel %vm4677, 1.0, 0.0
  %v4758 = vsel %vm4678, 1.0, 0.0
  %v4759 = vsel %vm4679, 1.0, 0.0
  %v4760 = vsel %vm4680, 1.0, 0.0
  %v4761 = vsel %vm4681, 1.0, 0.0
  %v4762 = vsel %vm4682, 1.0, 0.0
  %v4763 = vsel %vm4683, 1.0, 0.0
  %v4764 = vsel %vm4684, 1.0, 0.0
  %v4765 = vsel %vm4685, 1.0, 0.0
  %v4766 = vsel %vm4686, 1.0, 0.0
  %v4767 = vsel %vm4687, 1.0, 0.0
  %v4768 = vsel %vm4688, 1.0, 0.0
  %v4769 = vsel %vm4689, 1.0, 0.0
  %v4770 = vsel %vm4690, 1.0, 0.0
  %v4771 = vsel %vm4691, 1.0, 0.0
  %v4772 = vsel %vm4692, 1.0, 0.0
  %v4773 = vsel %vm4693, 1.0, 0.0
  %v4774 = vsel %vm4694, 1.0, 0.0
  %v4775 = vsel %vm4695, 1.0, 0.0
  %v4776 = vsel %vm4696, 1.0, 0.0
  %v4777 = vsel %vm4697, 1.0, 0.0
  %v4778 = vsel %vm4698, 1.0, 0.0
  %v4779 = vsel %vm4699, 1.0, 0.0
  %v4780 = vsel %vm4700, 1.0, 0.0
  %v4781 = vsel %vm4701, 1.0, 0.0
  %v4782 = vsel %vm4702, 1.0, 0.0
  %v4784 = vsel %vm4107, %v4622, 0
  %v4787 = vsel %vm2651, %v4778, 0
  %v4790 = vsel %vm2651, %v4779, 0
  %v4793 = vsel %vm2651, %v4780, 0
  %v4796 = vsel %vm2651, %v4781, 0
  %v4799 = vsel %vm2651, %v4782, 0
  %4801 = vmatprep.subr.mxu0 %v4704
  %4802 = vmatpush1.msra.mxu0 %v4703
  %4803 = vmatprep.subr.mxu0 %v4709
  %4804 = vmatpush1.msra.mxu0 %v4708
  %4805 = vmatprep.subr.mxu0 %v4714
  %4806 = vmatpush1.msra.mxu0 %v4713
  %4807 = vmatprep.subr.mxu0 %v4719
  %4808 = vmatpush1.msra.mxu0 %v4718
  %4809 = vmatprep.subr.mxu0 %v4724
  %4810 = vmatpush1.msra.mxu0 %v4723
  %4811 = vmatprep.subr.mxu0 %v4729
  %4812 = vmatpush1.msra.mxu0 %v4728
  %4813 = vmatprep.subr.mxu0 %v4734
  %4814 = vmatpush1.msra.mxu0 %v4733
  %4815 = vmatprep.subr.mxu0 %v4739
  %4816 = vmatpush1.msra.mxu0 %v4738
  %4817 = vmatprep.subr.mxu0 %v4744
  %4818 = vmatpush1.msra.mxu0 %v4743
  %4819 = vmatprep.subr.mxu0 %v4749
  %4820 = vmatpush1.msra.mxu0 %v4748
  %4821 = vmatprep.subr.mxu0 %v4754
  %4822 = vmatpush1.msra.mxu0 %v4753
  %4823 = vmatprep.subr.mxu0 %v4759
  %4824 = vmatpush1.msra.mxu0 %v4758
  %4825 = vmatprep.subr.mxu0 %v4764
  %4826 = vmatpush1.msra.mxu0 %v4763
  %4827 = vmatprep.subr.mxu0 %v4769
  %4828 = vmatpush1.msra.mxu0 %v4768
  %4829 = vmatprep.subr.mxu0 %v4774
  %4830 = vmatpush1.msra.mxu0 %v4773
  %4831 = vmatprep.subr.mxu0 %v4790
  %4832 = vmatpush1.msra.mxu0 %v4787
  %4833 = vmatprep.subr.mxu0 0.0
  %4834 = vmatpush1.msra.mxu0 0.0
  %4835 = vmatprep.subr.mxu0 0.0
  %4836 = vmatpush1.msra.mxu0 0.0
  %4837 = vmatprep.subr.mxu0 0.0
  %4838 = vmatpush1.msra.mxu0 0.0
  %4839 = vmatprep.subr.mxu0 0.0
  %4840 = vmatpush1.msra.mxu0 0.0
  %4841 = vmatprep.subr.mxu0 0.0
  %4842 = vmatpush1.msra.mxu0 0.0
  %4843 = vmatprep.subr.mxu0 0.0
  %4844 = vmatpush1.msra.mxu0 0.0
  %4845 = vmatprep.subr.mxu0 0.0
  %4846 = vmatpush1.msra.mxu0 0.0
  %4847 = vmatprep.subr.mxu0 0.0
  %4848 = vmatpush1.msra.mxu0 0.0
  %4849 = vmatprep.subr.mxu0 0.0
  %4850 = vmatpush1.msra.mxu0 0.0
  %4851 = vmatprep.subr.mxu0 0.0
  %4852 = vmatpush1.msra.mxu0 0.0
  %4853 = vmatprep.subr.mxu0 0.0
  %4854 = vmatpush1.msra.mxu0 0.0
  %4855 = vmatprep.subr.mxu0 0.0
  %4856 = vmatpush1.msra.mxu0 0.0
  %4857 = vmatprep.subr.mxu0 0.0
  %4858 = vmatpush1.msra.mxu0 0.0
  %4859 = vmatprep.subr.mxu0 0.0
  %4860 = vmatpush1.msra.mxu0 0.0
  %4861 = vmatprep.subr.mxu0 0.0
  %4862 = vmatpush1.msra.mxu0 0.0
  %4863 = vmatprep.subr.mxu0 0.0
  %4864 = vmatpush1.msra.mxu0 0.0
  %4865 = vmatprep.mubr.f32.mxu0 0.0
  %4866 = vmatmul.mubr.f32.gmra.mrb[0].mxu0 %v4784
  %v4867 = vpop.f32.mrb[0].mxu0
  %v4868 = vadd.f32 0.0, %v4867
  %v4869 = vpop.f32.mrb[0].mxu0
  %v4870 = vadd.f32 0.0, %v4869
  %4871 = vdwg.mxu0
  %4872 = vmatprep.subr.mxu0 %v4706
  %4873 = vmatpush1.msra.mxu0 %v4705
  %4874 = vmatprep.subr.mxu0 %v4711
  %4875 = vmatpush1.msra.mxu0 %v4710
  %4876 = vmatprep.subr.mxu0 %v4716
  %4877 = vmatpush1.msra.mxu0 %v4715
  %4878 = vmatprep.subr.mxu0 %v4721
  %4879 = vmatpush1.msra.mxu0 %v4720
  %4880 = vmatprep.subr.mxu0 %v4726
  %4881 = vmatpush1.msra.mxu0 %v4725
  %4882 = vmatprep.subr.mxu0 %v4731
  %4883 = vmatpush1.msra.mxu0 %v4730
  %4884 = vmatprep.subr.mxu0 %v4736
  %4885 = vmatpush1.msra.mxu0 %v4735
  %4886 = vmatprep.subr.mxu0 %v4741
  %4887 = vmatpush1.msra.mxu0 %v4740
  %4888 = vmatprep.subr.mxu0 %v4746
  %4889 = vmatpush1.msra.mxu0 %v4745
  %4890 = vmatprep.subr.mxu0 %v4751
  %4891 = vmatpush1.msra.mxu0 %v4750
  %4892 = vmatprep.subr.mxu0 %v4756
  %4893 = vmatpush1.msra.mxu0 %v4755
  %4894 = vmatprep.subr.mxu0 %v4761
  %4895 = vmatpush1.msra.mxu0 %v4760
  %4896 = vmatprep.subr.mxu0 %v4766
  %4897 = vmatpush1.msra.mxu0 %v4765
  %4898 = vmatprep.subr.mxu0 %v4771
  %4899 = vmatpush1.msra.mxu0 %v4770
  %4900 = vmatprep.subr.mxu0 %v4776
  %4901 = vmatpush1.msra.mxu0 %v4775
  %4902 = vmatprep.subr.mxu0 %v4796
  %4903 = vmatpush1.msra.mxu0 %v4793
  %4904 = vmatprep.subr.mxu0 0.0
  %4905 = vmatpush1.msra.mxu0 0.0
  %4906 = vmatprep.subr.mxu0 0.0
  %4907 = vmatpush1.msra.mxu0 0.0
  %4908 = vmatprep.subr.mxu0 0.0
  %4909 = vmatpush1.msra.mxu0 0.0
  %4910 = vmatprep.subr.mxu0 0.0
  %4911 = vmatpush1.msra.mxu0 0.0
  %4912 = vmatprep.subr.mxu0 0.0
  %4913 = vmatpush1.msra.mxu0 0.0
  %4914 = vmatprep.subr.mxu0 0.0
  %4915 = vmatpush1.msra.mxu0 0.0
  %4916 = vmatprep.subr.mxu0 0.0
  %4917 = vmatpush1.msra.mxu0 0.0
  %4918 = vmatprep.subr.mxu0 0.0
  %4919 = vmatpush1.msra.mxu0 0.0
  %4920 = vmatprep.subr.mxu0 0.0
  %4921 = vmatpush1.msra.mxu0 0.0
  %4922 = vmatprep.subr.mxu0 0.0
  %4923 = vmatpush1.msra.mxu0 0.0
  %4924 = vmatprep.subr.mxu0 0.0
  %4925 = vmatpush1.msra.mxu0 0.0
  %4926 = vmatprep.subr.mxu0 0.0
  %4927 = vmatpush1.msra.mxu0 0.0
  %4928 = vmatprep.subr.mxu0 0.0
  %4929 = vmatpush1.msra.mxu0 0.0
  %4930 = vmatprep.subr.mxu0 0.0
  %4931 = vmatpush1.msra.mxu0 0.0
  %4932 = vmatprep.subr.mxu0 0.0
  %4933 = vmatpush1.msra.mxu0 0.0
  %4934 = vmatprep.subr.mxu0 0.0
  %4935 = vmatpush1.msra.mxu0 0.0
  %4936 = vmatprep.mubr.f32.mxu0 0.0
  %4937 = vmatmul.mubr.f32.gmra.mrb[0].mxu0 %v4784
  %v4938 = vpop.f32.mrb[0].mxu0
  %v4939 = vadd.f32 0.0, %v4938
  %v4940 = vpop.f32.mrb[0].mxu0
  %v4941 = vadd.f32 0.0, %v4940
  %4942 = vdwg.mxu0
  %4943 = vmatprep.subr.mxu0 0.0
  %4944 = vmatpush1.msra.mxu0 %v4707
  %4945 = vmatprep.subr.mxu0 0.0
  %4946 = vmatpush1.msra.mxu0 %v4712
  %4947 = vmatprep.subr.mxu0 0.0
  %4948 = vmatpush1.msra.mxu0 %v4717
  %4949 = vmatprep.subr.mxu0 0.0
  %4950 = vmatpush1.msra.mxu0 %v4722
  %4951 = vmatprep.subr.mxu0 0.0
  %4952 = vmatpush1.msra.mxu0 %v4727
  %4953 = vmatprep.subr.mxu0 0.0
  %4954 = vmatpush1.msra.mxu0 %v4732
  %4955 = vmatprep.subr.mxu0 0.0
  %4956 = vmatpush1.msra.mxu0 %v4737
  %4957 = vmatprep.subr.mxu0 0.0
  %4958 = vmatpush1.msra.mxu0 %v4742
  %4959 = vmatprep.subr.mxu0 0.0
  %4960 = vmatpush1.msra.mxu0 %v4747
  %4961 = vmatprep.subr.mxu0 0.0
  %4962 = vmatpush1.msra.mxu0 %v4752
  %4963 = vmatprep.subr.mxu0 0.0
  %4964 = vmatpush1.msra.mxu0 %v4757
  %4965 = vmatprep.subr.mxu0 0.0
  %4966 = vmatpush1.msra.mxu0 %v4762
  %4967 = vmatprep.subr.mxu0 0.0
  %4968 = vmatpush1.msra.mxu0 %v4767
  %4969 = vmatprep.subr.mxu0 0.0
  %4970 = vmatpush1.msra.mxu0 %v4772
  %4971 = vmatprep.subr.mxu0 0.0
  %4972 = vmatpush1.msra.mxu0 %v4777
  %4973 = vmatprep.subr.mxu0 0.0
  %4974 = vmatpush1.msra.mxu0 %v4799
  %4975 = vmatprep.subr.mxu0 0.0
  %4976 = vmatpush1.msra.mxu0 0.0
  %4977 = vmatprep.subr.mxu0 0.0
  %4978 = vmatpush1.msra.mxu0 0.0
  %4979 = vmatprep.subr.mxu0 0.0
  %4980 = vmatpush1.msra.mxu0 0.0
  %4981 = vmatprep.subr.mxu0 0.0
  %4982 = vmatpush1.msra.mxu0 0.0
  %4983 = vmatprep.subr.mxu0 0.0
  %4984 = vmatpush1.msra.mxu0 0.0
  %4985 = vmatprep.subr.mxu0 0.0
  %4986 = vmatpush1.msra.mxu0 0.0
  %4987 = vmatprep.subr.mxu0 0.0
  %4988 = vmatpush1.msra.mxu0 0.0
  %4989 = vmatprep.subr.mxu0 0.0
  %4990 = vmatpush1.msra.mxu0 0.0
  %4991 = vmatprep.subr.mxu0 0.0
  %4992 = vmatpush1.msra.mxu0 0.0
  %4993 = vmatprep.subr.mxu0 0.0
  %4994 = vmatpush1.msra.mxu0 0.0
  %4995 = vmatprep.subr.mxu0 0.0
  %4996 = vmatpush1.msra.mxu0 0.0
  %4997 = vmatprep.subr.mxu0 0.0
  %4998 = vmatpush1.msra.mxu0 0.0
  %4999 = vmatprep.subr.mxu0 0.0
  %5000 = vmatpush1.msra.mxu0 0.0
  %5001 = vmatprep.subr.mxu0 0.0
  %5002 = vmatpush1.msra.mxu0 0.0
  %5003 = vmatprep.subr.mxu0 0.0
  %5004 = vmatpush1.msra.mxu0 0.0
  %5005 = vmatprep.subr.mxu0 0.0
  %5006 = vmatpush1.msra.mxu0 0.0
  %5007 = vmatprep.mubr.f32.mxu0 0.0
  %5008 = vmatmul.mubr.f32.gmra.mrb[0].mxu0 %v4784
  %v5009 = vpop.f32.mrb[0].mxu0
  %v5010 = vadd.f32 0.0, %v5009
  %v5011 = vpop.f32.mrb[0].mxu0
  %5012 = vdwg.mxu0
  %v5014 = vsel %vm4107, %v4458, 0
  %v5017 = vsel %vm2651, %v4614, 0
  %v5020 = vsel %vm2651, %v4615, 0
  %v5023 = vsel %vm2651, %v4616, 0
  %v5026 = vsel %vm2651, %v4617, 0
  %v5029 = vsel %vm2651, %v4618, 0
  %5031 = vmatprep.subr.mxu0 %v4540
  %5032 = vmatpush1.msra.mxu0 %v4539
  %5033 = vmatprep.subr.mxu0 %v4545
  %5034 = vmatpush1.msra.mxu0 %v4544
  %5035 = vmatprep.subr.mxu0 %v4550
  %5036 = vmatpush1.msra.mxu0 %v4549
  %5037 = vmatprep.subr.mxu0 %v4555
  %5038 = vmatpush1.msra.mxu0 %v4554
  %5039 = vmatprep.subr.mxu0 %v4560
  %5040 = vmatpush1.msra.mxu0 %v4559
  %5041 = vmatprep.subr.mxu0 %v4565
  %5042 = vmatpush1.msra.mxu0 %v4564
  %5043 = vmatprep.subr.mxu0 %v4570
  %5044 = vmatpush1.msra.mxu0 %v4569
  %5045 = vmatprep.subr.mxu0 %v4575
  %5046 = vmatpush1.msra.mxu0 %v4574
  %5047 = vmatprep.subr.mxu0 %v4580
  %5048 = vmatpush1.msra.mxu0 %v4579
  %5049 = vmatprep.subr.mxu0 %v4585
  %5050 = vmatpush1.msra.mxu0 %v4584
  %5051 = vmatprep.subr.mxu0 %v4590
  %5052 = vmatpush1.msra.mxu0 %v4589
  %5053 = vmatprep.subr.mxu0 %v4595
  %5054 = vmatpush1.msra.mxu0 %v4594
  %5055 = vmatprep.subr.mxu0 %v4600
  %5056 = vmatpush1.msra.mxu0 %v4599
  %5057 = vmatprep.subr.mxu0 %v4605
  %5058 = vmatpush1.msra.mxu0 %v4604
  %5059 = vmatprep.subr.mxu0 %v4610
  %5060 = vmatpush1.msra.mxu0 %v4609
  %5061 = vmatprep.subr.mxu0 %v5020
  %5062 = vmatpush1.msra.mxu0 %v5017
  %5063 = vmatprep.subr.mxu0 0.0
  %5064 = vmatpush1.msra.mxu0 0.0
  %5065 = vmatprep.subr.mxu0 0.0
  %5066 = vmatpush1.msra.mxu0 0.0
  %5067 = vmatprep.subr.mxu0 0.0
  %5068 = vmatpush1.msra.mxu0 0.0
  %5069 = vmatprep.subr.mxu0 0.0
  %5070 = vmatpush1.msra.mxu0 0.0
  %5071 = vmatprep.subr.mxu0 0.0
  %5072 = vmatpush1.msra.mxu0 0.0
  %5073 = vmatprep.subr.mxu0 0.0
  %5074 = vmatpush1.msra.mxu0 0.0
  %5075 = vmatprep.subr.mxu0 0.0
  %5076 = vmatpush1.msra.mxu0 0.0
  %5077 = vmatprep.subr.mxu0 0.0
  %5078 = vmatpush1.msra.mxu0 0.0
  %5079 = vmatprep.subr.mxu0 0.0
  %5080 = vmatpush1.msra.mxu0 0.0
  %5081 = vmatprep.subr.mxu0 0.0
  %5082 = vmatpush1.msra.mxu0 0.0
  %5083 = vmatprep.subr.mxu0 0.0
  %5084 = vmatpush1.msra.mxu0 0.0
  %5085 = vmatprep.subr.mxu0 0.0
  %5086 = vmatpush1.msra.mxu0 0.0
  %5087 = vmatprep.subr.mxu0 0.0
  %5088 = vmatpush1.msra.mxu0 0.0
  %5089 = vmatprep.subr.mxu0 0.0
  %5090 = vmatpush1.msra.mxu0 0.0
  %5091 = vmatprep.subr.mxu0 0.0
  %5092 = vmatpush1.msra.mxu0 0.0
  %5093 = vmatprep.subr.mxu0 0.0
  %5094 = vmatpush1.msra.mxu0 0.0
  %5095 = vmatprep.mubr.f32.mxu0 0.0
  %5096 = vmatmul.mubr.f32.gmra.mrb[0].mxu0 %v5014
  %v5097 = vpop.f32.mrb[0].mxu0
  %v5098 = vadd.f32 %v4868, %v5097
  %v5099 = vpop.f32.mrb[0].mxu0
  %v5100 = vadd.f32 %v4870, %v5099
  %5101 = vdwg.mxu0
  %5102 = vmatprep.subr.mxu0 %v4542
  %5103 = vmatpush1.msra.mxu0 %v4541
  %5104 = vmatprep.subr.mxu0 %v4547
  %5105 = vmatpush1.msra.mxu0 %v4546
  %5106 = vmatprep.subr.mxu0 %v4552
  %5107 = vmatpush1.msra.mxu0 %v4551
  %5108 = vmatprep.subr.mxu0 %v4557
  %5109 = vmatpush1.msra.mxu0 %v4556
  %5110 = vmatprep.subr.mxu0 %v4562
  %5111 = vmatpush1.msra.mxu0 %v4561
  %5112 = vmatprep.subr.mxu0 %v4567
  %5113 = vmatpush1.msra.mxu0 %v4566
  %5114 = vmatprep.subr.mxu0 %v4572
  %5115 = vmatpush1.msra.mxu0 %v4571
  %5116 = vmatprep.subr.mxu0 %v4577
  %5117 = vmatpush1.msra.mxu0 %v4576
  %5118 = vmatprep.subr.mxu0 %v4582
  %5119 = vmatpush1.msra.mxu0 %v4581
  %5120 = vmatprep.subr.mxu0 %v4587
  %5121 = vmatpush1.msra.mxu0 %v4586
  %5122 = vmatprep.subr.mxu0 %v4592
  %5123 = vmatpush1.msra.mxu0 %v4591
  %5124 = vmatprep.subr.mxu0 %v4597
  %5125 = vmatpush1.msra.mxu0 %v4596
  %5126 = vmatprep.subr.mxu0 %v4602
  %5127 = vmatpush1.msra.mxu0 %v4601
  %5128 = vmatprep.subr.mxu0 %v4607
  %5129 = vmatpush1.msra.mxu0 %v4606
  %5130 = vmatprep.subr.mxu0 %v4612
  %5131 = vmatpush1.msra.mxu0 %v4611
  %5132 = vmatprep.subr.mxu0 %v5026
  %5133 = vmatpush1.msra.mxu0 %v5023
  %5134 = vmatprep.subr.mxu0 0.0
  %5135 = vmatpush1.msra.mxu0 0.0
  %5136 = vmatprep.subr.mxu0 0.0
  %5137 = vmatpush1.msra.mxu0 0.0
  %5138 = vmatprep.subr.mxu0 0.0
  %5139 = vmatpush1.msra.mxu0 0.0
  %5140 = vmatprep.subr.mxu0 0.0
  %5141 = vmatpush1.msra.mxu0 0.0
  %5142 = vmatprep.subr.mxu0 0.0
  %5143 = vmatpush1.msra.mxu0 0.0
  %5144 = vmatprep.subr.mxu0 0.0
  %5145 = vmatpush1.msra.mxu0 0.0
  %5146 = vmatprep.subr.mxu0 0.0
  %5147 = vmatpush1.msra.mxu0 0.0
  %5148 = vmatprep.subr.mxu0 0.0
  %5149 = vmatpush1.msra.mxu0 0.0
  %5150 = vmatprep.subr.mxu0 0.0
  %5151 = vmatpush1.msra.mxu0 0.0
  %5152 = vmatprep.subr.mxu0 0.0
  %5153 = vmatpush1.msra.mxu0 0.0
  %5154 = vmatprep.subr.mxu0 0.0
  %5155 = vmatpush1.msra.mxu0 0.0
  %5156 = vmatprep.subr.mxu0 0.0
  %5157 = vmatpush1.msra.mxu0 0.0
  %5158 = vmatprep.subr.mxu0 0.0
  %5159 = vmatpush1.msra.mxu0 0.0
  %5160 = vmatprep.subr.mxu0 0.0
  %5161 = vmatpush1.msra.mxu0 0.0
  %5162 = vmatprep.subr.mxu0 0.0
  %5163 = vmatpush1.msra.mxu0 0.0
  %5164 = vmatprep.subr.mxu0 0.0
  %5165 = vmatpush1.msra.mxu0 0.0
  %5166 = vmatprep.mubr.f32.mxu0 0.0
  %5167 = vmatmul.mubr.f32.gmra.mrb[0].mxu0 %v5014
  %v5168 = vpop.f32.mrb[0].mxu0
  %v5169 = vadd.f32 %v4939, %v5168
  %v5170 = vpop.f32.mrb[0].mxu0
  %v5171 = vadd.f32 %v4941, %v5170
  %5172 = vdwg.mxu0
  %5173 = vmatprep.subr.mxu0 0.0
  %5174 = vmatpush1.msra.mxu0 %v4543
  %5175 = vmatprep.subr.mxu0 0.0
  %5176 = vmatpush1.msra.mxu0 %v4548
  %5177 = vmatprep.subr.mxu0 0.0
  %5178 = vmatpush1.msra.mxu0 %v4553
  %5179 = vmatprep.subr.mxu0 0.0
  %5180 = vmatpush1.msra.mxu0 %v4558
  %5181 = vmatprep.subr.mxu0 0.0
  %5182 = vmatpush1.msra.mxu0 %v4563
  %5183 = vmatprep.subr.mxu0 0.0
  %5184 = vmatpush1.msra.mxu0 %v4568
  %5185 = vmatprep.subr.mxu0 0.0
  %5186 = vmatpush1.msra.mxu0 %v4573
  %5187 = vmatprep.subr.mxu0 0.0
  %5188 = vmatpush1.msra.mxu0 %v4578
  %5189 = vmatprep.subr.mxu0 0.0
  %5190 = vmatpush1.msra.mxu0 %v4583
  %5191 = vmatprep.subr.mxu0 0.0
  %5192 = vmatpush1.msra.mxu0 %v4588
  %5193 = vmatprep.subr.mxu0 0.0
  %5194 = vmatpush1.msra.mxu0 %v4593
  %5195 = vmatprep.subr.mxu0 0.0
  %5196 = vmatpush1.msra.mxu0 %v4598
  %5197 = vmatprep.subr.mxu0 0.0
  %5198 = vmatpush1.msra.mxu0 %v4603
  %5199 = vmatprep.subr.mxu0 0.0
  %5200 = vmatpush1.msra.mxu0 %v4608
  %5201 = vmatprep.subr.mxu0 0.0
  %5202 = vmatpush1.msra.mxu0 %v4613
  %5203 = vmatprep.subr.mxu0 0.0
  %5204 = vmatpush1.msra.mxu0 %v5029
  %5205 = vmatprep.subr.mxu0 0.0
  %5206 = vmatpush1.msra.mxu0 0.0
  %5207 = vmatprep.subr.mxu0 0.0
  %5208 = vmatpush1.msra.mxu0 0.0
  %5209 = vmatprep.subr.mxu0 0.0
  %5210 = vmatpush1.msra.mxu0 0.0
  %5211 = vmatprep.subr.mxu0 0.0
  %5212 = vmatpush1.msra.mxu0 0.0
  %5213 = vmatprep.subr.mxu0 0.0
  %5214 = vmatpush1.msra.mxu0 0.0
  %5215 = vmatprep.subr.mxu0 0.0
  %5216 = vmatpush1.msra.mxu0 0.0
  %5217 = vmatprep.subr.mxu0 0.0
  %5218 = vmatpush1.msra.mxu0 0.0
  %5219 = vmatprep.subr.mxu0 0.0
  %5220 = vmatpush1.msra.mxu0 0.0
  %5221 = vmatprep.subr.mxu0 0.0
  %5222 = vmatpush1.msra.mxu0 0.0
  %5223 = vmatprep.subr.mxu0 0.0
  %5224 = vmatpush1.msra.mxu0 0.0
  %5225 = vmatprep.subr.mxu0 0.0
  %5226 = vmatpush1.msra.mxu0 0.0
  %5227 = vmatprep.subr.mxu0 0.0
  %5228 = vmatpush1.msra.mxu0 0.0
  %5229 = vmatprep.subr.mxu0 0.0
  %5230 = vmatpush1.msra.mxu0 0.0
  %5231 = vmatprep.subr.mxu0 0.0
  %5232 = vmatpush1.msra.mxu0 0.0
  %5233 = vmatprep.subr.mxu0 0.0
  %5234 = vmatpush1.msra.mxu0 0.0
  %5235 = vmatprep.subr.mxu0 0.0
  %5236 = vmatpush1.msra.mxu0 0.0
  %5237 = vmatprep.mubr.f32.mxu0 0.0
  %5238 = vmatmul.mubr.f32.gmra.mrb[0].mxu0 %v5014
  %v5239 = vpop.f32.mrb[0].mxu0
  %v5240 = vadd.f32 %v5010, %v5239
  %v5241 = vpop.f32.mrb[0].mxu0
  %5242 = vdwg.mxu0
  %v5243 = vrot.slane %v4269, 2
  %v5245 = vrot.slane %v4339, 1
  %v5247 = vsel %vm4457, %v5243, %v5245
  %vm5248 = vcmp.eq.s32.totalorder %v4374, 2
  %vm5249 = vcmp.eq.s32.totalorder %v4375, 2
  %vm5250 = vcmp.eq.s32.totalorder %v4376, 2
  %vm5251 = vcmp.eq.s32.totalorder %v4377, 2
  %vm5252 = vcmp.eq.s32.totalorder %v4378, 2
  %vm5253 = vcmp.eq.s32.totalorder %v4379, 2
  %vm5254 = vcmp.eq.s32.totalorder %v4380, 2
  %vm5255 = vcmp.eq.s32.totalorder %v4381, 2
  %vm5256 = vcmp.eq.s32.totalorder %v4382, 2
  %vm5257 = vcmp.eq.s32.totalorder %v4383, 2
  %vm5258 = vcmp.eq.s32.totalorder %v4384, 2
  %vm5259 = vcmp.eq.s32.totalorder %v4385, 2
  %vm5260 = vcmp.eq.s32.totalorder %v4386, 2
  %vm5261 = vcmp.eq.s32.totalorder %v4387, 2
  %vm5262 = vcmp.eq.s32.totalorder %v4388, 2
  %vm5263 = vcmp.eq.s32.totalorder %v4389, 2
  %vm5264 = vcmp.eq.s32.totalorder %v4390, 2
  %vm5265 = vcmp.eq.s32.totalorder %v4391, 2
  %vm5266 = vcmp.eq.s32.totalorder %v4392, 2
  %vm5267 = vcmp.eq.s32.totalorder %v4393, 2
  %vm5268 = vcmp.eq.s32.totalorder %v4394, 2
  %vm5269 = vcmp.eq.s32.totalorder %v4395, 2
  %vm5270 = vcmp.eq.s32.totalorder %v4396, 2
  %vm5271 = vcmp.eq.s32.totalorder %v4397, 2
  %vm5272 = vcmp.eq.s32.totalorder %v4398, 2
  %vm5273 = vcmp.eq.s32.totalorder %v4399, 2
  %vm5274 = vcmp.eq.s32.totalorder %v4400, 2
  %vm5275 = vcmp.eq.s32.totalorder %v4401, 2
  %vm5276 = vcmp.eq.s32.totalorder %v4402, 2
  %vm5277 = vcmp.eq.s32.totalorder %v4403, 2
  %vm5278 = vcmp.eq.s32.totalorder %v4404, 2
  %vm5279 = vcmp.eq.s32.totalorder %v4405, 2
  %vm5280 = vcmp.eq.s32.totalorder %v4406, 2
  %vm5281 = vcmp.eq.s32.totalorder %v4407, 2
  %vm5282 = vcmp.eq.s32.totalorder %v4408, 2
  %vm5283 = vcmp.eq.s32.totalorder %v4409, 2
  %vm5284 = vcmp.eq.s32.totalorder %v4410, 2
  %vm5285 = vcmp.eq.s32.totalorder %v4411, 2
  %vm5286 = vcmp.eq.s32.totalorder %v4412, 2
  %vm5287 = vcmp.eq.s32.totalorder %v4413, 2
  %vm5288 = vcmp.eq.s32.totalorder %v4414, 2
  %vm5289 = vcmp.eq.s32.totalorder %v4415, 2
  %vm5290 = vcmp.eq.s32.totalorder %v4416, 2
  %vm5291 = vcmp.eq.s32.totalorder %v4417, 2
  %vm5292 = vcmp.eq.s32.totalorder %v4418, 2
  %vm5293 = vcmp.eq.s32.totalorder %v4419, 2
  %vm5294 = vcmp.eq.s32.totalorder %v4420, 2
  %vm5295 = vcmp.eq.s32.totalorder %v4421, 2
  %vm5296 = vcmp.eq.s32.totalorder %v4422, 2
  %vm5297 = vcmp.eq.s32.totalorder %v4423, 2
  %vm5298 = vcmp.eq.s32.totalorder %v4424, 2
  %vm5299 = vcmp.eq.s32.totalorder %v4425, 2
  %vm5300 = vcmp.eq.s32.totalorder %v4426, 2
  %vm5301 = vcmp.eq.s32.totalorder %v4427, 2
  %vm5302 = vcmp.eq.s32.totalorder %v4428, 2
  %vm5303 = vcmp.eq.s32.totalorder %v4429, 2
  %vm5304 = vcmp.eq.s32.totalorder %v4430, 2
  %vm5305 = vcmp.eq.s32.totalorder %v4431, 2
  %vm5306 = vcmp.eq.s32.totalorder %v4432, 2
  %vm5307 = vcmp.eq.s32.totalorder %v4433, 2
  %vm5308 = vcmp.eq.s32.totalorder %v4434, 2
  %vm5309 = vcmp.eq.s32.totalorder %v4435, 2
  %vm5310 = vcmp.eq.s32.totalorder %v4436, 2
  %vm5311 = vcmp.eq.s32.totalorder %v4437, 2
  %vm5312 = vcmp.eq.s32.totalorder %v4438, 2
  %vm5313 = vcmp.eq.s32.totalorder %v4439, 2
  %vm5314 = vcmp.eq.s32.totalorder %v4440, 2
  %vm5315 = vcmp.eq.s32.totalorder %v4441, 2
  %vm5316 = vcmp.eq.s32.totalorder %v4442, 2
  %vm5317 = vcmp.eq.s32.totalorder %v4443, 2
  %vm5318 = vcmp.eq.s32.totalorder %v4444, 2
  %vm5319 = vcmp.eq.s32.totalorder %v4445, 2
  %vm5320 = vcmp.eq.s32.totalorder %v4446, 2
  %vm5321 = vcmp.eq.s32.totalorder %v4447, 2
  %vm5322 = vcmp.eq.s32.totalorder %v4448, 2
  %vm5323 = vcmp.eq.s32.totalorder %v4449, 2
  %vm5324 = vcmp.eq.s32.totalorder %v4450, 2
  %vm5325 = vcmp.eq.s32.totalorder %v4451, 2
  %vm5326 = vcmp.eq.s32.totalorder %v4452, 2
  %vm5327 = vcmp.eq.s32.totalorder %v4453, 2
  %v5328 = vsel %vm5248, 1.0, 0.0
  %v5329 = vsel %vm5249, 1.0, 0.0
  %v5330 = vsel %vm5250, 1.0, 0.0
  %v5331 = vsel %vm5251, 1.0, 0.0
  %v5332 = vsel %vm5252, 1.0, 0.0
  %v5333 = vsel %vm5253, 1.0, 0.0
  %v5334 = vsel %vm5254, 1.0, 0.0
  %v5335 = vsel %vm5255, 1.0, 0.0
  %v5336 = vsel %vm5256, 1.0, 0.0
  %v5337 = vsel %vm5257, 1.0, 0.0
  %v5338 = vsel %vm5258, 1.0, 0.0
  %v5339 = vsel %vm5259, 1.0, 0.0
  %v5340 = vsel %vm5260, 1.0, 0.0
  %v5341 = vsel %vm5261, 1.0, 0.0
  %v5342 = vsel %vm5262, 1.0, 0.0
  %v5343 = vsel %vm5263, 1.0, 0.0
  %v5344 = vsel %vm5264, 1.0, 0.0
  %v5345 = vsel %vm5265, 1.0, 0.0
  %v5346 = vsel %vm5266, 1.0, 0.0
  %v5347 = vsel %vm5267, 1.0, 0.0
  %v5348 = vsel %vm5268, 1.0, 0.0
  %v5349 = vsel %vm5269, 1.0, 0.0
  %v5350 = vsel %vm5270, 1.0, 0.0
  %v5351 = vsel %vm5271, 1.0, 0.0
  %v5352 = vsel %vm5272, 1.0, 0.0
  %v5353 = vsel %vm5273, 1.0, 0.0
  %v5354 = vsel %vm5274, 1.0, 0.0
  %v5355 = vsel %vm5275, 1.0, 0.0
  %v5356 = vsel %vm5276, 1.0, 0.0
  %v5357 = vsel %vm5277, 1.0, 0.0
  %v5358 = vsel %vm5278, 1.0, 0.0
  %v5359 = vsel %vm5279, 1.0, 0.0
  %v5360 = vsel %vm5280, 1.0, 0.0
  %v5361 = vsel %vm5281, 1.0, 0.0
  %v5362 = vsel %vm5282, 1.0, 0.0
  %v5363 = vsel %vm5283, 1.0, 0.0
  %v5364 = vsel %vm5284, 1.0, 0.0
  %v5365 = vsel %vm5285, 1.0, 0.0
  %v5366 = vsel %vm5286, 1.0, 0.0
  %v5367 = vsel %vm5287, 1.0, 0.0
  %v5368 = vsel %vm5288, 1.0, 0.0
  %v5369 = vsel %vm5289, 1.0, 0.0
  %v5370 = vsel %vm5290, 1.0, 0.0
  %v5371 = vsel %vm5291, 1.0, 0.0
  %v5372 = vsel %vm5292, 1.0, 0.0
  %v5373 = vsel %vm5293, 1.0, 0.0
  %v5374 = vsel %vm5294, 1.0, 0.0
  %v5375 = vsel %vm5295, 1.0, 0.0
  %v5376 = vsel %vm5296, 1.0, 0.0
  %v5377 = vsel %vm5297, 1.0, 0.0
  %v5378 = vsel %vm5298, 1.0, 0.0
  %v5379 = vsel %vm5299, 1.0, 0.0
  %v5380 = vsel %vm5300, 1.0, 0.0
  %v5381 = vsel %vm5301, 1.0, 0.0
  %v5382 = vsel %vm5302, 1.0, 0.0
  %v5383 = vsel %vm5303, 1.0, 0.0
  %v5384 = vsel %vm5304, 1.0, 0.0
  %v5385 = vsel %vm5305, 1.0, 0.0
  %v5386 = vsel %vm5306, 1.0, 0.0
  %v5387 = vsel %vm5307, 1.0, 0.0
  %v5388 = vsel %vm5308, 1.0, 0.0
  %v5389 = vsel %vm5309, 1.0, 0.0
  %v5390 = vsel %vm5310, 1.0, 0.0
  %v5391 = vsel %vm5311, 1.0, 0.0
  %v5392 = vsel %vm5312, 1.0, 0.0
  %v5393 = vsel %vm5313, 1.0, 0.0
  %v5394 = vsel %vm5314, 1.0, 0.0
  %v5395 = vsel %vm5315, 1.0, 0.0
  %v5396 = vsel %vm5316, 1.0, 0.0
  %v5397 = vsel %vm5317, 1.0, 0.0
  %v5398 = vsel %vm5318, 1.0, 0.0
  %v5399 = vsel %vm5319, 1.0, 0.0
  %v5400 = vsel %vm5320, 1.0, 0.0
  %v5401 = vsel %vm5321, 1.0, 0.0
  %v5402 = vsel %vm5322, 1.0, 0.0
  %v5403 = vsel %vm5323, 1.0, 0.0
  %v5404 = vsel %vm5324, 1.0, 0.0
  %v5405 = vsel %vm5325, 1.0, 0.0
  %v5406 = vsel %vm5326, 1.0, 0.0
  %v5407 = vsel %vm5327, 1.0, 0.0
  %v5409 = vsel %vm4107, %v5247, 0
  %v5412 = vsel %vm2651, %v5403, 0
  %v5415 = vsel %vm2651, %v5404, 0
  %v5418 = vsel %vm2651, %v5405, 0
  %v5421 = vsel %vm2651, %v5406, 0
  %v5424 = vsel %vm2651, %v5407, 0
  %5426 = vmatprep.subr.mxu0 %v5329
  %5427 = vmatpush1.msra.mxu0 %v5328
  %5428 = vmatprep.subr.mxu0 %v5334
  %5429 = vmatpush1.msra.mxu0 %v5333
  %5430 = vmatprep.subr.mxu0 %v5339
  %5431 = vmatpush1.msra.mxu0 %v5338
  %5432 = vmatprep.subr.mxu0 %v5344
  %5433 = vmatpush1.msra.mxu0 %v5343
  %5434 = vmatprep.subr.mxu0 %v5349
  %5435 = vmatpush1.msra.mxu0 %v5348
  %5436 = vmatprep.subr.mxu0 %v5354
  %5437 = vmatpush1.msra.mxu0 %v5353
  %5438 = vmatprep.subr.mxu0 %v5359
  %5439 = vmatpush1.msra.mxu0 %v5358
  %5440 = vmatprep.subr.mxu0 %v5364
  %5441 = vmatpush1.msra.mxu0 %v5363
  %5442 = vmatprep.subr.mxu0 %v5369
  %5443 = vmatpush1.msra.mxu0 %v5368
  %5444 = vmatprep.subr.mxu0 %v5374
  %5445 = vmatpush1.msra.mxu0 %v5373
  %5446 = vmatprep.subr.mxu0 %v5379
  %5447 = vmatpush1.msra.mxu0 %v5378
  %5448 = vmatprep.subr.mxu0 %v5384
  %5449 = vmatpush1.msra.mxu0 %v5383
  %5450 = vmatprep.subr.mxu0 %v5389
  %5451 = vmatpush1.msra.mxu0 %v5388
  %5452 = vmatprep.subr.mxu0 %v5394
  %5453 = vmatpush1.msra.mxu0 %v5393
  %5454 = vmatprep.subr.mxu0 %v5399
  %5455 = vmatpush1.msra.mxu0 %v5398
  %5456 = vmatprep.subr.mxu0 %v5415
  %5457 = vmatpush1.msra.mxu0 %v5412
  %5458 = vmatprep.subr.mxu0 0.0
  %5459 = vmatpush1.msra.mxu0 0.0
  %5460 = vmatprep.subr.mxu0 0.0
  %5461 = vmatpush1.msra.mxu0 0.0
  %5462 = vmatprep.subr.mxu0 0.0
  %5463 = vmatpush1.msra.mxu0 0.0
  %5464 = vmatprep.subr.mxu0 0.0
  %5465 = vmatpush1.msra.mxu0 0.0
  %5466 = vmatprep.subr.mxu0 0.0
  %5467 = vmatpush1.msra.mxu0 0.0
  %5468 = vmatprep.subr.mxu0 0.0
  %5469 = vmatpush1.msra.mxu0 0.0
  %5470 = vmatprep.subr.mxu0 0.0
  %5471 = vmatpush1.msra.mxu0 0.0
  %5472 = vmatprep.subr.mxu0 0.0
  %5473 = vmatpush1.msra.mxu0 0.0
  %5474 = vmatprep.subr.mxu0 0.0
  %5475 = vmatpush1.msra.mxu0 0.0
  %5476 = vmatprep.subr.mxu0 0.0
  %5477 = vmatpush1.msra.mxu0 0.0
  %5478 = vmatprep.subr.mxu0 0.0
  %5479 = vmatpush1.msra.mxu0 0.0
  %5480 = vmatprep.subr.mxu0 0.0
  %5481 = vmatpush1.msra.mxu0 0.0
  %5482 = vmatprep.subr.mxu0 0.0
  %5483 = vmatpush1.msra.mxu0 0.0
  %5484 = vmatprep.subr.mxu0 0.0
  %5485 = vmatpush1.msra.mxu0 0.0
  %5486 = vmatprep.subr.mxu0 0.0
  %5487 = vmatpush1.msra.mxu0 0.0
  %5488 = vmatprep.subr.mxu0 0.0
  %5489 = vmatpush1.msra.mxu0 0.0
  %5490 = vmatprep.mubr.f32.mxu0 0.0
  %5491 = vmatmul.mubr.f32.gmra.mrb[0].mxu0 %v5409
  %v5492 = vpop.f32.mrb[0].mxu0
  %v5493 = vadd.f32 0.0, %v5492
  %v5494 = vpop.f32.mrb[0].mxu0
  %v5495 = vadd.f32 0.0, %v5494
  %5496 = vdwg.mxu0
  %5497 = vmatprep.subr.mxu0 %v5331
  %5498 = vmatpush1.msra.mxu0 %v5330
  %5499 = vmatprep.subr.mxu0 %v5336
  %5500 = vmatpush1.msra.mxu0 %v5335
  %5501 = vmatprep.subr.mxu0 %v5341
  %5502 = vmatpush1.msra.mxu0 %v5340
  %5503 = vmatprep.subr.mxu0 %v5346
  %5504 = vmatpush1.msra.mxu0 %v5345
  %5505 = vmatprep.subr.mxu0 %v5351
  %5506 = vmatpush1.msra.mxu0 %v5350
  %5507 = vmatprep.subr.mxu0 %v5356
  %5508 = vmatpush1.msra.mxu0 %v5355
  %5509 = vmatprep.subr.mxu0 %v5361
  %5510 = vmatpush1.msra.mxu0 %v5360
  %5511 = vmatprep.subr.mxu0 %v5366
  %5512 = vmatpush1.msra.mxu0 %v5365
  %5513 = vmatprep.subr.mxu0 %v5371
  %5514 = vmatpush1.msra.mxu0 %v5370
  %5515 = vmatprep.subr.mxu0 %v5376
  %5516 = vmatpush1.msra.mxu0 %v5375
  %5517 = vmatprep.subr.mxu0 %v5381
  %5518 = vmatpush1.msra.mxu0 %v5380
  %5519 = vmatprep.subr.mxu0 %v5386
  %5520 = vmatpush1.msra.mxu0 %v5385
  %5521 = vmatprep.subr.mxu0 %v5391
  %5522 = vmatpush1.msra.mxu0 %v5390
  %5523 = vmatprep.subr.mxu0 %v5396
  %5524 = vmatpush1.msra.mxu0 %v5395
  %5525 = vmatprep.subr.mxu0 %v5401
  %5526 = vmatpush1.msra.mxu0 %v5400
  %5527 = vmatprep.subr.mxu0 %v5421
  %5528 = vmatpush1.msra.mxu0 %v5418
  %5529 = vmatprep.subr.mxu0 0.0
  %5530 = vmatpush1.msra.mxu0 0.0
  %5531 = vmatprep.subr.mxu0 0.0
  %5532 = vmatpush1.msra.mxu0 0.0
  %5533 = vmatprep.subr.mxu0 0.0
  %5534 = vmatpush1.msra.mxu0 0.0
  %5535 = vmatprep.subr.mxu0 0.0
  %5536 = vmatpush1.msra.mxu0 0.0
  %5537 = vmatprep.subr.mxu0 0.0
  %5538 = vmatpush1.msra.mxu0 0.0
  %5539 = vmatprep.subr.mxu0 0.0
  %5540 = vmatpush1.msra.mxu0 0.0
  %5541 = vmatprep.subr.mxu0 0.0
  %5542 = vmatpush1.msra.mxu0 0.0
  %5543 = vmatprep.subr.mxu0 0.0
  %5544 = vmatpush1.msra.mxu0 0.0
  %5545 = vmatprep.subr.mxu0 0.0
  %5546 = vmatpush1.msra.mxu0 0.0
  %5547 = vmatprep.subr.mxu0 0.0
  %5548 = vmatpush1.msra.mxu0 0.0
  %5549 = vmatprep.subr.mxu0 0.0
  %5550 = vmatpush1.msra.mxu0 0.0
  %5551 = vmatprep.subr.mxu0 0.0
  %5552 = vmatpush1.msra.mxu0 0.0
  %5553 = vmatprep.subr.mxu0 0.0
  %5554 = vmatpush1.msra.mxu0 0.0
  %5555 = vmatprep.subr.mxu0 0.0
  %5556 = vmatpush1.msra.mxu0 0.0
  %5557 = vmatprep.subr.mxu0 0.0
  %5558 = vmatpush1.msra.mxu0 0.0
  %5559 = vmatprep.subr.mxu0 0.0
  %5560 = vmatpush1.msra.mxu0 0.0
  %5561 = vmatprep.mubr.f32.mxu0 0.0
  %5562 = vmatmul.mubr.f32.gmra.mrb[0].mxu0 %v5409
  %v5563 = vpop.f32.mrb[0].mxu0
  %v5564 = vadd.f32 0.0, %v5563
  %v5565 = vpop.f32.mrb[0].mxu0
  %v5566 = vadd.f32 0.0, %v5565
  %5567 = vdwg.mxu0
  %5568 = vmatprep.subr.mxu0 0.0
  %5569 = vmatpush1.msra.mxu0 %v5332
  %5570 = vmatprep.subr.mxu0 0.0
  %5571 = vmatpush1.msra.mxu0 %v5337
  %5572 = vmatprep.subr.mxu0 0.0
  %5573 = vmatpush1.msra.mxu0 %v5342
  %5574 = vmatprep.subr.mxu0 0.0
  %5575 = vmatpush1.msra.mxu0 %v5347
  %5576 = vmatprep.subr.mxu0 0.0
  %5577 = vmatpush1.msra.mxu0 %v5352
  %5578 = vmatprep.subr.mxu0 0.0
  %5579 = vmatpush1.msra.mxu0 %v5357
  %5580 = vmatprep.subr.mxu0 0.0
  %5581 = vmatpush1.msra.mxu0 %v5362
  %5582 = vmatprep.subr.mxu0 0.0
  %5583 = vmatpush1.msra.mxu0 %v5367
  %5584 = vmatprep.subr.mxu0 0.0
  %5585 = vmatpush1.msra.mxu0 %v5372
  %5586 = vmatprep.subr.mxu0 0.0
  %5587 = vmatpush1.msra.mxu0 %v5377
  %5588 = vmatprep.subr.mxu0 0.0
  %5589 = vmatpush1.msra.mxu0 %v5382
  %5590 = vmatprep.subr.mxu0 0.0
  %5591 = vmatpush1.msra.mxu0 %v5387
  %5592 = vmatprep.subr.mxu0 0.0
  %5593 = vmatpush1.msra.mxu0 %v5392
  %5594 = vmatprep.subr.mxu0 0.0
  %5595 = vmatpush1.msra.mxu0 %v5397
  %5596 = vmatprep.subr.mxu0 0.0
  %5597 = vmatpush1.msra.mxu0 %v5402
  %5598 = vmatprep.subr.mxu0 0.0
  %5599 = vmatpush1.msra.mxu0 %v5424
  %5600 = vmatprep.subr.mxu0 0.0
  %5601 = vmatpush1.msra.mxu0 0.0
  %5602 = vmatprep.subr.mxu0 0.0
  %5603 = vmatpush1.msra.mxu0 0.0
  %5604 = vmatprep.subr.mxu0 0.0
  %5605 = vmatpush1.msra.mxu0 0.0
  %5606 = vmatprep.subr.mxu0 0.0
  %5607 = vmatpush1.msra.mxu0 0.0
  %5608 = vmatprep.subr.mxu0 0.0
  %5609 = vmatpush1.msra.mxu0 0.0
  %5610 = vmatprep.subr.mxu0 0.0
  %5611 = vmatpush1.msra.mxu0 0.0
  %5612 = vmatprep.subr.mxu0 0.0
  %5613 = vmatpush1.msra.mxu0 0.0
  %5614 = vmatprep.subr.mxu0 0.0
  %5615 = vmatpush1.msra.mxu0 0.0
  %5616 = vmatprep.subr.mxu0 0.0
  %5617 = vmatpush1.msra.mxu0 0.0
  %5618 = vmatprep.subr.mxu0 0.0
  %5619 = vmatpush1.msra.mxu0 0.0
  %5620 = vmatprep.subr.mxu0 0.0
  %5621 = vmatpush1.msra.mxu0 0.0
  %5622 = vmatprep.subr.mxu0 0.0
  %5623 = vmatpush1.msra.mxu0 0.0
  %5624 = vmatprep.subr.mxu0 0.0
  %5625 = vmatpush1.msra.mxu0 0.0
  %5626 = vmatprep.subr.mxu0 0.0
  %5627 = vmatpush1.msra.mxu0 0.0
  %5628 = vmatprep.subr.mxu0 0.0
  %5629 = vmatpush1.msra.mxu0 0.0
  %5630 = vmatprep.subr.mxu0 0.0
  %5631 = vmatpush1.msra.mxu0 0.0
  %5632 = vmatprep.mubr.f32.mxu0 0.0
  %5633 = vmatmul.mubr.f32.gmra.mrb[0].mxu0 %v5409
  %v5634 = vpop.f32.mrb[0].mxu0
  %v5635 = vadd.f32 0.0, %v5634
  %v5636 = vpop.f32.mrb[0].mxu0
  %5637 = vdwg.mxu0
  %v5638 = vadd.f32 %v5098, %v5493
  %v5639 = vadd.f32 %v5100, %v5495
  %v5640 = vadd.f32 %v5169, %v5564
  %v5641 = vadd.f32 %v5171, %v5566
  %v5642 = vadd.f32 %v5240, %v5635
  %v5643 = vrot.slane %v4269, 3
  %v5645 = vrot.slane %v4339, 2
  %v5647 = vsel %vm4457, %v5643, %v5645
  %vm5648 = vcmp.eq.s32.totalorder %v4374, 3
  %vm5649 = vcmp.eq.s32.totalorder %v4375, 3
  %vm5650 = vcmp.eq.s32.totalorder %v4376, 3
  %vm5651 = vcmp.eq.s32.totalorder %v4377, 3
  %vm5652 = vcmp.eq.s32.totalorder %v4378, 3
  %vm5653 = vcmp.eq.s32.totalorder %v4379, 3
  %vm5654 = vcmp.eq.s32.totalorder %v4380, 3
  %vm5655 = vcmp.eq.s32.totalorder %v4381, 3
  %vm5656 = vcmp.eq.s32.totalorder %v4382, 3
  %vm5657 = vcmp.eq.s32.totalorder %v4383, 3
  %vm5658 = vcmp.eq.s32.totalorder %v4384, 3
  %vm5659 = vcmp.eq.s32.totalorder %v4385, 3
  %vm5660 = vcmp.eq.s32.totalorder %v4386, 3
  %vm5661 = vcmp.eq.s32.totalorder %v4387, 3
  %vm5662 = vcmp.eq.s32.totalorder %v4388, 3
  %vm5663 = vcmp.eq.s32.totalorder %v4389, 3
  %vm5664 = vcmp.eq.s32.totalorder %v4390, 3
  %vm5665 = vcmp.eq.s32.totalorder %v4391, 3
  %vm5666 = vcmp.eq.s32.totalorder %v4392, 3
  %vm5667 = vcmp.eq.s32.totalorder %v4393, 3
  %vm5668 = vcmp.eq.s32.totalorder %v4394, 3
  %vm5669 = vcmp.eq.s32.totalorder %v4395, 3
  %vm5670 = vcmp.eq.s32.totalorder %v4396, 3
  %vm5671 = vcmp.eq.s32.totalorder %v4397, 3
  %vm5672 = vcmp.eq.s32.totalorder %v4398, 3
  %vm5673 = vcmp.eq.s32.totalorder %v4399, 3
  %vm5674 = vcmp.eq.s32.totalorder %v4400, 3
  %vm5675 = vcmp.eq.s32.totalorder %v4401, 3
  %vm5676 = vcmp.eq.s32.totalorder %v4402, 3
  %vm5677 = vcmp.eq.s32.totalorder %v4403, 3
  %vm5678 = vcmp.eq.s32.totalorder %v4404, 3
  %vm5679 = vcmp.eq.s32.totalorder %v4405, 3
  %vm5680 = vcmp.eq.s32.totalorder %v4406, 3
  %vm5681 = vcmp.eq.s32.totalorder %v4407, 3
  %vm5682 = vcmp.eq.s32.totalorder %v4408, 3
  %vm5683 = vcmp.eq.s32.totalorder %v4409, 3
  %vm5684 = vcmp.eq.s32.totalorder %v4410, 3
  %vm5685 = vcmp.eq.s32.totalorder %v4411, 3
  %vm5686 = vcmp.eq.s32.totalorder %v4412, 3
  %vm5687 = vcmp.eq.s32.totalorder %v4413, 3
  %vm5688 = vcmp.eq.s32.totalorder %v4414, 3
  %vm5689 = vcmp.eq.s32.totalorder %v4415, 3
  %vm5690 = vcmp.eq.s32.totalorder %v4416, 3
  %vm5691 = vcmp.eq.s32.totalorder %v4417, 3
  %vm5692 = vcmp.eq.s32.totalorder %v4418, 3
  %vm5693 = vcmp.eq.s32.totalorder %v4419, 3
  %vm5694 = vcmp.eq.s32.totalorder %v4420, 3
  %vm5695 = vcmp.eq.s32.totalorder %v4421, 3
  %vm5696 = vcmp.eq.s32.totalorder %v4422, 3
  %vm5697 = vcmp.eq.s32.totalorder %v4423, 3
  %vm5698 = vcmp.eq.s32.totalorder %v4424, 3
  %vm5699 = vcmp.eq.s32.totalorder %v4425, 3
  %vm5700 = vcmp.eq.s32.totalorder %v4426, 3
  %vm5701 = vcmp.eq.s32.totalorder %v4427, 3
  %vm5702 = vcmp.eq.s32.totalorder %v4428, 3
  %vm5703 = vcmp.eq.s32.totalorder %v4429, 3
  %vm5704 = vcmp.eq.s32.totalorder %v4430, 3
  %vm5705 = vcmp.eq.s32.totalorder %v4431, 3
  %vm5706 = vcmp.eq.s32.totalorder %v4432, 3
  %vm5707 = vcmp.eq.s32.totalorder %v4433, 3
  %vm5708 = vcmp.eq.s32.totalorder %v4434, 3
  %vm5709 = vcmp.eq.s32.totalorder %v4435, 3
  %vm5710 = vcmp.eq.s32.totalorder %v4436, 3
  %vm5711 = vcmp.eq.s32.totalorder %v4437, 3
  %vm5712 = vcmp.eq.s32.totalorder %v4438, 3
  %vm5713 = vcmp.eq.s32.totalorder %v4439, 3
  %vm5714 = vcmp.eq.s32.totalorder %v4440, 3
  %vm5715 = vcmp.eq.s32.totalorder %v4441, 3
  %vm5716 = vcmp.eq.s32.totalorder %v4442, 3
  %vm5717 = vcmp.eq.s32.totalorder %v4443, 3
  %vm5718 = vcmp.eq.s32.totalorder %v4444, 3
  %vm5719 = vcmp.eq.s32.totalorder %v4445, 3
  %vm5720 = vcmp.eq.s32.totalorder %v4446, 3
  %vm5721 = vcmp.eq.s32.totalorder %v4447, 3
  %vm5722 = vcmp.eq.s32.totalorder %v4448, 3
  %vm5723 = vcmp.eq.s32.totalorder %v4449, 3
  %vm5724 = vcmp.eq.s32.totalorder %v4450, 3
  %vm5725 = vcmp.eq.s32.totalorder %v4451, 3
  %vm5726 = vcmp.eq.s32.totalorder %v4452, 3
  %vm5727 = vcmp.eq.s32.totalorder %v4453, 3
  %v5728 = vsel %vm5648, 1.0, 0.0
  %v5729 = vsel %vm5649, 1.0, 0.0
  %v5730 = vsel %vm5650, 1.0, 0.0
  %v5731 = vsel %vm5651, 1.0, 0.0
  %v5732 = vsel %vm5652, 1.0, 0.0
  %v5733 = vsel %vm5653, 1.0, 0.0
  %v5734 = vsel %vm5654, 1.0, 0.0
  %v5735 = vsel %vm5655, 1.0, 0.0
  %v5736 = vsel %vm5656, 1.0, 0.0
  %v5737 = vsel %vm5657, 1.0, 0.0
  %v5738 = vsel %vm5658, 1.0, 0.0
  %v5739 = vsel %vm5659, 1.0, 0.0
  %v5740 = vsel %vm5660, 1.0, 0.0
  %v5741 = vsel %vm5661, 1.0, 0.0
  %v5742 = vsel %vm5662, 1.0, 0.0
  %v5743 = vsel %vm5663, 1.0, 0.0
  %v5744 = vsel %vm5664, 1.0, 0.0
  %v5745 = vsel %vm5665, 1.0, 0.0
  %v5746 = vsel %vm5666, 1.0, 0.0
  %v5747 = vsel %vm5667, 1.0, 0.0
  %v5748 = vsel %vm5668, 1.0, 0.0
  %v5749 = vsel %vm5669, 1.0, 0.0
  %v5750 = vsel %vm5670, 1.0, 0.0
  %v5751 = vsel %vm5671, 1.0, 0.0
  %v5752 = vsel %vm5672, 1.0, 0.0
  %v5753 = vsel %vm5673, 1.0, 0.0
  %v5754 = vsel %vm5674, 1.0, 0.0
  %v5755 = vsel %vm5675, 1.0, 0.0
  %v5756 = vsel %vm5676, 1.0, 0.0
  %v5757 = vsel %vm5677, 1.0, 0.0
  %v5758 = vsel %vm5678, 1.0, 0.0
  %v5759 = vsel %vm5679, 1.0, 0.0
  %v5760 = vsel %vm5680, 1.0, 0.0
  %v5761 = vsel %vm5681, 1.0, 0.0
  %v5762 = vsel %vm5682, 1.0, 0.0
  %v5763 = vsel %vm5683, 1.0, 0.0
  %v5764 = vsel %vm5684, 1.0, 0.0
  %v5765 = vsel %vm5685, 1.0, 0.0
  %v5766 = vsel %vm5686, 1.0, 0.0
  %v5767 = vsel %vm5687, 1.0, 0.0
  %v5768 = vsel %vm5688, 1.0, 0.0
  %v5769 = vsel %vm5689, 1.0, 0.0
  %v5770 = vsel %vm5690, 1.0, 0.0
  %v5771 = vsel %vm5691, 1.0, 0.0
  %v5772 = vsel %vm5692, 1.0, 0.0
  %v5773 = vsel %vm5693, 1.0, 0.0
  %v5774 = vsel %vm5694, 1.0, 0.0
  %v5775 = vsel %vm5695, 1.0, 0.0
  %v5776 = vsel %vm5696, 1.0, 0.0
  %v5777 = vsel %vm5697, 1.0, 0.0
  %v5778 = vsel %vm5698, 1.0, 0.0
  %v5779 = vsel %vm5699, 1.0, 0.0
  %v5780 = vsel %vm5700, 1.0, 0.0
  %v5781 = vsel %vm5701, 1.0, 0.0
  %v5782 = vsel %vm5702, 1.0, 0.0
  %v5783 = vsel %vm5703, 1.0, 0.0
  %v5784 = vsel %vm5704, 1.0, 0.0
  %v5785 = vsel %vm5705, 1.0, 0.0
  %v5786 = vsel %vm5706, 1.0, 0.0
  %v5787 = vsel %vm5707, 1.0, 0.0
  %v5788 = vsel %vm5708, 1.0, 0.0
  %v5789 = vsel %vm5709, 1.0, 0.0
  %v5790 = vsel %vm5710, 1.0, 0.0
  %v5791 = vsel %vm5711, 1.0, 0.0
  %v5792 = vsel %vm5712, 1.0, 0.0
  %v5793 = vsel %vm5713, 1.0, 0.0
  %v5794 = vsel %vm5714, 1.0, 0.0
  %v5795 = vsel %vm5715, 1.0, 0.0
  %v5796 = vsel %vm5716, 1.0, 0.0
  %v5797 = vsel %vm5717, 1.0, 0.0
  %v5798 = vsel %vm5718, 1.0, 0.0
  %v5799 = vsel %vm5719, 1.0, 0.0
  %v5800 = vsel %vm5720, 1.0, 0.0
  %v5801 = vsel %vm5721, 1.0, 0.0
  %v5802 = vsel %vm5722, 1.0, 0.0
  %v5803 = vsel %vm5723, 1.0, 0.0
  %v5804 = vsel %vm5724, 1.0, 0.0
  %v5805 = vsel %vm5725, 1.0, 0.0
  %v5806 = vsel %vm5726, 1.0, 0.0
  %v5807 = vsel %vm5727, 1.0, 0.0
  %v5809 = vsel %vm4107, %v5647, 0
  %v5812 = vsel %vm2651, %v5803, 0
  %v5815 = vsel %vm2651, %v5804, 0
  %v5818 = vsel %vm2651, %v5805, 0
  %v5821 = vsel %vm2651, %v5806, 0
  %v5824 = vsel %vm2651, %v5807, 0
  %5826 = vmatprep.subr.mxu0 %v5729
  %5827 = vmatpush1.msra.mxu0 %v5728
  %5828 = vmatprep.subr.mxu0 %v5734
  %5829 = vmatpush1.msra.mxu0 %v5733
  %5830 = vmatprep.subr.mxu0 %v5739
  %5831 = vmatpush1.msra.mxu0 %v5738
  %5832 = vmatprep.subr.mxu0 %v5744
  %5833 = vmatpush1.msra.mxu0 %v5743
  %5834 = vmatprep.subr.mxu0 %v5749
  %5835 = vmatpush1.msra.mxu0 %v5748
  %5836 = vmatprep.subr.mxu0 %v5754
  %5837 = vmatpush1.msra.mxu0 %v5753
  %5838 = vmatprep.subr.mxu0 %v5759
  %5839 = vmatpush1.msra.mxu0 %v5758
  %5840 = vmatprep.subr.mxu0 %v5764
  %5841 = vmatpush1.msra.mxu0 %v5763
  %5842 = vmatprep.subr.mxu0 %v5769
  %5843 = vmatpush1.msra.mxu0 %v5768
  %5844 = vmatprep.subr.mxu0 %v5774
  %5845 = vmatpush1.msra.mxu0 %v5773
  %5846 = vmatprep.subr.mxu0 %v5779
  %5847 = vmatpush1.msra.mxu0 %v5778
  %5848 = vmatprep.subr.mxu0 %v5784
  %5849 = vmatpush1.msra.mxu0 %v5783
  %5850 = vmatprep.subr.mxu0 %v5789
  %5851 = vmatpush1.msra.mxu0 %v5788
  %5852 = vmatprep.subr.mxu0 %v5794
  %5853 = vmatpush1.msra.mxu0 %v5793
  %5854 = vmatprep.subr.mxu0 %v5799
  %5855 = vmatpush1.msra.mxu0 %v5798
  %5856 = vmatprep.subr.mxu0 %v5815
  %5857 = vmatpush1.msra.mxu0 %v5812
  %5858 = vmatprep.subr.mxu0 0.0
  %5859 = vmatpush1.msra.mxu0 0.0
  %5860 = vmatprep.subr.mxu0 0.0
  %5861 = vmatpush1.msra.mxu0 0.0
  %5862 = vmatprep.subr.mxu0 0.0
  %5863 = vmatpush1.msra.mxu0 0.0
  %5864 = vmatprep.subr.mxu0 0.0
  %5865 = vmatpush1.msra.mxu0 0.0
  %5866 = vmatprep.subr.mxu0 0.0
  %5867 = vmatpush1.msra.mxu0 0.0
  %5868 = vmatprep.subr.mxu0 0.0
  %5869 = vmatpush1.msra.mxu0 0.0
  %5870 = vmatprep.subr.mxu0 0.0
  %5871 = vmatpush1.msra.mxu0 0.0
  %5872 = vmatprep.subr.mxu0 0.0
  %5873 = vmatpush1.msra.mxu0 0.0
  %5874 = vmatprep.subr.mxu0 0.0
  %5875 = vmatpush1.msra.mxu0 0.0
  %5876 = vmatprep.subr.mxu0 0.0
  %5877 = vmatpush1.msra.mxu0 0.0
  %5878 = vmatprep.subr.mxu0 0.0
  %5879 = vmatpush1.msra.mxu0 0.0
  %5880 = vmatprep.subr.mxu0 0.0
  %5881 = vmatpush1.msra.mxu0 0.0
  %5882 = vmatprep.subr.mxu0 0.0
  %5883 = vmatpush1.msra.mxu0 0.0
  %5884 = vmatprep.subr.mxu0 0.0
  %5885 = vmatpush1.msra.mxu0 0.0
  %5886 = vmatprep.subr.mxu0 0.0
  %5887 = vmatpush1.msra.mxu0 0.0
  %5888 = vmatprep.subr.mxu0 0.0
  %5889 = vmatpush1.msra.mxu0 0.0
  %5890 = vmatprep.mubr.f32.mxu0 0.0
  %5891 = vmatmul.mubr.f32.gmra.mrb[0].mxu0 %v5809
  %v5892 = vpop.f32.mrb[0].mxu0
  %v5893 = vadd.f32 0.0, %v5892
  %v5894 = vpop.f32.mrb[0].mxu0
  %v5895 = vadd.f32 0.0, %v5894
  %5896 = vdwg.mxu0
  %5897 = vmatprep.subr.mxu0 %v5731
  %5898 = vmatpush1.msra.mxu0 %v5730
  %5899 = vmatprep.subr.mxu0 %v5736
  %5900 = vmatpush1.msra.mxu0 %v5735
  %5901 = vmatprep.subr.mxu0 %v5741
  %5902 = vmatpush1.msra.mxu0 %v5740
  %5903 = vmatprep.subr.mxu0 %v5746
  %5904 = vmatpush1.msra.mxu0 %v5745
  %5905 = vmatprep.subr.mxu0 %v5751
  %5906 = vmatpush1.msra.mxu0 %v5750
  %5907 = vmatprep.subr.mxu0 %v5756
  %5908 = vmatpush1.msra.mxu0 %v5755
  %5909 = vmatprep.subr.mxu0 %v5761
  %5910 = vmatpush1.msra.mxu0 %v5760
  %5911 = vmatprep.subr.mxu0 %v5766
  %5912 = vmatpush1.msra.mxu0 %v5765
  %5913 = vmatprep.subr.mxu0 %v5771
  %5914 = vmatpush1.msra.mxu0 %v5770
  %5915 = vmatprep.subr.mxu0 %v5776
  %5916 = vmatpush1.msra.mxu0 %v5775
  %5917 = vmatprep.subr.mxu0 %v5781
  %5918 = vmatpush1.msra.mxu0 %v5780
  %5919 = vmatprep.subr.mxu0 %v5786
  %5920 = vmatpush1.msra.mxu0 %v5785
  %5921 = vmatprep.subr.mxu0 %v5791
  %5922 = vmatpush1.msra.mxu0 %v5790
  %5923 = vmatprep.subr.mxu0 %v5796
  %5924 = vmatpush1.msra.mxu0 %v5795
  %5925 = vmatprep.subr.mxu0 %v5801
  %5926 = vmatpush1.msra.mxu0 %v5800
  %5927 = vmatprep.subr.mxu0 %v5821
  %5928 = vmatpush1.msra.mxu0 %v5818
  %5929 = vmatprep.subr.mxu0 0.0
  %5930 = vmatpush1.msra.mxu0 0.0
  %5931 = vmatprep.subr.mxu0 0.0
  %5932 = vmatpush1.msra.mxu0 0.0
  %5933 = vmatprep.subr.mxu0 0.0
  %5934 = vmatpush1.msra.mxu0 0.0
  %5935 = vmatprep.subr.mxu0 0.0
  %5936 = vmatpush1.msra.mxu0 0.0
  %5937 = vmatprep.subr.mxu0 0.0
  %5938 = vmatpush1.msra.mxu0 0.0
  %5939 = vmatprep.subr.mxu0 0.0
  %5940 = vmatpush1.msra.mxu0 0.0
  %5941 = vmatprep.subr.mxu0 0.0
  %5942 = vmatpush1.msra.mxu0 0.0
  %5943 = vmatprep.subr.mxu0 0.0
  %5944 = vmatpush1.msra.mxu0 0.0
  %5945 = vmatprep.subr.mxu0 0.0
  %5946 = vmatpush1.msra.mxu0 0.0
  %5947 = vmatprep.subr.mxu0 0.0
  %5948 = vmatpush1.msra.mxu0 0.0
  %5949 = vmatprep.subr.mxu0 0.0
  %5950 = vmatpush1.msra.mxu0 0.0
  %5951 = vmatprep.subr.mxu0 0.0
  %5952 = vmatpush1.msra.mxu0 0.0
  %5953 = vmatprep.subr.mxu0 0.0
  %5954 = vmatpush1.msra.mxu0 0.0
  %5955 = vmatprep.subr.mxu0 0.0
  %5956 = vmatpush1.msra.mxu0 0.0
  %5957 = vmatprep.subr.mxu0 0.0
  %5958 = vmatpush1.msra.mxu0 0.0
  %5959 = vmatprep.subr.mxu0 0.0
  %5960 = vmatpush1.msra.mxu0 0.0
  %5961 = vmatprep.mubr.f32.mxu0 0.0
  %5962 = vmatmul.mubr.f32.gmra.mrb[0].mxu0 %v5809
  %v5963 = vpop.f32.mrb[0].mxu0
  %v5964 = vadd.f32 0.0, %v5963
  %v5965 = vpop.f32.mrb[0].mxu0
  %v5966 = vadd.f32 0.0, %v5965
  %5967 = vdwg.mxu0
  %5968 = vmatprep.subr.mxu0 0.0
  %5969 = vmatpush1.msra.mxu0 %v5732
  %5970 = vmatprep.subr.mxu0 0.0
  %5971 = vmatpush1.msra.mxu0 %v5737
  %5972 = vmatprep.subr.mxu0 0.0
  %5973 = vmatpush1.msra.mxu0 %v5742
  %5974 = vmatprep.subr.mxu0 0.0
  %5975 = vmatpush1.msra.mxu0 %v5747
  %5976 = vmatprep.subr.mxu0 0.0
  %5977 = vmatpush1.msra.mxu0 %v5752
  %5978 = vmatprep.subr.mxu0 0.0
  %5979 = vmatpush1.msra.mxu0 %v5757
  %5980 = vmatprep.subr.mxu0 0.0
  %5981 = vmatpush1.msra.mxu0 %v5762
  %5982 = vmatprep.subr.mxu0 0.0
  %5983 = vmatpush1.msra.mxu0 %v5767
  %5984 = vmatprep.subr.mxu0 0.0
  %5985 = vmatpush1.msra.mxu0 %v5772
  %5986 = vmatprep.subr.mxu0 0.0
  %5987 = vmatpush1.msra.mxu0 %v5777
  %5988 = vmatprep.subr.mxu0 0.0
  %5989 = vmatpush1.msra.mxu0 %v5782
  %5990 = vmatprep.subr.mxu0 0.0
  %5991 = vmatpush1.msra.mxu0 %v5787
  %5992 = vmatprep.subr.mxu0 0.0
  %5993 = vmatpush1.msra.mxu0 %v5792
  %5994 = vmatprep.subr.mxu0 0.0
  %5995 = vmatpush1.msra.mxu0 %v5797
  %5996 = vmatprep.subr.mxu0 0.0
  %5997 = vmatpush1.msra.mxu0 %v5802
  %5998 = vmatprep.subr.mxu0 0.0
  %5999 = vmatpush1.msra.mxu0 %v5824
  %6000 = vmatprep.subr.mxu0 0.0
  %6001 = vmatpush1.msra.mxu0 0.0
  %6002 = vmatprep.subr.mxu0 0.0
  %6003 = vmatpush1.msra.mxu0 0.0
  %6004 = vmatprep.subr.mxu0 0.0
  %6005 = vmatpush1.msra.mxu0 0.0
  %6006 = vmatprep.subr.mxu0 0.0
  %6007 = vmatpush1.msra.mxu0 0.0
  %6008 = vmatprep.subr.mxu0 0.0
  %6009 = vmatpush1.msra.mxu0 0.0
  %6010 = vmatprep.subr.mxu0 0.0
  %6011 = vmatpush1.msra.mxu0 0.0
  %6012 = vmatprep.subr.mxu0 0.0
  %6013 = vmatpush1.msra.mxu0 0.0
  %6014 = vmatprep.subr.mxu0 0.0
  %6015 = vmatpush1.msra.mxu0 0.0
  %6016 = vmatprep.subr.mxu0 0.0
  %6017 = vmatpush1.msra.mxu0 0.0
  %6018 = vmatprep.subr.mxu0 0.0
  %6019 = vmatpush1.msra.mxu0 0.0
  %6020 = vmatprep.subr.mxu0 0.0
  %6021 = vmatpush1.msra.mxu0 0.0
  %6022 = vmatprep.subr.mxu0 0.0
  %6023 = vmatpush1.msra.mxu0 0.0
  %6024 = vmatprep.subr.mxu0 0.0
  %6025 = vmatpush1.msra.mxu0 0.0
  %6026 = vmatprep.subr.mxu0 0.0
  %6027 = vmatpush1.msra.mxu0 0.0
  %6028 = vmatprep.subr.mxu0 0.0
  %6029 = vmatpush1.msra.mxu0 0.0
  %6030 = vmatprep.subr.mxu0 0.0
  %6031 = vmatpush1.msra.mxu0 0.0
  %6032 = vmatprep.mubr.f32.mxu0 0.0
  %6033 = vmatmul.mubr.f32.gmra.mrb[0].mxu0 %v5809
  %v6034 = vpop.f32.mrb[0].mxu0
  %v6035 = vadd.f32 0.0, %v6034
  %v6036 = vpop.f32.mrb[0].mxu0
  %6037 = vdwg.mxu0
  %v6038 = vadd.f32 %v5638, %v5893
  %v6039 = vadd.f32 %v5639, %v5895
  %v6040 = vadd.f32 %v5640, %v5964
  %v6041 = vadd.f32 %v5641, %v5966
  %v6042 = vadd.f32 %v5642, %v6035
  %v6043 = vrot.slane %v4269, 4
  %v6045 = vrot.slane %v4339, 3
  %v6047 = vsel %vm4457, %v6043, %v6045
  %vm6048 = vcmp.eq.s32.totalorder %v4374, 4
  %vm6049 = vcmp.eq.s32.totalorder %v4375, 4
  %vm6050 = vcmp.eq.s32.totalorder %v4376, 4
  %vm6051 = vcmp.eq.s32.totalorder %v4377, 4
  %vm6052 = vcmp.eq.s32.totalorder %v4378, 4
  %vm6053 = vcmp.eq.s32.totalorder %v4379, 4
  %vm6054 = vcmp.eq.s32.totalorder %v4380, 4
  %vm6055 = vcmp.eq.s32.totalorder %v4381, 4
  %vm6056 = vcmp.eq.s32.totalorder %v4382, 4
  %vm6057 = vcmp.eq.s32.totalorder %v4383, 4
  %vm6058 = vcmp.eq.s32.totalorder %v4384, 4
  %vm6059 = vcmp.eq.s32.totalorder %v4385, 4
  %vm6060 = vcmp.eq.s32.totalorder %v4386, 4
  %vm6061 = vcmp.eq.s32.totalorder %v4387, 4
  %vm6062 = vcmp.eq.s32.totalorder %v4388, 4
  %vm6063 = vcmp.eq.s32.totalorder %v4389, 4
  %vm6064 = vcmp.eq.s32.totalorder %v4390, 4
  %vm6065 = vcmp.eq.s32.totalorder %v4391, 4
  %vm6066 = vcmp.eq.s32.totalorder %v4392, 4
  %vm6067 = vcmp.eq.s32.totalorder %v4393, 4
  %vm6068 = vcmp.eq.s32.totalorder %v4394, 4
  %vm6069 = vcmp.eq.s32.totalorder %v4395, 4
  %vm6070 = vcmp.eq.s32.totalorder %v4396, 4
  %vm6071 = vcmp.eq.s32.totalorder %v4397, 4
  %vm6072 = vcmp.eq.s32.totalorder %v4398, 4
  %vm6073 = vcmp.eq.s32.totalorder %v4399, 4
  %vm6074 = vcmp.eq.s32.totalorder %v4400, 4
  %vm6075 = vcmp.eq.s32.totalorder %v4401, 4
  %vm6076 = vcmp.eq.s32.totalorder %v4402, 4
  %vm6077 = vcmp.eq.s32.totalorder %v4403, 4
  %vm6078 = vcmp.eq.s32.totalorder %v4404, 4
  %vm6079 = vcmp.eq.s32.totalorder %v4405, 4
  %vm6080 = vcmp.eq.s32.totalorder %v4406, 4
  %vm6081 = vcmp.eq.s32.totalorder %v4407, 4
  %vm6082 = vcmp.eq.s32.totalorder %v4408, 4
  %vm6083 = vcmp.eq.s32.totalorder %v4409, 4
  %vm6084 = vcmp.eq.s32.totalorder %v4410, 4
  %vm6085 = vcmp.eq.s32.totalorder %v4411, 4
  %vm6086 = vcmp.eq.s32.totalorder %v4412, 4
  %vm6087 = vcmp.eq.s32.totalorder %v4413, 4
  %vm6088 = vcmp.eq.s32.totalorder %v4414, 4
  %vm6089 = vcmp.eq.s32.totalorder %v4415, 4
  %vm6090 = vcmp.eq.s32.totalorder %v4416, 4
  %vm6091 = vcmp.eq.s32.totalorder %v4417, 4
  %vm6092 = vcmp.eq.s32.totalorder %v4418, 4
  %vm6093 = vcmp.eq.s32.totalorder %v4419, 4
  %vm6094 = vcmp.eq.s32.totalorder %v4420, 4
  %vm6095 = vcmp.eq.s32.totalorder %v4421, 4
  %vm6096 = vcmp.eq.s32.totalorder %v4422, 4
  %vm6097 = vcmp.eq.s32.totalorder %v4423, 4
  %vm6098 = vcmp.eq.s32.totalorder %v4424, 4
  %vm6099 = vcmp.eq.s32.totalorder %v4425, 4
  %vm6100 = vcmp.eq.s32.totalorder %v4426, 4
  %vm6101 = vcmp.eq.s32.totalorder %v4427, 4
  %vm6102 = vcmp.eq.s32.totalorder %v4428, 4
  %vm6103 = vcmp.eq.s32.totalorder %v4429, 4
  %vm6104 = vcmp.eq.s32.totalorder %v4430, 4
  %vm6105 = vcmp.eq.s32.totalorder %v4431, 4
  %vm6106 = vcmp.eq.s32.totalorder %v4432, 4
  %vm6107 = vcmp.eq.s32.totalorder %v4433, 4
  %vm6108 = vcmp.eq.s32.totalorder %v4434, 4
  %vm6109 = vcmp.eq.s32.totalorder %v4435, 4
  %vm6110 = vcmp.eq.s32.totalorder %v4436, 4
  %vm6111 = vcmp.eq.s32.totalorder %v4437, 4
  %vm6112 = vcmp.eq.s32.totalorder %v4438, 4
  %vm6113 = vcmp.eq.s32.totalorder %v4439, 4
  %vm6114 = vcmp.eq.s32.totalorder %v4440, 4
  %vm6115 = vcmp.eq.s32.totalorder %v4441, 4
  %vm6116 = vcmp.eq.s32.totalorder %v4442, 4
  %vm6117 = vcmp.eq.s32.totalorder %v4443, 4
  %vm6118 = vcmp.eq.s32.totalorder %v4444, 4
  %vm6119 = vcmp.eq.s32.totalorder %v4445, 4
  %vm6120 = vcmp.eq.s32.totalorder %v4446, 4
  %vm6121 = vcmp.eq.s32.totalorder %v4447, 4
  %vm6122 = vcmp.eq.s32.totalorder %v4448, 4
  %vm6123 = vcmp.eq.s32.totalorder %v4449, 4
  %vm6124 = vcmp.eq.s32.totalorder %v4450, 4
  %vm6125 = vcmp.eq.s32.totalorder %v4451, 4
  %vm6126 = vcmp.eq.s32.totalorder %v4452, 4
  %vm6127 = vcmp.eq.s32.totalorder %v4453, 4
  %v6128 = vsel %vm6048, 1.0, 0.0
  %v6129 = vsel %vm6049, 1.0, 0.0
  %v6130 = vsel %vm6050, 1.0, 0.0
  %v6131 = vsel %vm6051, 1.0, 0.0
  %v6132 = vsel %vm6052, 1.0, 0.0
  %v6133 = vsel %vm6053, 1.0, 0.0
  %v6134 = vsel %vm6054, 1.0, 0.0
  %v6135 = vsel %vm6055, 1.0, 0.0
  %v6136 = vsel %vm6056, 1.0, 0.0
  %v6137 = vsel %vm6057, 1.0, 0.0
  %v6138 = vsel %vm6058, 1.0, 0.0
  %v6139 = vsel %vm6059, 1.0, 0.0
  %v6140 = vsel %vm6060, 1.0, 0.0
  %v6141 = vsel %vm6061, 1.0, 0.0
  %v6142 = vsel %vm6062, 1.0, 0.0
  %v6143 = vsel %vm6063, 1.0, 0.0
  %v6144 = vsel %vm6064, 1.0, 0.0
  %v6145 = vsel %vm6065, 1.0, 0.0
  %v6146 = vsel %vm6066, 1.0, 0.0
  %v6147 = vsel %vm6067, 1.0, 0.0
  %v6148 = vsel %vm6068, 1.0, 0.0
  %v6149 = vsel %vm6069, 1.0, 0.0
  %v6150 = vsel %vm6070, 1.0, 0.0
  %v6151 = vsel %vm6071, 1.0, 0.0
  %v6152 = vsel %vm6072, 1.0, 0.0
  %v6153 = vsel %vm6073, 1.0, 0.0
  %v6154 = vsel %vm6074, 1.0, 0.0
  %v6155 = vsel %vm6075, 1.0, 0.0
  %v6156 = vsel %vm6076, 1.0, 0.0
  %v6157 = vsel %vm6077, 1.0, 0.0
  %v6158 = vsel %vm6078, 1.0, 0.0
  %v6159 = vsel %vm6079, 1.0, 0.0
  %v6160 = vsel %vm6080, 1.0, 0.0
  %v6161 = vsel %vm6081, 1.0, 0.0
  %v6162 = vsel %vm6082, 1.0, 0.0
  %v6163 = vsel %vm6083, 1.0, 0.0
  %v6164 = vsel %vm6084, 1.0, 0.0
  %v6165 = vsel %vm6085, 1.0, 0.0
  %v6166 = vsel %vm6086, 1.0, 0.0
  %v6167 = vsel %vm6087, 1.0, 0.0
  %v6168 = vsel %vm6088, 1.0, 0.0
  %v6169 = vsel %vm6089, 1.0, 0.0
  %v6170 = vsel %vm6090, 1.0, 0.0
  %v6171 = vsel %vm6091, 1.0, 0.0
  %v6172 = vsel %vm6092, 1.0, 0.0
  %v6173 = vsel %vm6093, 1.0, 0.0
  %v6174 = vsel %vm6094, 1.0, 0.0
  %v6175 = vsel %vm6095, 1.0, 0.0
  %v6176 = vsel %vm6096, 1.0, 0.0
  %v6177 = vsel %vm6097, 1.0, 0.0
  %v6178 = vsel %vm6098, 1.0, 0.0
  %v6179 = vsel %vm6099, 1.0, 0.0
  %v6180 = vsel %vm6100, 1.0, 0.0
  %v6181 = vsel %vm6101, 1.0, 0.0
  %v6182 = vsel %vm6102, 1.0, 0.0
  %v6183 = vsel %vm6103, 1.0, 0.0
  %v6184 = vsel %vm6104, 1.0, 0.0
  %v6185 = vsel %vm6105, 1.0, 0.0
  %v6186 = vsel %vm6106, 1.0, 0.0
  %v6187 = vsel %vm6107, 1.0, 0.0
  %v6188 = vsel %vm6108, 1.0, 0.0
  %v6189 = vsel %vm6109, 1.0, 0.0
  %v6190 = vsel %vm6110, 1.0, 0.0
  %v6191 = vsel %vm6111, 1.0, 0.0
  %v6192 = vsel %vm6112, 1.0, 0.0
  %v6193 = vsel %vm6113, 1.0, 0.0
  %v6194 = vsel %vm6114, 1.0, 0.0
  %v6195 = vsel %vm6115, 1.0, 0.0
  %v6196 = vsel %vm6116, 1.0, 0.0
  %v6197 = vsel %vm6117, 1.0, 0.0
  %v6198 = vsel %vm6118, 1.0, 0.0
  %v6199 = vsel %vm6119, 1.0, 0.0
  %v6200 = vsel %vm6120, 1.0, 0.0
  %v6201 = vsel %vm6121, 1.0, 0.0
  %v6202 = vsel %vm6122, 1.0, 0.0
  %v6203 = vsel %vm6123, 1.0, 0.0
  %v6204 = vsel %vm6124, 1.0, 0.0
  %v6205 = vsel %vm6125, 1.0, 0.0
  %v6206 = vsel %vm6126, 1.0, 0.0
  %v6207 = vsel %vm6127, 1.0, 0.0
  %v6209 = vsel %vm4107, %v6047, 0
  %v6212 = vsel %vm2651, %v6203, 0
  %v6215 = vsel %vm2651, %v6204, 0
  %v6218 = vsel %vm2651, %v6205, 0
  %v6221 = vsel %vm2651, %v6206, 0
  %v6224 = vsel %vm2651, %v6207, 0
  %6226 = vmatprep.subr.mxu0 %v6129
  %6227 = vmatpush1.msra.mxu0 %v6128
  %6228 = vmatprep.subr.mxu0 %v6134
  %6229 = vmatpush1.msra.mxu0 %v6133
  %6230 = vmatprep.subr.mxu0 %v6139
  %6231 = vmatpush1.msra.mxu0 %v6138
  %6232 = vmatprep.subr.mxu0 %v6144
  %6233 = vmatpush1.msra.mxu0 %v6143
  %6234 = vmatprep.subr.mxu0 %v6149
  %6235 = vmatpush1.msra.mxu0 %v6148
  %6236 = vmatprep.subr.mxu0 %v6154
  %6237 = vmatpush1.msra.mxu0 %v6153
  %6238 = vmatprep.subr.mxu0 %v6159
  %6239 = vmatpush1.msra.mxu0 %v6158
  %6240 = vmatprep.subr.mxu0 %v6164
  %6241 = vmatpush1.msra.mxu0 %v6163
  %6242 = vmatprep.subr.mxu0 %v6169
  %6243 = vmatpush1.msra.mxu0 %v6168
  %6244 = vmatprep.subr.mxu0 %v6174
  %6245 = vmatpush1.msra.mxu0 %v6173
  %6246 = vmatprep.subr.mxu0 %v6179
  %6247 = vmatpush1.msra.mxu0 %v6178
  %6248 = vmatprep.subr.mxu0 %v6184
  %6249 = vmatpush1.msra.mxu0 %v6183
  %6250 = vmatprep.subr.mxu0 %v6189
  %6251 = vmatpush1.msra.mxu0 %v6188
  %6252 = vmatprep.subr.mxu0 %v6194
  %6253 = vmatpush1.msra.mxu0 %v6193
  %6254 = vmatprep.subr.mxu0 %v6199
  %6255 = vmatpush1.msra.mxu0 %v6198
  %6256 = vmatprep.subr.mxu0 %v6215
  %6257 = vmatpush1.msra.mxu0 %v6212
  %6258 = vmatprep.subr.mxu0 0.0
  %6259 = vmatpush1.msra.mxu0 0.0
  %6260 = vmatprep.subr.mxu0 0.0
  %6261 = vmatpush1.msra.mxu0 0.0
  %6262 = vmatprep.subr.mxu0 0.0
  %6263 = vmatpush1.msra.mxu0 0.0
  %6264 = vmatprep.subr.mxu0 0.0
  %6265 = vmatpush1.msra.mxu0 0.0
  %6266 = vmatprep.subr.mxu0 0.0
  %6267 = vmatpush1.msra.mxu0 0.0
  %6268 = vmatprep.subr.mxu0 0.0
  %6269 = vmatpush1.msra.mxu0 0.0
  %6270 = vmatprep.subr.mxu0 0.0
  %6271 = vmatpush1.msra.mxu0 0.0
  %6272 = vmatprep.subr.mxu0 0.0
  %6273 = vmatpush1.msra.mxu0 0.0
  %6274 = vmatprep.subr.mxu0 0.0
  %6275 = vmatpush1.msra.mxu0 0.0
  %6276 = vmatprep.subr.mxu0 0.0
  %6277 = vmatpush1.msra.mxu0 0.0
  %6278 = vmatprep.subr.mxu0 0.0
  %6279 = vmatpush1.msra.mxu0 0.0
  %6280 = vmatprep.subr.mxu0 0.0
  %6281 = vmatpush1.msra.mxu0 0.0
  %6282 = vmatprep.subr.mxu0 0.0
  %6283 = vmatpush1.msra.mxu0 0.0
  %6284 = vmatprep.subr.mxu0 0.0
  %6285 = vmatpush1.msra.mxu0 0.0
  %6286 = vmatprep.subr.mxu0 0.0
  %6287 = vmatpush1.msra.mxu0 0.0
  %6288 = vmatprep.subr.mxu0 0.0
  %6289 = vmatpush1.msra.mxu0 0.0
  %6290 = vmatprep.mubr.f32.mxu0 0.0
  %6291 = vmatmul.mubr.f32.gmra.mrb[0].mxu0 %v6209
  %v6292 = vpop.f32.mrb[0].mxu0
  %v6293 = vadd.f32 0.0, %v6292
  %v6294 = vpop.f32.mrb[0].mxu0
  %v6295 = vadd.f32 0.0, %v6294
  %6296 = vdwg.mxu0
  %6297 = vmatprep.subr.mxu0 %v6131
  %6298 = vmatpush1.msra.mxu0 %v6130
  %6299 = vmatprep.subr.mxu0 %v6136
  %6300 = vmatpush1.msra.mxu0 %v6135
  %6301 = vmatprep.subr.mxu0 %v6141
  %6302 = vmatpush1.msra.mxu0 %v6140
  %6303 = vmatprep.subr.mxu0 %v6146
  %6304 = vmatpush1.msra.mxu0 %v6145
  %6305 = vmatprep.subr.mxu0 %v6151
  %6306 = vmatpush1.msra.mxu0 %v6150
  %6307 = vmatprep.subr.mxu0 %v6156
  %6308 = vmatpush1.msra.mxu0 %v6155
  %6309 = vmatprep.subr.mxu0 %v6161
  %6310 = vmatpush1.msra.mxu0 %v6160
  %6311 = vmatprep.subr.mxu0 %v6166
  %6312 = vmatpush1.msra.mxu0 %v6165
  %6313 = vmatprep.subr.mxu0 %v6171
  %6314 = vmatpush1.msra.mxu0 %v6170
  %6315 = vmatprep.subr.mxu0 %v6176
  %6316 = vmatpush1.msra.mxu0 %v6175
  %6317 = vmatprep.subr.mxu0 %v6181
  %6318 = vmatpush1.msra.mxu0 %v6180
  %6319 = vmatprep.subr.mxu0 %v6186
  %6320 = vmatpush1.msra.mxu0 %v6185
  %6321 = vmatprep.subr.mxu0 %v6191
  %6322 = vmatpush1.msra.mxu0 %v6190
  %6323 = vmatprep.subr.mxu0 %v6196
  %6324 = vmatpush1.msra.mxu0 %v6195
  %6325 = vmatprep.subr.mxu0 %v6201
  %6326 = vmatpush1.msra.mxu0 %v6200
  %6327 = vmatprep.subr.mxu0 %v6221
  %6328 = vmatpush1.msra.mxu0 %v6218
  %6329 = vmatprep.subr.mxu0 0.0
  %6330 = vmatpush1.msra.mxu0 0.0
  %6331 = vmatprep.subr.mxu0 0.0
  %6332 = vmatpush1.msra.mxu0 0.0
  %6333 = vmatprep.subr.mxu0 0.0
  %6334 = vmatpush1.msra.mxu0 0.0
  %6335 = vmatprep.subr.mxu0 0.0
  %6336 = vmatpush1.msra.mxu0 0.0
  %6337 = vmatprep.subr.mxu0 0.0
  %6338 = vmatpush1.msra.mxu0 0.0
  %6339 = vmatprep.subr.mxu0 0.0
  %6340 = vmatpush1.msra.mxu0 0.0
  %6341 = vmatprep.subr.mxu0 0.0
  %6342 = vmatpush1.msra.mxu0 0.0
  %6343 = vmatprep.subr.mxu0 0.0
  %6344 = vmatpush1.msra.mxu0 0.0
  %6345 = vmatprep.subr.mxu0 0.0
  %6346 = vmatpush1.msra.mxu0 0.0
  %6347 = vmatprep.subr.mxu0 0.0
  %6348 = vmatpush1.msra.mxu0 0.0
  %6349 = vmatprep.subr.mxu0 0.0
  %6350 = vmatpush1.msra.mxu0 0.0
  %6351 = vmatprep.subr.mxu0 0.0
  %6352 = vmatpush1.msra.mxu0 0.0
  %6353 = vmatprep.subr.mxu0 0.0
  %6354 = vmatpush1.msra.mxu0 0.0
  %6355 = vmatprep.subr.mxu0 0.0
  %6356 = vmatpush1.msra.mxu0 0.0
  %6357 = vmatprep.subr.mxu0 0.0
  %6358 = vmatpush1.msra.mxu0 0.0
  %6359 = vmatprep.subr.mxu0 0.0
  %6360 = vmatpush1.msra.mxu0 0.0
  %6361 = vmatprep.mubr.f32.mxu0 0.0
  %6362 = vmatmul.mubr.f32.gmra.mrb[0].mxu0 %v6209
  %v6363 = vpop.f32.mrb[0].mxu0
  %v6364 = vadd.f32 0.0, %v6363
  %v6365 = vpop.f32.mrb[0].mxu0
  %v6366 = vadd.f32 0.0, %v6365
  %6367 = vdwg.mxu0
  %6368 = vmatprep.subr.mxu0 0.0
  %6369 = vmatpush1.msra.mxu0 %v6132
  %6370 = vmatprep.subr.mxu0 0.0
  %6371 = vmatpush1.msra.mxu0 %v6137
  %6372 = vmatprep.subr.mxu0 0.0
  %6373 = vmatpush1.msra.mxu0 %v6142
  %6374 = vmatprep.subr.mxu0 0.0
  %6375 = vmatpush1.msra.mxu0 %v6147
  %6376 = vmatprep.subr.mxu0 0.0
  %6377 = vmatpush1.msra.mxu0 %v6152
  %6378 = vmatprep.subr.mxu0 0.0
  %6379 = vmatpush1.msra.mxu0 %v6157
  %6380 = vmatprep.subr.mxu0 0.0
  %6381 = vmatpush1.msra.mxu0 %v6162
  %6382 = vmatprep.subr.mxu0 0.0
  %6383 = vmatpush1.msra.mxu0 %v6167
  %6384 = vmatprep.subr.mxu0 0.0
  %6385 = vmatpush1.msra.mxu0 %v6172
  %6386 = vmatprep.subr.mxu0 0.0
  %6387 = vmatpush1.msra.mxu0 %v6177
  %6388 = vmatprep.subr.mxu0 0.0
  %6389 = vmatpush1.msra.mxu0 %v6182
  %6390 = vmatprep.subr.mxu0 0.0
  %6391 = vmatpush1.msra.mxu0 %v6187
  %6392 = vmatprep.subr.mxu0 0.0
  %6393 = vmatpush1.msra.mxu0 %v6192
  %6394 = vmatprep.subr.mxu0 0.0
  %6395 = vmatpush1.msra.mxu0 %v6197
  %6396 = vmatprep.subr.mxu0 0.0
  %6397 = vmatpush1.msra.mxu0 %v6202
  %6398 = vmatprep.subr.mxu0 0.0
  %6399 = vmatpush1.msra.mxu0 %v6224
  %6400 = vmatprep.subr.mxu0 0.0
  %6401 = vmatpush1.msra.mxu0 0.0
  %6402 = vmatprep.subr.mxu0 0.0
  %6403 = vmatpush1.msra.mxu0 0.0
  %6404 = vmatprep.subr.mxu0 0.0
  %6405 = vmatpush1.msra.mxu0 0.0
  %6406 = vmatprep.subr.mxu0 0.0
  %6407 = vmatpush1.msra.mxu0 0.0
  %6408 = vmatprep.subr.mxu0 0.0
  %6409 = vmatpush1.msra.mxu0 0.0
  %6410 = vmatprep.subr.mxu0 0.0
  %6411 = vmatpush1.msra.mxu0 0.0
  %6412 = vmatprep.subr.mxu0 0.0
  %6413 = vmatpush1.msra.mxu0 0.0
  %6414 = vmatprep.subr.mxu0 0.0
  %6415 = vmatpush1.msra.mxu0 0.0
  %6416 = vmatprep.subr.mxu0 0.0
  %6417 = vmatpush1.msra.mxu0 0.0
  %6418 = vmatprep.subr.mxu0 0.0
  %6419 = vmatpush1.msra.mxu0 0.0
  %6420 = vmatprep.subr.mxu0 0.0
  %6421 = vmatpush1.msra.mxu0 0.0
  %6422 = vmatprep.subr.mxu0 0.0
  %6423 = vmatpush1.msra.mxu0 0.0
  %6424 = vmatprep.subr.mxu0 0.0
  %6425 = vmatpush1.msra.mxu0 0.0
  %6426 = vmatprep.subr.mxu0 0.0
  %6427 = vmatpush1.msra.mxu0 0.0
  %6428 = vmatprep.subr.mxu0 0.0
  %6429 = vmatpush1.msra.mxu0 0.0
  %6430 = vmatprep.subr.mxu0 0.0
  %6431 = vmatpush1.msra.mxu0 0.0
  %6432 = vmatprep.mubr.f32.mxu0 0.0
  %6433 = vmatmul.mubr.f32.gmra.mrb[0].mxu0 %v6209
  %v6434 = vpop.f32.mrb[0].mxu0
  %v6435 = vadd.f32 0.0, %v6434
  %v6436 = vpop.f32.mrb[0].mxu0
  %6437 = vdwg.mxu0
  %v6438 = vadd.f32 %v6038, %v6293
  %v6439 = vadd.f32 %v6039, %v6295
  %v6440 = vadd.f32 %v6040, %v6364
  %v6441 = vadd.f32 %v6041, %v6366
  %v6442 = vadd.f32 %v6042, %v6435
  %v6443 = vrot.slane %v4269, 5
  %v6445 = vrot.slane %v4339, 4
  %v6447 = vsel %vm4457, %v6443, %v6445
  %vm6448 = vcmp.eq.s32.totalorder %v4374, 5
  %vm6449 = vcmp.eq.s32.totalorder %v4375, 5
  %vm6450 = vcmp.eq.s32.totalorder %v4376, 5
  %vm6451 = vcmp.eq.s32.totalorder %v4377, 5
  %vm6452 = vcmp.eq.s32.totalorder %v4378, 5
  %vm6453 = vcmp.eq.s32.totalorder %v4379, 5
  %vm6454 = vcmp.eq.s32.totalorder %v4380, 5
  %vm6455 = vcmp.eq.s32.totalorder %v4381, 5
  %vm6456 = vcmp.eq.s32.totalorder %v4382, 5
  %vm6457 = vcmp.eq.s32.totalorder %v4383, 5
  %vm6458 = vcmp.eq.s32.totalorder %v4384, 5
  %vm6459 = vcmp.eq.s32.totalorder %v4385, 5
  %vm6460 = vcmp.eq.s32.totalorder %v4386, 5
  %vm6461 = vcmp.eq.s32.totalorder %v4387, 5
  %vm6462 = vcmp.eq.s32.totalorder %v4388, 5
  %vm6463 = vcmp.eq.s32.totalorder %v4389, 5
  %vm6464 = vcmp.eq.s32.totalorder %v4390, 5
  %vm6465 = vcmp.eq.s32.totalorder %v4391, 5
  %vm6466 = vcmp.eq.s32.totalorder %v4392, 5
  %vm6467 = vcmp.eq.s32.totalorder %v4393, 5
  %vm6468 = vcmp.eq.s32.totalorder %v4394, 5
  %vm6469 = vcmp.eq.s32.totalorder %v4395, 5
  %vm6470 = vcmp.eq.s32.totalorder %v4396, 5
  %vm6471 = vcmp.eq.s32.totalorder %v4397, 5
  %vm6472 = vcmp.eq.s32.totalorder %v4398, 5
  %vm6473 = vcmp.eq.s32.totalorder %v4399, 5
  %vm6474 = vcmp.eq.s32.totalorder %v4400, 5
  %vm6475 = vcmp.eq.s32.totalorder %v4401, 5
  %vm6476 = vcmp.eq.s32.totalorder %v4402, 5
  %vm6477 = vcmp.eq.s32.totalorder %v4403, 5
  %vm6478 = vcmp.eq.s32.totalorder %v4404, 5
  %vm6479 = vcmp.eq.s32.totalorder %v4405, 5
  %vm6480 = vcmp.eq.s32.totalorder %v4406, 5
  %vm6481 = vcmp.eq.s32.totalorder %v4407, 5
  %vm6482 = vcmp.eq.s32.totalorder %v4408, 5
  %vm6483 = vcmp.eq.s32.totalorder %v4409, 5
  %vm6484 = vcmp.eq.s32.totalorder %v4410, 5
  %vm6485 = vcmp.eq.s32.totalorder %v4411, 5
  %vm6486 = vcmp.eq.s32.totalorder %v4412, 5
  %vm6487 = vcmp.eq.s32.totalorder %v4413, 5
  %vm6488 = vcmp.eq.s32.totalorder %v4414, 5
  %vm6489 = vcmp.eq.s32.totalorder %v4415, 5
  %vm6490 = vcmp.eq.s32.totalorder %v4416, 5
  %vm6491 = vcmp.eq.s32.totalorder %v4417, 5
  %vm6492 = vcmp.eq.s32.totalorder %v4418, 5
  %vm6493 = vcmp.eq.s32.totalorder %v4419, 5
  %vm6494 = vcmp.eq.s32.totalorder %v4420, 5
  %vm6495 = vcmp.eq.s32.totalorder %v4421, 5
  %vm6496 = vcmp.eq.s32.totalorder %v4422, 5
  %vm6497 = vcmp.eq.s32.totalorder %v4423, 5
  %vm6498 = vcmp.eq.s32.totalorder %v4424, 5
  %vm6499 = vcmp.eq.s32.totalorder %v4425, 5
  %vm6500 = vcmp.eq.s32.totalorder %v4426, 5
  %vm6501 = vcmp.eq.s32.totalorder %v4427, 5
  %vm6502 = vcmp.eq.s32.totalorder %v4428, 5
  %vm6503 = vcmp.eq.s32.totalorder %v4429, 5
  %vm6504 = vcmp.eq.s32.totalorder %v4430, 5
  %vm6505 = vcmp.eq.s32.totalorder %v4431, 5
  %vm6506 = vcmp.eq.s32.totalorder %v4432, 5
  %vm6507 = vcmp.eq.s32.totalorder %v4433, 5
  %vm6508 = vcmp.eq.s32.totalorder %v4434, 5
  %vm6509 = vcmp.eq.s32.totalorder %v4435, 5
  %vm6510 = vcmp.eq.s32.totalorder %v4436, 5
  %vm6511 = vcmp.eq.s32.totalorder %v4437, 5
  %vm6512 = vcmp.eq.s32.totalorder %v4438, 5
  %vm6513 = vcmp.eq.s32.totalorder %v4439, 5
  %vm6514 = vcmp.eq.s32.totalorder %v4440, 5
  %vm6515 = vcmp.eq.s32.totalorder %v4441, 5
  %vm6516 = vcmp.eq.s32.totalorder %v4442, 5
  %vm6517 = vcmp.eq.s32.totalorder %v4443, 5
  %vm6518 = vcmp.eq.s32.totalorder %v4444, 5
  %vm6519 = vcmp.eq.s32.totalorder %v4445, 5
  %vm6520 = vcmp.eq.s32.totalorder %v4446, 5
  %vm6521 = vcmp.eq.s32.totalorder %v4447, 5
  %vm6522 = vcmp.eq.s32.totalorder %v4448, 5
  %vm6523 = vcmp.eq.s32.totalorder %v4449, 5
  %vm6524 = vcmp.eq.s32.totalorder %v4450, 5
  %vm6525 = vcmp.eq.s32.totalorder %v4451, 5
  %vm6526 = vcmp.eq.s32.totalorder %v4452, 5
  %vm6527 = vcmp.eq.s32.totalorder %v4453, 5
  %v6528 = vsel %vm6448, 1.0, 0.0
  %v6529 = vsel %vm6449, 1.0, 0.0
  %v6530 = vsel %vm6450, 1.0, 0.0
  %v6531 = vsel %vm6451, 1.0, 0.0
  %v6532 = vsel %vm6452, 1.0, 0.0
  %v6533 = vsel %vm6453, 1.0, 0.0
  %v6534 = vsel %vm6454, 1.0, 0.0
  %v6535 = vsel %vm6455, 1.0, 0.0
  %v6536 = vsel %vm6456, 1.0, 0.0
  %v6537 = vsel %vm6457, 1.0, 0.0
  %v6538 = vsel %vm6458, 1.0, 0.0
  %v6539 = vsel %vm6459, 1.0, 0.0
  %v6540 = vsel %vm6460, 1.0, 0.0
  %v6541 = vsel %vm6461, 1.0, 0.0
  %v6542 = vsel %vm6462, 1.0, 0.0
  %v6543 = vsel %vm6463, 1.0, 0.0
  %v6544 = vsel %vm6464, 1.0, 0.0
  %v6545 = vsel %vm6465, 1.0, 0.0
  %v6546 = vsel %vm6466, 1.0, 0.0
  %v6547 = vsel %vm6467, 1.0, 0.0
  %v6548 = vsel %vm6468, 1.0, 0.0
  %v6549 = vsel %vm6469, 1.0, 0.0
  %v6550 = vsel %vm6470, 1.0, 0.0
  %v6551 = vsel %vm6471, 1.0, 0.0
  %v6552 = vsel %vm6472, 1.0, 0.0
  %v6553 = vsel %vm6473, 1.0, 0.0
  %v6554 = vsel %vm6474, 1.0, 0.0
  %v6555 = vsel %vm6475, 1.0, 0.0
  %v6556 = vsel %vm6476, 1.0, 0.0
  %v6557 = vsel %vm6477, 1.0, 0.0
  %v6558 = vsel %vm6478, 1.0, 0.0
  %v6559 = vsel %vm6479, 1.0, 0.0
  %v6560 = vsel %vm6480, 1.0, 0.0
  %v6561 = vsel %vm6481, 1.0, 0.0
  %v6562 = vsel %vm6482, 1.0, 0.0
  %v6563 = vsel %vm6483, 1.0, 0.0
  %v6564 = vsel %vm6484, 1.0, 0.0
  %v6565 = vsel %vm6485, 1.0, 0.0
  %v6566 = vsel %vm6486, 1.0, 0.0
  %v6567 = vsel %vm6487, 1.0, 0.0
  %v6568 = vsel %vm6488, 1.0, 0.0
  %v6569 = vsel %vm6489, 1.0, 0.0
  %v6570 = vsel %vm6490, 1.0, 0.0
  %v6571 = vsel %vm6491, 1.0, 0.0
  %v6572 = vsel %vm6492, 1.0, 0.0
  %v6573 = vsel %vm6493, 1.0, 0.0
  %v6574 = vsel %vm6494, 1.0, 0.0
  %v6575 = vsel %vm6495, 1.0, 0.0
  %v6576 = vsel %vm6496, 1.0, 0.0
  %v6577 = vsel %vm6497, 1.0, 0.0
  %v6578 = vsel %vm6498, 1.0, 0.0
  %v6579 = vsel %vm6499, 1.0, 0.0
  %v6580 = vsel %vm6500, 1.0, 0.0
  %v6581 = vsel %vm6501, 1.0, 0.0
  %v6582 = vsel %vm6502, 1.0, 0.0
  %v6583 = vsel %vm6503, 1.0, 0.0
  %v6584 = vsel %vm6504, 1.0, 0.0
  %v6585 = vsel %vm6505, 1.0, 0.0
  %v6586 = vsel %vm6506, 1.0, 0.0
  %v6587 = vsel %vm6507, 1.0, 0.0
  %v6588 = vsel %vm6508, 1.0, 0.0
  %v6589 = vsel %vm6509, 1.0, 0.0
  %v6590 = vsel %vm6510, 1.0, 0.0
  %v6591 = vsel %vm6511, 1.0, 0.0
  %v6592 = vsel %vm6512, 1.0, 0.0
  %v6593 = vsel %vm6513, 1.0, 0.0
  %v6594 = vsel %vm6514, 1.0, 0.0
  %v6595 = vsel %vm6515, 1.0, 0.0
  %v6596 = vsel %vm6516, 1.0, 0.0
  %v6597 = vsel %vm6517, 1.0, 0.0
  %v6598 = vsel %vm6518, 1.0, 0.0
  %v6599 = vsel %vm6519, 1.0, 0.0
  %v6600 = vsel %vm6520, 1.0, 0.0
  %v6601 = vsel %vm6521, 1.0, 0.0
  %v6602 = vsel %vm6522, 1.0, 0.0
  %v6603 = vsel %vm6523, 1.0, 0.0
  %v6604 = vsel %vm6524, 1.0, 0.0
  %v6605 = vsel %vm6525, 1.0, 0.0
  %v6606 = vsel %vm6526, 1.0, 0.0
  %v6607 = vsel %vm6527, 1.0, 0.0
  %v6609 = vsel %vm4107, %v6447, 0
  %v6612 = vsel %vm2651, %v6603, 0
  %v6615 = vsel %vm2651, %v6604, 0
  %v6618 = vsel %vm2651, %v6605, 0
  %v6621 = vsel %vm2651, %v6606, 0
  %v6624 = vsel %vm2651, %v6607, 0
  %6626 = vmatprep.subr.mxu0 %v6529
  %6627 = vmatpush1.msra.mxu0 %v6528
  %6628 = vmatprep.subr.mxu0 %v6534
  %6629 = vmatpush1.msra.mxu0 %v6533
  %6630 = vmatprep.subr.mxu0 %v6539
  %6631 = vmatpush1.msra.mxu0 %v6538
  %6632 = vmatprep.subr.mxu0 %v6544
  %6633 = vmatpush1.msra.mxu0 %v6543
  %6634 = vmatprep.subr.mxu0 %v6549
  %6635 = vmatpush1.msra.mxu0 %v6548
  %6636 = vmatprep.subr.mxu0 %v6554
  %6637 = vmatpush1.msra.mxu0 %v6553
  %6638 = vmatprep.subr.mxu0 %v6559
  %6639 = vmatpush1.msra.mxu0 %v6558
  %6640 = vmatprep.subr.mxu0 %v6564
  %6641 = vmatpush1.msra.mxu0 %v6563
  %6642 = vmatprep.subr.mxu0 %v6569
  %6643 = vmatpush1.msra.mxu0 %v6568
  %6644 = vmatprep.subr.mxu0 %v6574
  %6645 = vmatpush1.msra.mxu0 %v6573
  %6646 = vmatprep.subr.mxu0 %v6579
  %6647 = vmatpush1.msra.mxu0 %v6578
  %6648 = vmatprep.subr.mxu0 %v6584
  %6649 = vmatpush1.msra.mxu0 %v6583
  %6650 = vmatprep.subr.mxu0 %v6589
  %6651 = vmatpush1.msra.mxu0 %v6588
  %6652 = vmatprep.subr.mxu0 %v6594
  %6653 = vmatpush1.msra.mxu0 %v6593
  %6654 = vmatprep.subr.mxu0 %v6599
  %6655 = vmatpush1.msra.mxu0 %v6598
  %6656 = vmatprep.subr.mxu0 %v6615
  %6657 = vmatpush1.msra.mxu0 %v6612
  %6658 = vmatprep.subr.mxu0 0.0
  %6659 = vmatpush1.msra.mxu0 0.0
  %6660 = vmatprep.subr.mxu0 0.0
  %6661 = vmatpush1.msra.mxu0 0.0
  %6662 = vmatprep.subr.mxu0 0.0
  %6663 = vmatpush1.msra.mxu0 0.0
  %6664 = vmatprep.subr.mxu0 0.0
  %6665 = vmatpush1.msra.mxu0 0.0
  %6666 = vmatprep.subr.mxu0 0.0
  %6667 = vmatpush1.msra.mxu0 0.0
  %6668 = vmatprep.subr.mxu0 0.0
  %6669 = vmatpush1.msra.mxu0 0.0
  %6670 = vmatprep.subr.mxu0 0.0
  %6671 = vmatpush1.msra.mxu0 0.0
  %6672 = vmatprep.subr.mxu0 0.0
  %6673 = vmatpush1.msra.mxu0 0.0
  %6674 = vmatprep.subr.mxu0 0.0
  %6675 = vmatpush1.msra.mxu0 0.0
  %6676 = vmatprep.subr.mxu0 0.0
  %6677 = vmatpush1.msra.mxu0 0.0
  %6678 = vmatprep.subr.mxu0 0.0
  %6679 = vmatpush1.msra.mxu0 0.0
  %6680 = vmatprep.subr.mxu0 0.0
  %6681 = vmatpush1.msra.mxu0 0.0
  %6682 = vmatprep.subr.mxu0 0.0
  %6683 = vmatpush1.msra.mxu0 0.0
  %6684 = vmatprep.subr.mxu0 0.0
  %6685 = vmatpush1.msra.mxu0 0.0
  %6686 = vmatprep.subr.mxu0 0.0
  %6687 = vmatpush1.msra.mxu0 0.0
  %6688 = vmatprep.subr.mxu0 0.0
  %6689 = vmatpush1.msra.mxu0 0.0
  %6690 = vmatprep.mubr.f32.mxu0 0.0
  %6691 = vmatmul.mubr.f32.gmra.mrb[0].mxu0 %v6609
  %v6692 = vpop.f32.mrb[0].mxu0
  %v6693 = vadd.f32 0.0, %v6692
  %v6694 = vpop.f32.mrb[0].mxu0
  %v6695 = vadd.f32 0.0, %v6694
  %6696 = vdwg.mxu0
  %6697 = vmatprep.subr.mxu0 %v6531
  %6698 = vmatpush1.msra.mxu0 %v6530
  %6699 = vmatprep.subr.mxu0 %v6536
  %6700 = vmatpush1.msra.mxu0 %v6535
  %6701 = vmatprep.subr.mxu0 %v6541
  %6702 = vmatpush1.msra.mxu0 %v6540
  %6703 = vmatprep.subr.mxu0 %v6546
  %6704 = vmatpush1.msra.mxu0 %v6545
  %6705 = vmatprep.subr.mxu0 %v6551
  %6706 = vmatpush1.msra.mxu0 %v6550
  %6707 = vmatprep.subr.mxu0 %v6556
  %6708 = vmatpush1.msra.mxu0 %v6555
  %6709 = vmatprep.subr.mxu0 %v6561
  %6710 = vmatpush1.msra.mxu0 %v6560
  %6711 = vmatprep.subr.mxu0 %v6566
  %6712 = vmatpush1.msra.mxu0 %v6565
  %6713 = vmatprep.subr.mxu0 %v6571
  %6714 = vmatpush1.msra.mxu0 %v6570
  %6715 = vmatprep.subr.mxu0 %v6576
  %6716 = vmatpush1.msra.mxu0 %v6575
  %6717 = vmatprep.subr.mxu0 %v6581
  %6718 = vmatpush1.msra.mxu0 %v6580
  %6719 = vmatprep.subr.mxu0 %v6586
  %6720 = vmatpush1.msra.mxu0 %v6585
  %6721 = vmatprep.subr.mxu0 %v6591
  %6722 = vmatpush1.msra.mxu0 %v6590
  %6723 = vmatprep.subr.mxu0 %v6596
  %6724 = vmatpush1.msra.mxu0 %v6595
  %6725 = vmatprep.subr.mxu0 %v6601
  %6726 = vmatpush1.msra.mxu0 %v6600
  %6727 = vmatprep.subr.mxu0 %v6621
  %6728 = vmatpush1.msra.mxu0 %v6618
  %6729 = vmatprep.subr.mxu0 0.0
  %6730 = vmatpush1.msra.mxu0 0.0
  %6731 = vmatprep.subr.mxu0 0.0
  %6732 = vmatpush1.msra.mxu0 0.0
  %6733 = vmatprep.subr.mxu0 0.0
  %6734 = vmatpush1.msra.mxu0 0.0
  %6735 = vmatprep.subr.mxu0 0.0
  %6736 = vmatpush1.msra.mxu0 0.0
  %6737 = vmatprep.subr.mxu0 0.0
  %6738 = vmatpush1.msra.mxu0 0.0
  %6739 = vmatprep.subr.mxu0 0.0
  %6740 = vmatpush1.msra.mxu0 0.0
  %6741 = vmatprep.subr.mxu0 0.0
  %6742 = vmatpush1.msra.mxu0 0.0
  %6743 = vmatprep.subr.mxu0 0.0
  %6744 = vmatpush1.msra.mxu0 0.0
  %6745 = vmatprep.subr.mxu0 0.0
  %6746 = vmatpush1.msra.mxu0 0.0
  %6747 = vmatprep.subr.mxu0 0.0
  %6748 = vmatpush1.msra.mxu0 0.0
  %6749 = vmatprep.subr.mxu0 0.0
  %6750 = vmatpush1.msra.mxu0 0.0
  %6751 = vmatprep.subr.mxu0 0.0
  %6752 = vmatpush1.msra.mxu0 0.0
  %6753 = vmatprep.subr.mxu0 0.0
  %6754 = vmatpush1.msra.mxu0 0.0
  %6755 = vmatprep.subr.mxu0 0.0
  %6756 = vmatpush1.msra.mxu0 0.0
  %6757 = vmatprep.subr.mxu0 0.0
  %6758 = vmatpush1.msra.mxu0 0.0
  %6759 = vmatprep.subr.mxu0 0.0
  %6760 = vmatpush1.msra.mxu0 0.0
  %6761 = vmatprep.mubr.f32.mxu0 0.0
  %6762 = vmatmul.mubr.f32.gmra.mrb[0].mxu0 %v6609
  %v6763 = vpop.f32.mrb[0].mxu0
  %v6764 = vadd.f32 0.0, %v6763
  %v6765 = vpop.f32.mrb[0].mxu0
  %v6766 = vadd.f32 0.0, %v6765
  %6767 = vdwg.mxu0
  %6768 = vmatprep.subr.mxu0 0.0
  %6769 = vmatpush1.msra.mxu0 %v6532
  %6770 = vmatprep.subr.mxu0 0.0
  %6771 = vmatpush1.msra.mxu0 %v6537
  %6772 = vmatprep.subr.mxu0 0.0
  %6773 = vmatpush1.msra.mxu0 %v6542
  %6774 = vmatprep.subr.mxu0 0.0
  %6775 = vmatpush1.msra.mxu0 %v6547
  %6776 = vmatprep.subr.mxu0 0.0
  %6777 = vmatpush1.msra.mxu0 %v6552
  %6778 = vmatprep.subr.mxu0 0.0
  %6779 = vmatpush1.msra.mxu0 %v6557
  %6780 = vmatprep.subr.mxu0 0.0
  %6781 = vmatpush1.msra.mxu0 %v6562
  %6782 = vmatprep.subr.mxu0 0.0
  %6783 = vmatpush1.msra.mxu0 %v6567
  %6784 = vmatprep.subr.mxu0 0.0
  %6785 = vmatpush1.msra.mxu0 %v6572
  %6786 = vmatprep.subr.mxu0 0.0
  %6787 = vmatpush1.msra.mxu0 %v6577
  %6788 = vmatprep.subr.mxu0 0.0
  %6789 = vmatpush1.msra.mxu0 %v6582
  %6790 = vmatprep.subr.mxu0 0.0
  %6791 = vmatpush1.msra.mxu0 %v6587
  %6792 = vmatprep.subr.mxu0 0.0
  %6793 = vmatpush1.msra.mxu0 %v6592
  %6794 = vmatprep.subr.mxu0 0.0
  %6795 = vmatpush1.msra.mxu0 %v6597
  %6796 = vmatprep.subr.mxu0 0.0
  %6797 = vmatpush1.msra.mxu0 %v6602
  %6798 = vmatprep.subr.mxu0 0.0
  %6799 = vmatpush1.msra.mxu0 %v6624
  %6800 = vmatprep.subr.mxu0 0.0
  %6801 = vmatpush1.msra.mxu0 0.0
  %6802 = vmatprep.subr.mxu0 0.0
  %6803 = vmatpush1.msra.mxu0 0.0
  %6804 = vmatprep.subr.mxu0 0.0
  %6805 = vmatpush1.msra.mxu0 0.0
  %6806 = vmatprep.subr.mxu0 0.0
  %6807 = vmatpush1.msra.mxu0 0.0
  %6808 = vmatprep.subr.mxu0 0.0
  %6809 = vmatpush1.msra.mxu0 0.0
  %6810 = vmatprep.subr.mxu0 0.0
  %6811 = vmatpush1.msra.mxu0 0.0
  %6812 = vmatprep.subr.mxu0 0.0
  %6813 = vmatpush1.msra.mxu0 0.0
  %6814 = vmatprep.subr.mxu0 0.0
  %6815 = vmatpush1.msra.mxu0 0.0
  %6816 = vmatprep.subr.mxu0 0.0
  %6817 = vmatpush1.msra.mxu0 0.0
  %6818 = vmatprep.subr.mxu0 0.0
  %6819 = vmatpush1.msra.mxu0 0.0
  %6820 = vmatprep.subr.mxu0 0.0
  %6821 = vmatpush1.msra.mxu0 0.0
  %6822 = vmatprep.subr.mxu0 0.0
  %6823 = vmatpush1.msra.mxu0 0.0
  %6824 = vmatprep.subr.mxu0 0.0
  %6825 = vmatpush1.msra.mxu0 0.0
  %6826 = vmatprep.subr.mxu0 0.0
  %6827 = vmatpush1.msra.mxu0 0.0
  %6828 = vmatprep.subr.mxu0 0.0
  %6829 = vmatpush1.msra.mxu0 0.0
  %6830 = vmatprep.subr.mxu0 0.0
  %6831 = vmatpush1.msra.mxu0 0.0
  %6832 = vmatprep.mubr.f32.mxu0 0.0
  %6833 = vmatmul.mubr.f32.gmra.mrb[0].mxu0 %v6609
  %v6834 = vpop.f32.mrb[0].mxu0
  %v6835 = vadd.f32 0.0, %v6834
  %v6836 = vpop.f32.mrb[0].mxu0
  %6837 = vdwg.mxu0
  %v6838 = vadd.f32 %v6438, %v6693
  %v6839 = vadd.f32 %v6439, %v6695
  %v6840 = vadd.f32 %v6440, %v6764
  %v6841 = vadd.f32 %v6441, %v6766
  %v6842 = vadd.f32 %v6442, %v6835
  %v6843 = vrot.slane %v4269, 6
  %v6845 = vrot.slane %v4339, 5
  %v6847 = vsel %vm4457, %v6843, %v6845
  %vm6848 = vcmp.eq.s32.totalorder %v4374, 6
  %vm6849 = vcmp.eq.s32.totalorder %v4375, 6
  %vm6850 = vcmp.eq.s32.totalorder %v4376, 6
  %vm6851 = vcmp.eq.s32.totalorder %v4377, 6
  %vm6852 = vcmp.eq.s32.totalorder %v4378, 6
  %vm6853 = vcmp.eq.s32.totalorder %v4379, 6
  %vm6854 = vcmp.eq.s32.totalorder %v4380, 6
  %vm6855 = vcmp.eq.s32.totalorder %v4381, 6
  %vm6856 = vcmp.eq.s32.totalorder %v4382, 6
  %vm6857 = vcmp.eq.s32.totalorder %v4383, 6
  %vm6858 = vcmp.eq.s32.totalorder %v4384, 6
  %vm6859 = vcmp.eq.s32.totalorder %v4385, 6
  %vm6860 = vcmp.eq.s32.totalorder %v4386, 6
  %vm6861 = vcmp.eq.s32.totalorder %v4387, 6
  %vm6862 = vcmp.eq.s32.totalorder %v4388, 6
  %vm6863 = vcmp.eq.s32.totalorder %v4389, 6
  %vm6864 = vcmp.eq.s32.totalorder %v4390, 6
  %vm6865 = vcmp.eq.s32.totalorder %v4391, 6
  %vm6866 = vcmp.eq.s32.totalorder %v4392, 6
  %vm6867 = vcmp.eq.s32.totalorder %v4393, 6
  %vm6868 = vcmp.eq.s32.totalorder %v4394, 6
  %vm6869 = vcmp.eq.s32.totalorder %v4395, 6
  %vm6870 = vcmp.eq.s32.totalorder %v4396, 6
  %vm6871 = vcmp.eq.s32.totalorder %v4397, 6
  %vm6872 = vcmp.eq.s32.totalorder %v4398, 6
  %vm6873 = vcmp.eq.s32.totalorder %v4399, 6
  %vm6874 = vcmp.eq.s32.totalorder %v4400, 6
  %vm6875 = vcmp.eq.s32.totalorder %v4401, 6
  %vm6876 = vcmp.eq.s32.totalorder %v4402, 6
  %vm6877 = vcmp.eq.s32.totalorder %v4403, 6
  %vm6878 = vcmp.eq.s32.totalorder %v4404, 6
  %vm6879 = vcmp.eq.s32.totalorder %v4405, 6
  %vm6880 = vcmp.eq.s32.totalorder %v4406, 6
  %vm6881 = vcmp.eq.s32.totalorder %v4407, 6
  %vm6882 = vcmp.eq.s32.totalorder %v4408, 6
  %vm6883 = vcmp.eq.s32.totalorder %v4409, 6
  %vm6884 = vcmp.eq.s32.totalorder %v4410, 6
  %vm6885 = vcmp.eq.s32.totalorder %v4411, 6
  %vm6886 = vcmp.eq.s32.totalorder %v4412, 6
  %vm6887 = vcmp.eq.s32.totalorder %v4413, 6
  %vm6888 = vcmp.eq.s32.totalorder %v4414, 6
  %vm6889 = vcmp.eq.s32.totalorder %v4415, 6
  %vm6890 = vcmp.eq.s32.totalorder %v4416, 6
  %vm6891 = vcmp.eq.s32.totalorder %v4417, 6
  %vm6892 = vcmp.eq.s32.totalorder %v4418, 6
  %vm6893 = vcmp.eq.s32.totalorder %v4419, 6
  %vm6894 = vcmp.eq.s32.totalorder %v4420, 6
  %vm6895 = vcmp.eq.s32.totalorder %v4421, 6
  %vm6896 = vcmp.eq.s32.totalorder %v4422, 6
  %vm6897 = vcmp.eq.s32.totalorder %v4423, 6
  %vm6898 = vcmp.eq.s32.totalorder %v4424, 6
  %vm6899 = vcmp.eq.s32.totalorder %v4425, 6
  %vm6900 = vcmp.eq.s32.totalorder %v4426, 6
  %vm6901 = vcmp.eq.s32.totalorder %v4427, 6
  %vm6902 = vcmp.eq.s32.totalorder %v4428, 6
  %vm6903 = vcmp.eq.s32.totalorder %v4429, 6
  %vm6904 = vcmp.eq.s32.totalorder %v4430, 6
  %vm6905 = vcmp.eq.s32.totalorder %v4431, 6
  %vm6906 = vcmp.eq.s32.totalorder %v4432, 6
  %vm6907 = vcmp.eq.s32.totalorder %v4433, 6
  %vm6908 = vcmp.eq.s32.totalorder %v4434, 6
  %vm6909 = vcmp.eq.s32.totalorder %v4435, 6
  %vm6910 = vcmp.eq.s32.totalorder %v4436, 6
  %vm6911 = vcmp.eq.s32.totalorder %v4437, 6
  %vm6912 = vcmp.eq.s32.totalorder %v4438, 6
  %vm6913 = vcmp.eq.s32.totalorder %v4439, 6
  %vm6914 = vcmp.eq.s32.totalorder %v4440, 6
  %vm6915 = vcmp.eq.s32.totalorder %v4441, 6
  %vm6916 = vcmp.eq.s32.totalorder %v4442, 6
  %vm6917 = vcmp.eq.s32.totalorder %v4443, 6
  %vm6918 = vcmp.eq.s32.totalorder %v4444, 6
  %vm6919 = vcmp.eq.s32.totalorder %v4445, 6
  %vm6920 = vcmp.eq.s32.totalorder %v4446, 6
  %vm6921 = vcmp.eq.s32.totalorder %v4447, 6
  %vm6922 = vcmp.eq.s32.totalorder %v4448, 6
  %vm6923 = vcmp.eq.s32.totalorder %v4449, 6
  %vm6924 = vcmp.eq.s32.totalorder %v4450, 6
  %vm6925 = vcmp.eq.s32.totalorder %v4451, 6
  %vm6926 = vcmp.eq.s32.totalorder %v4452, 6
  %vm6927 = vcmp.eq.s32.totalorder %v4453, 6
  %v6928 = vsel %vm6848, 1.0, 0.0
  %v6929 = vsel %vm6849, 1.0, 0.0
  %v6930 = vsel %vm6850, 1.0, 0.0
  %v6931 = vsel %vm6851, 1.0, 0.0
  %v6932 = vsel %vm6852, 1.0, 0.0
  %v6933 = vsel %vm6853, 1.0, 0.0
  %v6934 = vsel %vm6854, 1.0, 0.0
  %v6935 = vsel %vm6855, 1.0, 0.0
  %v6936 = vsel %vm6856, 1.0, 0.0
  %v6937 = vsel %vm6857, 1.0, 0.0
  %v6938 = vsel %vm6858, 1.0, 0.0
  %v6939 = vsel %vm6859, 1.0, 0.0
  %v6940 = vsel %vm6860, 1.0, 0.0
  %v6941 = vsel %vm6861, 1.0, 0.0
  %v6942 = vsel %vm6862, 1.0, 0.0
  %v6943 = vsel %vm6863, 1.0, 0.0
  %v6944 = vsel %vm6864, 1.0, 0.0
  %v6945 = vsel %vm6865, 1.0, 0.0
  %v6946 = vsel %vm6866, 1.0, 0.0
  %v6947 = vsel %vm6867, 1.0, 0.0
  %v6948 = vsel %vm6868, 1.0, 0.0
  %v6949 = vsel %vm6869, 1.0, 0.0
  %v6950 = vsel %vm6870, 1.0, 0.0
  %v6951 = vsel %vm6871, 1.0, 0.0
  %v6952 = vsel %vm6872, 1.0, 0.0
  %v6953 = vsel %vm6873, 1.0, 0.0
  %v6954 = vsel %vm6874, 1.0, 0.0
  %v6955 = vsel %vm6875, 1.0, 0.0
  %v6956 = vsel %vm6876, 1.0, 0.0
  %v6957 = vsel %vm6877, 1.0, 0.0
  %v6958 = vsel %vm6878, 1.0, 0.0
  %v6959 = vsel %vm6879, 1.0, 0.0
  %v6960 = vsel %vm6880, 1.0, 0.0
  %v6961 = vsel %vm6881, 1.0, 0.0
  %v6962 = vsel %vm6882, 1.0, 0.0
  %v6963 = vsel %vm6883, 1.0, 0.0
  %v6964 = vsel %vm6884, 1.0, 0.0
  %v6965 = vsel %vm6885, 1.0, 0.0
  %v6966 = vsel %vm6886, 1.0, 0.0
  %v6967 = vsel %vm6887, 1.0, 0.0
  %v6968 = vsel %vm6888, 1.0, 0.0
  %v6969 = vsel %vm6889, 1.0, 0.0
  %v6970 = vsel %vm6890, 1.0, 0.0
  %v6971 = vsel %vm6891, 1.0, 0.0
  %v6972 = vsel %vm6892, 1.0, 0.0
  %v6973 = vsel %vm6893, 1.0, 0.0
  %v6974 = vsel %vm6894, 1.0, 0.0
  %v6975 = vsel %vm6895, 1.0, 0.0
  %v6976 = vsel %vm6896, 1.0, 0.0
  %v6977 = vsel %vm6897, 1.0, 0.0
  %v6978 = vsel %vm6898, 1.0, 0.0
  %v6979 = vsel %vm6899, 1.0, 0.0
  %v6980 = vsel %vm6900, 1.0, 0.0
  %v6981 = vsel %vm6901, 1.0, 0.0
  %v6982 = vsel %vm6902, 1.0, 0.0
  %v6983 = vsel %vm6903, 1.0, 0.0
  %v6984 = vsel %vm6904, 1.0, 0.0
  %v6985 = vsel %vm6905, 1.0, 0.0
  %v6986 = vsel %vm6906, 1.0, 0.0
  %v6987 = vsel %vm6907, 1.0, 0.0
  %v6988 = vsel %vm6908, 1.0, 0.0
  %v6989 = vsel %vm6909, 1.0, 0.0
  %v6990 = vsel %vm6910, 1.0, 0.0
  %v6991 = vsel %vm6911, 1.0, 0.0
  %v6992 = vsel %vm6912, 1.0, 0.0
  %v6993 = vsel %vm6913, 1.0, 0.0
  %v6994 = vsel %vm6914, 1.0, 0.0
  %v6995 = vsel %vm6915, 1.0, 0.0
  %v6996 = vsel %vm6916, 1.0, 0.0
  %v6997 = vsel %vm6917, 1.0, 0.0
  %v6998 = vsel %vm6918, 1.0, 0.0
  %v6999 = vsel %vm6919, 1.0, 0.0
  %v7000 = vsel %vm6920, 1.0, 0.0
  %v7001 = vsel %vm6921, 1.0, 0.0
  %v7002 = vsel %vm6922, 1.0, 0.0
  %v7003 = vsel %vm6923, 1.0, 0.0
  %v7004 = vsel %vm6924, 1.0, 0.0
  %v7005 = vsel %vm6925, 1.0, 0.0
  %v7006 = vsel %vm6926, 1.0, 0.0
  %v7007 = vsel %vm6927, 1.0, 0.0
  %v7009 = vsel %vm4107, %v6847, 0
  %v7012 = vsel %vm2651, %v7003, 0
  %v7015 = vsel %vm2651, %v7004, 0
  %v7018 = vsel %vm2651, %v7005, 0
  %v7021 = vsel %vm2651, %v7006, 0
  %v7024 = vsel %vm2651, %v7007, 0
  %7026 = vmatprep.subr.mxu0 %v6929
  %7027 = vmatpush1.msra.mxu0 %v6928
  %7028 = vmatprep.subr.mxu0 %v6934
  %7029 = vmatpush1.msra.mxu0 %v6933
  %7030 = vmatprep.subr.mxu0 %v6939
  %7031 = vmatpush1.msra.mxu0 %v6938
  %7032 = vmatprep.subr.mxu0 %v6944
  %7033 = vmatpush1.msra.mxu0 %v6943
  %7034 = vmatprep.subr.mxu0 %v6949
  %7035 = vmatpush1.msra.mxu0 %v6948
  %7036 = vmatprep.subr.mxu0 %v6954
  %7037 = vmatpush1.msra.mxu0 %v6953
  %7038 = vmatprep.subr.mxu0 %v6959
  %7039 = vmatpush1.msra.mxu0 %v6958
  %7040 = vmatprep.subr.mxu0 %v6964
  %7041 = vmatpush1.msra.mxu0 %v6963
  %7042 = vmatprep.subr.mxu0 %v6969
  %7043 = vmatpush1.msra.mxu0 %v6968
  %7044 = vmatprep.subr.mxu0 %v6974
  %7045 = vmatpush1.msra.mxu0 %v6973
  %7046 = vmatprep.subr.mxu0 %v6979
  %7047 = vmatpush1.msra.mxu0 %v6978
  %7048 = vmatprep.subr.mxu0 %v6984
  %7049 = vmatpush1.msra.mxu0 %v6983
  %7050 = vmatprep.subr.mxu0 %v6989
  %7051 = vmatpush1.msra.mxu0 %v6988
  %7052 = vmatprep.subr.mxu0 %v6994
  %7053 = vmatpush1.msra.mxu0 %v6993
  %7054 = vmatprep.subr.mxu0 %v6999
  %7055 = vmatpush1.msra.mxu0 %v6998
  %7056 = vmatprep.subr.mxu0 %v7015
  %7057 = vmatpush1.msra.mxu0 %v7012
  %7058 = vmatprep.subr.mxu0 0.0
  %7059 = vmatpush1.msra.mxu0 0.0
  %7060 = vmatprep.subr.mxu0 0.0
  %7061 = vmatpush1.msra.mxu0 0.0
  %7062 = vmatprep.subr.mxu0 0.0
  %7063 = vmatpush1.msra.mxu0 0.0
  %7064 = vmatprep.subr.mxu0 0.0
  %7065 = vmatpush1.msra.mxu0 0.0
  %7066 = vmatprep.subr.mxu0 0.0
  %7067 = vmatpush1.msra.mxu0 0.0
  %7068 = vmatprep.subr.mxu0 0.0
  %7069 = vmatpush1.msra.mxu0 0.0
  %7070 = vmatprep.subr.mxu0 0.0
  %7071 = vmatpush1.msra.mxu0 0.0
  %7072 = vmatprep.subr.mxu0 0.0
  %7073 = vmatpush1.msra.mxu0 0.0
  %7074 = vmatprep.subr.mxu0 0.0
  %7075 = vmatpush1.msra.mxu0 0.0
  %7076 = vmatprep.subr.mxu0 0.0
  %7077 = vmatpush1.msra.mxu0 0.0
  %7078 = vmatprep.subr.mxu0 0.0
  %7079 = vmatpush1.msra.mxu0 0.0
  %7080 = vmatprep.subr.mxu0 0.0
  %7081 = vmatpush1.msra.mxu0 0.0
  %7082 = vmatprep.subr.mxu0 0.0
  %7083 = vmatpush1.msra.mxu0 0.0
  %7084 = vmatprep.subr.mxu0 0.0
  %7085 = vmatpush1.msra.mxu0 0.0
  %7086 = vmatprep.subr.mxu0 0.0
  %7087 = vmatpush1.msra.mxu0 0.0
  %7088 = vmatprep.subr.mxu0 0.0
  %7089 = vmatpush1.msra.mxu0 0.0
  %7090 = vmatprep.mubr.f32.mxu0 0.0
  %7091 = vmatmul.mubr.f32.gmra.mrb[0].mxu0 %v7009
  %v7092 = vpop.f32.mrb[0].mxu0
  %v7093 = vadd.f32 0.0, %v7092
  %v7094 = vpop.f32.mrb[0].mxu0
  %v7095 = vadd.f32 0.0, %v7094
  %7096 = vdwg.mxu0
  %7097 = vmatprep.subr.mxu0 %v6931
  %7098 = vmatpush1.msra.mxu0 %v6930
  %7099 = vmatprep.subr.mxu0 %v6936
  %7100 = vmatpush1.msra.mxu0 %v6935
  %7101 = vmatprep.subr.mxu0 %v6941
  %7102 = vmatpush1.msra.mxu0 %v6940
  %7103 = vmatprep.subr.mxu0 %v6946
  %7104 = vmatpush1.msra.mxu0 %v6945
  %7105 = vmatprep.subr.mxu0 %v6951
  %7106 = vmatpush1.msra.mxu0 %v6950
  %7107 = vmatprep.subr.mxu0 %v6956
  %7108 = vmatpush1.msra.mxu0 %v6955
  %7109 = vmatprep.subr.mxu0 %v6961
  %7110 = vmatpush1.msra.mxu0 %v6960
  %7111 = vmatprep.subr.mxu0 %v6966
  %7112 = vmatpush1.msra.mxu0 %v6965
  %7113 = vmatprep.subr.mxu0 %v6971
  %7114 = vmatpush1.msra.mxu0 %v6970
  %7115 = vmatprep.subr.mxu0 %v6976
  %7116 = vmatpush1.msra.mxu0 %v6975
  %7117 = vmatprep.subr.mxu0 %v6981
  %7118 = vmatpush1.msra.mxu0 %v6980
  %7119 = vmatprep.subr.mxu0 %v6986
  %7120 = vmatpush1.msra.mxu0 %v6985
  %7121 = vmatprep.subr.mxu0 %v6991
  %7122 = vmatpush1.msra.mxu0 %v6990
  %7123 = vmatprep.subr.mxu0 %v6996
  %7124 = vmatpush1.msra.mxu0 %v6995
  %7125 = vmatprep.subr.mxu0 %v7001
  %7126 = vmatpush1.msra.mxu0 %v7000
  %7127 = vmatprep.subr.mxu0 %v7021
  %7128 = vmatpush1.msra.mxu0 %v7018
  %7129 = vmatprep.subr.mxu0 0.0
  %7130 = vmatpush1.msra.mxu0 0.0
  %7131 = vmatprep.subr.mxu0 0.0
  %7132 = vmatpush1.msra.mxu0 0.0
  %7133 = vmatprep.subr.mxu0 0.0
  %7134 = vmatpush1.msra.mxu0 0.0
  %7135 = vmatprep.subr.mxu0 0.0
  %7136 = vmatpush1.msra.mxu0 0.0
  %7137 = vmatprep.subr.mxu0 0.0
  %7138 = vmatpush1.msra.mxu0 0.0
  %7139 = vmatprep.subr.mxu0 0.0
  %7140 = vmatpush1.msra.mxu0 0.0
  %7141 = vmatprep.subr.mxu0 0.0
  %7142 = vmatpush1.msra.mxu0 0.0
  %7143 = vmatprep.subr.mxu0 0.0
  %7144 = vmatpush1.msra.mxu0 0.0
  %7145 = vmatprep.subr.mxu0 0.0
  %7146 = vmatpush1.msra.mxu0 0.0
  %7147 = vmatprep.subr.mxu0 0.0
  %7148 = vmatpush1.msra.mxu0 0.0
  %7149 = vmatprep.subr.mxu0 0.0
  %7150 = vmatpush1.msra.mxu0 0.0
  %7151 = vmatprep.subr.mxu0 0.0
  %7152 = vmatpush1.msra.mxu0 0.0
  %7153 = vmatprep.subr.mxu0 0.0
  %7154 = vmatpush1.msra.mxu0 0.0
  %7155 = vmatprep.subr.mxu0 0.0
  %7156 = vmatpush1.msra.mxu0 0.0
  %7157 = vmatprep.subr.mxu0 0.0
  %7158 = vmatpush1.msra.mxu0 0.0
  %7159 = vmatprep.subr.mxu0 0.0
  %7160 = vmatpush1.msra.mxu0 0.0
  %7161 = vmatprep.mubr.f32.mxu0 0.0
  %7162 = vmatmul.mubr.f32.gmra.mrb[0].mxu0 %v7009
  %v7163 = vpop.f32.mrb[0].mxu0
  %v7164 = vadd.f32 0.0, %v7163
  %v7165 = vpop.f32.mrb[0].mxu0
  %v7166 = vadd.f32 0.0, %v7165
  %7167 = vdwg.mxu0
  %7168 = vmatprep.subr.mxu0 0.0
  %7169 = vmatpush1.msra.mxu0 %v6932
  %7170 = vmatprep.subr.mxu0 0.0
  %7171 = vmatpush1.msra.mxu0 %v6937
  %7172 = vmatprep.subr.mxu0 0.0
  %7173 = vmatpush1.msra.mxu0 %v6942
  %7174 = vmatprep.subr.mxu0 0.0
  %7175 = vmatpush1.msra.mxu0 %v6947
  %7176 = vmatprep.subr.mxu0 0.0
  %7177 = vmatpush1.msra.mxu0 %v6952
  %7178 = vmatprep.subr.mxu0 0.0
  %7179 = vmatpush1.msra.mxu0 %v6957
  %7180 = vmatprep.subr.mxu0 0.0
  %7181 = vmatpush1.msra.mxu0 %v6962
  %7182 = vmatprep.subr.mxu0 0.0
  %7183 = vmatpush1.msra.mxu0 %v6967
  %7184 = vmatprep.subr.mxu0 0.0
  %7185 = vmatpush1.msra.mxu0 %v6972
  %7186 = vmatprep.subr.mxu0 0.0
  %7187 = vmatpush1.msra.mxu0 %v6977
  %7188 = vmatprep.subr.mxu0 0.0
  %7189 = vmatpush1.msra.mxu0 %v6982
  %7190 = vmatprep.subr.mxu0 0.0
  %7191 = vmatpush1.msra.mxu0 %v6987
  %7192 = vmatprep.subr.mxu0 0.0
  %7193 = vmatpush1.msra.mxu0 %v6992
  %7194 = vmatprep.subr.mxu0 0.0
  %7195 = vmatpush1.msra.mxu0 %v6997
  %7196 = vmatprep.subr.mxu0 0.0
  %7197 = vmatpush1.msra.mxu0 %v7002
  %7198 = vmatprep.subr.mxu0 0.0
  %7199 = vmatpush1.msra.mxu0 %v7024
  %7200 = vmatprep.subr.mxu0 0.0
  %7201 = vmatpush1.msra.mxu0 0.0
  %7202 = vmatprep.subr.mxu0 0.0
  %7203 = vmatpush1.msra.mxu0 0.0
  %7204 = vmatprep.subr.mxu0 0.0
  %7205 = vmatpush1.msra.mxu0 0.0
  %7206 = vmatprep.subr.mxu0 0.0
  %7207 = vmatpush1.msra.mxu0 0.0
  %7208 = vmatprep.subr.mxu0 0.0
  %7209 = vmatpush1.msra.mxu0 0.0
  %7210 = vmatprep.subr.mxu0 0.0
  %7211 = vmatpush1.msra.mxu0 0.0
  %7212 = vmatprep.subr.mxu0 0.0
  %7213 = vmatpush1.msra.mxu0 0.0
  %7214 = vmatprep.subr.mxu0 0.0
  %7215 = vmatpush1.msra.mxu0 0.0
  %7216 = vmatprep.subr.mxu0 0.0
  %7217 = vmatpush1.msra.mxu0 0.0
  %7218 = vmatprep.subr.mxu0 0.0
  %7219 = vmatpush1.msra.mxu0 0.0
  %7220 = vmatprep.subr.mxu0 0.0
  %7221 = vmatpush1.msra.mxu0 0.0
  %7222 = vmatprep.subr.mxu0 0.0
  %7223 = vmatpush1.msra.mxu0 0.0
  %7224 = vmatprep.subr.mxu0 0.0
  %7225 = vmatpush1.msra.mxu0 0.0
  %7226 = vmatprep.subr.mxu0 0.0
  %7227 = vmatpush1.msra.mxu0 0.0
  %7228 = vmatprep.subr.mxu0 0.0
  %7229 = vmatpush1.msra.mxu0 0.0
  %7230 = vmatprep.subr.mxu0 0.0
  %7231 = vmatpush1.msra.mxu0 0.0
  %7232 = vmatprep.mubr.f32.mxu0 0.0
  %7233 = vmatmul.mubr.f32.gmra.mrb[0].mxu0 %v7009
  %v7234 = vpop.f32.mrb[0].mxu0
  %v7235 = vadd.f32 0.0, %v7234
  %v7236 = vpop.f32.mrb[0].mxu0
  %7237 = vdwg.mxu0
  %v7238 = vadd.f32 %v6838, %v7093
  %v7239 = vadd.f32 %v6839, %v7095
  %v7240 = vadd.f32 %v6840, %v7164
  %v7241 = vadd.f32 %v6841, %v7166
  %v7242 = vadd.f32 %v6842, %v7235
  %v7243 = vld [vmem:[#allocation2] sm:$0x1]
  %v7244 = vld [vmem:[#allocation3] sm:$0x1]
  %v7245 = vld [vmem:[#allocation4] sm:$0x1]
  %v7247 = vlaneseq
  %v7248 = vshrl.u32 %v7247, 7
  %v7249 = vsub.s32 0, %v7248
  %v7250 = vrot.slane %v7243, %v7249
  %v7252 = vsel %vm4457, %v7243, %v7250
  %7254 = vset.pattern.permute.xlu0 0
  %7255 = vperm.xlu0 %7254, %v7252
  %v7256 = vpop.permute.xlu0 %7255
  %v7258 = vadd.f32 %v7238, %v7256
  %v7259 = vadd.f32 %v7239, %v7256
  %v7260 = vadd.f32 %v7240, %v7256
  %v7261 = vadd.f32 %v7241, %v7256
  %v7262 = vadd.f32 %v7242, %v7256
  %7268 = vrot.lane.b32.xlu0 %v7258, 127
  %v7269 = vpop.permute.xlu0 %7268
  %7270 = vrot.lane.b32.xlu0 %v7259, 127
  %v7271 = vpop.permute.xlu0 %7270
  %7272 = vrot.lane.b32.xlu0 %v7260, 127
  %v7273 = vpop.permute.xlu0 %7272
  %7274 = vrot.lane.b32.xlu0 %v7261, 127
  %v7275 = vpop.permute.xlu0 %7274
  %7276 = vrot.lane.b32.xlu0 %v7262, 127
  %v7277 = vpop.permute.xlu0 %7276
  %vm7278 = vcmask 1039360
  %v7279 = vsel %vm7278, %v7269, %v7271
  %v7280 = vsel %vm7278, %v7271, %v7273
  %v7281 = vsel %vm7278, %v7273, %v7275
  %v7282 = vsel %vm7278, %v7275, %v7277
  %vm7288 = vcmask 1041408
  %v7289 = vsel %vm7288, %v7279, 0.0
  %v7290 = vsel %vm7288, %v7280, 0.0
  %v7291 = vadd.f32 %v7289, %v7290
  %v7292 = vsel %vm7288, %v7281, 0.0
  %v7293 = vadd.f32 %v7291, %v7292
  %v7294 = vsel %vm7288, %v7282, 0.0
  %v7295 = vadd.f32 %v7293, %v7294
  %vm7296 = vcmask 918528
  %v7297 = vsel %vm7296, %v7277, 0.0
  %v7298 = vadd.f32 %v7295, %v7297
  %7299 = vadd.xlane.f32.xlu0 %v7298
  %v7300 = vpop.xlane.xlu0 %7299
  %v7301 = vmul.f32 %v7258, %v7258
  %v7302 = vmul.f32 %v7259, %v7259
  %v7303 = vmul.f32 %v7260, %v7260
  %v7304 = vmul.f32 %v7261, %v7261
  %v7305 = vmul.f32 %v7262, %v7262
  %7311 = vrot.lane.b32.xlu0 %v7301, 127
  %v7312 = vpop.permute.xlu0 %7311
  %7313 = vrot.lane.b32.xlu0 %v7302, 127
  %v7314 = vpop.permute.xlu0 %7313
  %7315 = vrot.lane.b32.xlu0 %v7303, 127
  %v7316 = vpop.permute.xlu0 %7315
  %7317 = vrot.lane.b32.xlu0 %v7304, 127
  %v7318 = vpop.permute.xlu0 %7317
  %7319 = vrot.lane.b32.xlu0 %v7305, 127
  %v7320 = vpop.permute.xlu0 %7319
  %v7321 = vsel %vm7278, %v7312, %v7314
  %v7322 = vsel %vm7278, %v7314, %v7316
  %v7323 = vsel %vm7278, %v7316, %v7318
  %v7324 = vsel %vm7278, %v7318, %v7320
  %v7330 = vsel %vm7288, %v7321, 0.0
  %v7331 = vsel %vm7288, %v7322, 0.0
  %v7332 = vadd.f32 %v7330, %v7331
  %v7333 = vsel %vm7288, %v7323, 0.0
  %v7334 = vadd.f32 %v7332, %v7333
  %v7335 = vsel %vm7288, %v7324, 0.0
  %v7336 = vadd.f32 %v7334, %v7335
  %v7337 = vsel %vm7296, %v7320, 0.0
  %v7338 = vadd.f32 %v7336, %v7337
  %7339 = vadd.xlane.f32.xlu0 %v7338
  %v7340 = vpop.xlane.xlu0 %7339
  %v7341 = vadd.f32 %v7300, 0.0
  %v7343 = vrot.slane %v7300, 1
  %v7345 = vadd.f32 %v7341, %v7343
  %v7346 = vadd.f32 %v7340, 0.0
  %v7348 = vrot.slane %v7340, 1
  %v7350 = vadd.f32 %v7346, %v7348
  %v7351 = vrcp.pop 1250.0
  %v7352 = vmul.f32 %v7345, %v7351
  %v7353 = vmul.f32 %v7350, %v7351
  %v7354 = vmul.f32 %v7352, %v7352
  %v7355 = vsub.f32 %v7353, %v7354
  %v7356 = vmax.f32 %v7355, 0.0
  %v7357 = vadd.f32 %v7356, 1e-05
  %v7358 = vrsqrt.pop %v7357
  %v7359 = vmul.f32 %v7244, %v7358
  %v7360 = vmul.f32 %v7352, %v7359
  %v7361 = vsub.f32 %v7245, %v7360
  %v7363 = vlaneseq
  %v7364 = vshrl.u32 %v7363, 7
  %v7365 = vsub.s32 0, %v7364
  %v7366 = vrot.slane %v7359, %v7365
  %v7368 = vsel %vm4457, %v7359, %v7366
  %7370 = vset.pattern.permute.xlu0 0
  %7371 = vperm.xlu0 %7370, %v7368
  %v7372 = vpop.permute.xlu0 %7371
  %v7374 = vmul.f32 %v7258, %v7372
  %v7375 = vmul.f32 %v7259, %v7372
  %v7376 = vmul.f32 %v7260, %v7372
  %v7377 = vmul.f32 %v7261, %v7372
  %v7378 = vmul.f32 %v7262, %v7372
  %v7380 = vlaneseq
  %v7381 = vshrl.u32 %v7380, 7
  %v7382 = vsub.s32 0, %v7381
  %v7383 = vrot.slane %v7361, %v7382
  %v7385 = vsel %vm4457, %v7361, %v7383
  %7387 = vset.pattern.permute.xlu0 0
  %7388 = vperm.xlu0 %7387, %v7385
  %v7389 = vpop.permute.xlu0 %7388
  %v7391 = vadd.f32 %v7374, %v7389
  %v7392 = vadd.f32 %v7375, %v7389
  %v7393 = vadd.f32 %v7376, %v7389
  %v7394 = vadd.f32 %v7377, %v7389
  %v7395 = vadd.f32 %v7378, %v7389
  %v7401 = vcombine.low %v7391, %v7392
  %v7402 = vcombine.low %v7393, %v7394
  %v7404 = vunpack.c.l.s4 1983009808
  %v7405 = vunpack.c.0.s8 %v7404
  %v7406 = vlaneseq
  %v7407 = vshrl.u32 %v7406, 7
  %v7408 = vsub.s32 %v7405, %v7407
  %v7409 = vrot.slane %v7401, %v7408
  %v7411 = vunpack.c.l.s4 1983009808
  %v7412 = vunpack.c.0.s8 %v7411
  %v7413 = vlaneseq
  %v7414 = vshrl.u32 %v7413, 7
  %v7415 = vsub.s32 %v7412, %v7414
  %v7416 = vrot.slane %v7402, %v7415
  %v7417 = vcombine.low %v7409, %v7416
  %v7419 = vunpack.c.l.s4 1983009808
  %v7420 = vunpack.c.0.s8 %v7419
  %v7421 = vlaneseq
  %v7422 = vshrl.u32 %v7421, 7
  %v7423 = vsub.s32 %v7420, %v7422
  %v7424 = vrot.slane %v7395, %v7423
  %7425 = vrot.lane.b32.xlu0 %v7417, 127
  %v7426 = vpop.permute.xlu0 %7425
  %7427 = vrot.lane.b32.xlu0 %v7424, 127
  %v7428 = vpop.permute.xlu0 %7427
  %v7429 = vrot.slane %v7426, 2
  %v7430 = vrot.slane %v7428, 2
  %vm7431 = vcmask 1045504
  %v7432 = vsel %vm7431, %v7429, %v7430
  %v7433 = vsel %vm7278, %v7426, %v7432
  %7436 = vst [vmem:[%s19] sm:$0xff] %v7433
  %7437 = vst.msk [vmem:[%s19 + $0x8] sm:$0x3] %vm7296, %v7428
  // Predicated region
  $region78: #{forward.1} parent=0 // pred_check
    _
  $region79: #{forward.1} parent=0 // pred_check_branch
    %7439 = sbr.rel (0) target = $region81
  $region80: #{forward.1} parent=0 // pred_region
    _
  $region81: #{forward.1} parent=0 // pred_fallthru
    _
  // Predicated region
  $region82: #{forward.1} parent=0 // pred_check
    _
  $region83: #{forward.1} parent=0 // pred_check_branch
    %7441 = sbr.rel (0) target = $region85
  $region84: #{forward.1} parent=0 // pred_region
    _
  $region85: #{forward.1} parent=0 // pred_fallthru
    _

</llo_original>
